<compile_context>
chip_gen: v7x
topology: tpu7x:2x2x1
jax: 0.10.0
libtpu: 0.0.40
codegen_flags: <defaults>
</compile_context>

<pallas_src>
from functools import partial

import numpy as np
import jax
import jax.numpy as jnp
from jax.experimental import pallas as pl
from jax.experimental.pallas import tpu as pltpu


# ----------------------------------------------------------------------------
# In-kernel helpers
# ----------------------------------------------------------------------------
def _write_shifted(buf_ref, act):
    """Write activation `act` (Hh, Ww, C) into buf_ref (3, Hh+2, Ww, C) as three
    width-shifted, zero-haloed copies so every 3x3 tap of the next conv reads a
    contiguous (Hh*Ww, C) matmul LHS (only a free leading-dim offset)."""
    _, hp2, ww, c = buf_ref.shape
    hh = hp2 - 2
    dt = buf_ref.dtype
    act = act.astype(dt)

    zrow = jnp.zeros((3, 1, ww, c), dt)
    buf_ref[:, 0:1, :, :] = zrow                      # top halo row (all 3 copies)
    buf_ref[:, hh + 1:hh + 2, :, :] = zrow            # bottom halo row

    zcol = jnp.zeros((hh, 1, c), dt)
    # kx = 0 tap needs x[h, w-1]  -> activation shifted right by one column
    buf_ref[0, 1:hh + 1, :, :] = jnp.concatenate([zcol, act[:, :ww - 1, :]], axis=1)
    # kx = 1 tap needs x[h, w]    -> centered copy
    buf_ref[1, 1:hh + 1, :, :] = act
    # kx = 2 tap needs x[h, w+1]  -> activation shifted left by one column
    buf_ref[2, 1:hh + 1, :, :] = jnp.concatenate([act[:, 1:, :], zcol], axis=1)


def _conv3x3_accumulate(buf_ref, w_ref, acc_ref, hh, ww):
    """9 shifted MXU matmuls accumulated into a VMEM scratch accumulator.
    LHS views are zero-copy: ky is a leading-dim offset of the shifted buffer and
    the (hh, ww, C) -> (hh*ww, C) reshape is sublane-tile aligned (ww % 8 == 0)."""
    cin = buf_ref.shape[-1]
    acc_ref[...] = jnp.zeros_like(acc_ref)
    for ky in range(3):
        for kx in range(3):
            lhs = buf_ref[kx, ky:ky + hh, :, :].reshape(hh * ww, cin)
            acc_ref[...] += jnp.dot(lhs, w_ref[ky, kx],
                                    preferred_element_type=jnp.float32)


# ----------------------------------------------------------------------------
# Fused kernel: conv1+ReLU -> conv2+ReLU -> maxpool2x2 -> conv3+ReLU -> conv4
# One grid step = one batch element; all intermediates stay in VMEM scratch.
# ----------------------------------------------------------------------------
def _fused_vgg_block_kernel(x_ref, w1_ref, b1_ref, w2_ref, b2_ref,
                            w3_ref, b3_ref, w4_ref, b4_ref, o_ref,
                            buf1, buf2, buf3, acc_a, acc_b, *, H, W):
    Ho, Wo = H // 2, W // 2

    # ---- conv1 (im2col'd in the wrapper: single (H*W,32)x(32,64) matmul) + ReLU
    a1 = jnp.dot(x_ref[0], w1_ref[...], preferred_element_type=jnp.float32)
    a1 = jnp.maximum(a1 + b1_ref[...], 0.0)                    # (H*W, 64)
    _write_shifted(buf1, a1.reshape(H, W, 64))

    # ---- conv2 + ReLU, with the 2x2/2 maxpool fused into the epilogue ----------
    _conv3x3_accumulate(buf1, w2_ref, acc_a, H, W)
    acc_a[...] = jnp.maximum(acc_a[...] + b2_ref[...], 0.0)    # (H*W, 64), row = h*W+w
    # width-pair max via strided sublane loads from the accumulator scratch
    col_even = acc_a[pl.ds(0, H * Wo, 2), :]                   # rows with even w
    col_odd = acc_a[pl.ds(1, H * Wo, 2), :]                    # rows with odd  w
    wmax = jnp.maximum(col_even, col_odd)                      # (H*Wo, 64), row = h*Wo+j
    wmax = wmax.reshape(Ho, 2, Wo, 64)                         # aligned leading split
    pooled = jnp.maximum(wmax[:, 0], wmax[:, 1])               # (Ho, Wo, 64)
    _write_shifted(buf2, pooled)

    # ---- conv3 + ReLU -----------------------------------------------------------
    _conv3x3_accumulate(buf2, w3_ref, acc_b, Ho, Wo)
    a3 = jnp.maximum(acc_b[...] + b3_ref[...], 0.0)            # (Ho*Wo, 128)
    _write_shifted(buf3, a3.reshape(Ho, Wo, 128))

    # ---- conv4 (features[:8] stops before the ReLU at index 8) -----------------
    _conv3x3_accumulate(buf3, w4_ref, acc_b, Ho, Wo)
    o_ref[0] = (acc_b[...] + b4_ref[...]).astype(o_ref.dtype)  # lane-dense (Ho*Wo,128)


# ----------------------------------------------------------------------------
# Wrapper: NCHW in / NCHW out like the PyTorch module.
# ----------------------------------------------------------------------------
def feature_extractor_forward(x_nchw, params):
    B, Cin, H, W = x_nchw.shape
    assert Cin == 3 and H % 2 == 0 and W % 8 == 0 and (W // 2) % 8 == 0
    Ho, Wo = H // 2, W // 2

    x = jnp.transpose(x_nchw, (0, 2, 3, 1))                    # -> NHWC
    # im2col for conv1 (depth-3 contraction wastes the MXU): (B, H*W, 27) -> K=32
    xp = jnp.pad(x, ((0, 0), (1, 1), (1, 1), (0, 0)))
    patches = jnp.concatenate(
        [xp[:, ky:ky + H, kx:kx + W, :] for ky in range(3) for kx in range(3)],
        axis=-1).reshape(B, H * W, 27)
    patches = jnp.pad(patches, ((0, 0), (0, 0), (0, 5)))       # 27 -> 32 (zeros)
    w1_flat = jnp.pad(params["w1"].reshape(27, 64), ((0, 5), (0, 0)))

    out = pl.pallas_call(
        partial(_fused_vgg_block_kernel, H=H, W=W),
        out_shape=jax.ShapeDtypeStruct((B, Ho * Wo, 128), x_nchw.dtype),
        grid_spec=pltpu.PrefetchScalarGridSpec(
            num_scalar_prefetch=0,
            grid=(B,),
            in_specs=[
                pl.BlockSpec((1, H * W, 32), lambda b: (b, 0, 0)),
                pl.BlockSpec((32, 64), lambda b: (0, 0)),
                pl.BlockSpec((1, 64), lambda b: (0, 0)),
                pl.BlockSpec((3, 3, 64, 64), lambda b: (0, 0, 0, 0)),
                pl.BlockSpec((1, 64), lambda b: (0, 0)),
                pl.BlockSpec((3, 3, 64, 128), lambda b: (0, 0, 0, 0)),
                pl.BlockSpec((1, 128), lambda b: (0, 0)),
                pl.BlockSpec((3, 3, 128, 128), lambda b: (0, 0, 0, 0)),
                pl.BlockSpec((1, 128), lambda b: (0, 0)),
            ],
            out_specs=pl.BlockSpec((1, Ho * Wo, 128), lambda b: (b, 0, 0)),
            scratch_shapes=[
                pltpu.VMEM((3, H + 2, W, 64), jnp.float32),    # conv2 input (shifted)
                pltpu.VMEM((3, Ho + 2, Wo, 64), jnp.float32),  # conv3 input (shifted)
                pltpu.VMEM((3, Ho + 2, Wo, 128), jnp.float32), # conv4 input (shifted)
                pltpu.VMEM((H * W, 64), jnp.float32),          # conv2 accumulator
                pltpu.VMEM((Ho * Wo, 128), jnp.float32),       # conv3/conv4 accumulator
            ],
        ),
        compiler_params=pltpu.CompilerParams(
            dimension_semantics=("parallel",)),
    )(patches, w1_flat, params["b1"].reshape(1, 64),
      params["w2"], params["b2"].reshape(1, 64),
      params["w3"], params["b3"].reshape(1, 128),
      params["w4"], params["b4"].reshape(1, 128))

    out = out.reshape(B, Ho, Wo, 128)
    return jnp.transpose(out, (0, 3, 1, 2))                    # -> NCHW


feature_extractor = jax.jit(feature_extractor_forward)


# ----------------------------------------------------------------------------
# Pure-JAX reference (same default matmul precision as the kernel).
# ----------------------------------------------------------------------------
def _ref_conv(x, w, b, relu):
    y = jax.lax.conv_general_dilated(
        x, w, window_strides=(1, 1), padding="SAME",
        dimension_numbers=("NHWC", "HWIO", "NHWC"))
    y = y + b
    return jnp.maximum(y, 0.0) if relu else y


def reference_forward(x_nchw, params):
    x = jnp.transpose(x_nchw, (0, 2, 3, 1))
    x = _ref_conv(x, params["w1"], params["b1"], True)
    x = _ref_conv(x, params["w2"], params["b2"], True)
    x = jax.lax.reduce_window(x, -jnp.inf, jax.lax.max,
                              (1, 2, 2, 1), (1, 2, 2, 1), "VALID")
    x = _ref_conv(x, params["w3"], params["b3"], True)
    x = _ref_conv(x, params["w4"], params["b4"], False)
    return jnp.transpose(x, (0, 3, 1, 2))


if __name__ == "__main__":
    B, C, H, W = 2, 3, 16, 16
    key = jax.random.PRNGKey(0)
    k_x, *wkeys = jax.random.split(key, 10)
    x = jax.random.normal(k_x, (B, C, H, W), dtype=jnp.float32)

    def he_init(k, kh, kw, cin, cout):
        scale = float(np.sqrt(2.0 / (kh * kw * cin)))
        return jax.random.normal(k, (kh, kw, cin, cout), dtype=jnp.float32) * scale

    params = {
        "w1": he_init(wkeys[0], 3, 3, 3, 64),
        "b1": 0.01 * jax.random.normal(wkeys[1], (64,), dtype=jnp.float32),
        "w2": he_init(wkeys[2], 3, 3, 64, 64),
        "b2": 0.01 * jax.random.normal(wkeys[3], (64,), dtype=jnp.float32),
        "w3": he_init(wkeys[4], 3, 3, 64, 128),
        "b3": 0.01 * jax.random.normal(wkeys[5], (128,), dtype=jnp.float32),
        "w4": he_init(wkeys[6], 3, 3, 128, 128),
        "b4": 0.01 * jax.random.normal(wkeys[7], (128,), dtype=jnp.float32),
    }

    out = feature_extractor(x, params)
    out = jax.block_until_ready(out)
    assert out.shape == (B, 128, H // 2, W // 2), out.shape

    ref = reference_forward(x, params)
    # Default (single-pass bf16) MXU precision in both kernel and reference.
    np.testing.assert_allclose(np.asarray(out), np.asarray(ref), rtol=5e-2, atol=5e-2)

    print("KERNEL_OK")
</pallas_src>

<mosaic_0001>
module attributes {stable_mosaic.version = 11 : i64} {
  func.func @_fused_vgg_block_kernel(%arg0: i32, %arg1: memref<1x256x32xf32, #tpu.memory_space<vmem>>, %arg2: memref<32x64xf32, #tpu.memory_space<vmem>>, %arg3: memref<1x64xf32, #tpu.memory_space<vmem>>, %arg4: memref<3x3x64x64xf32, #tpu.memory_space<vmem>>, %arg5: memref<1x64xf32, #tpu.memory_space<vmem>>, %arg6: memref<3x3x64x128xf32, #tpu.memory_space<vmem>>, %arg7: memref<1x128xf32, #tpu.memory_space<vmem>>, %arg8: memref<3x3x128x128xf32, #tpu.memory_space<vmem>>, %arg9: memref<1x128xf32, #tpu.memory_space<vmem>>, %arg10: memref<1x64x128xf32, #tpu.memory_space<vmem>>, %arg11: memref<3x18x16x64xf32, #tpu.memory_space<vmem>>, %arg12: memref<3x10x8x64xf32, #tpu.memory_space<vmem>>, %arg13: memref<3x10x8x128xf32, #tpu.memory_space<vmem>>, %arg14: memref<256x64xf32, #tpu.memory_space<vmem>>, %arg15: memref<64x128xf32, #tpu.memory_space<vmem>>) attributes {dimension_semantics = [#tpu.dimension_semantics<parallel>], iteration_bounds = array<i64: 2>, scalar_prefetch = 0 : i64, scratch_operands = 5 : i64, tpu.core_type = #tpu.core_type<tc>, window_params = [{transform_indices = @transform_0, window_bounds = array<i64: 1, 256, 32>}, {pipeline_mode = #tpu.pipeline_mode<synchronous>, transform_indices = @transform_1, window_bounds = array<i64: 32, 64>}, {pipeline_mode = #tpu.pipeline_mode<synchronous>, transform_indices = @transform_2, window_bounds = array<i64: 1, 64>}, {pipeline_mode = #tpu.pipeline_mode<synchronous>, transform_indices = @transform_3, window_bounds = array<i64: 3, 3, 64, 64>}, {pipeline_mode = #tpu.pipeline_mode<synchronous>, transform_indices = @transform_4, window_bounds = array<i64: 1, 64>}, {pipeline_mode = #tpu.pipeline_mode<synchronous>, transform_indices = @transform_5, window_bounds = array<i64: 3, 3, 64, 128>}, {pipeline_mode = #tpu.pipeline_mode<synchronous>, transform_indices = @transform_6, window_bounds = array<i64: 1, 128>}, {pipeline_mode = #tpu.pipeline_mode<synchronous>, transform_indices = @transform_7, window_bounds = array<i64: 3, 3, 128, 128>}, {pipeline_mode = #tpu.pipeline_mode<synchronous>, transform_indices = @transform_8, window_bounds = array<i64: 1, 128>}, {transform_indices = @transform_9, window_bounds = array<i64: 1, 64, 128>}]} {
    %c0 = arith.constant 0 : index
    %c0_0 = arith.constant 0 : index
    %c0_1 = arith.constant 0 : index
    %0 = vector.load %arg1[%c0, %c0_0, %c0_1] : memref<1x256x32xf32, #tpu.memory_space<vmem>>, vector<1x256x32xf32>
    %1 = vector.shape_cast %0 : vector<1x256x32xf32> to vector<256x32xf32>
    %c0_2 = arith.constant 0 : index
    %c0_3 = arith.constant 0 : index
    %2 = vector.load %arg2[%c0_2, %c0_3] : memref<32x64xf32, #tpu.memory_space<vmem>>, vector<32x64xf32>
    %cst = arith.constant dense<0.000000e+00> : vector<256x64xf32>
    %3 = tpu.matmul %1, %2, %cst {dimension_numbers = #tpu.dot_dimension_numbers<[1], [0], [0], [1], [0, 0, 1, 1], [], []>} : vector<256x32xf32>, vector<32x64xf32>, vector<256x64xf32> -> vector<256x64xf32>
    %c0_4 = arith.constant 0 : index
    %c0_5 = arith.constant 0 : index
    %4 = vector.load %arg3[%c0_4, %c0_5] : memref<1x64xf32, #tpu.memory_space<vmem>>, vector<1x64xf32>
    %5 = vector.broadcast %4 : vector<1x64xf32> to vector<256x64xf32>
    %6 = arith.addf %3, %5 : vector<256x64xf32>
    %cst_6 = arith.constant 0.000000e+00 : f32
    %7 = vector.broadcast %cst_6 : f32 to vector<256x64xf32>
    %8 = arith.maximumf %6, %7 : vector<256x64xf32>
    %9 = vector.shape_cast %8 : vector<256x64xf32> to vector<16x16x64xf32>
    %cst_7 = arith.constant 0.000000e+00 : f32
    %10 = vector.broadcast %cst_7 : f32 to vector<3x1x16x64xf32>
    %c0_8 = arith.constant 0 : index
    %c0_9 = arith.constant 0 : index
    %c0_10 = arith.constant 0 : index
    %c0_11 = arith.constant 0 : index
    %11 = vector.load %arg11[%c0_8, %c0_9, %c0_10, %c0_11] : memref<3x18x16x64xf32, #tpu.memory_space<vmem>>, vector<3x1x16x64xf32>
    tpu.vector_store %arg11[%c0_8, %c0_9, %c0_10, %c0_11], %10 {strides = array<i32>} : memref<3x18x16x64xf32, #tpu.memory_space<vmem>>, vector<3x1x16x64xf32>,
    %c0_12 = arith.constant 0 : index
    %c17 = arith.constant 17 : index
    %c0_13 = arith.constant 0 : index
    %c0_14 = arith.constant 0 : index
    %12 = vector.load %arg11[%c0_12, %c17, %c0_13, %c0_14] : memref<3x18x16x64xf32, #tpu.memory_space<vmem>>, vector<3x1x16x64xf32>
    tpu.vector_store %arg11[%c0_12, %c17, %c0_13, %c0_14], %10 {strides = array<i32>} : memref<3x18x16x64xf32, #tpu.memory_space<vmem>>, vector<3x1x16x64xf32>,
    %cst_15 = arith.constant 0.000000e+00 : f32
    %13 = vector.broadcast %cst_15 : f32 to vector<16x1x64xf32>
    %14 = vector.extract_strided_slice %9 {offsets = [0, 0, 0], sizes = [16, 15, 64], strides = [1, 1, 1]} : vector<16x16x64xf32> to vector<16x15x64xf32>
    %15 = tpu.concatenate %13, %14 in 1 : vector<16x1x64xf32>, vector<16x15x64xf32> -> vector<16x16x64xf32>
    %c0_16 = arith.constant 0 : index
    %c1 = arith.constant 1 : index
    %c0_17 = arith.constant 0 : index
    %c0_18 = arith.constant 0 : index
    %16 = vector.load %arg11[%c0_16, %c1, %c0_17, %c0_18] : memref<3x18x16x64xf32, #tpu.memory_space<vmem>>, vector<1x16x16x64xf32>
    %17 = vector.shape_cast %16 : vector<1x16x16x64xf32> to vector<16x16x64xf32>
    %18 = vector.shape_cast %15 : vector<16x16x64xf32> to vector<1x16x16x64xf32>
    tpu.vector_store %arg11[%c0_16, %c1, %c0_17, %c0_18], %18 {strides = array<i32>} : memref<3x18x16x64xf32, #tpu.memory_space<vmem>>, vector<1x16x16x64xf32>,
    %c1_19 = arith.constant 1 : index
    %c1_20 = arith.constant 1 : index
    %c0_21 = arith.constant 0 : index
    %c0_22 = arith.constant 0 : index
    %19 = vector.load %arg11[%c1_19, %c1_20, %c0_21, %c0_22] : memref<3x18x16x64xf32, #tpu.memory_space<vmem>>, vector<1x16x16x64xf32>
    %20 = vector.shape_cast %19 : vector<1x16x16x64xf32> to vector<16x16x64xf32>
    %21 = vector.shape_cast %9 : vector<16x16x64xf32> to vector<1x16x16x64xf32>
    tpu.vector_store %arg11[%c1_19, %c1_20, %c0_21, %c0_22], %21 {strides = array<i32>} : memref<3x18x16x64xf32, #tpu.memory_space<vmem>>, vector<1x16x16x64xf32>,
    %22 = vector.extract_strided_slice %9 {offsets = [0, 1, 0], sizes = [16, 15, 64], strides = [1, 1, 1]} : vector<16x16x64xf32> to vector<16x15x64xf32>
    %23 = tpu.concatenate %22, %13 in 1 : vector<16x15x64xf32>, vector<16x1x64xf32> -> vector<16x16x64xf32>
    %c2 = arith.constant 2 : index
    %c1_23 = arith.constant 1 : index
    %c0_24 = arith.constant 0 : index
    %c0_25 = arith.constant 0 : index
    %24 = vector.load %arg11[%c2, %c1_23, %c0_24, %c0_25] : memref<3x18x16x64xf32, #tpu.memory_space<vmem>>, vector<1x16x16x64xf32>
    %25 = vector.shape_cast %24 : vector<1x16x16x64xf32> to vector<16x16x64xf32>
    %26 = vector.shape_cast %23 : vector<16x16x64xf32> to vector<1x16x16x64xf32>
    tpu.vector_store %arg11[%c2, %c1_23, %c0_24, %c0_25], %26 {strides = array<i32>} : memref<3x18x16x64xf32, #tpu.memory_space<vmem>>, vector<1x16x16x64xf32>,
    %cst_26 = arith.constant 0.000000e+00 : f32
    %27 = vector.broadcast %cst_26 : f32 to vector<256x64xf32>
    %c0_27 = arith.constant 0 : index
    %c0_28 = arith.constant 0 : index
    %28 = vector.load %arg14[%c0_27, %c0_28] : memref<256x64xf32, #tpu.memory_space<vmem>>, vector<256x64xf32>
    tpu.vector_store %arg14[%c0_27, %c0_28], %27 {strides = array<i32>} : memref<256x64xf32, #tpu.memory_space<vmem>>, vector<256x64xf32>,
    %c0_29 = arith.constant 0 : index
    %c0_30 = arith.constant 0 : index
    %c0_31 = arith.constant 0 : index
    %c0_32 = arith.constant 0 : index
    %29 = vector.load %arg11[%c0_29, %c0_30, %c0_31, %c0_32] : memref<3x18x16x64xf32, #tpu.memory_space<vmem>>, vector<1x16x16x64xf32>
    %30 = vector.shape_cast %29 : vector<1x16x16x64xf32> to vector<16x16x64xf32>
    %31 = vector.shape_cast %30 : vector<16x16x64xf32> to vector<256x64xf32>
    %c0_33 = arith.constant 0 : index
    %c0_34 = arith.constant 0 : index
    %32 = vector.load %arg14[%c0_33, %c0_34] : memref<256x64xf32, #tpu.memory_space<vmem>>, vector<256x64xf32>
    %c0_35 = arith.constant 0 : index
    %c0_36 = arith.constant 0 : index
    %c0_37 = arith.constant 0 : index
    %c0_38 = arith.constant 0 : index
    %33 = vector.load %arg4[%c0_35, %c0_36, %c0_37, %c0_38] : memref<3x3x64x64xf32, #tpu.memory_space<vmem>>, vector<1x1x64x64xf32>
    %34 = vector.shape_cast %33 : vector<1x1x64x64xf32> to vector<64x64xf32>
    %cst_39 = arith.constant dense<0.000000e+00> : vector<256x64xf32>
    %35 = tpu.matmul %31, %34, %cst_39 {dimension_numbers = #tpu.dot_dimension_numbers<[1], [0], [0], [1], [0, 0, 1, 1], [], []>} : vector<256x64xf32>, vector<64x64xf32>, vector<256x64xf32> -> vector<256x64xf32>
    %36 = arith.addf %32, %35 : vector<256x64xf32>
    %c0_40 = arith.constant 0 : index
    %c0_41 = arith.constant 0 : index
    %37 = vector.load %arg14[%c0_40, %c0_41] : memref<256x64xf32, #tpu.memory_space<vmem>>, vector<256x64xf32>
    tpu.vector_store %arg14[%c0_40, %c0_41], %36 {strides = array<i32>} : memref<256x64xf32, #tpu.memory_space<vmem>>, vector<256x64xf32>,
    %c1_42 = arith.constant 1 : index
    %c0_43 = arith.constant 0 : index
    %c0_44 = arith.constant 0 : index
    %c0_45 = arith.constant 0 : index
    %38 = vector.load %arg11[%c1_42, %c0_43, %c0_44, %c0_45] : memref<3x18x16x64xf32, #tpu.memory_space<vmem>>, vector<1x16x16x64xf32>
    %39 = vector.shape_cast %38 : vector<1x16x16x64xf32> to vector<16x16x64xf32>
    %40 = vector.shape_cast %39 : vector<16x16x64xf32> to vector<256x64xf32>
    %c0_46 = arith.constant 0 : index
    %c0_47 = arith.constant 0 : index
    %41 = vector.load %arg14[%c0_46, %c0_47] : memref<256x64xf32, #tpu.memory_space<vmem>>, vector<256x64xf32>
    %c0_48 = arith.constant 0 : index
    %c1_49 = arith.constant 1 : index
    %c0_50 = arith.constant 0 : index
    %c0_51 = arith.constant 0 : index
    %42 = vector.load %arg4[%c0_48, %c1_49, %c0_50, %c0_51] : memref<3x3x64x64xf32, #tpu.memory_space<vmem>>, vector<1x1x64x64xf32>
    %43 = vector.shape_cast %42 : vector<1x1x64x64xf32> to vector<64x64xf32>
    %cst_52 = arith.constant dense<0.000000e+00> : vector<256x64xf32>
    %44 = tpu.matmul %40, %43, %cst_52 {dimension_numbers = #tpu.dot_dimension_numbers<[1], [0], [0], [1], [0, 0, 1, 1], [], []>} : vector<256x64xf32>, vector<64x64xf32>, vector<256x64xf32> -> vector<256x64xf32>
    %45 = arith.addf %41, %44 : vector<256x64xf32>
    %c0_53 = arith.constant 0 : index
    %c0_54 = arith.constant 0 : index
    %46 = vector.load %arg14[%c0_53, %c0_54] : memref<256x64xf32, #tpu.memory_space<vmem>>, vector<256x64xf32>
    tpu.vector_store %arg14[%c0_53, %c0_54], %45 {strides = array<i32>} : memref<256x64xf32, #tpu.memory_space<vmem>>, vector<256x64xf32>,
    %c2_55 = arith.constant 2 : index
    %c0_56 = arith.constant 0 : index
    %c0_57 = arith.constant 0 : index
    %c0_58 = arith.constant 0 : index
    %47 = vector.load %arg11[%c2_55, %c0_56, %c0_57, %c0_58] : memref<3x18x16x64xf32, #tpu.memory_space<vmem>>, vector<1x16x16x64xf32>
    %48 = vector.shape_cast %47 : vector<1x16x16x64xf32> to vector<16x16x64xf32>
    %49 = vector.shape_cast %48 : vector<16x16x64xf32> to vector<256x64xf32>
    %c0_59 = arith.constant 0 : index
    %c0_60 = arith.constant 0 : index
    %50 = vector.load %arg14[%c0_59, %c0_60] : memref<256x64xf32, #tpu.memory_space<vmem>>, vector<256x64xf32>
    %c0_61 = arith.constant 0 : index
    %c2_62 = arith.constant 2 : index
    %c0_63 = arith.constant 0 : index
    %c0_64 = arith.constant 0 : index
    %51 = vector.load %arg4[%c0_61, %c2_62, %c0_63, %c0_64] : memref<3x3x64x64xf32, #tpu.memory_space<vmem>>, vector<1x1x64x64xf32>
    %52 = vector.shape_cast %51 : vector<1x1x64x64xf32> to vector<64x64xf32>
    %cst_65 = arith.constant dense<0.000000e+00> : vector<256x64xf32>
    %53 = tpu.matmul %49, %52, %cst_65 {dimension_numbers = #tpu.dot_dimension_numbers<[1], [0], [0], [1], [0, 0, 1, 1], [], []>} : vector<256x64xf32>, vector<64x64xf32>, vector<256x64xf32> -> vector<256x64xf32>
    %54 = arith.addf %50, %53 : vector<256x64xf32>
    %c0_66 = arith.constant 0 : index
    %c0_67 = arith.constant 0 : index
    %55 = vector.load %arg14[%c0_66, %c0_67] : memref<256x64xf32, #tpu.memory_space<vmem>>, vector<256x64xf32>
    tpu.vector_store %arg14[%c0_66, %c0_67], %54 {strides = array<i32>} : memref<256x64xf32, #tpu.memory_space<vmem>>, vector<256x64xf32>,
    %c0_68 = arith.constant 0 : index
    %c1_69 = arith.constant 1 : index
    %c0_70 = arith.constant 0 : index
    %c0_71 = arith.constant 0 : index
    %56 = vector.load %arg11[%c0_68, %c1_69, %c0_70, %c0_71] : memref<3x18x16x64xf32, #tpu.memory_space<vmem>>, vector<1x16x16x64xf32>
    %57 = vector.shape_cast %56 : vector<1x16x16x64xf32> to vector<16x16x64xf32>
    %58 = vector.shape_cast %57 : vector<16x16x64xf32> to vector<256x64xf32>
    %c0_72 = arith.constant 0 : index
    %c0_73 = arith.constant 0 : index
    %59 = vector.load %arg14[%c0_72, %c0_73] : memref<256x64xf32, #tpu.memory_space<vmem>>, vector<256x64xf32>
    %c1_74 = arith.constant 1 : index
    %c0_75 = arith.constant 0 : index
    %c0_76 = arith.constant 0 : index
    %c0_77 = arith.constant 0 : index
    %60 = vector.load %arg4[%c1_74, %c0_75, %c0_76, %c0_77] : memref<3x3x64x64xf32, #tpu.memory_space<vmem>>, vector<1x1x64x64xf32>
    %61 = vector.shape_cast %60 : vector<1x1x64x64xf32> to vector<64x64xf32>
    %cst_78 = arith.constant dense<0.000000e+00> : vector<256x64xf32>
    %62 = tpu.matmul %58, %61, %cst_78 {dimension_numbers = #tpu.dot_dimension_numbers<[1], [0], [0], [1], [0, 0, 1, 1], [], []>} : vector<256x64xf32>, vector<64x64xf32>, vector<256x64xf32> -> vector<256x64xf32>
    %63 = arith.addf %59, %62 : vector<256x64xf32>
    %c0_79 = arith.constant 0 : index
    %c0_80 = arith.constant 0 : index
    %64 = vector.load %arg14[%c0_79, %c0_80] : memref<256x64xf32, #tpu.memory_space<vmem>>, vector<256x64xf32>
    tpu.vector_store %arg14[%c0_79, %c0_80], %63 {strides = array<i32>} : memref<256x64xf32, #tpu.memory_space<vmem>>, vector<256x64xf32>,
    %c1_81 = arith.constant 1 : index
    %c1_82 = arith.constant 1 : index
    %c0_83 = arith.constant 0 : index
    %c0_84 = arith.constant 0 : index
    %65 = vector.load %arg11[%c1_81, %c1_82, %c0_83, %c0_84] : memref<3x18x16x64xf32, #tpu.memory_space<vmem>>, vector<1x16x16x64xf32>
    %66 = vector.shape_cast %65 : vector<1x16x16x64xf32> to vector<16x16x64xf32>
    %67 = vector.shape_cast %66 : vector<16x16x64xf32> to vector<256x64xf32>
    %c0_85 = arith.constant 0 : index
    %c0_86 = arith.constant 0 : index
    %68 = vector.load %arg14[%c0_85, %c0_86] : memref<256x64xf32, #tpu.memory_space<vmem>>, vector<256x64xf32>
    %c1_87 = arith.constant 1 : index
    %c1_88 = arith.constant 1 : index
    %c0_89 = arith.constant 0 : index
    %c0_90 = arith.constant 0 : index
    %69 = vector.load %arg4[%c1_87, %c1_88, %c0_89, %c0_90] : memref<3x3x64x64xf32, #tpu.memory_space<vmem>>, vector<1x1x64x64xf32>
    %70 = vector.shape_cast %69 : vector<1x1x64x64xf32> to vector<64x64xf32>
    %cst_91 = arith.constant dense<0.000000e+00> : vector<256x64xf32>
    %71 = tpu.matmul %67, %70, %cst_91 {dimension_numbers = #tpu.dot_dimension_numbers<[1], [0], [0], [1], [0, 0, 1, 1], [], []>} : vector<256x64xf32>, vector<64x64xf32>, vector<256x64xf32> -> vector<256x64xf32>
    %72 = arith.addf %68, %71 : vector<256x64xf32>
    %c0_92 = arith.constant 0 : index
    %c0_93 = arith.constant 0 : index
    %73 = vector.load %arg14[%c0_92, %c0_93] : memref<256x64xf32, #tpu.memory_space<vmem>>, vector<256x64xf32>
    tpu.vector_store %arg14[%c0_92, %c0_93], %72 {strides = array<i32>} : memref<256x64xf32, #tpu.memory_space<vmem>>, vector<256x64xf32>,
    %c2_94 = arith.constant 2 : index
    %c1_95 = arith.constant 1 : index
    %c0_96 = arith.constant 0 : index
    %c0_97 = arith.constant 0 : index
    %74 = vector.load %arg11[%c2_94, %c1_95, %c0_96, %c0_97] : memref<3x18x16x64xf32, #tpu.memory_space<vmem>>, vector<1x16x16x64xf32>
    %75 = vector.shape_cast %74 : vector<1x16x16x64xf32> to vector<16x16x64xf32>
    %76 = vector.shape_cast %75 : vector<16x16x64xf32> to vector<256x64xf32>
    %c0_98 = arith.constant 0 : index
    %c0_99 = arith.constant 0 : index
    %77 = vector.load %arg14[%c0_98, %c0_99] : memref<256x64xf32, #tpu.memory_space<vmem>>, vector<256x64xf32>
    %c1_100 = arith.constant 1 : index
    %c2_101 = arith.constant 2 : index
    %c0_102 = arith.constant 0 : index
    %c0_103 = arith.constant 0 : index
    %78 = vector.load %arg4[%c1_100, %c2_101, %c0_102, %c0_103] : memref<3x3x64x64xf32, #tpu.memory_space<vmem>>, vector<1x1x64x64xf32>
    %79 = vector.shape_cast %78 : vector<1x1x64x64xf32> to vector<64x64xf32>
    %cst_104 = arith.constant dense<0.000000e+00> : vector<256x64xf32>
    %80 = tpu.matmul %76, %79, %cst_104 {dimension_numbers = #tpu.dot_dimension_numbers<[1], [0], [0], [1], [0, 0, 1, 1], [], []>} : vector<256x64xf32>, vector<64x64xf32>, vector<256x64xf32> -> vector<256x64xf32>
    %81 = arith.addf %77, %80 : vector<256x64xf32>
    %c0_105 = arith.constant 0 : index
    %c0_106 = arith.constant 0 : index
    %82 = vector.load %arg14[%c0_105, %c0_106] : memref<256x64xf32, #tpu.memory_space<vmem>>, vector<256x64xf32>
    tpu.vector_store %arg14[%c0_105, %c0_106], %81 {strides = array<i32>} : memref<256x64xf32, #tpu.memory_space<vmem>>, vector<256x64xf32>,
    %c0_107 = arith.constant 0 : index
    %c2_108 = arith.constant 2 : index
    %c0_109 = arith.constant 0 : index
    %c0_110 = arith.constant 0 : index
    %83 = vector.load %arg11[%c0_107, %c2_108, %c0_109, %c0_110] : memref<3x18x16x64xf32, #tpu.memory_space<vmem>>, vector<1x16x16x64xf32>
    %84 = vector.shape_cast %83 : vector<1x16x16x64xf32> to vector<16x16x64xf32>
    %85 = vector.shape_cast %84 : vector<16x16x64xf32> to vector<256x64xf32>
    %c0_111 = arith.constant 0 : index
    %c0_112 = arith.constant 0 : index
    %86 = vector.load %arg14[%c0_111, %c0_112] : memref<256x64xf32, #tpu.memory_space<vmem>>, vector<256x64xf32>
    %c2_113 = arith.constant 2 : index
    %c0_114 = arith.constant 0 : index
    %c0_115 = arith.constant 0 : index
    %c0_116 = arith.constant 0 : index
    %87 = vector.load %arg4[%c2_113, %c0_114, %c0_115, %c0_116] : memref<3x3x64x64xf32, #tpu.memory_space<vmem>>, vector<1x1x64x64xf32>
    %88 = vector.shape_cast %87 : vector<1x1x64x64xf32> to vector<64x64xf32>
    %cst_117 = arith.constant dense<0.000000e+00> : vector<256x64xf32>
    %89 = tpu.matmul %85, %88, %cst_117 {dimension_numbers = #tpu.dot_dimension_numbers<[1], [0], [0], [1], [0, 0, 1, 1], [], []>} : vector<256x64xf32>, vector<64x64xf32>, vector<256x64xf32> -> vector<256x64xf32>
    %90 = arith.addf %86, %89 : vector<256x64xf32>
    %c0_118 = arith.constant 0 : index
    %c0_119 = arith.constant 0 : index
    %91 = vector.load %arg14[%c0_118, %c0_119] : memref<256x64xf32, #tpu.memory_space<vmem>>, vector<256x64xf32>
    tpu.vector_store %arg14[%c0_118, %c0_119], %90 {strides = array<i32>} : memref<256x64xf32, #tpu.memory_space<vmem>>, vector<256x64xf32>,
    %c1_120 = arith.constant 1 : index
    %c2_121 = arith.constant 2 : index
    %c0_122 = arith.constant 0 : index
    %c0_123 = arith.constant 0 : index
    %92 = vector.load %arg11[%c1_120, %c2_121, %c0_122, %c0_123] : memref<3x18x16x64xf32, #tpu.memory_space<vmem>>, vector<1x16x16x64xf32>
    %93 = vector.shape_cast %92 : vector<1x16x16x64xf32> to vector<16x16x64xf32>
    %94 = vector.shape_cast %93 : vector<16x16x64xf32> to vector<256x64xf32>
    %c0_124 = arith.constant 0 : index
    %c0_125 = arith.constant 0 : index
    %95 = vector.load %arg14[%c0_124, %c0_125] : memref<256x64xf32, #tpu.memory_space<vmem>>, vector<256x64xf32>
    %c2_126 = arith.constant 2 : index
    %c1_127 = arith.constant 1 : index
    %c0_128 = arith.constant 0 : index
    %c0_129 = arith.constant 0 : index
    %96 = vector.load %arg4[%c2_126, %c1_127, %c0_128, %c0_129] : memref<3x3x64x64xf32, #tpu.memory_space<vmem>>, vector<1x1x64x64xf32>
    %97 = vector.shape_cast %96 : vector<1x1x64x64xf32> to vector<64x64xf32>
    %cst_130 = arith.constant dense<0.000000e+00> : vector<256x64xf32>
    %98 = tpu.matmul %94, %97, %cst_130 {dimension_numbers = #tpu.dot_dimension_numbers<[1], [0], [0], [1], [0, 0, 1, 1], [], []>} : vector<256x64xf32>, vector<64x64xf32>, vector<256x64xf32> -> vector<256x64xf32>
    %99 = arith.addf %95, %98 : vector<256x64xf32>
    %c0_131 = arith.constant 0 : index
    %c0_132 = arith.constant 0 : index
    %100 = vector.load %arg14[%c0_131, %c0_132] : memref<256x64xf32, #tpu.memory_space<vmem>>, vector<256x64xf32>
    tpu.vector_store %arg14[%c0_131, %c0_132], %99 {strides = array<i32>} : memref<256x64xf32, #tpu.memory_space<vmem>>, vector<256x64xf32>,
    %c2_133 = arith.constant 2 : index
    %c2_134 = arith.constant 2 : index
    %c0_135 = arith.constant 0 : index
    %c0_136 = arith.constant 0 : index
    %101 = vector.load %arg11[%c2_133, %c2_134, %c0_135, %c0_136] : memref<3x18x16x64xf32, #tpu.memory_space<vmem>>, vector<1x16x16x64xf32>
    %102 = vector.shape_cast %101 : vector<1x16x16x64xf32> to vector<16x16x64xf32>
    %103 = vector.shape_cast %102 : vector<16x16x64xf32> to vector<256x64xf32>
    %c0_137 = arith.constant 0 : index
    %c0_138 = arith.constant 0 : index
    %104 = vector.load %arg14[%c0_137, %c0_138] : memref<256x64xf32, #tpu.memory_space<vmem>>, vector<256x64xf32>
    %c2_139 = arith.constant 2 : index
    %c2_140 = arith.constant 2 : index
    %c0_141 = arith.constant 0 : index
    %c0_142 = arith.constant 0 : index
    %105 = vector.load %arg4[%c2_139, %c2_140, %c0_141, %c0_142] : memref<3x3x64x64xf32, #tpu.memory_space<vmem>>, vector<1x1x64x64xf32>
    %106 = vector.shape_cast %105 : vector<1x1x64x64xf32> to vector<64x64xf32>
    %cst_143 = arith.constant dense<0.000000e+00> : vector<256x64xf32>
    %107 = tpu.matmul %103, %106, %cst_143 {dimension_numbers = #tpu.dot_dimension_numbers<[1], [0], [0], [1], [0, 0, 1, 1], [], []>} : vector<256x64xf32>, vector<64x64xf32>, vector<256x64xf32> -> vector<256x64xf32>
    %108 = arith.addf %104, %107 : vector<256x64xf32>
    %c0_144 = arith.constant 0 : index
    %c0_145 = arith.constant 0 : index
    %109 = vector.load %arg14[%c0_144, %c0_145] : memref<256x64xf32, #tpu.memory_space<vmem>>, vector<256x64xf32>
    tpu.vector_store %arg14[%c0_144, %c0_145], %108 {strides = array<i32>} : memref<256x64xf32, #tpu.memory_space<vmem>>, vector<256x64xf32>,
    %c0_146 = arith.constant 0 : index
    %c0_147 = arith.constant 0 : index
    %110 = vector.load %arg14[%c0_146, %c0_147] : memref<256x64xf32, #tpu.memory_space<vmem>>, vector<256x64xf32>
    %c0_148 = arith.constant 0 : index
    %c0_149 = arith.constant 0 : index
    %111 = vector.load %arg5[%c0_148, %c0_149] : memref<1x64xf32, #tpu.memory_space<vmem>>, vector<1x64xf32>
    %112 = vector.broadcast %111 : vector<1x64xf32> to vector<256x64xf32>
    %113 = arith.addf %110, %112 : vector<256x64xf32>
    %cst_150 = arith.constant 0.000000e+00 : f32
    %114 = vector.broadcast %cst_150 : f32 to vector<256x64xf32>
    %115 = arith.maximumf %113, %114 : vector<256x64xf32>
    %c0_151 = arith.constant 0 : index
    %c0_152 = arith.constant 0 : index
    %116 = vector.load %arg14[%c0_151, %c0_152] : memref<256x64xf32, #tpu.memory_space<vmem>>, vector<256x64xf32>
    tpu.vector_store %arg14[%c0_151, %c0_152], %115 {strides = array<i32>} : memref<256x64xf32, #tpu.memory_space<vmem>>, vector<256x64xf32>,
    %c0_153 = arith.constant 0 : index
    %c0_154 = arith.constant 0 : index
    %117 = tpu.strided_load %arg14[%c0_153, %c0_154] {strides = array<i32: 2, 1>} : memref<256x64xf32, #tpu.memory_space<vmem>>, vector<128x64xf32>
    %c1_155 = arith.constant 1 : index
    %c0_156 = arith.constant 0 : index
    %118 = tpu.strided_load %arg14[%c1_155, %c0_156] {strides = array<i32: 2, 1>} : memref<256x64xf32, #tpu.memory_space<vmem>>, vector<128x64xf32>
    %119 = arith.maximumf %117, %118 : vector<128x64xf32>
    %120 = vector.shape_cast %119 : vector<128x64xf32> to vector<8x2x8x64xf32>
    %121 = vector.extract_strided_slice %120 {offsets = [0, 0, 0, 0], sizes = [8, 1, 8, 64], strides = [1, 1, 1, 1]} : vector<8x2x8x64xf32> to vector<8x1x8x64xf32>
    %122 = vector.shape_cast %121 : vector<8x1x8x64xf32> to vector<8x8x64xf32>
    %123 = vector.extract_strided_slice %120 {offsets = [0, 1, 0, 0], sizes = [8, 1, 8, 64], strides = [1, 1, 1, 1]} : vector<8x2x8x64xf32> to vector<8x1x8x64xf32>
    %124 = vector.shape_cast %123 : vector<8x1x8x64xf32> to vector<8x8x64xf32>
    %125 = arith.maximumf %122, %124 : vector<8x8x64xf32>
    %cst_157 = arith.constant 0.000000e+00 : f32
    %126 = vector.broadcast %cst_157 : f32 to vector<3x1x8x64xf32>
    %c0_158 = arith.constant 0 : index
    %c0_159 = arith.constant 0 : index
    %c0_160 = arith.constant 0 : index
    %c0_161 = arith.constant 0 : index
    %127 = vector.load %arg12[%c0_158, %c0_159, %c0_160, %c0_161] : memref<3x10x8x64xf32, #tpu.memory_space<vmem>>, vector<3x1x8x64xf32>
    tpu.vector_store %arg12[%c0_158, %c0_159, %c0_160, %c0_161], %126 {strides = array<i32>} : memref<3x10x8x64xf32, #tpu.memory_space<vmem>>, vector<3x1x8x64xf32>,
    %c0_162 = arith.constant 0 : index
    %c9 = arith.constant 9 : index
    %c0_163 = arith.constant 0 : index
    %c0_164 = arith.constant 0 : index
    %128 = vector.load %arg12[%c0_162, %c9, %c0_163, %c0_164] : memref<3x10x8x64xf32, #tpu.memory_space<vmem>>, vector<3x1x8x64xf32>
    tpu.vector_store %arg12[%c0_162, %c9, %c0_163, %c0_164], %126 {strides = array<i32>} : memref<3x10x8x64xf32, #tpu.memory_space<vmem>>, vector<3x1x8x64xf32>,
    %cst_165 = arith.constant 0.000000e+00 : f32
    %129 = vector.broadcast %cst_165 : f32 to vector<8x1x64xf32>
    %130 = vector.extract_strided_slice %125 {offsets = [0, 0, 0], sizes = [8, 7, 64], strides = [1, 1, 1]} : vector<8x8x64xf32> to vector<8x7x64xf32>
    %131 = tpu.concatenate %129, %130 in 1 : vector<8x1x64xf32>, vector<8x7x64xf32> -> vector<8x8x64xf32>
    %c0_166 = arith.constant 0 : index
    %c1_167 = arith.constant 1 : index
    %c0_168 = arith.constant 0 : index
    %c0_169 = arith.constant 0 : index
    %132 = vector.load %arg12[%c0_166, %c1_167, %c0_168, %c0_169] : memref<3x10x8x64xf32, #tpu.memory_space<vmem>>, vector<1x8x8x64xf32>
    %133 = vector.shape_cast %132 : vector<1x8x8x64xf32> to vector<8x8x64xf32>
    %134 = vector.shape_cast %131 : vector<8x8x64xf32> to vector<1x8x8x64xf32>
    tpu.vector_store %arg12[%c0_166, %c1_167, %c0_168, %c0_169], %134 {strides = array<i32>} : memref<3x10x8x64xf32, #tpu.memory_space<vmem>>, vector<1x8x8x64xf32>,
    %c1_170 = arith.constant 1 : index
    %c1_171 = arith.constant 1 : index
    %c0_172 = arith.constant 0 : index
    %c0_173 = arith.constant 0 : index
    %135 = vector.load %arg12[%c1_170, %c1_171, %c0_172, %c0_173] : memref<3x10x8x64xf32, #tpu.memory_space<vmem>>, vector<1x8x8x64xf32>
    %136 = vector.shape_cast %135 : vector<1x8x8x64xf32> to vector<8x8x64xf32>
    %137 = vector.shape_cast %125 : vector<8x8x64xf32> to vector<1x8x8x64xf32>
    tpu.vector_store %arg12[%c1_170, %c1_171, %c0_172, %c0_173], %137 {strides = array<i32>} : memref<3x10x8x64xf32, #tpu.memory_space<vmem>>, vector<1x8x8x64xf32>,
    %138 = vector.extract_strided_slice %125 {offsets = [0, 1, 0], sizes = [8, 7, 64], strides = [1, 1, 1]} : vector<8x8x64xf32> to vector<8x7x64xf32>
    %139 = tpu.concatenate %138, %129 in 1 : vector<8x7x64xf32>, vector<8x1x64xf32> -> vector<8x8x64xf32>
    %c2_174 = arith.constant 2 : index
    %c1_175 = arith.constant 1 : index
    %c0_176 = arith.constant 0 : index
    %c0_177 = arith.constant 0 : index
    %140 = vector.load %arg12[%c2_174, %c1_175, %c0_176, %c0_177] : memref<3x10x8x64xf32, #tpu.memory_space<vmem>>, vector<1x8x8x64xf32>
    %141 = vector.shape_cast %140 : vector<1x8x8x64xf32> to vector<8x8x64xf32>
    %142 = vector.shape_cast %139 : vector<8x8x64xf32> to vector<1x8x8x64xf32>
    tpu.vector_store %arg12[%c2_174, %c1_175, %c0_176, %c0_177], %142 {strides = array<i32>} : memref<3x10x8x64xf32, #tpu.memory_space<vmem>>, vector<1x8x8x64xf32>,
    %cst_178 = arith.constant 0.000000e+00 : f32
    %143 = vector.broadcast %cst_178 : f32 to vector<64x128xf32>
    %c0_179 = arith.constant 0 : index
    %c0_180 = arith.constant 0 : index
    %144 = vector.load %arg15[%c0_179, %c0_180] : memref<64x128xf32, #tpu.memory_space<vmem>>, vector<64x128xf32>
    tpu.vector_store %arg15[%c0_179, %c0_180], %143 {strides = array<i32>} : memref<64x128xf32, #tpu.memory_space<vmem>>, vector<64x128xf32>,
    %c0_181 = arith.constant 0 : index
    %c0_182 = arith.constant 0 : index
    %c0_183 = arith.constant 0 : index
    %c0_184 = arith.constant 0 : index
    %145 = vector.load %arg12[%c0_181, %c0_182, %c0_183, %c0_184] : memref<3x10x8x64xf32, #tpu.memory_space<vmem>>, vector<1x8x8x64xf32>
    %146 = vector.shape_cast %145 : vector<1x8x8x64xf32> to vector<8x8x64xf32>
    %147 = vector.shape_cast %146 : vector<8x8x64xf32> to vector<64x64xf32>
    %c0_185 = arith.constant 0 : index
    %c0_186 = arith.constant 0 : index
    %148 = vector.load %arg15[%c0_185, %c0_186] : memref<64x128xf32, #tpu.memory_space<vmem>>, vector<64x128xf32>
    %c0_187 = arith.constant 0 : index
    %c0_188 = arith.constant 0 : index
    %c0_189 = arith.constant 0 : index
    %c0_190 = arith.constant 0 : index
    %149 = vector.load %arg6[%c0_187, %c0_188, %c0_189, %c0_190] : memref<3x3x64x128xf32, #tpu.memory_space<vmem>>, vector<1x1x64x128xf32>
    %150 = vector.shape_cast %149 : vector<1x1x64x128xf32> to vector<64x128xf32>
    %cst_191 = arith.constant dense<0.000000e+00> : vector<64x128xf32>
    %151 = tpu.matmul %147, %150, %cst_191 {dimension_numbers = #tpu.dot_dimension_numbers<[1], [0], [0], [1], [0, 0, 1, 1], [], []>} : vector<64x64xf32>, vector<64x128xf32>, vector<64x128xf32> -> vector<64x128xf32>
    %152 = arith.addf %148, %151 : vector<64x128xf32>
    %c0_192 = arith.constant 0 : index
    %c0_193 = arith.constant 0 : index
    %153 = vector.load %arg15[%c0_192, %c0_193] : memref<64x128xf32, #tpu.memory_space<vmem>>, vector<64x128xf32>
    tpu.vector_store %arg15[%c0_192, %c0_193], %152 {strides = array<i32>} : memref<64x128xf32, #tpu.memory_space<vmem>>, vector<64x128xf32>,
    %c1_194 = arith.constant 1 : index
    %c0_195 = arith.constant 0 : index
    %c0_196 = arith.constant 0 : index
    %c0_197 = arith.constant 0 : index
    %154 = vector.load %arg12[%c1_194, %c0_195, %c0_196, %c0_197] : memref<3x10x8x64xf32, #tpu.memory_space<vmem>>, vector<1x8x8x64xf32>
    %155 = vector.shape_cast %154 : vector<1x8x8x64xf32> to vector<8x8x64xf32>
    %156 = vector.shape_cast %155 : vector<8x8x64xf32> to vector<64x64xf32>
    %c0_198 = arith.constant 0 : index
    %c0_199 = arith.constant 0 : index
    %157 = vector.load %arg15[%c0_198, %c0_199] : memref<64x128xf32, #tpu.memory_space<vmem>>, vector<64x128xf32>
    %c0_200 = arith.constant 0 : index
    %c1_201 = arith.constant 1 : index
    %c0_202 = arith.constant 0 : index
    %c0_203 = arith.constant 0 : index
    %158 = vector.load %arg6[%c0_200, %c1_201, %c0_202, %c0_203] : memref<3x3x64x128xf32, #tpu.memory_space<vmem>>, vector<1x1x64x128xf32>
    %159 = vector.shape_cast %158 : vector<1x1x64x128xf32> to vector<64x128xf32>
    %cst_204 = arith.constant dense<0.000000e+00> : vector<64x128xf32>
    %160 = tpu.matmul %156, %159, %cst_204 {dimension_numbers = #tpu.dot_dimension_numbers<[1], [0], [0], [1], [0, 0, 1, 1], [], []>} : vector<64x64xf32>, vector<64x128xf32>, vector<64x128xf32> -> vector<64x128xf32>
    %161 = arith.addf %157, %160 : vector<64x128xf32>
    %c0_205 = arith.constant 0 : index
    %c0_206 = arith.constant 0 : index
    %162 = vector.load %arg15[%c0_205, %c0_206] : memref<64x128xf32, #tpu.memory_space<vmem>>, vector<64x128xf32>
    tpu.vector_store %arg15[%c0_205, %c0_206], %161 {strides = array<i32>} : memref<64x128xf32, #tpu.memory_space<vmem>>, vector<64x128xf32>,
    %c2_207 = arith.constant 2 : index
    %c0_208 = arith.constant 0 : index
    %c0_209 = arith.constant 0 : index
    %c0_210 = arith.constant 0 : index
    %163 = vector.load %arg12[%c2_207, %c0_208, %c0_209, %c0_210] : memref<3x10x8x64xf32, #tpu.memory_space<vmem>>, vector<1x8x8x64xf32>
    %164 = vector.shape_cast %163 : vector<1x8x8x64xf32> to vector<8x8x64xf32>
    %165 = vector.shape_cast %164 : vector<8x8x64xf32> to vector<64x64xf32>
    %c0_211 = arith.constant 0 : index
    %c0_212 = arith.constant 0 : index
    %166 = vector.load %arg15[%c0_211, %c0_212] : memref<64x128xf32, #tpu.memory_space<vmem>>, vector<64x128xf32>
    %c0_213 = arith.constant 0 : index
    %c2_214 = arith.constant 2 : index
    %c0_215 = arith.constant 0 : index
    %c0_216 = arith.constant 0 : index
    %167 = vector.load %arg6[%c0_213, %c2_214, %c0_215, %c0_216] : memref<3x3x64x128xf32, #tpu.memory_space<vmem>>, vector<1x1x64x128xf32>
    %168 = vector.shape_cast %167 : vector<1x1x64x128xf32> to vector<64x128xf32>
    %cst_217 = arith.constant dense<0.000000e+00> : vector<64x128xf32>
    %169 = tpu.matmul %165, %168, %cst_217 {dimension_numbers = #tpu.dot_dimension_numbers<[1], [0], [0], [1], [0, 0, 1, 1], [], []>} : vector<64x64xf32>, vector<64x128xf32>, vector<64x128xf32> -> vector<64x128xf32>
    %170 = arith.addf %166, %169 : vector<64x128xf32>
    %c0_218 = arith.constant 0 : index
    %c0_219 = arith.constant 0 : index
    %171 = vector.load %arg15[%c0_218, %c0_219] : memref<64x128xf32, #tpu.memory_space<vmem>>, vector<64x128xf32>
    tpu.vector_store %arg15[%c0_218, %c0_219], %170 {strides = array<i32>} : memref<64x128xf32, #tpu.memory_space<vmem>>, vector<64x128xf32>,
    %c0_220 = arith.constant 0 : index
    %c1_221 = arith.constant 1 : index
    %c0_222 = arith.constant 0 : index
    %c0_223 = arith.constant 0 : index
    %172 = vector.load %arg12[%c0_220, %c1_221, %c0_222, %c0_223] : memref<3x10x8x64xf32, #tpu.memory_space<vmem>>, vector<1x8x8x64xf32>
    %173 = vector.shape_cast %172 : vector<1x8x8x64xf32> to vector<8x8x64xf32>
    %174 = vector.shape_cast %173 : vector<8x8x64xf32> to vector<64x64xf32>
    %c0_224 = arith.constant 0 : index
    %c0_225 = arith.constant 0 : index
    %175 = vector.load %arg15[%c0_224, %c0_225] : memref<64x128xf32, #tpu.memory_space<vmem>>, vector<64x128xf32>
    %c1_226 = arith.constant 1 : index
    %c0_227 = arith.constant 0 : index
    %c0_228 = arith.constant 0 : index
    %c0_229 = arith.constant 0 : index
    %176 = vector.load %arg6[%c1_226, %c0_227, %c0_228, %c0_229] : memref<3x3x64x128xf32, #tpu.memory_space<vmem>>, vector<1x1x64x128xf32>
    %177 = vector.shape_cast %176 : vector<1x1x64x128xf32> to vector<64x128xf32>
    %cst_230 = arith.constant dense<0.000000e+00> : vector<64x128xf32>
    %178 = tpu.matmul %174, %177, %cst_230 {dimension_numbers = #tpu.dot_dimension_numbers<[1], [0], [0], [1], [0, 0, 1, 1], [], []>} : vector<64x64xf32>, vector<64x128xf32>, vector<64x128xf32> -> vector<64x128xf32>
    %179 = arith.addf %175, %178 : vector<64x128xf32>
    %c0_231 = arith.constant 0 : index
    %c0_232 = arith.constant 0 : index
    %180 = vector.load %arg15[%c0_231, %c0_232] : memref<64x128xf32, #tpu.memory_space<vmem>>, vector<64x128xf32>
    tpu.vector_store %arg15[%c0_231, %c0_232], %179 {strides = array<i32>} : memref<64x128xf32, #tpu.memory_space<vmem>>, vector<64x128xf32>,
    %c1_233 = arith.constant 1 : index
    %c1_234 = arith.constant 1 : index
    %c0_235 = arith.constant 0 : index
    %c0_236 = arith.constant 0 : index
    %181 = vector.load %arg12[%c1_233, %c1_234, %c0_235, %c0_236] : memref<3x10x8x64xf32, #tpu.memory_space<vmem>>, vector<1x8x8x64xf32>
    %182 = vector.shape_cast %181 : vector<1x8x8x64xf32> to vector<8x8x64xf32>
    %183 = vector.shape_cast %182 : vector<8x8x64xf32> to vector<64x64xf32>
    %c0_237 = arith.constant 0 : index
    %c0_238 = arith.constant 0 : index
    %184 = vector.load %arg15[%c0_237, %c0_238] : memref<64x128xf32, #tpu.memory_space<vmem>>, vector<64x128xf32>
    %c1_239 = arith.constant 1 : index
    %c1_240 = arith.constant 1 : index
    %c0_241 = arith.constant 0 : index
    %c0_242 = arith.constant 0 : index
    %185 = vector.load %arg6[%c1_239, %c1_240, %c0_241, %c0_242] : memref<3x3x64x128xf32, #tpu.memory_space<vmem>>, vector<1x1x64x128xf32>
    %186 = vector.shape_cast %185 : vector<1x1x64x128xf32> to vector<64x128xf32>
    %cst_243 = arith.constant dense<0.000000e+00> : vector<64x128xf32>
    %187 = tpu.matmul %183, %186, %cst_243 {dimension_numbers = #tpu.dot_dimension_numbers<[1], [0], [0], [1], [0, 0, 1, 1], [], []>} : vector<64x64xf32>, vector<64x128xf32>, vector<64x128xf32> -> vector<64x128xf32>
    %188 = arith.addf %184, %187 : vector<64x128xf32>
    %c0_244 = arith.constant 0 : index
    %c0_245 = arith.constant 0 : index
    %189 = vector.load %arg15[%c0_244, %c0_245] : memref<64x128xf32, #tpu.memory_space<vmem>>, vector<64x128xf32>
    tpu.vector_store %arg15[%c0_244, %c0_245], %188 {strides = array<i32>} : memref<64x128xf32, #tpu.memory_space<vmem>>, vector<64x128xf32>,
    %c2_246 = arith.constant 2 : index
    %c1_247 = arith.constant 1 : index
    %c0_248 = arith.constant 0 : index
    %c0_249 = arith.constant 0 : index
    %190 = vector.load %arg12[%c2_246, %c1_247, %c0_248, %c0_249] : memref<3x10x8x64xf32, #tpu.memory_space<vmem>>, vector<1x8x8x64xf32>
    %191 = vector.shape_cast %190 : vector<1x8x8x64xf32> to vector<8x8x64xf32>
    %192 = vector.shape_cast %191 : vector<8x8x64xf32> to vector<64x64xf32>
    %c0_250 = arith.constant 0 : index
    %c0_251 = arith.constant 0 : index
    %193 = vector.load %arg15[%c0_250, %c0_251] : memref<64x128xf32, #tpu.memory_space<vmem>>, vector<64x128xf32>
    %c1_252 = arith.constant 1 : index
    %c2_253 = arith.constant 2 : index
    %c0_254 = arith.constant 0 : index
    %c0_255 = arith.constant 0 : index
    %194 = vector.load %arg6[%c1_252, %c2_253, %c0_254, %c0_255] : memref<3x3x64x128xf32, #tpu.memory_space<vmem>>, vector<1x1x64x128xf32>
    %195 = vector.shape_cast %194 : vector<1x1x64x128xf32> to vector<64x128xf32>
    %cst_256 = arith.constant dense<0.000000e+00> : vector<64x128xf32>
    %196 = tpu.matmul %192, %195, %cst_256 {dimension_numbers = #tpu.dot_dimension_numbers<[1], [0], [0], [1], [0, 0, 1, 1], [], []>} : vector<64x64xf32>, vector<64x128xf32>, vector<64x128xf32> -> vector<64x128xf32>
    %197 = arith.addf %193, %196 : vector<64x128xf32>
    %c0_257 = arith.constant 0 : index
    %c0_258 = arith.constant 0 : index
    %198 = vector.load %arg15[%c0_257, %c0_258] : memref<64x128xf32, #tpu.memory_space<vmem>>, vector<64x128xf32>
    tpu.vector_store %arg15[%c0_257, %c0_258], %197 {strides = array<i32>} : memref<64x128xf32, #tpu.memory_space<vmem>>, vector<64x128xf32>,
    %c0_259 = arith.constant 0 : index
    %c2_260 = arith.constant 2 : index
    %c0_261 = arith.constant 0 : index
    %c0_262 = arith.constant 0 : index
    %199 = vector.load %arg12[%c0_259, %c2_260, %c0_261, %c0_262] : memref<3x10x8x64xf32, #tpu.memory_space<vmem>>, vector<1x8x8x64xf32>
    %200 = vector.shape_cast %199 : vector<1x8x8x64xf32> to vector<8x8x64xf32>
    %201 = vector.shape_cast %200 : vector<8x8x64xf32> to vector<64x64xf32>
    %c0_263 = arith.constant 0 : index
    %c0_264 = arith.constant 0 : index
    %202 = vector.load %arg15[%c0_263, %c0_264] : memref<64x128xf32, #tpu.memory_space<vmem>>, vector<64x128xf32>
    %c2_265 = arith.constant 2 : index
    %c0_266 = arith.constant 0 : index
    %c0_267 = arith.constant 0 : index
    %c0_268 = arith.constant 0 : index
    %203 = vector.load %arg6[%c2_265, %c0_266, %c0_267, %c0_268] : memref<3x3x64x128xf32, #tpu.memory_space<vmem>>, vector<1x1x64x128xf32>
    %204 = vector.shape_cast %203 : vector<1x1x64x128xf32> to vector<64x128xf32>
    %cst_269 = arith.constant dense<0.000000e+00> : vector<64x128xf32>
    %205 = tpu.matmul %201, %204, %cst_269 {dimension_numbers = #tpu.dot_dimension_numbers<[1], [0], [0], [1], [0, 0, 1, 1], [], []>} : vector<64x64xf32>, vector<64x128xf32>, vector<64x128xf32> -> vector<64x128xf32>
    %206 = arith.addf %202, %205 : vector<64x128xf32>
    %c0_270 = arith.constant 0 : index
    %c0_271 = arith.constant 0 : index
    %207 = vector.load %arg15[%c0_270, %c0_271] : memref<64x128xf32, #tpu.memory_space<vmem>>, vector<64x128xf32>
    tpu.vector_store %arg15[%c0_270, %c0_271], %206 {strides = array<i32>} : memref<64x128xf32, #tpu.memory_space<vmem>>, vector<64x128xf32>,
    %c1_272 = arith.constant 1 : index
    %c2_273 = arith.constant 2 : index
    %c0_274 = arith.constant 0 : index
    %c0_275 = arith.constant 0 : index
    %208 = vector.load %arg12[%c1_272, %c2_273, %c0_274, %c0_275] : memref<3x10x8x64xf32, #tpu.memory_space<vmem>>, vector<1x8x8x64xf32>
    %209 = vector.shape_cast %208 : vector<1x8x8x64xf32> to vector<8x8x64xf32>
    %210 = vector.shape_cast %209 : vector<8x8x64xf32> to vector<64x64xf32>
    %c0_276 = arith.constant 0 : index
    %c0_277 = arith.constant 0 : index
    %211 = vector.load %arg15[%c0_276, %c0_277] : memref<64x128xf32, #tpu.memory_space<vmem>>, vector<64x128xf32>
    %c2_278 = arith.constant 2 : index
    %c1_279 = arith.constant 1 : index
    %c0_280 = arith.constant 0 : index
    %c0_281 = arith.constant 0 : index
    %212 = vector.load %arg6[%c2_278, %c1_279, %c0_280, %c0_281] : memref<3x3x64x128xf32, #tpu.memory_space<vmem>>, vector<1x1x64x128xf32>
    %213 = vector.shape_cast %212 : vector<1x1x64x128xf32> to vector<64x128xf32>
    %cst_282 = arith.constant dense<0.000000e+00> : vector<64x128xf32>
    %214 = tpu.matmul %210, %213, %cst_282 {dimension_numbers = #tpu.dot_dimension_numbers<[1], [0], [0], [1], [0, 0, 1, 1], [], []>} : vector<64x64xf32>, vector<64x128xf32>, vector<64x128xf32> -> vector<64x128xf32>
    %215 = arith.addf %211, %214 : vector<64x128xf32>
    %c0_283 = arith.constant 0 : index
    %c0_284 = arith.constant 0 : index
    %216 = vector.load %arg15[%c0_283, %c0_284] : memref<64x128xf32, #tpu.memory_space<vmem>>, vector<64x128xf32>
    tpu.vector_store %arg15[%c0_283, %c0_284], %215 {strides = array<i32>} : memref<64x128xf32, #tpu.memory_space<vmem>>, vector<64x128xf32>,
    %c2_285 = arith.constant 2 : index
    %c2_286 = arith.constant 2 : index
    %c0_287 = arith.constant 0 : index
    %c0_288 = arith.constant 0 : index
    %217 = vector.load %arg12[%c2_285, %c2_286, %c0_287, %c0_288] : memref<3x10x8x64xf32, #tpu.memory_space<vmem>>, vector<1x8x8x64xf32>
    %218 = vector.shape_cast %217 : vector<1x8x8x64xf32> to vector<8x8x64xf32>
    %219 = vector.shape_cast %218 : vector<8x8x64xf32> to vector<64x64xf32>
    %c0_289 = arith.constant 0 : index
    %c0_290 = arith.constant 0 : index
    %220 = vector.load %arg15[%c0_289, %c0_290] : memref<64x128xf32, #tpu.memory_space<vmem>>, vector<64x128xf32>
    %c2_291 = arith.constant 2 : index
    %c2_292 = arith.constant 2 : index
    %c0_293 = arith.constant 0 : index
    %c0_294 = arith.constant 0 : index
    %221 = vector.load %arg6[%c2_291, %c2_292, %c0_293, %c0_294] : memref<3x3x64x128xf32, #tpu.memory_space<vmem>>, vector<1x1x64x128xf32>
    %222 = vector.shape_cast %221 : vector<1x1x64x128xf32> to vector<64x128xf32>
    %cst_295 = arith.constant dense<0.000000e+00> : vector<64x128xf32>
    %223 = tpu.matmul %219, %222, %cst_295 {dimension_numbers = #tpu.dot_dimension_numbers<[1], [0], [0], [1], [0, 0, 1, 1], [], []>} : vector<64x64xf32>, vector<64x128xf32>, vector<64x128xf32> -> vector<64x128xf32>
    %224 = arith.addf %220, %223 : vector<64x128xf32>
    %c0_296 = arith.constant 0 : index
    %c0_297 = arith.constant 0 : index
    %225 = vector.load %arg15[%c0_296, %c0_297] : memref<64x128xf32, #tpu.memory_space<vmem>>, vector<64x128xf32>
    tpu.vector_store %arg15[%c0_296, %c0_297], %224 {strides = array<i32>} : memref<64x128xf32, #tpu.memory_space<vmem>>, vector<64x128xf32>,
    %c0_298 = arith.constant 0 : index
    %c0_299 = arith.constant 0 : index
    %226 = vector.load %arg15[%c0_298, %c0_299] : memref<64x128xf32, #tpu.memory_space<vmem>>, vector<64x128xf32>
    %c0_300 = arith.constant 0 : index
    %c0_301 = arith.constant 0 : index
    %227 = vector.load %arg7[%c0_300, %c0_301] : memref<1x128xf32, #tpu.memory_space<vmem>>, vector<1x128xf32>
    %228 = vector.broadcast %227 : vector<1x128xf32> to vector<64x128xf32>
    %229 = arith.addf %226, %228 : vector<64x128xf32>
    %cst_302 = arith.constant 0.000000e+00 : f32
    %230 = vector.broadcast %cst_302 : f32 to vector<64x128xf32>
    %231 = arith.maximumf %229, %230 : vector<64x128xf32>
    %232 = vector.shape_cast %231 : vector<64x128xf32> to vector<8x8x128xf32>
    %cst_303 = arith.constant 0.000000e+00 : f32
    %233 = vector.broadcast %cst_303 : f32 to vector<3x1x8x128xf32>
    %c0_304 = arith.constant 0 : index
    %c0_305 = arith.constant 0 : index
    %c0_306 = arith.constant 0 : index
    %c0_307 = arith.constant 0 : index
    %234 = vector.load %arg13[%c0_304, %c0_305, %c0_306, %c0_307] : memref<3x10x8x128xf32, #tpu.memory_space<vmem>>, vector<3x1x8x128xf32>
    tpu.vector_store %arg13[%c0_304, %c0_305, %c0_306, %c0_307], %233 {strides = array<i32>} : memref<3x10x8x128xf32, #tpu.memory_space<vmem>>, vector<3x1x8x128xf32>,
    %c0_308 = arith.constant 0 : index
    %c9_309 = arith.constant 9 : index
    %c0_310 = arith.constant 0 : index
    %c0_311 = arith.constant 0 : index
    %235 = vector.load %arg13[%c0_308, %c9_309, %c0_310, %c0_311] : memref<3x10x8x128xf32, #tpu.memory_space<vmem>>, vector<3x1x8x128xf32>
    tpu.vector_store %arg13[%c0_308, %c9_309, %c0_310, %c0_311], %233 {strides = array<i32>} : memref<3x10x8x128xf32, #tpu.memory_space<vmem>>, vector<3x1x8x128xf32>,
    %cst_312 = arith.constant 0.000000e+00 : f32
    %236 = vector.broadcast %cst_312 : f32 to vector<8x1x128xf32>
    %237 = vector.extract_strided_slice %232 {offsets = [0, 0, 0], sizes = [8, 7, 128], strides = [1, 1, 1]} : vector<8x8x128xf32> to vector<8x7x128xf32>
    %238 = tpu.concatenate %236, %237 in 1 : vector<8x1x128xf32>, vector<8x7x128xf32> -> vector<8x8x128xf32>
    %c0_313 = arith.constant 0 : index
    %c1_314 = arith.constant 1 : index
    %c0_315 = arith.constant 0 : index
    %c0_316 = arith.constant 0 : index
    %239 = vector.load %arg13[%c0_313, %c1_314, %c0_315, %c0_316] : memref<3x10x8x128xf32, #tpu.memory_space<vmem>>, vector<1x8x8x128xf32>
    %240 = vector.shape_cast %239 : vector<1x8x8x128xf32> to vector<8x8x128xf32>
    %241 = vector.shape_cast %238 : vector<8x8x128xf32> to vector<1x8x8x128xf32>
    tpu.vector_store %arg13[%c0_313, %c1_314, %c0_315, %c0_316], %241 {strides = array<i32>} : memref<3x10x8x128xf32, #tpu.memory_space<vmem>>, vector<1x8x8x128xf32>,
    %c1_317 = arith.constant 1 : index
    %c1_318 = arith.constant 1 : index
    %c0_319 = arith.constant 0 : index
    %c0_320 = arith.constant 0 : index
    %242 = vector.load %arg13[%c1_317, %c1_318, %c0_319, %c0_320] : memref<3x10x8x128xf32, #tpu.memory_space<vmem>>, vector<1x8x8x128xf32>
    %243 = vector.shape_cast %242 : vector<1x8x8x128xf32> to vector<8x8x128xf32>
    %244 = vector.shape_cast %232 : vector<8x8x128xf32> to vector<1x8x8x128xf32>
    tpu.vector_store %arg13[%c1_317, %c1_318, %c0_319, %c0_320], %244 {strides = array<i32>} : memref<3x10x8x128xf32, #tpu.memory_space<vmem>>, vector<1x8x8x128xf32>,
    %245 = vector.extract_strided_slice %232 {offsets = [0, 1, 0], sizes = [8, 7, 128], strides = [1, 1, 1]} : vector<8x8x128xf32> to vector<8x7x128xf32>
    %246 = tpu.concatenate %245, %236 in 1 : vector<8x7x128xf32>, vector<8x1x128xf32> -> vector<8x8x128xf32>
    %c2_321 = arith.constant 2 : index
    %c1_322 = arith.constant 1 : index
    %c0_323 = arith.constant 0 : index
    %c0_324 = arith.constant 0 : index
    %247 = vector.load %arg13[%c2_321, %c1_322, %c0_323, %c0_324] : memref<3x10x8x128xf32, #tpu.memory_space<vmem>>, vector<1x8x8x128xf32>
    %248 = vector.shape_cast %247 : vector<1x8x8x128xf32> to vector<8x8x128xf32>
    %249 = vector.shape_cast %246 : vector<8x8x128xf32> to vector<1x8x8x128xf32>
    tpu.vector_store %arg13[%c2_321, %c1_322, %c0_323, %c0_324], %249 {strides = array<i32>} : memref<3x10x8x128xf32, #tpu.memory_space<vmem>>, vector<1x8x8x128xf32>,
    %cst_325 = arith.constant 0.000000e+00 : f32
    %250 = vector.broadcast %cst_325 : f32 to vector<64x128xf32>
    %c0_326 = arith.constant 0 : index
    %c0_327 = arith.constant 0 : index
    %251 = vector.load %arg15[%c0_326, %c0_327] : memref<64x128xf32, #tpu.memory_space<vmem>>, vector<64x128xf32>
    tpu.vector_store %arg15[%c0_326, %c0_327], %250 {strides = array<i32>} : memref<64x128xf32, #tpu.memory_space<vmem>>, vector<64x128xf32>,
    %c0_328 = arith.constant 0 : index
    %c0_329 = arith.constant 0 : index
    %c0_330 = arith.constant 0 : index
    %c0_331 = arith.constant 0 : index
    %252 = vector.load %arg13[%c0_328, %c0_329, %c0_330, %c0_331] : memref<3x10x8x128xf32, #tpu.memory_space<vmem>>, vector<1x8x8x128xf32>
    %253 = vector.shape_cast %252 : vector<1x8x8x128xf32> to vector<8x8x128xf32>
    %254 = vector.shape_cast %253 : vector<8x8x128xf32> to vector<64x128xf32>
    %c0_332 = arith.constant 0 : index
    %c0_333 = arith.constant 0 : index
    %255 = vector.load %arg15[%c0_332, %c0_333] : memref<64x128xf32, #tpu.memory_space<vmem>>, vector<64x128xf32>
    %c0_334 = arith.constant 0 : index
    %c0_335 = arith.constant 0 : index
    %c0_336 = arith.constant 0 : index
    %c0_337 = arith.constant 0 : index
    %256 = vector.load %arg8[%c0_334, %c0_335, %c0_336, %c0_337] : memref<3x3x128x128xf32, #tpu.memory_space<vmem>>, vector<1x1x128x128xf32>
    %257 = vector.shape_cast %256 : vector<1x1x128x128xf32> to vector<128x128xf32>
    %cst_338 = arith.constant dense<0.000000e+00> : vector<64x128xf32>
    %258 = tpu.matmul %254, %257, %cst_338 {dimension_numbers = #tpu.dot_dimension_numbers<[1], [0], [0], [1], [0, 0, 1, 1], [], []>} : vector<64x128xf32>, vector<128x128xf32>, vector<64x128xf32> -> vector<64x128xf32>
    %259 = arith.addf %255, %258 : vector<64x128xf32>
    %c0_339 = arith.constant 0 : index
    %c0_340 = arith.constant 0 : index
    %260 = vector.load %arg15[%c0_339, %c0_340] : memref<64x128xf32, #tpu.memory_space<vmem>>, vector<64x128xf32>
    tpu.vector_store %arg15[%c0_339, %c0_340], %259 {strides = array<i32>} : memref<64x128xf32, #tpu.memory_space<vmem>>, vector<64x128xf32>,
    %c1_341 = arith.constant 1 : index
    %c0_342 = arith.constant 0 : index
    %c0_343 = arith.constant 0 : index
    %c0_344 = arith.constant 0 : index
    %261 = vector.load %arg13[%c1_341, %c0_342, %c0_343, %c0_344] : memref<3x10x8x128xf32, #tpu.memory_space<vmem>>, vector<1x8x8x128xf32>
    %262 = vector.shape_cast %261 : vector<1x8x8x128xf32> to vector<8x8x128xf32>
    %263 = vector.shape_cast %262 : vector<8x8x128xf32> to vector<64x128xf32>
    %c0_345 = arith.constant 0 : index
    %c0_346 = arith.constant 0 : index
    %264 = vector.load %arg15[%c0_345, %c0_346] : memref<64x128xf32, #tpu.memory_space<vmem>>, vector<64x128xf32>
    %c0_347 = arith.constant 0 : index
    %c1_348 = arith.constant 1 : index
    %c0_349 = arith.constant 0 : index
    %c0_350 = arith.constant 0 : index
    %265 = vector.load %arg8[%c0_347, %c1_348, %c0_349, %c0_350] : memref<3x3x128x128xf32, #tpu.memory_space<vmem>>, vector<1x1x128x128xf32>
    %266 = vector.shape_cast %265 : vector<1x1x128x128xf32> to vector<128x128xf32>
    %cst_351 = arith.constant dense<0.000000e+00> : vector<64x128xf32>
    %267 = tpu.matmul %263, %266, %cst_351 {dimension_numbers = #tpu.dot_dimension_numbers<[1], [0], [0], [1], [0, 0, 1, 1], [], []>} : vector<64x128xf32>, vector<128x128xf32>, vector<64x128xf32> -> vector<64x128xf32>
    %268 = arith.addf %264, %267 : vector<64x128xf32>
    %c0_352 = arith.constant 0 : index
    %c0_353 = arith.constant 0 : index
    %269 = vector.load %arg15[%c0_352, %c0_353] : memref<64x128xf32, #tpu.memory_space<vmem>>, vector<64x128xf32>
    tpu.vector_store %arg15[%c0_352, %c0_353], %268 {strides = array<i32>} : memref<64x128xf32, #tpu.memory_space<vmem>>, vector<64x128xf32>,
    %c2_354 = arith.constant 2 : index
    %c0_355 = arith.constant 0 : index
    %c0_356 = arith.constant 0 : index
    %c0_357 = arith.constant 0 : index
    %270 = vector.load %arg13[%c2_354, %c0_355, %c0_356, %c0_357] : memref<3x10x8x128xf32, #tpu.memory_space<vmem>>, vector<1x8x8x128xf32>
    %271 = vector.shape_cast %270 : vector<1x8x8x128xf32> to vector<8x8x128xf32>
    %272 = vector.shape_cast %271 : vector<8x8x128xf32> to vector<64x128xf32>
    %c0_358 = arith.constant 0 : index
    %c0_359 = arith.constant 0 : index
    %273 = vector.load %arg15[%c0_358, %c0_359] : memref<64x128xf32, #tpu.memory_space<vmem>>, vector<64x128xf32>
    %c0_360 = arith.constant 0 : index
    %c2_361 = arith.constant 2 : index
    %c0_362 = arith.constant 0 : index
    %c0_363 = arith.constant 0 : index
    %274 = vector.load %arg8[%c0_360, %c2_361, %c0_362, %c0_363] : memref<3x3x128x128xf32, #tpu.memory_space<vmem>>, vector<1x1x128x128xf32>
    %275 = vector.shape_cast %274 : vector<1x1x128x128xf32> to vector<128x128xf32>
    %cst_364 = arith.constant dense<0.000000e+00> : vector<64x128xf32>
    %276 = tpu.matmul %272, %275, %cst_364 {dimension_numbers = #tpu.dot_dimension_numbers<[1], [0], [0], [1], [0, 0, 1, 1], [], []>} : vector<64x128xf32>, vector<128x128xf32>, vector<64x128xf32> -> vector<64x128xf32>
    %277 = arith.addf %273, %276 : vector<64x128xf32>
    %c0_365 = arith.constant 0 : index
    %c0_366 = arith.constant 0 : index
    %278 = vector.load %arg15[%c0_365, %c0_366] : memref<64x128xf32, #tpu.memory_space<vmem>>, vector<64x128xf32>
    tpu.vector_store %arg15[%c0_365, %c0_366], %277 {strides = array<i32>} : memref<64x128xf32, #tpu.memory_space<vmem>>, vector<64x128xf32>,
    %c0_367 = arith.constant 0 : index
    %c1_368 = arith.constant 1 : index
    %c0_369 = arith.constant 0 : index
    %c0_370 = arith.constant 0 : index
    %279 = vector.load %arg13[%c0_367, %c1_368, %c0_369, %c0_370] : memref<3x10x8x128xf32, #tpu.memory_space<vmem>>, vector<1x8x8x128xf32>
    %280 = vector.shape_cast %279 : vector<1x8x8x128xf32> to vector<8x8x128xf32>
    %281 = vector.shape_cast %280 : vector<8x8x128xf32> to vector<64x128xf32>
    %c0_371 = arith.constant 0 : index
    %c0_372 = arith.constant 0 : index
    %282 = vector.load %arg15[%c0_371, %c0_372] : memref<64x128xf32, #tpu.memory_space<vmem>>, vector<64x128xf32>
    %c1_373 = arith.constant 1 : index
    %c0_374 = arith.constant 0 : index
    %c0_375 = arith.constant 0 : index
    %c0_376 = arith.constant 0 : index
    %283 = vector.load %arg8[%c1_373, %c0_374, %c0_375, %c0_376] : memref<3x3x128x128xf32, #tpu.memory_space<vmem>>, vector<1x1x128x128xf32>
    %284 = vector.shape_cast %283 : vector<1x1x128x128xf32> to vector<128x128xf32>
    %cst_377 = arith.constant dense<0.000000e+00> : vector<64x128xf32>
    %285 = tpu.matmul %281, %284, %cst_377 {dimension_numbers = #tpu.dot_dimension_numbers<[1], [0], [0], [1], [0, 0, 1, 1], [], []>} : vector<64x128xf32>, vector<128x128xf32>, vector<64x128xf32> -> vector<64x128xf32>
    %286 = arith.addf %282, %285 : vector<64x128xf32>
    %c0_378 = arith.constant 0 : index
    %c0_379 = arith.constant 0 : index
    %287 = vector.load %arg15[%c0_378, %c0_379] : memref<64x128xf32, #tpu.memory_space<vmem>>, vector<64x128xf32>
    tpu.vector_store %arg15[%c0_378, %c0_379], %286 {strides = array<i32>} : memref<64x128xf32, #tpu.memory_space<vmem>>, vector<64x128xf32>,
    %c1_380 = arith.constant 1 : index
    %c1_381 = arith.constant 1 : index
    %c0_382 = arith.constant 0 : index
    %c0_383 = arith.constant 0 : index
    %288 = vector.load %arg13[%c1_380, %c1_381, %c0_382, %c0_383] : memref<3x10x8x128xf32, #tpu.memory_space<vmem>>, vector<1x8x8x128xf32>
    %289 = vector.shape_cast %288 : vector<1x8x8x128xf32> to vector<8x8x128xf32>
    %290 = vector.shape_cast %289 : vector<8x8x128xf32> to vector<64x128xf32>
    %c0_384 = arith.constant 0 : index
    %c0_385 = arith.constant 0 : index
    %291 = vector.load %arg15[%c0_384, %c0_385] : memref<64x128xf32, #tpu.memory_space<vmem>>, vector<64x128xf32>
    %c1_386 = arith.constant 1 : index
    %c1_387 = arith.constant 1 : index
    %c0_388 = arith.constant 0 : index
    %c0_389 = arith.constant 0 : index
    %292 = vector.load %arg8[%c1_386, %c1_387, %c0_388, %c0_389] : memref<3x3x128x128xf32, #tpu.memory_space<vmem>>, vector<1x1x128x128xf32>
    %293 = vector.shape_cast %292 : vector<1x1x128x128xf32> to vector<128x128xf32>
    %cst_390 = arith.constant dense<0.000000e+00> : vector<64x128xf32>
    %294 = tpu.matmul %290, %293, %cst_390 {dimension_numbers = #tpu.dot_dimension_numbers<[1], [0], [0], [1], [0, 0, 1, 1], [], []>} : vector<64x128xf32>, vector<128x128xf32>, vector<64x128xf32> -> vector<64x128xf32>
    %295 = arith.addf %291, %294 : vector<64x128xf32>
    %c0_391 = arith.constant 0 : index
    %c0_392 = arith.constant 0 : index
    %296 = vector.load %arg15[%c0_391, %c0_392] : memref<64x128xf32, #tpu.memory_space<vmem>>, vector<64x128xf32>
    tpu.vector_store %arg15[%c0_391, %c0_392], %295 {strides = array<i32>} : memref<64x128xf32, #tpu.memory_space<vmem>>, vector<64x128xf32>,
    %c2_393 = arith.constant 2 : index
    %c1_394 = arith.constant 1 : index
    %c0_395 = arith.constant 0 : index
    %c0_396 = arith.constant 0 : index
    %297 = vector.load %arg13[%c2_393, %c1_394, %c0_395, %c0_396] : memref<3x10x8x128xf32, #tpu.memory_space<vmem>>, vector<1x8x8x128xf32>
    %298 = vector.shape_cast %297 : vector<1x8x8x128xf32> to vector<8x8x128xf32>
    %299 = vector.shape_cast %298 : vector<8x8x128xf32> to vector<64x128xf32>
    %c0_397 = arith.constant 0 : index
    %c0_398 = arith.constant 0 : index
    %300 = vector.load %arg15[%c0_397, %c0_398] : memref<64x128xf32, #tpu.memory_space<vmem>>, vector<64x128xf32>
    %c1_399 = arith.constant 1 : index
    %c2_400 = arith.constant 2 : index
    %c0_401 = arith.constant 0 : index
    %c0_402 = arith.constant 0 : index
    %301 = vector.load %arg8[%c1_399, %c2_400, %c0_401, %c0_402] : memref<3x3x128x128xf32, #tpu.memory_space<vmem>>, vector<1x1x128x128xf32>
    %302 = vector.shape_cast %301 : vector<1x1x128x128xf32> to vector<128x128xf32>
    %cst_403 = arith.constant dense<0.000000e+00> : vector<64x128xf32>
    %303 = tpu.matmul %299, %302, %cst_403 {dimension_numbers = #tpu.dot_dimension_numbers<[1], [0], [0], [1], [0, 0, 1, 1], [], []>} : vector<64x128xf32>, vector<128x128xf32>, vector<64x128xf32> -> vector<64x128xf32>
    %304 = arith.addf %300, %303 : vector<64x128xf32>
    %c0_404 = arith.constant 0 : index
    %c0_405 = arith.constant 0 : index
    %305 = vector.load %arg15[%c0_404, %c0_405] : memref<64x128xf32, #tpu.memory_space<vmem>>, vector<64x128xf32>
    tpu.vector_store %arg15[%c0_404, %c0_405], %304 {strides = array<i32>} : memref<64x128xf32, #tpu.memory_space<vmem>>, vector<64x128xf32>,
    %c0_406 = arith.constant 0 : index
    %c2_407 = arith.constant 2 : index
    %c0_408 = arith.constant 0 : index
    %c0_409 = arith.constant 0 : index
    %306 = vector.load %arg13[%c0_406, %c2_407, %c0_408, %c0_409] : memref<3x10x8x128xf32, #tpu.memory_space<vmem>>, vector<1x8x8x128xf32>
    %307 = vector.shape_cast %306 : vector<1x8x8x128xf32> to vector<8x8x128xf32>
    %308 = vector.shape_cast %307 : vector<8x8x128xf32> to vector<64x128xf32>
    %c0_410 = arith.constant 0 : index
    %c0_411 = arith.constant 0 : index
    %309 = vector.load %arg15[%c0_410, %c0_411] : memref<64x128xf32, #tpu.memory_space<vmem>>, vector<64x128xf32>
    %c2_412 = arith.constant 2 : index
    %c0_413 = arith.constant 0 : index
    %c0_414 = arith.constant 0 : index
    %c0_415 = arith.constant 0 : index
    %310 = vector.load %arg8[%c2_412, %c0_413, %c0_414, %c0_415] : memref<3x3x128x128xf32, #tpu.memory_space<vmem>>, vector<1x1x128x128xf32>
    %311 = vector.shape_cast %310 : vector<1x1x128x128xf32> to vector<128x128xf32>
    %cst_416 = arith.constant dense<0.000000e+00> : vector<64x128xf32>
    %312 = tpu.matmul %308, %311, %cst_416 {dimension_numbers = #tpu.dot_dimension_numbers<[1], [0], [0], [1], [0, 0, 1, 1], [], []>} : vector<64x128xf32>, vector<128x128xf32>, vector<64x128xf32> -> vector<64x128xf32>
    %313 = arith.addf %309, %312 : vector<64x128xf32>
    %c0_417 = arith.constant 0 : index
    %c0_418 = arith.constant 0 : index
    %314 = vector.load %arg15[%c0_417, %c0_418] : memref<64x128xf32, #tpu.memory_space<vmem>>, vector<64x128xf32>
    tpu.vector_store %arg15[%c0_417, %c0_418], %313 {strides = array<i32>} : memref<64x128xf32, #tpu.memory_space<vmem>>, vector<64x128xf32>,
    %c1_419 = arith.constant 1 : index
    %c2_420 = arith.constant 2 : index
    %c0_421 = arith.constant 0 : index
    %c0_422 = arith.constant 0 : index
    %315 = vector.load %arg13[%c1_419, %c2_420, %c0_421, %c0_422] : memref<3x10x8x128xf32, #tpu.memory_space<vmem>>, vector<1x8x8x128xf32>
    %316 = vector.shape_cast %315 : vector<1x8x8x128xf32> to vector<8x8x128xf32>
    %317 = vector.shape_cast %316 : vector<8x8x128xf32> to vector<64x128xf32>
    %c0_423 = arith.constant 0 : index
    %c0_424 = arith.constant 0 : index
    %318 = vector.load %arg15[%c0_423, %c0_424] : memref<64x128xf32, #tpu.memory_space<vmem>>, vector<64x128xf32>
    %c2_425 = arith.constant 2 : index
    %c1_426 = arith.constant 1 : index
    %c0_427 = arith.constant 0 : index
    %c0_428 = arith.constant 0 : index
    %319 = vector.load %arg8[%c2_425, %c1_426, %c0_427, %c0_428] : memref<3x3x128x128xf32, #tpu.memory_space<vmem>>, vector<1x1x128x128xf32>
    %320 = vector.shape_cast %319 : vector<1x1x128x128xf32> to vector<128x128xf32>
    %cst_429 = arith.constant dense<0.000000e+00> : vector<64x128xf32>
    %321 = tpu.matmul %317, %320, %cst_429 {dimension_numbers = #tpu.dot_dimension_numbers<[1], [0], [0], [1], [0, 0, 1, 1], [], []>} : vector<64x128xf32>, vector<128x128xf32>, vector<64x128xf32> -> vector<64x128xf32>
    %322 = arith.addf %318, %321 : vector<64x128xf32>
    %c0_430 = arith.constant 0 : index
    %c0_431 = arith.constant 0 : index
    %323 = vector.load %arg15[%c0_430, %c0_431] : memref<64x128xf32, #tpu.memory_space<vmem>>, vector<64x128xf32>
    tpu.vector_store %arg15[%c0_430, %c0_431], %322 {strides = array<i32>} : memref<64x128xf32, #tpu.memory_space<vmem>>, vector<64x128xf32>,
    %c2_432 = arith.constant 2 : index
    %c2_433 = arith.constant 2 : index
    %c0_434 = arith.constant 0 : index
    %c0_435 = arith.constant 0 : index
    %324 = vector.load %arg13[%c2_432, %c2_433, %c0_434, %c0_435] : memref<3x10x8x128xf32, #tpu.memory_space<vmem>>, vector<1x8x8x128xf32>
    %325 = vector.shape_cast %324 : vector<1x8x8x128xf32> to vector<8x8x128xf32>
    %326 = vector.shape_cast %325 : vector<8x8x128xf32> to vector<64x128xf32>
    %c0_436 = arith.constant 0 : index
    %c0_437 = arith.constant 0 : index
    %327 = vector.load %arg15[%c0_436, %c0_437] : memref<64x128xf32, #tpu.memory_space<vmem>>, vector<64x128xf32>
    %c2_438 = arith.constant 2 : index
    %c2_439 = arith.constant 2 : index
    %c0_440 = arith.constant 0 : index
    %c0_441 = arith.constant 0 : index
    %328 = vector.load %arg8[%c2_438, %c2_439, %c0_440, %c0_441] : memref<3x3x128x128xf32, #tpu.memory_space<vmem>>, vector<1x1x128x128xf32>
    %329 = vector.shape_cast %328 : vector<1x1x128x128xf32> to vector<128x128xf32>
    %cst_442 = arith.constant dense<0.000000e+00> : vector<64x128xf32>
    %330 = tpu.matmul %326, %329, %cst_442 {dimension_numbers = #tpu.dot_dimension_numbers<[1], [0], [0], [1], [0, 0, 1, 1], [], []>} : vector<64x128xf32>, vector<128x128xf32>, vector<64x128xf32> -> vector<64x128xf32>
    %331 = arith.addf %327, %330 : vector<64x128xf32>
    %c0_443 = arith.constant 0 : index
    %c0_444 = arith.constant 0 : index
    %332 = vector.load %arg15[%c0_443, %c0_444] : memref<64x128xf32, #tpu.memory_space<vmem>>, vector<64x128xf32>
    tpu.vector_store %arg15[%c0_443, %c0_444], %331 {strides = array<i32>} : memref<64x128xf32, #tpu.memory_space<vmem>>, vector<64x128xf32>,
    %c0_445 = arith.constant 0 : index
    %c0_446 = arith.constant 0 : index
    %333 = vector.load %arg15[%c0_445, %c0_446] : memref<64x128xf32, #tpu.memory_space<vmem>>, vector<64x128xf32>
    %c0_447 = arith.constant 0 : index
    %c0_448 = arith.constant 0 : index
    %334 = vector.load %arg9[%c0_447, %c0_448] : memref<1x128xf32, #tpu.memory_space<vmem>>, vector<1x128xf32>
    %335 = vector.broadcast %334 : vector<1x128xf32> to vector<64x128xf32>
    %336 = arith.addf %333, %335 : vector<64x128xf32>
    %c0_449 = arith.constant 0 : index
    %c0_450 = arith.constant 0 : index
    %c0_451 = arith.constant 0 : index
    %337 = vector.load %arg10[%c0_449, %c0_450, %c0_451] : memref<1x64x128xf32, #tpu.memory_space<vmem>>, vector<1x64x128xf32>
    %338 = vector.shape_cast %337 : vector<1x64x128xf32> to vector<64x128xf32>
    %339 = vector.shape_cast %336 : vector<64x128xf32> to vector<1x64x128xf32>
    tpu.vector_store %arg10[%c0_449, %c0_450, %c0_451], %339 {strides = array<i32>} : memref<1x64x128xf32, #tpu.memory_space<vmem>>, vector<1x64x128xf32>,
    return
  }
  func.func @transform_0(%arg0: i32) -> (i32, i32, i32) {
    %c0_i32 = arith.constant 0 : i32
    %c0_i32_0 = arith.constant 0 : i32
    %c0_i32_1 = arith.constant 0 : i32
    return %arg0, %c0_i32, %c0_i32_0 : i32, i32, i32
  }
  func.func @transform_1(%arg0: i32) -> (i32, i32) {
    %c0_i32 = arith.constant 0 : i32
    %c0_i32_0 = arith.constant 0 : i32
    %c0_i32_1 = arith.constant 0 : i32
    return %c0_i32, %c0_i32_0 : i32, i32
  }
  func.func @transform_2(%arg0: i32) -> (i32, i32) {
    %c0_i32 = arith.constant 0 : i32
    %c0_i32_0 = arith.constant 0 : i32
    %c0_i32_1 = arith.constant 0 : i32
    return %c0_i32, %c0_i32_0 : i32, i32
  }
  func.func @transform_3(%arg0: i32) -> (i32, i32, i32, i32) {
    %c0_i32 = arith.constant 0 : i32
    %c0_i32_0 = arith.constant 0 : i32
    %c0_i32_1 = arith.constant 0 : i32
    %c0_i32_2 = arith.constant 0 : i32
    %c0_i32_3 = arith.constant 0 : i32
    return %c0_i32, %c0_i32_0, %c0_i32_1, %c0_i32_2 : i32, i32, i32, i32
  }
  func.func @transform_4(%arg0: i32) -> (i32, i32) {
    %c0_i32 = arith.constant 0 : i32
    %c0_i32_0 = arith.constant 0 : i32
    %c0_i32_1 = arith.constant 0 : i32
    return %c0_i32, %c0_i32_0 : i32, i32
  }
  func.func @transform_5(%arg0: i32) -> (i32, i32, i32, i32) {
    %c0_i32 = arith.constant 0 : i32
    %c0_i32_0 = arith.constant 0 : i32
    %c0_i32_1 = arith.constant 0 : i32
    %c0_i32_2 = arith.constant 0 : i32
    %c0_i32_3 = arith.constant 0 : i32
    return %c0_i32, %c0_i32_0, %c0_i32_1, %c0_i32_2 : i32, i32, i32, i32
  }
  func.func @transform_6(%arg0: i32) -> (i32, i32) {
    %c0_i32 = arith.constant 0 : i32
    %c0_i32_0 = arith.constant 0 : i32
    %c0_i32_1 = arith.constant 0 : i32
    return %c0_i32, %c0_i32_0 : i32, i32
  }
  func.func @transform_7(%arg0: i32) -> (i32, i32, i32, i32) {
    %c0_i32 = arith.constant 0 : i32
    %c0_i32_0 = arith.constant 0 : i32
    %c0_i32_1 = arith.constant 0 : i32
    %c0_i32_2 = arith.constant 0 : i32
    %c0_i32_3 = arith.constant 0 : i32
    return %c0_i32, %c0_i32_0, %c0_i32_1, %c0_i32_2 : i32, i32, i32, i32
  }
  func.func @transform_8(%arg0: i32) -> (i32, i32) {
    %c0_i32 = arith.constant 0 : i32
    %c0_i32_0 = arith.constant 0 : i32
    %c0_i32_1 = arith.constant 0 : i32
    return %c0_i32, %c0_i32_0 : i32, i32
  }
  func.func @transform_9(%arg0: i32) -> (i32, i32, i32) {
    %c0_i32 = arith.constant 0 : i32
    %c0_i32_0 = arith.constant 0 : i32
    %c0_i32_1 = arith.constant 0 : i32
    return %arg0, %c0_i32, %c0_i32_0 : i32, i32, i32
  }
}

</mosaic_0001>

<llo_original>
// kernel: feature_extractor_forward.1
$region0: #{feature_extractor_forward.1}
  #allocation0 [shape = 'u32[]', space=smem, size = 0x4, offset = 0x4, fixed_abs, tag = 'smem constant byte address 0x4 - core index']
  #allocation1 [shape = 'u32[144,128]{1,0:T(1,128)}', space=vmem, size = 0x12000, scoped, tag = 'internal scratch']
  #allocation2 [shape = 'f32[3,18,16,64]{3,2,1,0:T(8,128)}', space=vmem, size = 0x6c000, scoped, tag = 'scratch operand']
  #allocation3 [shape = 'f32[3,10,8,64]{3,2,1,0:T(8,128)}', space=vmem, size = 0x1e000, scoped, tag = 'scratch operand']
  #allocation4 [shape = 'f32[3,10,8,128]{3,2,1,0:T(8,128)}', space=vmem, size = 0x1e000, scoped, tag = 'scratch operand']
  #allocation5 [shape = 'f32[256,64]{1,0:T(8,128)}', space=vmem, size = 0x20000, scoped, tag = 'scratch operand']
  #allocation6 [shape = 'f32[64,128]{1,0:T(8,128)}', space=vmem, size = 0x8000, scoped, tag = 'scratch operand']
  %s0 = inlined_call_operand.vmem [shape: f32[2,256,32], index: 0, kind: input, shape index: {}]
  %s1 = inlined_call_operand.vmem [shape: f32[32,64], index: 1, kind: input, shape index: {}]
  %s2 = inlined_call_operand.vmem [shape: f32[1,64], index: 2, kind: input, shape index: {}]
  %s3 = inlined_call_operand.vmem [shape: f32[3,3,64,64], index: 3, kind: input, shape index: {}]
  %s4 = inlined_call_operand.vmem [shape: f32[1,64], index: 4, kind: input, shape index: {}]
  %s5 = inlined_call_operand.vmem [shape: f32[3,3,64,128], index: 5, kind: input, shape index: {}]
  %s6 = inlined_call_operand.vmem [shape: f32[1,128], index: 6, kind: input, shape index: {}]
  %s7 = inlined_call_operand.vmem [shape: f32[3,3,128,128], index: 7, kind: input, shape index: {}]
  %s8 = inlined_call_operand.vmem [shape: f32[1,128], index: 8, kind: input, shape index: {}]
  %s9 = inlined_call_operand.hbm [shape: f32[2,64,128], index: 9, kind: output, shape index: {}]
  %s10 = sld [smem:[#allocation0]]
  $region69: #{feature_extractor_forward.1} parent=0
    _
  %s12 = ssub.s32 1, %s10
  %s13 = scalar_select 0, %s12, %s10
  $region1: #{feature_extractor_forward.1} parent=0
    #allocation7 [shape = 'u8[65536]{0}', space=vmem, size = 0x10000, scoped, tag = 'output window, operand 0']
    #allocation8 [shape = 's32[2]{0}', space=sflag, size = 0x8, scoped, tag = 'scoped memory for feature_extractor_forward.1']
    %14 = vsyncpa [#allocation8], 0
    %s15 = scalar_lea.sflag [#allocation8], 1
    %16 = vsyncpa %s15, 0
    loop: start=0, step=1, limit=4
    $region2: #{feature_extractor_forward.1} parent=1 // loop_pre_header
      _
    $region3: #{feature_extractor_forward.1} parent=1 // loop_header
      %s18 = sphi 0, %s22
      %p19 = scmp.ge.s32.totalorder %s18, 4
      %s28 = sphi 0, %s30
      %s31 = sphi 0, %s28
      %s32 = sphi 0, %s31
      %s48 = sphi 0, %s32
      %s52 = sphi 0, %s52
      %s54 = sphi 0, %s52
      %s55 = sphi 0, %s54
      %s69 = sphi 0, %s55
      %s73 = sphi 0, %s73
      %s75 = sphi 0, %s73
      %s76 = sphi 0, %s75
      %s90 = sphi 0, %s76
      %s94 = sphi 0, %s94
      %s96 = sphi 0, %s94
      %s97 = sphi 0, %s96
      %s111 = sphi 0, %s97
      %s115 = sphi 0, %s115
      %s117 = sphi 0, %s115
      %s118 = sphi 0, %s117
      %s132 = sphi 0, %s118
      %s136 = sphi 0, %s136
      %s138 = sphi 0, %s136
      %s139 = sphi 0, %s138
      %s153 = sphi 0, %s139
      %s157 = sphi 0, %s157
      %s159 = sphi 0, %s157
      %s160 = sphi 0, %s159
      %s174 = sphi 0, %s160
      %s178 = sphi 0, %s178
      %s180 = sphi 0, %s178
      %s181 = sphi 0, %s180
      %s195 = sphi 0, %s181
      %s199 = sphi 0, %s199
      %s201 = sphi 0, %s199
      %s202 = sphi 0, %s201
      %s216 = sphi 0, %s202
      %s222 = sphi 0, %s224
      %s225 = sphi 0, %s222
      %s226 = sphi 0, %s225
      %s242 = sphi 0, %s226
    $region4: #{feature_extractor_forward.1} parent=1 // loop_header_branch
      %21 = sbr.rel (%p19) target = $region8
    $region5: #{feature_extractor_forward.1} parent=1 // loop_body
      %s23 = ssub.s32 %s18, 1
      %s24 = ssub.s32 %s18, 2
      %s25 = sadd.s32 %s18, 1
      %s26 = ssub.s32 %s18, %s25
      %p27 = scmp.eq.s32.totalorder %s26, 0
      %s29 = sadd.s32 %s28, 1
      %s30 = scalar_select %p27, %s28, %s29
      %p33 = pneg %p27
      %p34 = scmp.eq.s32.totalorder %s18, 1
      %p35 = por %p33, %p34
      %p36 = scmp.ne.s32.totalorder %s28, %s31
      %p37 = scmp.eq.s32.totalorder %s18, 0
      %p38 = por %p36, %p37
      %p39 = scmp.ne.s32.totalorder %s28, %s31
      %p40 = scmp.eq.s32.totalorder %s23, 1
      %p41 = por %p39, %p40
      %p42 = scmp.ne.s32.totalorder %s31, %s32
      %p43 = scmp.eq.s32.totalorder %s23, 0
      %p44 = por %p42, %p43
      %p45 = scmp.ne.s32.totalorder %s31, %s32
      %p46 = scmp.eq.s32.totalorder %s24, 1
      %p47 = por %p45, %p46
      %p49 = scmp.ne.s32.totalorder %s32, %s48
      %p50 = scmp.eq.s32.totalorder %s24, 0
      %p51 = por %p49, %p50
      %s53 = sadd.s32 %s52, 1
      %p56 = scmp.eq.s32.totalorder %s18, 1
      %p57 = scmp.ne.s32.totalorder %s52, %s54
      %p58 = scmp.eq.s32.totalorder %s18, 0
      %p59 = por %p57, %p58
      %p60 = scmp.ne.s32.totalorder %s52, %s54
      %p61 = scmp.eq.s32.totalorder %s23, 1
      %p62 = por %p60, %p61
      %p63 = scmp.ne.s32.totalorder %s54, %s55
      %p64 = scmp.eq.s32.totalorder %s23, 0
      %p65 = por %p63, %p64
      %p66 = scmp.ne.s32.totalorder %s54, %s55
      %p67 = scmp.eq.s32.totalorder %s24, 1
      %p68 = por %p66, %p67
      %p70 = scmp.ne.s32.totalorder %s55, %s69
      %p71 = scmp.eq.s32.totalorder %s24, 0
      %p72 = por %p70, %p71
      %s74 = sadd.s32 %s73, 1
      %p77 = scmp.eq.s32.totalorder %s18, 1
      %p78 = scmp.ne.s32.totalorder %s73, %s75
      %p79 = scmp.eq.s32.totalorder %s18, 0
      %p80 = por %p78, %p79
      %p81 = scmp.ne.s32.totalorder %s73, %s75
      %p82 = scmp.eq.s32.totalorder %s23, 1
      %p83 = por %p81, %p82
      %p84 = scmp.ne.s32.totalorder %s75, %s76
      %p85 = scmp.eq.s32.totalorder %s23, 0
      %p86 = por %p84, %p85
      %p87 = scmp.ne.s32.totalorder %s75, %s76
      %p88 = scmp.eq.s32.totalorder %s24, 1
      %p89 = por %p87, %p88
      %p91 = scmp.ne.s32.totalorder %s76, %s90
      %p92 = scmp.eq.s32.totalorder %s24, 0
      %p93 = por %p91, %p92
      %s95 = sadd.s32 %s94, 1
      %p98 = scmp.eq.s32.totalorder %s18, 1
      %p99 = scmp.ne.s32.totalorder %s94, %s96
      %p100 = scmp.eq.s32.totalorder %s18, 0
      %p101 = por %p99, %p100
      %p102 = scmp.ne.s32.totalorder %s94, %s96
      %p103 = scmp.eq.s32.totalorder %s23, 1
      %p104 = por %p102, %p103
      %p105 = scmp.ne.s32.totalorder %s96, %s97
      %p106 = scmp.eq.s32.totalorder %s23, 0
      %p107 = por %p105, %p106
      %p108 = scmp.ne.s32.totalorder %s96, %s97
      %p109 = scmp.eq.s32.totalorder %s24, 1
      %p110 = por %p108, %p109
      %p112 = scmp.ne.s32.totalorder %s97, %s111
      %p113 = scmp.eq.s32.totalorder %s24, 0
      %p114 = por %p112, %p113
      %s116 = sadd.s32 %s115, 1
      %p119 = scmp.eq.s32.totalorder %s18, 1
      %p120 = scmp.ne.s32.totalorder %s115, %s117
      %p121 = scmp.eq.s32.totalorder %s18, 0
      %p122 = por %p120, %p121
      %p123 = scmp.ne.s32.totalorder %s115, %s117
      %p124 = scmp.eq.s32.totalorder %s23, 1
      %p125 = por %p123, %p124
      %p126 = scmp.ne.s32.totalorder %s117, %s118
      %p127 = scmp.eq.s32.totalorder %s23, 0
      %p128 = por %p126, %p127
      %p129 = scmp.ne.s32.totalorder %s117, %s118
      %p130 = scmp.eq.s32.totalorder %s24, 1
      %p131 = por %p129, %p130
      %p133 = scmp.ne.s32.totalorder %s118, %s132
      %p134 = scmp.eq.s32.totalorder %s24, 0
      %p135 = por %p133, %p134
      %s137 = sadd.s32 %s136, 1
      %p140 = scmp.eq.s32.totalorder %s18, 1
      %p141 = scmp.ne.s32.totalorder %s136, %s138
      %p142 = scmp.eq.s32.totalorder %s18, 0
      %p143 = por %p141, %p142
      %p144 = scmp.ne.s32.totalorder %s136, %s138
      %p145 = scmp.eq.s32.totalorder %s23, 1
      %p146 = por %p144, %p145
      %p147 = scmp.ne.s32.totalorder %s138, %s139
      %p148 = scmp.eq.s32.totalorder %s23, 0
      %p149 = por %p147, %p148
      %p150 = scmp.ne.s32.totalorder %s138, %s139
      %p151 = scmp.eq.s32.totalorder %s24, 1
      %p152 = por %p150, %p151
      %p154 = scmp.ne.s32.totalorder %s139, %s153
      %p155 = scmp.eq.s32.totalorder %s24, 0
      %p156 = por %p154, %p155
      %s158 = sadd.s32 %s157, 1
      %p161 = scmp.eq.s32.totalorder %s18, 1
      %p162 = scmp.ne.s32.totalorder %s157, %s159
      %p163 = scmp.eq.s32.totalorder %s18, 0
      %p164 = por %p162, %p163
      %p165 = scmp.ne.s32.totalorder %s157, %s159
      %p166 = scmp.eq.s32.totalorder %s23, 1
      %p167 = por %p165, %p166
      %p168 = scmp.ne.s32.totalorder %s159, %s160
      %p169 = scmp.eq.s32.totalorder %s23, 0
      %p170 = por %p168, %p169
      %p171 = scmp.ne.s32.totalorder %s159, %s160
      %p172 = scmp.eq.s32.totalorder %s24, 1
      %p173 = por %p171, %p172
      %p175 = scmp.ne.s32.totalorder %s160, %s174
      %p176 = scmp.eq.s32.totalorder %s24, 0
      %p177 = por %p175, %p176
      %s179 = sadd.s32 %s178, 1
      %p182 = scmp.eq.s32.totalorder %s18, 1
      %p183 = scmp.ne.s32.totalorder %s178, %s180
      %p184 = scmp.eq.s32.totalorder %s18, 0
      %p185 = por %p183, %p184
      %p186 = scmp.ne.s32.totalorder %s178, %s180
      %p187 = scmp.eq.s32.totalorder %s23, 1
      %p188 = por %p186, %p187
      %p189 = scmp.ne.s32.totalorder %s180, %s181
      %p190 = scmp.eq.s32.totalorder %s23, 0
      %p191 = por %p189, %p190
      %p192 = scmp.ne.s32.totalorder %s180, %s181
      %p193 = scmp.eq.s32.totalorder %s24, 1
      %p194 = por %p192, %p193
      %p196 = scmp.ne.s32.totalorder %s181, %s195
      %p197 = scmp.eq.s32.totalorder %s24, 0
      %p198 = por %p196, %p197
      %s200 = sadd.s32 %s199, 1
      %p203 = scmp.eq.s32.totalorder %s18, 1
      %p204 = scmp.ne.s32.totalorder %s199, %s201
      %p205 = scmp.eq.s32.totalorder %s18, 0
      %p206 = por %p204, %p205
      %p207 = scmp.ne.s32.totalorder %s199, %s201
      %p208 = scmp.eq.s32.totalorder %s23, 1
      %p209 = por %p207, %p208
      %p210 = scmp.ne.s32.totalorder %s201, %s202
      %p211 = scmp.eq.s32.totalorder %s23, 0
      %p212 = por %p210, %p211
      %p213 = scmp.ne.s32.totalorder %s201, %s202
      %p214 = scmp.eq.s32.totalorder %s24, 1
      %p215 = por %p213, %p214
      %p217 = scmp.ne.s32.totalorder %s202, %s216
      %p218 = scmp.eq.s32.totalorder %s24, 0
      %p219 = por %p217, %p218
      %s220 = ssub.s32 %s18, %s25
      %p221 = scmp.eq.s32.totalorder %s220, 0
      %s223 = sadd.s32 %s222, 1
      %s224 = scalar_select %p221, %s222, %s223
      %p227 = pneg %p221
      %p228 = scmp.eq.s32.totalorder %s18, 1
      %p229 = por %p227, %p228
      %p230 = scmp.ne.s32.totalorder %s222, %s225
      %p231 = scmp.eq.s32.totalorder %s18, 0
      %p232 = por %p230, %p231
      %p233 = scmp.ne.s32.totalorder %s222, %s225
      %p234 = scmp.eq.s32.totalorder %s23, 1
      %p235 = por %p233, %p234
      %p236 = scmp.ne.s32.totalorder %s225, %s226
      %p237 = scmp.eq.s32.totalorder %s23, 0
      %p238 = por %p236, %p237
      %p239 = scmp.ne.s32.totalorder %s225, %s226
      %p240 = scmp.eq.s32.totalorder %s24, 1
      %p241 = por %p239, %p240
      %p243 = scmp.ne.s32.totalorder %s226, %s242
      %p244 = scmp.eq.s32.totalorder %s24, 0
      %p245 = por %p243, %p244
      %p246 = scmp.le.s32.totalorder 1, %s18
      %p247 = scmp.lt.s32.totalorder %s18, 3
      %p248 = pnand %p246, %p247
      %p249 = pneg %p248
      // Predicated region
      $region9: #{feature_extractor_forward.1} parent=5 // pred_check
        _
      $region10: #{feature_extractor_forward.1} parent=5 // pred_check_branch
        %251 = sbr.rel (%p248) target = $region12
      $region11: #{feature_extractor_forward.1} parent=5 // pred_region
        %s252 = ssub.s32 %s18, 1
        // Predicated region
        $region13: #{feature_extractor_forward.1} parent=11 // pred_check
          %p253 = pneg %p65
        $region14: #{feature_extractor_forward.1} parent=11 // pred_check_branch
          %255 = sbr.rel (%p253) target = $region16
        $region15: #{feature_extractor_forward.1} parent=11 // pred_region
          _
        $region16: #{feature_extractor_forward.1} parent=11 // pred_fallthru
          _
        // Predicated region
        $region17: #{feature_extractor_forward.1} parent=11 // pred_check
          %p256 = pneg %p86
        $region18: #{feature_extractor_forward.1} parent=11 // pred_check_branch
          %258 = sbr.rel (%p256) target = $region20
        $region19: #{feature_extractor_forward.1} parent=11 // pred_region
          _
        $region20: #{feature_extractor_forward.1} parent=11 // pred_fallthru
          _
        // Predicated region
        $region21: #{feature_extractor_forward.1} parent=11 // pred_check
          %p259 = pneg %p107
        $region22: #{feature_extractor_forward.1} parent=11 // pred_check_branch
          %261 = sbr.rel (%p259) target = $region24
        $region23: #{feature_extractor_forward.1} parent=11 // pred_region
          _
        $region24: #{feature_extractor_forward.1} parent=11 // pred_fallthru
          _
        // Predicated region
        $region25: #{feature_extractor_forward.1} parent=11 // pred_check
          %p262 = pneg %p128
        $region26: #{feature_extractor_forward.1} parent=11 // pred_check_branch
          %264 = sbr.rel (%p262) target = $region28
        $region27: #{feature_extractor_forward.1} parent=11 // pred_region
          _
        $region28: #{feature_extractor_forward.1} parent=11 // pred_fallthru
          _
        // Predicated region
        $region29: #{feature_extractor_forward.1} parent=11 // pred_check
          %p265 = pneg %p149
        $region30: #{feature_extractor_forward.1} parent=11 // pred_check_branch
          %267 = sbr.rel (%p265) target = $region32
        $region31: #{feature_extractor_forward.1} parent=11 // pred_region
          _
        $region32: #{feature_extractor_forward.1} parent=11 // pred_fallthru
          _
        // Predicated region
        $region33: #{feature_extractor_forward.1} parent=11 // pred_check
          %p268 = pneg %p170
        $region34: #{feature_extractor_forward.1} parent=11 // pred_check_branch
          %270 = sbr.rel (%p268) target = $region36
        $region35: #{feature_extractor_forward.1} parent=11 // pred_region
          _
        $region36: #{feature_extractor_forward.1} parent=11 // pred_fallthru
          _
        // Predicated region
        $region37: #{feature_extractor_forward.1} parent=11 // pred_check
          %p271 = pneg %p191
        $region38: #{feature_extractor_forward.1} parent=11 // pred_check_branch
          %273 = sbr.rel (%p271) target = $region40
        $region39: #{feature_extractor_forward.1} parent=11 // pred_region
          _
        $region40: #{feature_extractor_forward.1} parent=11 // pred_fallthru
          _
        // Predicated region
        $region41: #{feature_extractor_forward.1} parent=11 // pred_check
          %p274 = pneg %p212
        $region42: #{feature_extractor_forward.1} parent=11 // pred_check_branch
          %276 = sbr.rel (%p274) target = $region44
        $region43: #{feature_extractor_forward.1} parent=11 // pred_region
          _
        $region44: #{feature_extractor_forward.1} parent=11 // pred_fallthru
          _
      $region12: #{feature_extractor_forward.1} parent=5 // pred_fallthru
        _
      %p277 = scmp.lt.s32.totalorder %s18, 2
      // Predicated region
      $region45: #{feature_extractor_forward.1} parent=5 // pred_check
        %p278 = pneg %p277
      $region46: #{feature_extractor_forward.1} parent=5 // pred_check_branch
        %280 = sbr.rel (%p278) target = $region48
      $region47: #{feature_extractor_forward.1} parent=5 // pred_region
        // Predicated region
        $region49: #{feature_extractor_forward.1} parent=47 // pred_check
          %p281 = pneg %p38
        $region50: #{feature_extractor_forward.1} parent=47 // pred_check_branch
          %283 = sbr.rel (%p281) target = $region52
        $region51: #{feature_extractor_forward.1} parent=47 // pred_region
          %p284 = scmp.lt.s32.totalorder %s18, 1
          %s285 = scalar_select %p284, %s18, 1
          %s286 = smul.addr %s285, 32
          %s287 = smul.addr %s286, 8
          %s288 = scalar_lea.vmem %s0, %s287
        $region52: #{feature_extractor_forward.1} parent=47 // pred_fallthru
          _
      $region48: #{feature_extractor_forward.1} parent=5 // pred_fallthru
        _
      %p289 = scmp.le.s32.totalorder 1, %s18
      %p290 = scmp.lt.s32.totalorder %s18, 3
      %p291 = pnand %p289, %p290
      %p292 = pneg %p291
      // Predicated region
      $region53: #{feature_extractor_forward.1} parent=5 // pred_check
        _
      $region54: #{feature_extractor_forward.1} parent=5 // pred_check_branch
        %294 = sbr.rel (%p291) target = $region56
      $region55: #{feature_extractor_forward.1} parent=5 // pred_region
        %s295 = ssub.s32 %s18, 1
        %p296 = scmp.lt.s32.totalorder %s23, 1
        %s297 = scalar_select %p296, %s23, 1
        %s298 = smul.addr %s297, 32
        %s299 = smul.addr %s298, 8
        %s300 = scalar_lea.vmem %s0, %s299
        %p301 = pneg %p44
        %p302 = pneg %p41
        %p303 = pneg %p65
        %p304 = pneg %p62
        %p305 = pneg %p86
        %p306 = pneg %p83
        %p307 = pneg %p107
        %p308 = pneg %p104
        %p309 = pneg %p128
        %p310 = pneg %p125
        %p311 = pneg %p149
        %p312 = pneg %p146
        %p313 = pneg %p170
        %p314 = pneg %p167
        %p315 = pneg %p191
        %p316 = pneg %p188
        %p317 = pneg %p212
        %p318 = pneg %p209
        %p319 = pneg %p238
        %p320 = pneg %p235
        %s321 = sand.u32 %s225, 1
        %s322 = scalar_lea.sflag [#allocation8], %s321
        %s323 = sand.u32 %s225, 1
        %s324 = smul.addr %s323, 64
        %s325 = scalar_lea.vmem [#allocation7], %s324
        %p326 = scmp.lt.s32.totalorder %s23, 1
        %s327 = scalar_select %p326, %s23, 1
        %s328 = smul.addr %s327, 32
        %s329 = smul.addr %s328, 8
        %s330 = scalar_lea.vmem %s0, %s329
        %v331 = vld [vmem:[%s330] sm:$0xff]
        %v332 = vld [vmem:[%s330 + $0x8] sm:$0xff]
        %v333 = vld [vmem:[%s330 + $0x10] sm:$0xff]
        %v334 = vld [vmem:[%s330 + $0x18] sm:$0xff]
        %v335 = vld [vmem:[%s330 + $0x20] sm:$0xff]
        %v336 = vld [vmem:[%s330 + $0x28] sm:$0xff]
        %v337 = vld [vmem:[%s330 + $0x30] sm:$0xff]
        %v338 = vld [vmem:[%s330 + $0x38] sm:$0xff]
        %v339 = vld [vmem:[%s330 + $0x40] sm:$0xff]
        %v340 = vld [vmem:[%s330 + $0x48] sm:$0xff]
        %v341 = vld [vmem:[%s330 + $0x50] sm:$0xff]
        %v342 = vld [vmem:[%s330 + $0x58] sm:$0xff]
        %v343 = vld [vmem:[%s330 + $0x60] sm:$0xff]
        %v344 = vld [vmem:[%s330 + $0x68] sm:$0xff]
        %v345 = vld [vmem:[%s330 + $0x70] sm:$0xff]
        %v346 = vld [vmem:[%s330 + $0x78] sm:$0xff]
        %v347 = vld [vmem:[%s330 + $0x80] sm:$0xff]
        %v348 = vld [vmem:[%s330 + $0x88] sm:$0xff]
        %v349 = vld [vmem:[%s330 + $0x90] sm:$0xff]
        %v350 = vld [vmem:[%s330 + $0x98] sm:$0xff]
        %v351 = vld [vmem:[%s330 + $0xa0] sm:$0xff]
        %v352 = vld [vmem:[%s330 + $0xa8] sm:$0xff]
        %v353 = vld [vmem:[%s330 + $0xb0] sm:$0xff]
        %v354 = vld [vmem:[%s330 + $0xb8] sm:$0xff]
        %v355 = vld [vmem:[%s330 + $0xc0] sm:$0xff]
        %v356 = vld [vmem:[%s330 + $0xc8] sm:$0xff]
        %v357 = vld [vmem:[%s330 + $0xd0] sm:$0xff]
        %v358 = vld [vmem:[%s330 + $0xd8] sm:$0xff]
        %v359 = vld [vmem:[%s330 + $0xe0] sm:$0xff]
        %v360 = vld [vmem:[%s330 + $0xe8] sm:$0xff]
        %v361 = vld [vmem:[%s330 + $0xf0] sm:$0xff]
        %v362 = vld [vmem:[%s330 + $0xf8] sm:$0xff]
        %v363 = vld [vmem:[%s1] sm:$0xff]
        %v364 = vld [vmem:[%s1 + $0x8] sm:$0xff]
        %v365 = vld [vmem:[%s1 + $0x10] sm:$0xff]
        %v366 = vld [vmem:[%s1 + $0x18] sm:$0xff]
        %v367 = vld [vmem:[%s2] sm:$0x1]
        %v369 = vlaneseq
        %v370 = vshrl.u32 %v369, 7
        %v371 = vsub.s32 0, %v370
        %v372 = vrot.slane %v367, %v371
        %vm374 = vcmask 261120
        %v376 = vsel %vm374, %v331, 0
        %v379 = vsel %vm374, %v332, 0
        %v382 = vsel %vm374, %v333, 0
        %v385 = vsel %vm374, %v334, 0
        %v388 = vsel %vm374, %v335, 0
        %v391 = vsel %vm374, %v336, 0
        %v394 = vsel %vm374, %v337, 0
        %v397 = vsel %vm374, %v338, 0
        %v400 = vsel %vm374, %v339, 0
        %v403 = vsel %vm374, %v340, 0
        %v406 = vsel %vm374, %v341, 0
        %v409 = vsel %vm374, %v342, 0
        %v412 = vsel %vm374, %v343, 0
        %v415 = vsel %vm374, %v344, 0
        %v418 = vsel %vm374, %v345, 0
        %v421 = vsel %vm374, %v346, 0
        %v424 = vsel %vm374, %v347, 0
        %v427 = vsel %vm374, %v348, 0
        %v430 = vsel %vm374, %v349, 0
        %v433 = vsel %vm374, %v350, 0
        %v436 = vsel %vm374, %v351, 0
        %v439 = vsel %vm374, %v352, 0
        %v442 = vsel %vm374, %v353, 0
        %v445 = vsel %vm374, %v354, 0
        %v448 = vsel %vm374, %v355, 0
        %v451 = vsel %vm374, %v356, 0
        %v454 = vsel %vm374, %v357, 0
        %v457 = vsel %vm374, %v358, 0
        %v460 = vsel %vm374, %v359, 0
        %v463 = vsel %vm374, %v360, 0
        %v466 = vsel %vm374, %v361, 0
        %v469 = vsel %vm374, %v362, 0
        %471 = vmatprep.subr.mxu0 0.0
        %472 = vmatpush1.msra.mxu0 %v363
        %473 = vmatprep.subr.mxu0 0.0
        %474 = vmatpush1.msra.mxu0 %v364
        %475 = vmatprep.subr.mxu0 0.0
        %476 = vmatpush1.msra.mxu0 %v365
        %477 = vmatprep.subr.mxu0 0.0
        %478 = vmatpush1.msra.mxu0 %v366
        %479 = vmatprep.subr.mxu0 0.0
        %480 = vmatpush1.msra.mxu0 0.0
        %481 = vmatprep.subr.mxu0 0.0
        %482 = vmatpush1.msra.mxu0 0.0
        %483 = vmatprep.subr.mxu0 0.0
        %484 = vmatpush1.msra.mxu0 0.0
        %485 = vmatprep.subr.mxu0 0.0
        %486 = vmatpush1.msra.mxu0 0.0
        %487 = vmatprep.subr.mxu0 0.0
        %488 = vmatpush1.msra.mxu0 0.0
        %489 = vmatprep.subr.mxu0 0.0
        %490 = vmatpush1.msra.mxu0 0.0
        %491 = vmatprep.subr.mxu0 0.0
        %492 = vmatpush1.msra.mxu0 0.0
        %493 = vmatprep.subr.mxu0 0.0
        %494 = vmatpush1.msra.mxu0 0.0
        %495 = vmatprep.subr.mxu0 0.0
        %496 = vmatpush1.msra.mxu0 0.0
        %497 = vmatprep.subr.mxu0 0.0
        %498 = vmatpush1.msra.mxu0 0.0
        %499 = vmatprep.subr.mxu0 0.0
        %500 = vmatpush1.msra.mxu0 0.0
        %501 = vmatprep.subr.mxu0 0.0
        %502 = vmatpush1.msra.mxu0 0.0
        %503 = vmatprep.subr.mxu0 0.0
        %504 = vmatpush1.msra.mxu0 0.0
        %505 = vmatprep.subr.mxu0 0.0
        %506 = vmatpush1.msra.mxu0 0.0
        %507 = vmatprep.subr.mxu0 0.0
        %508 = vmatpush1.msra.mxu0 0.0
        %509 = vmatprep.subr.mxu0 0.0
        %510 = vmatpush1.msra.mxu0 0.0
        %511 = vmatprep.subr.mxu0 0.0
        %512 = vmatpush1.msra.mxu0 0.0
        %513 = vmatprep.subr.mxu0 0.0
        %514 = vmatpush1.msra.mxu0 0.0
        %515 = vmatprep.subr.mxu0 0.0
        %516 = vmatpush1.msra.mxu0 0.0
        %517 = vmatprep.subr.mxu0 0.0
        %518 = vmatpush1.msra.mxu0 0.0
        %519 = vmatprep.subr.mxu0 0.0
        %520 = vmatpush1.msra.mxu0 0.0
        %521 = vmatprep.subr.mxu0 0.0
        %522 = vmatpush1.msra.mxu0 0.0
        %523 = vmatprep.subr.mxu0 0.0
        %524 = vmatpush1.msra.mxu0 0.0
        %525 = vmatprep.subr.mxu0 0.0
        %526 = vmatpush1.msra.mxu0 0.0
        %527 = vmatprep.subr.mxu0 0.0
        %528 = vmatpush1.msra.mxu0 0.0
        %529 = vmatprep.subr.mxu0 0.0
        %530 = vmatpush1.msra.mxu0 0.0
        %531 = vmatprep.subr.mxu0 0.0
        %532 = vmatpush1.msra.mxu0 0.0
        %533 = vmatprep.subr.mxu0 0.0
        %534 = vmatpush1.msra.mxu0 0.0
        %535 = vmatprep.mubr.f32.mxu0 0.0
        %536 = vmatmul.mubr.f32.gmra.mrb[0].mxu0 %v376
        %v537 = vpop.f32.mrb[0].mxu0
        %v538 = vadd.f32 %v372, %v537
        %v539 = vpop.f32.mrb[0].mxu0
        %540 = vmatprep.mubr.f32.mxu0 0.0
        %541 = vmatmul.mubr.f32.gmra.mrb[0].mxu0 %v379
        %v542 = vpop.f32.mrb[0].mxu0
        %v543 = vadd.f32 %v372, %v542
        %v544 = vpop.f32.mrb[0].mxu0
        %545 = vmatprep.mubr.f32.mxu0 0.0
        %546 = vmatmul.mubr.f32.gmra.mrb[0].mxu0 %v382
        %v547 = vpop.f32.mrb[0].mxu0
        %v548 = vadd.f32 %v372, %v547
        %v549 = vpop.f32.mrb[0].mxu0
        %550 = vmatprep.mubr.f32.mxu0 0.0
        %551 = vmatmul.mubr.f32.gmra.mrb[0].mxu0 %v385
        %v552 = vpop.f32.mrb[0].mxu0
        %v553 = vadd.f32 %v372, %v552
        %v554 = vpop.f32.mrb[0].mxu0
        %555 = vmatprep.mubr.f32.mxu0 0.0
        %556 = vmatmul.mubr.f32.gmra.mrb[0].mxu0 %v388
        %v557 = vpop.f32.mrb[0].mxu0
        %v558 = vadd.f32 %v372, %v557
        %v559 = vpop.f32.mrb[0].mxu0
        %560 = vmatprep.mubr.f32.mxu0 0.0
        %561 = vmatmul.mubr.f32.gmra.mrb[0].mxu0 %v391
        %v562 = vpop.f32.mrb[0].mxu0
        %v563 = vadd.f32 %v372, %v562
        %v564 = vpop.f32.mrb[0].mxu0
        %565 = vmatprep.mubr.f32.mxu0 0.0
        %566 = vmatmul.mubr.f32.gmra.mrb[0].mxu0 %v394
        %v567 = vpop.f32.mrb[0].mxu0
        %v568 = vadd.f32 %v372, %v567
        %v569 = vpop.f32.mrb[0].mxu0
        %570 = vmatprep.mubr.f32.mxu0 0.0
        %571 = vmatmul.mubr.f32.gmra.mrb[0].mxu0 %v397
        %v572 = vpop.f32.mrb[0].mxu0
        %v573 = vadd.f32 %v372, %v572
        %v574 = vpop.f32.mrb[0].mxu0
        %575 = vmatprep.mubr.f32.mxu0 0.0
        %576 = vmatmul.mubr.f32.gmra.mrb[0].mxu0 %v400
        %v577 = vpop.f32.mrb[0].mxu0
        %v578 = vadd.f32 %v372, %v577
        %v579 = vpop.f32.mrb[0].mxu0
        %580 = vmatprep.mubr.f32.mxu0 0.0
        %581 = vmatmul.mubr.f32.gmra.mrb[0].mxu0 %v403
        %v582 = vpop.f32.mrb[0].mxu0
        %v583 = vadd.f32 %v372, %v582
        %v584 = vpop.f32.mrb[0].mxu0
        %585 = vmatprep.mubr.f32.mxu0 0.0
        %586 = vmatmul.mubr.f32.gmra.mrb[0].mxu0 %v406
        %v587 = vpop.f32.mrb[0].mxu0
        %v588 = vadd.f32 %v372, %v587
        %v589 = vpop.f32.mrb[0].mxu0
        %590 = vmatprep.mubr.f32.mxu0 0.0
        %591 = vmatmul.mubr.f32.gmra.mrb[0].mxu0 %v409
        %v592 = vpop.f32.mrb[0].mxu0
        %v593 = vadd.f32 %v372, %v592
        %v594 = vpop.f32.mrb[0].mxu0
        %595 = vmatprep.mubr.f32.mxu0 0.0
        %596 = vmatmul.mubr.f32.gmra.mrb[0].mxu0 %v412
        %v597 = vpop.f32.mrb[0].mxu0
        %v598 = vadd.f32 %v372, %v597
        %v599 = vpop.f32.mrb[0].mxu0
        %600 = vmatprep.mubr.f32.mxu0 0.0
        %601 = vmatmul.mubr.f32.gmra.mrb[0].mxu0 %v415
        %v602 = vpop.f32.mrb[0].mxu0
        %v603 = vadd.f32 %v372, %v602
        %v604 = vpop.f32.mrb[0].mxu0
        %605 = vmatprep.mubr.f32.mxu0 0.0
        %606 = vmatmul.mubr.f32.gmra.mrb[0].mxu0 %v418
        %v607 = vpop.f32.mrb[0].mxu0
        %v608 = vadd.f32 %v372, %v607
        %v609 = vpop.f32.mrb[0].mxu0
        %610 = vmatprep.mubr.f32.mxu0 0.0
        %611 = vmatmul.mubr.f32.gmra.mrb[0].mxu0 %v421
        %v612 = vpop.f32.mrb[0].mxu0
        %v613 = vadd.f32 %v372, %v612
        %v614 = vpop.f32.mrb[0].mxu0
        %615 = vmatprep.mubr.f32.mxu0 0.0
        %616 = vmatmul.mubr.f32.gmra.mrb[0].mxu0 %v424
        %v617 = vpop.f32.mrb[0].mxu0
        %v618 = vadd.f32 %v372, %v617
        %v619 = vpop.f32.mrb[0].mxu0
        %620 = vmatprep.mubr.f32.mxu0 0.0
        %621 = vmatmul.mubr.f32.gmra.mrb[0].mxu0 %v427
        %v622 = vpop.f32.mrb[0].mxu0
        %v623 = vadd.f32 %v372, %v622
        %v624 = vpop.f32.mrb[0].mxu0
        %625 = vmatprep.mubr.f32.mxu0 0.0
        %626 = vmatmul.mubr.f32.gmra.mrb[0].mxu0 %v430
        %v627 = vpop.f32.mrb[0].mxu0
        %v628 = vadd.f32 %v372, %v627
        %v629 = vpop.f32.mrb[0].mxu0
        %630 = vmatprep.mubr.f32.mxu0 0.0
        %631 = vmatmul.mubr.f32.gmra.mrb[0].mxu0 %v433
        %v632 = vpop.f32.mrb[0].mxu0
        %v633 = vadd.f32 %v372, %v632
        %v634 = vpop.f32.mrb[0].mxu0
        %635 = vmatprep.mubr.f32.mxu0 0.0
        %636 = vmatmul.mubr.f32.gmra.mrb[0].mxu0 %v436
        %v637 = vpop.f32.mrb[0].mxu0
        %v638 = vadd.f32 %v372, %v637
        %v639 = vpop.f32.mrb[0].mxu0
        %640 = vmatprep.mubr.f32.mxu0 0.0
        %641 = vmatmul.mubr.f32.gmra.mrb[0].mxu0 %v439
        %v642 = vpop.f32.mrb[0].mxu0
        %v643 = vadd.f32 %v372, %v642
        %v644 = vpop.f32.mrb[0].mxu0
        %645 = vmatprep.mubr.f32.mxu0 0.0
        %646 = vmatmul.mubr.f32.gmra.mrb[0].mxu0 %v442
        %v647 = vpop.f32.mrb[0].mxu0
        %v648 = vadd.f32 %v372, %v647
        %v649 = vpop.f32.mrb[0].mxu0
        %650 = vmatprep.mubr.f32.mxu0 0.0
        %651 = vmatmul.mubr.f32.gmra.mrb[0].mxu0 %v445
        %v652 = vpop.f32.mrb[0].mxu0
        %v653 = vadd.f32 %v372, %v652
        %v654 = vpop.f32.mrb[0].mxu0
        %655 = vmatprep.mubr.f32.mxu0 0.0
        %656 = vmatmul.mubr.f32.gmra.mrb[0].mxu0 %v448
        %v657 = vpop.f32.mrb[0].mxu0
        %v658 = vadd.f32 %v372, %v657
        %v659 = vpop.f32.mrb[0].mxu0
        %660 = vmatprep.mubr.f32.mxu0 0.0
        %661 = vmatmul.mubr.f32.gmra.mrb[0].mxu0 %v451
        %v662 = vpop.f32.mrb[0].mxu0
        %v663 = vadd.f32 %v372, %v662
        %v664 = vpop.f32.mrb[0].mxu0
        %665 = vmatprep.mubr.f32.mxu0 0.0
        %666 = vmatmul.mubr.f32.gmra.mrb[0].mxu0 %v454
        %v667 = vpop.f32.mrb[0].mxu0
        %v668 = vadd.f32 %v372, %v667
        %v669 = vpop.f32.mrb[0].mxu0
        %670 = vmatprep.mubr.f32.mxu0 0.0
        %671 = vmatmul.mubr.f32.gmra.mrb[0].mxu0 %v457
        %v672 = vpop.f32.mrb[0].mxu0
        %v673 = vadd.f32 %v372, %v672
        %v674 = vpop.f32.mrb[0].mxu0
        %675 = vmatprep.mubr.f32.mxu0 0.0
        %676 = vmatmul.mubr.f32.gmra.mrb[0].mxu0 %v460
        %v677 = vpop.f32.mrb[0].mxu0
        %v678 = vadd.f32 %v372, %v677
        %v679 = vpop.f32.mrb[0].mxu0
        %680 = vmatprep.mubr.f32.mxu0 0.0
        %681 = vmatmul.mubr.f32.gmra.mrb[0].mxu0 %v463
        %v682 = vpop.f32.mrb[0].mxu0
        %v683 = vadd.f32 %v372, %v682
        %v684 = vpop.f32.mrb[0].mxu0
        %685 = vmatprep.mubr.f32.mxu0 0.0
        %686 = vmatmul.mubr.f32.gmra.mrb[0].mxu0 %v466
        %v687 = vpop.f32.mrb[0].mxu0
        %v688 = vadd.f32 %v372, %v687
        %v689 = vpop.f32.mrb[0].mxu0
        %690 = vmatprep.mubr.f32.mxu0 0.0
        %691 = vmatmul.mubr.f32.gmra.mrb[0].mxu0 %v469
        %v692 = vpop.f32.mrb[0].mxu0
        %v693 = vadd.f32 %v372, %v692
        %v694 = vpop.f32.mrb[0].mxu0
        %695 = vdwg.mxu0
        %v696 = vmax.f32 %v538, 0.0
        %v697 = vmax.f32 %v543, 0.0
        %v698 = vmax.f32 %v548, 0.0
        %v699 = vmax.f32 %v553, 0.0
        %v700 = vmax.f32 %v558, 0.0
        %v701 = vmax.f32 %v563, 0.0
        %v702 = vmax.f32 %v568, 0.0
        %v703 = vmax.f32 %v573, 0.0
        %v704 = vmax.f32 %v578, 0.0
        %v705 = vmax.f32 %v583, 0.0
        %v706 = vmax.f32 %v588, 0.0
        %v707 = vmax.f32 %v593, 0.0
        %v708 = vmax.f32 %v598, 0.0
        %v709 = vmax.f32 %v603, 0.0
        %v710 = vmax.f32 %v608, 0.0
        %v711 = vmax.f32 %v613, 0.0
        %v712 = vmax.f32 %v618, 0.0
        %v713 = vmax.f32 %v623, 0.0
        %v714 = vmax.f32 %v628, 0.0
        %v715 = vmax.f32 %v633, 0.0
        %v716 = vmax.f32 %v638, 0.0
        %v717 = vmax.f32 %v643, 0.0
        %v718 = vmax.f32 %v648, 0.0
        %v719 = vmax.f32 %v653, 0.0
        %v720 = vmax.f32 %v658, 0.0
        %v721 = vmax.f32 %v663, 0.0
        %v722 = vmax.f32 %v668, 0.0
        %v723 = vmax.f32 %v673, 0.0
        %v724 = vmax.f32 %v678, 0.0
        %v725 = vmax.f32 %v683, 0.0
        %v726 = vmax.f32 %v688, 0.0
        %v727 = vmax.f32 %v693, 0.0
        %vm728 = vcmask 523264
        %729 = vst.msk [vmem:[#allocation2] sm:$0xff] %vm728, 0.0
        %730 = vst.msk [vmem:[#allocation2 + $0x8] sm:$0xff] %vm728, 0.0
        %731 = vst.msk [vmem:[#allocation2 + $0x120] sm:$0xff] %vm728, 0.0
        %732 = vst.msk [vmem:[#allocation2 + $0x128] sm:$0xff] %vm728, 0.0
        %733 = vst.msk [vmem:[#allocation2 + $0x240] sm:$0xff] %vm728, 0.0
        %734 = vst.msk [vmem:[#allocation2 + $0x248] sm:$0xff] %vm728, 0.0
        %s735 = scalar_lea.vmem [#allocation2], 272
        %736 = vst.msk [vmem:[%s735] sm:$0xff] %vm728, 0.0
        %737 = vst.msk [vmem:[%s735 + $0x8] sm:$0xff] %vm728, 0.0
        %738 = vst.msk [vmem:[%s735 + $0x120] sm:$0xff] %vm728, 0.0
        %739 = vst.msk [vmem:[%s735 + $0x128] sm:$0xff] %vm728, 0.0
        %740 = vst.msk [vmem:[%s735 + $0x240] sm:$0xff] %vm728, 0.0
        %741 = vst.msk [vmem:[%s735 + $0x248] sm:$0xff] %vm728, 0.0
        %vm774 = vcmask 1040384
        %v775 = vrot.slane %v696, 7
        %v776 = vrot.slane %v697, 7
        %v777 = vsel %vm774, %v775, %v776
        %v778 = vrot.slane %v698, 7
        %v779 = vrot.slane %v699, 7
        %v780 = vsel %vm774, %v778, %v779
        %v781 = vrot.slane %v700, 7
        %v782 = vrot.slane %v701, 7
        %v783 = vsel %vm774, %v781, %v782
        %v784 = vrot.slane %v702, 7
        %v785 = vrot.slane %v703, 7
        %v786 = vsel %vm774, %v784, %v785
        %v787 = vrot.slane %v704, 7
        %v788 = vrot.slane %v705, 7
        %v789 = vsel %vm774, %v787, %v788
        %v790 = vrot.slane %v706, 7
        %v791 = vrot.slane %v707, 7
        %v792 = vsel %vm774, %v790, %v791
        %v793 = vrot.slane %v708, 7
        %v794 = vrot.slane %v709, 7
        %v795 = vsel %vm774, %v793, %v794
        %v796 = vrot.slane %v710, 7
        %v797 = vrot.slane %v711, 7
        %v798 = vsel %vm774, %v796, %v797
        %v799 = vrot.slane %v712, 7
        %v800 = vrot.slane %v713, 7
        %v801 = vsel %vm774, %v799, %v800
        %v802 = vrot.slane %v714, 7
        %v803 = vrot.slane %v715, 7
        %v804 = vsel %vm774, %v802, %v803
        %v805 = vrot.slane %v716, 7
        %v806 = vrot.slane %v717, 7
        %v807 = vsel %vm774, %v805, %v806
        %v808 = vrot.slane %v718, 7
        %v809 = vrot.slane %v719, 7
        %v810 = vsel %vm774, %v808, %v809
        %v811 = vrot.slane %v720, 7
        %v812 = vrot.slane %v721, 7
        %v813 = vsel %vm774, %v811, %v812
        %v814 = vrot.slane %v722, 7
        %v815 = vrot.slane %v723, 7
        %v816 = vsel %vm774, %v814, %v815
        %v817 = vrot.slane %v724, 7
        %v818 = vrot.slane %v725, 7
        %v819 = vsel %vm774, %v817, %v818
        %v820 = vrot.slane %v726, 7
        %v821 = vrot.slane %v727, 7
        %v822 = vsel %vm774, %v820, %v821
        %v855 = vsel %vm774, 0.0, %v775
        %v856 = vsel %vm774, 0.0, %v778
        %v857 = vsel %vm774, 0.0, %v781
        %v858 = vsel %vm774, 0.0, %v784
        %v859 = vsel %vm774, 0.0, %v787
        %v860 = vsel %vm774, 0.0, %v790
        %v861 = vsel %vm774, 0.0, %v793
        %v862 = vsel %vm774, 0.0, %v796
        %v863 = vsel %vm774, 0.0, %v799
        %v864 = vsel %vm774, 0.0, %v802
        %v865 = vsel %vm774, 0.0, %v805
        %v866 = vsel %vm774, 0.0, %v808
        %v867 = vsel %vm774, 0.0, %v811
        %v868 = vsel %vm774, 0.0, %v814
        %v869 = vsel %vm774, 0.0, %v817
        %v870 = vsel %vm774, 0.0, %v820
        %s871 = scalar_lea.vmem [#allocation2], 16
        %872 = vst.msk [vmem:[%s871] sm:$0xff] %vm728, %v855
        %873 = vst.msk [vmem:[%s871 + $0x8] sm:$0xff] %vm728, %v777
        %874 = vst.msk [vmem:[%s871 + $0x10] sm:$0xff] %vm728, %v856
        %875 = vst.msk [vmem:[%s871 + $0x18] sm:$0xff] %vm728, %v780
        %876 = vst.msk [vmem:[%s871 + $0x20] sm:$0xff] %vm728, %v857
        %877 = vst.msk [vmem:[%s871 + $0x28] sm:$0xff] %vm728, %v783
        %878 = vst.msk [vmem:[%s871 + $0x30] sm:$0xff] %vm728, %v858
        %879 = vst.msk [vmem:[%s871 + $0x38] sm:$0xff] %vm728, %v786
        %880 = vst.msk [vmem:[%s871 + $0x40] sm:$0xff] %vm728, %v859
        %881 = vst.msk [vmem:[%s871 + $0x48] sm:$0xff] %vm728, %v789
        %882 = vst.msk [vmem:[%s871 + $0x50] sm:$0xff] %vm728, %v860
        %883 = vst.msk [vmem:[%s871 + $0x58] sm:$0xff] %vm728, %v792
        %884 = vst.msk [vmem:[%s871 + $0x60] sm:$0xff] %vm728, %v861
        %885 = vst.msk [vmem:[%s871 + $0x68] sm:$0xff] %vm728, %v795
        %886 = vst.msk [vmem:[%s871 + $0x70] sm:$0xff] %vm728, %v862
        %887 = vst.msk [vmem:[%s871 + $0x78] sm:$0xff] %vm728, %v798
        %888 = vst.msk [vmem:[%s871 + $0x80] sm:$0xff] %vm728, %v863
        %889 = vst.msk [vmem:[%s871 + $0x88] sm:$0xff] %vm728, %v801
        %890 = vst.msk [vmem:[%s871 + $0x90] sm:$0xff] %vm728, %v864
        %891 = vst.msk [vmem:[%s871 + $0x98] sm:$0xff] %vm728, %v804
        %892 = vst.msk [vmem:[%s871 + $0xa0] sm:$0xff] %vm728, %v865
        %893 = vst.msk [vmem:[%s871 + $0xa8] sm:$0xff] %vm728, %v807
        %894 = vst.msk [vmem:[%s871 + $0xb0] sm:$0xff] %vm728, %v866
        %895 = vst.msk [vmem:[%s871 + $0xb8] sm:$0xff] %vm728, %v810
        %896 = vst.msk [vmem:[%s871 + $0xc0] sm:$0xff] %vm728, %v867
        %897 = vst.msk [vmem:[%s871 + $0xc8] sm:$0xff] %vm728, %v813
        %898 = vst.msk [vmem:[%s871 + $0xd0] sm:$0xff] %vm728, %v868
        %899 = vst.msk [vmem:[%s871 + $0xd8] sm:$0xff] %vm728, %v816
        %900 = vst.msk [vmem:[%s871 + $0xe0] sm:$0xff] %vm728, %v869
        %901 = vst.msk [vmem:[%s871 + $0xe8] sm:$0xff] %vm728, %v819
        %902 = vst.msk [vmem:[%s871 + $0xf0] sm:$0xff] %vm728, %v870
        %903 = vst.msk [vmem:[%s871 + $0xf8] sm:$0xff] %vm728, %v822
        %s904 = scalar_lea.vmem [#allocation2], 304
        %905 = vst.msk [vmem:[%s904] sm:$0xff] %vm728, %v696
        %906 = vst.msk [vmem:[%s904 + $0x8] sm:$0xff] %vm728, %v697
        %907 = vst.msk [vmem:[%s904 + $0x10] sm:$0xff] %vm728, %v698
        %908 = vst.msk [vmem:[%s904 + $0x18] sm:$0xff] %vm728, %v699
        %909 = vst.msk [vmem:[%s904 + $0x20] sm:$0xff] %vm728, %v700
        %910 = vst.msk [vmem:[%s904 + $0x28] sm:$0xff] %vm728, %v701
        %911 = vst.msk [vmem:[%s904 + $0x30] sm:$0xff] %vm728, %v702
        %912 = vst.msk [vmem:[%s904 + $0x38] sm:$0xff] %vm728, %v703
        %913 = vst.msk [vmem:[%s904 + $0x40] sm:$0xff] %vm728, %v704
        %914 = vst.msk [vmem:[%s904 + $0x48] sm:$0xff] %vm728, %v705
        %915 = vst.msk [vmem:[%s904 + $0x50] sm:$0xff] %vm728, %v706
        %916 = vst.msk [vmem:[%s904 + $0x58] sm:$0xff] %vm728, %v707
        %917 = vst.msk [vmem:[%s904 + $0x60] sm:$0xff] %vm728, %v708
        %918 = vst.msk [vmem:[%s904 + $0x68] sm:$0xff] %vm728, %v709
        %919 = vst.msk [vmem:[%s904 + $0x70] sm:$0xff] %vm728, %v710
        %920 = vst.msk [vmem:[%s904 + $0x78] sm:$0xff] %vm728, %v711
        %921 = vst.msk [vmem:[%s904 + $0x80] sm:$0xff] %vm728, %v712
        %922 = vst.msk [vmem:[%s904 + $0x88] sm:$0xff] %vm728, %v713
        %923 = vst.msk [vmem:[%s904 + $0x90] sm:$0xff] %vm728, %v714
        %924 = vst.msk [vmem:[%s904 + $0x98] sm:$0xff] %vm728, %v715
        %925 = vst.msk [vmem:[%s904 + $0xa0] sm:$0xff] %vm728, %v716
        %926 = vst.msk [vmem:[%s904 + $0xa8] sm:$0xff] %vm728, %v717
        %927 = vst.msk [vmem:[%s904 + $0xb0] sm:$0xff] %vm728, %v718
        %928 = vst.msk [vmem:[%s904 + $0xb8] sm:$0xff] %vm728, %v719
        %929 = vst.msk [vmem:[%s904 + $0xc0] sm:$0xff] %vm728, %v720
        %930 = vst.msk [vmem:[%s904 + $0xc8] sm:$0xff] %vm728, %v721
        %931 = vst.msk [vmem:[%s904 + $0xd0] sm:$0xff] %vm728, %v722
        %932 = vst.msk [vmem:[%s904 + $0xd8] sm:$0xff] %vm728, %v723
        %933 = vst.msk [vmem:[%s904 + $0xe0] sm:$0xff] %vm728, %v724
        %934 = vst.msk [vmem:[%s904 + $0xe8] sm:$0xff] %vm728, %v725
        %935 = vst.msk [vmem:[%s904 + $0xf0] sm:$0xff] %vm728, %v726
        %936 = vst.msk [vmem:[%s904 + $0xf8] sm:$0xff] %vm728, %v727
        %vm937 = vcmask 1046528
        %v938 = vrot.slane %v696, 1
        %v939 = vrot.slane %v697, 1
        %v940 = vsel %vm937, %v938, %v939
        %v941 = vrot.slane %v698, 1
        %v942 = vrot.slane %v699, 1
        %v943 = vsel %vm937, %v941, %v942
        %v944 = vrot.slane %v700, 1
        %v945 = vrot.slane %v701, 1
        %v946 = vsel %vm937, %v944, %v945
        %v947 = vrot.slane %v702, 1
        %v948 = vrot.slane %v703, 1
        %v949 = vsel %vm937, %v947, %v948
        %v950 = vrot.slane %v704, 1
        %v951 = vrot.slane %v705, 1
        %v952 = vsel %vm937, %v950, %v951
        %v953 = vrot.slane %v706, 1
        %v954 = vrot.slane %v707, 1
        %v955 = vsel %vm937, %v953, %v954
        %v956 = vrot.slane %v708, 1
        %v957 = vrot.slane %v709, 1
        %v958 = vsel %vm937, %v956, %v957
        %v959 = vrot.slane %v710, 1
        %v960 = vrot.slane %v711, 1
        %v961 = vsel %vm937, %v959, %v960
        %v962 = vrot.slane %v712, 1
        %v963 = vrot.slane %v713, 1
        %v964 = vsel %vm937, %v962, %v963
        %v965 = vrot.slane %v714, 1
        %v966 = vrot.slane %v715, 1
        %v967 = vsel %vm937, %v965, %v966
        %v968 = vrot.slane %v716, 1
        %v969 = vrot.slane %v717, 1
        %v970 = vsel %vm937, %v968, %v969
        %v971 = vrot.slane %v718, 1
        %v972 = vrot.slane %v719, 1
        %v973 = vsel %vm937, %v971, %v972
        %v974 = vrot.slane %v720, 1
        %v975 = vrot.slane %v721, 1
        %v976 = vsel %vm937, %v974, %v975
        %v977 = vrot.slane %v722, 1
        %v978 = vrot.slane %v723, 1
        %v979 = vsel %vm937, %v977, %v978
        %v980 = vrot.slane %v724, 1
        %v981 = vrot.slane %v725, 1
        %v982 = vsel %vm937, %v980, %v981
        %v983 = vrot.slane %v726, 1
        %v984 = vrot.slane %v727, 1
        %v985 = vsel %vm937, %v983, %v984
        %v1018 = vsel %vm937, %v939, 0.0
        %v1019 = vsel %vm937, %v942, 0.0
        %v1020 = vsel %vm937, %v945, 0.0
        %v1021 = vsel %vm937, %v948, 0.0
        %v1022 = vsel %vm937, %v951, 0.0
        %v1023 = vsel %vm937, %v954, 0.0
        %v1024 = vsel %vm937, %v957, 0.0
        %v1025 = vsel %vm937, %v960, 0.0
        %v1026 = vsel %vm937, %v963, 0.0
        %v1027 = vsel %vm937, %v966, 0.0
        %v1028 = vsel %vm937, %v969, 0.0
        %v1029 = vsel %vm937, %v972, 0.0
        %v1030 = vsel %vm937, %v975, 0.0
        %v1031 = vsel %vm937, %v978, 0.0
        %v1032 = vsel %vm937, %v981, 0.0
        %v1033 = vsel %vm937, %v984, 0.0
        %s1034 = scalar_lea.vmem [#allocation2], 592
        %1035 = vst.msk [vmem:[%s1034] sm:$0xff] %vm728, %v940
        %1036 = vst.msk [vmem:[%s1034 + $0x8] sm:$0xff] %vm728, %v1018
        %1037 = vst.msk [vmem:[%s1034 + $0x10] sm:$0xff] %vm728, %v943
        %1038 = vst.msk [vmem:[%s1034 + $0x18] sm:$0xff] %vm728, %v1019
        %1039 = vst.msk [vmem:[%s1034 + $0x20] sm:$0xff] %vm728, %v946
        %1040 = vst.msk [vmem:[%s1034 + $0x28] sm:$0xff] %vm728, %v1020
        %1041 = vst.msk [vmem:[%s1034 + $0x30] sm:$0xff] %vm728, %v949
        %1042 = vst.msk [vmem:[%s1034 + $0x38] sm:$0xff] %vm728, %v1021
        %1043 = vst.msk [vmem:[%s1034 + $0x40] sm:$0xff] %vm728, %v952
        %1044 = vst.msk [vmem:[%s1034 + $0x48] sm:$0xff] %vm728, %v1022
        %1045 = vst.msk [vmem:[%s1034 + $0x50] sm:$0xff] %vm728, %v955
        %1046 = vst.msk [vmem:[%s1034 + $0x58] sm:$0xff] %vm728, %v1023
        %1047 = vst.msk [vmem:[%s1034 + $0x60] sm:$0xff] %vm728, %v958
        %1048 = vst.msk [vmem:[%s1034 + $0x68] sm:$0xff] %vm728, %v1024
        %1049 = vst.msk [vmem:[%s1034 + $0x70] sm:$0xff] %vm728, %v961
        %1050 = vst.msk [vmem:[%s1034 + $0x78] sm:$0xff] %vm728, %v1025
        %1051 = vst.msk [vmem:[%s1034 + $0x80] sm:$0xff] %vm728, %v964
        %1052 = vst.msk [vmem:[%s1034 + $0x88] sm:$0xff] %vm728, %v1026
        %1053 = vst.msk [vmem:[%s1034 + $0x90] sm:$0xff] %vm728, %v967
        %1054 = vst.msk [vmem:[%s1034 + $0x98] sm:$0xff] %vm728, %v1027
        %1055 = vst.msk [vmem:[%s1034 + $0xa0] sm:$0xff] %vm728, %v970
        %1056 = vst.msk [vmem:[%s1034 + $0xa8] sm:$0xff] %vm728, %v1028
        %1057 = vst.msk [vmem:[%s1034 + $0xb0] sm:$0xff] %vm728, %v973
        %1058 = vst.msk [vmem:[%s1034 + $0xb8] sm:$0xff] %vm728, %v1029
        %1059 = vst.msk [vmem:[%s1034 + $0xc0] sm:$0xff] %vm728, %v976
        %1060 = vst.msk [vmem:[%s1034 + $0xc8] sm:$0xff] %vm728, %v1030
        %1061 = vst.msk [vmem:[%s1034 + $0xd0] sm:$0xff] %vm728, %v979
        %1062 = vst.msk [vmem:[%s1034 + $0xd8] sm:$0xff] %vm728, %v1031
        %1063 = vst.msk [vmem:[%s1034 + $0xe0] sm:$0xff] %vm728, %v982
        %1064 = vst.msk [vmem:[%s1034 + $0xe8] sm:$0xff] %vm728, %v1032
        %1065 = vst.msk [vmem:[%s1034 + $0xf0] sm:$0xff] %vm728, %v985
        %1066 = vst.msk [vmem:[%s1034 + $0xf8] sm:$0xff] %vm728, %v1033
        %1067 = vst.msk [vmem:[#allocation5] sm:$0xff] %vm728, 0.0
        %1068 = vst.msk [vmem:[#allocation5 + $0x8] sm:$0xff] %vm728, 0.0
        %1069 = vst.msk [vmem:[#allocation5 + $0x10] sm:$0xff] %vm728, 0.0
        %1070 = vst.msk [vmem:[#allocation5 + $0x18] sm:$0xff] %vm728, 0.0
        %1071 = vst.msk [vmem:[#allocation5 + $0x20] sm:$0xff] %vm728, 0.0
        %1072 = vst.msk [vmem:[#allocation5 + $0x28] sm:$0xff] %vm728, 0.0
        %1073 = vst.msk [vmem:[#allocation5 + $0x30] sm:$0xff] %vm728, 0.0
        %1074 = vst.msk [vmem:[#allocation5 + $0x38] sm:$0xff] %vm728, 0.0
        %1075 = vst.msk [vmem:[#allocation5 + $0x40] sm:$0xff] %vm728, 0.0
        %1076 = vst.msk [vmem:[#allocation5 + $0x48] sm:$0xff] %vm728, 0.0
        %1077 = vst.msk [vmem:[#allocation5 + $0x50] sm:$0xff] %vm728, 0.0
        %1078 = vst.msk [vmem:[#allocation5 + $0x58] sm:$0xff] %vm728, 0.0
        %1079 = vst.msk [vmem:[#allocation5 + $0x60] sm:$0xff] %vm728, 0.0
        %1080 = vst.msk [vmem:[#allocation5 + $0x68] sm:$0xff] %vm728, 0.0
        %1081 = vst.msk [vmem:[#allocation5 + $0x70] sm:$0xff] %vm728, 0.0
        %1082 = vst.msk [vmem:[#allocation5 + $0x78] sm:$0xff] %vm728, 0.0
        %1083 = vst.msk [vmem:[#allocation5 + $0x80] sm:$0xff] %vm728, 0.0
        %1084 = vst.msk [vmem:[#allocation5 + $0x88] sm:$0xff] %vm728, 0.0
        %1085 = vst.msk [vmem:[#allocation5 + $0x90] sm:$0xff] %vm728, 0.0
        %1086 = vst.msk [vmem:[#allocation5 + $0x98] sm:$0xff] %vm728, 0.0
        %1087 = vst.msk [vmem:[#allocation5 + $0xa0] sm:$0xff] %vm728, 0.0
        %1088 = vst.msk [vmem:[#allocation5 + $0xa8] sm:$0xff] %vm728, 0.0
        %1089 = vst.msk [vmem:[#allocation5 + $0xb0] sm:$0xff] %vm728, 0.0
        %1090 = vst.msk [vmem:[#allocation5 + $0xb8] sm:$0xff] %vm728, 0.0
        %1091 = vst.msk [vmem:[#allocation5 + $0xc0] sm:$0xff] %vm728, 0.0
        %1092 = vst.msk [vmem:[#allocation5 + $0xc8] sm:$0xff] %vm728, 0.0
        %1093 = vst.msk [vmem:[#allocation5 + $0xd0] sm:$0xff] %vm728, 0.0
        %1094 = vst.msk [vmem:[#allocation5 + $0xd8] sm:$0xff] %vm728, 0.0
        %1095 = vst.msk [vmem:[#allocation5 + $0xe0] sm:$0xff] %vm728, 0.0
        %1096 = vst.msk [vmem:[#allocation5 + $0xe8] sm:$0xff] %vm728, 0.0
        %1097 = vst.msk [vmem:[#allocation5 + $0xf0] sm:$0xff] %vm728, 0.0
        %1098 = vst.msk [vmem:[#allocation5 + $0xf8] sm:$0xff] %vm728, 0.0
        %v1099 = vld [vmem:[#allocation2] sm:$0xff]
        %v1100 = vld [vmem:[#allocation2 + $0x8] sm:$0xff]
        %v1101 = vld [vmem:[#allocation2 + $0x10] sm:$0xff]
        %v1102 = vld [vmem:[#allocation2 + $0x18] sm:$0xff]
        %v1103 = vld [vmem:[#allocation2 + $0x20] sm:$0xff]
        %v1104 = vld [vmem:[#allocation2 + $0x28] sm:$0xff]
        %v1105 = vld [vmem:[#allocation2 + $0x30] sm:$0xff]
        %v1106 = vld [vmem:[#allocation2 + $0x38] sm:$0xff]
        %v1107 = vld [vmem:[#allocation2 + $0x40] sm:$0xff]
        %v1108 = vld [vmem:[#allocation2 + $0x48] sm:$0xff]
        %v1109 = vld [vmem:[#allocation2 + $0x50] sm:$0xff]
        %v1110 = vld [vmem:[#allocation2 + $0x58] sm:$0xff]
        %v1111 = vld [vmem:[#allocation2 + $0x60] sm:$0xff]
        %v1112 = vld [vmem:[#allocation2 + $0x68] sm:$0xff]
        %v1113 = vld [vmem:[#allocation2 + $0x70] sm:$0xff]
        %v1114 = vld [vmem:[#allocation2 + $0x78] sm:$0xff]
        %v1115 = vld [vmem:[#allocation2 + $0x80] sm:$0xff]
        %v1116 = vld [vmem:[#allocation2 + $0x88] sm:$0xff]
        %v1117 = vld [vmem:[#allocation2 + $0x90] sm:$0xff]
        %v1118 = vld [vmem:[#allocation2 + $0x98] sm:$0xff]
        %v1119 = vld [vmem:[#allocation2 + $0xa0] sm:$0xff]
        %v1120 = vld [vmem:[#allocation2 + $0xa8] sm:$0xff]
        %v1121 = vld [vmem:[#allocation2 + $0xb0] sm:$0xff]
        %v1122 = vld [vmem:[#allocation2 + $0xb8] sm:$0xff]
        %v1123 = vld [vmem:[#allocation2 + $0xc0] sm:$0xff]
        %v1124 = vld [vmem:[#allocation2 + $0xc8] sm:$0xff]
        %v1125 = vld [vmem:[#allocation2 + $0xd0] sm:$0xff]
        %v1126 = vld [vmem:[#allocation2 + $0xd8] sm:$0xff]
        %v1127 = vld [vmem:[#allocation2 + $0xe0] sm:$0xff]
        %v1128 = vld [vmem:[#allocation2 + $0xe8] sm:$0xff]
        %v1129 = vld [vmem:[#allocation2 + $0xf0] sm:$0xff]
        %v1130 = vld [vmem:[#allocation2 + $0xf8] sm:$0xff]
        %v1131 = vld [vmem:[#allocation5] sm:$0xff]
        %v1132 = vld [vmem:[#allocation5 + $0x8] sm:$0xff]
        %v1133 = vld [vmem:[#allocation5 + $0x10] sm:$0xff]
        %v1134 = vld [vmem:[#allocation5 + $0x18] sm:$0xff]
        %v1135 = vld [vmem:[#allocation5 + $0x20] sm:$0xff]
        %v1136 = vld [vmem:[#allocation5 + $0x28] sm:$0xff]
        %v1137 = vld [vmem:[#allocation5 + $0x30] sm:$0xff]
        %v1138 = vld [vmem:[#allocation5 + $0x38] sm:$0xff]
        %v1139 = vld [vmem:[#allocation5 + $0x40] sm:$0xff]
        %v1140 = vld [vmem:[#allocation5 + $0x48] sm:$0xff]
        %v1141 = vld [vmem:[#allocation5 + $0x50] sm:$0xff]
        %v1142 = vld [vmem:[#allocation5 + $0x58] sm:$0xff]
        %v1143 = vld [vmem:[#allocation5 + $0x60] sm:$0xff]
        %v1144 = vld [vmem:[#allocation5 + $0x68] sm:$0xff]
        %v1145 = vld [vmem:[#allocation5 + $0x70] sm:$0xff]
        %v1146 = vld [vmem:[#allocation5 + $0x78] sm:$0xff]
        %v1147 = vld [vmem:[#allocation5 + $0x80] sm:$0xff]
        %v1148 = vld [vmem:[#allocation5 + $0x88] sm:$0xff]
        %v1149 = vld [vmem:[#allocation5 + $0x90] sm:$0xff]
        %v1150 = vld [vmem:[#allocation5 + $0x98] sm:$0xff]
        %v1151 = vld [vmem:[#allocation5 + $0xa0] sm:$0xff]
        %v1152 = vld [vmem:[#allocation5 + $0xa8] sm:$0xff]
        %v1153 = vld [vmem:[#allocation5 + $0xb0] sm:$0xff]
        %v1154 = vld [vmem:[#allocation5 + $0xb8] sm:$0xff]
        %v1155 = vld [vmem:[#allocation5 + $0xc0] sm:$0xff]
        %v1156 = vld [vmem:[#allocation5 + $0xc8] sm:$0xff]
        %v1157 = vld [vmem:[#allocation5 + $0xd0] sm:$0xff]
        %v1158 = vld [vmem:[#allocation5 + $0xd8] sm:$0xff]
        %v1159 = vld [vmem:[#allocation5 + $0xe0] sm:$0xff]
        %v1160 = vld [vmem:[#allocation5 + $0xe8] sm:$0xff]
        %v1161 = vld [vmem:[#allocation5 + $0xf0] sm:$0xff]
        %v1162 = vld [vmem:[#allocation5 + $0xf8] sm:$0xff]
        %v1163 = vld [vmem:[%s3] sm:$0xff]
        %v1164 = vld [vmem:[%s3 + $0x8] sm:$0xff]
        %v1165 = vld [vmem:[%s3 + $0x10] sm:$0xff]
        %v1166 = vld [vmem:[%s3 + $0x18] sm:$0xff]
        %v1167 = vld [vmem:[%s3 + $0x20] sm:$0xff]
        %v1168 = vld [vmem:[%s3 + $0x28] sm:$0xff]
        %v1169 = vld [vmem:[%s3 + $0x30] sm:$0xff]
        %v1170 = vld [vmem:[%s3 + $0x38] sm:$0xff]
        %v1172 = vsel %vm728, %v1099, 0
        %v1175 = vsel %vm728, %v1100, 0
        %v1178 = vsel %vm728, %v1101, 0
        %v1181 = vsel %vm728, %v1102, 0
        %v1184 = vsel %vm728, %v1103, 0
        %v1187 = vsel %vm728, %v1104, 0
        %v1190 = vsel %vm728, %v1105, 0
        %v1193 = vsel %vm728, %v1106, 0
        %v1196 = vsel %vm728, %v1107, 0
        %v1199 = vsel %vm728, %v1108, 0
        %v1202 = vsel %vm728, %v1109, 0
        %v1205 = vsel %vm728, %v1110, 0
        %v1208 = vsel %vm728, %v1111, 0
        %v1211 = vsel %vm728, %v1112, 0
        %v1214 = vsel %vm728, %v1113, 0
        %v1217 = vsel %vm728, %v1114, 0
        %v1220 = vsel %vm728, %v1115, 0
        %v1223 = vsel %vm728, %v1116, 0
        %v1226 = vsel %vm728, %v1117, 0
        %v1229 = vsel %vm728, %v1118, 0
        %v1232 = vsel %vm728, %v1119, 0
        %v1235 = vsel %vm728, %v1120, 0
        %v1238 = vsel %vm728, %v1121, 0
        %v1241 = vsel %vm728, %v1122, 0
        %v1244 = vsel %vm728, %v1123, 0
        %v1247 = vsel %vm728, %v1124, 0
        %v1250 = vsel %vm728, %v1125, 0
        %v1253 = vsel %vm728, %v1126, 0
        %v1256 = vsel %vm728, %v1127, 0
        %v1259 = vsel %vm728, %v1128, 0
        %v1262 = vsel %vm728, %v1129, 0
        %v1265 = vsel %vm728, %v1130, 0
        %1267 = vmatprep.subr.mxu0 0.0
        %1268 = vmatpush1.msra.mxu0 %v1163
        %1269 = vmatprep.subr.mxu0 0.0
        %1270 = vmatpush1.msra.mxu0 %v1164
        %1271 = vmatprep.subr.mxu0 0.0
        %1272 = vmatpush1.msra.mxu0 %v1165
        %1273 = vmatprep.subr.mxu0 0.0
        %1274 = vmatpush1.msra.mxu0 %v1166
        %1275 = vmatprep.subr.mxu0 0.0
        %1276 = vmatpush1.msra.mxu0 %v1167
        %1277 = vmatprep.subr.mxu0 0.0
        %1278 = vmatpush1.msra.mxu0 %v1168
        %1279 = vmatprep.subr.mxu0 0.0
        %1280 = vmatpush1.msra.mxu0 %v1169
        %1281 = vmatprep.subr.mxu0 0.0
        %1282 = vmatpush1.msra.mxu0 %v1170
        %1283 = vmatprep.subr.mxu0 0.0
        %1284 = vmatpush1.msra.mxu0 0.0
        %1285 = vmatprep.subr.mxu0 0.0
        %1286 = vmatpush1.msra.mxu0 0.0
        %1287 = vmatprep.subr.mxu0 0.0
        %1288 = vmatpush1.msra.mxu0 0.0
        %1289 = vmatprep.subr.mxu0 0.0
        %1290 = vmatpush1.msra.mxu0 0.0
        %1291 = vmatprep.subr.mxu0 0.0
        %1292 = vmatpush1.msra.mxu0 0.0
        %1293 = vmatprep.subr.mxu0 0.0
        %1294 = vmatpush1.msra.mxu0 0.0
        %1295 = vmatprep.subr.mxu0 0.0
        %1296 = vmatpush1.msra.mxu0 0.0
        %1297 = vmatprep.subr.mxu0 0.0
        %1298 = vmatpush1.msra.mxu0 0.0
        %1299 = vmatprep.subr.mxu0 0.0
        %1300 = vmatpush1.msra.mxu0 0.0
        %1301 = vmatprep.subr.mxu0 0.0
        %1302 = vmatpush1.msra.mxu0 0.0
        %1303 = vmatprep.subr.mxu0 0.0
        %1304 = vmatpush1.msra.mxu0 0.0
        %1305 = vmatprep.subr.mxu0 0.0
        %1306 = vmatpush1.msra.mxu0 0.0
        %1307 = vmatprep.subr.mxu0 0.0
        %1308 = vmatpush1.msra.mxu0 0.0
        %1309 = vmatprep.subr.mxu0 0.0
        %1310 = vmatpush1.msra.mxu0 0.0
        %1311 = vmatprep.subr.mxu0 0.0
        %1312 = vmatpush1.msra.mxu0 0.0
        %1313 = vmatprep.subr.mxu0 0.0
        %1314 = vmatpush1.msra.mxu0 0.0
        %1315 = vmatprep.subr.mxu0 0.0
        %1316 = vmatpush1.msra.mxu0 0.0
        %1317 = vmatprep.subr.mxu0 0.0
        %1318 = vmatpush1.msra.mxu0 0.0
        %1319 = vmatprep.subr.mxu0 0.0
        %1320 = vmatpush1.msra.mxu0 0.0
        %1321 = vmatprep.subr.mxu0 0.0
        %1322 = vmatpush1.msra.mxu0 0.0
        %1323 = vmatprep.subr.mxu0 0.0
        %1324 = vmatpush1.msra.mxu0 0.0
        %1325 = vmatprep.subr.mxu0 0.0
        %1326 = vmatpush1.msra.mxu0 0.0
        %1327 = vmatprep.subr.mxu0 0.0
        %1328 = vmatpush1.msra.mxu0 0.0
        %1329 = vmatprep.subr.mxu0 0.0
        %1330 = vmatpush1.msra.mxu0 0.0
        %1331 = vmatprep.mubr.f32.mxu0 0.0
        %1332 = vmatmul.mubr.f32.gmra.mrb[0].mxu0 %v1172
        %v1333 = vpop.f32.mrb[0].mxu0
        %v1334 = vadd.f32 0.0, %v1333
        %v1335 = vpop.f32.mrb[0].mxu0
        %1336 = vmatprep.mubr.f32.mxu0 0.0
        %1337 = vmatmul.mubr.f32.gmra.mrb[0].mxu0 %v1175
        %v1338 = vpop.f32.mrb[0].mxu0
        %v1339 = vadd.f32 0.0, %v1338
        %v1340 = vpop.f32.mrb[0].mxu0
        %1341 = vmatprep.mubr.f32.mxu0 0.0
        %1342 = vmatmul.mubr.f32.gmra.mrb[0].mxu0 %v1178
        %v1343 = vpop.f32.mrb[0].mxu0
        %v1344 = vadd.f32 0.0, %v1343
        %v1345 = vpop.f32.mrb[0].mxu0
        %1346 = vmatprep.mubr.f32.mxu0 0.0
        %1347 = vmatmul.mubr.f32.gmra.mrb[0].mxu0 %v1181
        %v1348 = vpop.f32.mrb[0].mxu0
        %v1349 = vadd.f32 0.0, %v1348
        %v1350 = vpop.f32.mrb[0].mxu0
        %1351 = vmatprep.mubr.f32.mxu0 0.0
        %1352 = vmatmul.mubr.f32.gmra.mrb[0].mxu0 %v1184
        %v1353 = vpop.f32.mrb[0].mxu0
        %v1354 = vadd.f32 0.0, %v1353
        %v1355 = vpop.f32.mrb[0].mxu0
        %1356 = vmatprep.mubr.f32.mxu0 0.0
        %1357 = vmatmul.mubr.f32.gmra.mrb[0].mxu0 %v1187
        %v1358 = vpop.f32.mrb[0].mxu0
        %v1359 = vadd.f32 0.0, %v1358
        %v1360 = vpop.f32.mrb[0].mxu0
        %1361 = vmatprep.mubr.f32.mxu0 0.0
        %1362 = vmatmul.mubr.f32.gmra.mrb[0].mxu0 %v1190
        %v1363 = vpop.f32.mrb[0].mxu0
        %v1364 = vadd.f32 0.0, %v1363
        %v1365 = vpop.f32.mrb[0].mxu0
        %1366 = vmatprep.mubr.f32.mxu0 0.0
        %1367 = vmatmul.mubr.f32.gmra.mrb[0].mxu0 %v1193
        %v1368 = vpop.f32.mrb[0].mxu0
        %v1369 = vadd.f32 0.0, %v1368
        %v1370 = vpop.f32.mrb[0].mxu0
        %1371 = vmatprep.mubr.f32.mxu0 0.0
        %1372 = vmatmul.mubr.f32.gmra.mrb[0].mxu0 %v1196
        %v1373 = vpop.f32.mrb[0].mxu0
        %v1374 = vadd.f32 0.0, %v1373
        %v1375 = vpop.f32.mrb[0].mxu0
        %1376 = vmatprep.mubr.f32.mxu0 0.0
        %1377 = vmatmul.mubr.f32.gmra.mrb[0].mxu0 %v1199
        %v1378 = vpop.f32.mrb[0].mxu0
        %v1379 = vadd.f32 0.0, %v1378
        %v1380 = vpop.f32.mrb[0].mxu0
        %1381 = vmatprep.mubr.f32.mxu0 0.0
        %1382 = vmatmul.mubr.f32.gmra.mrb[0].mxu0 %v1202
        %v1383 = vpop.f32.mrb[0].mxu0
        %v1384 = vadd.f32 0.0, %v1383
        %v1385 = vpop.f32.mrb[0].mxu0
        %1386 = vmatprep.mubr.f32.mxu0 0.0
        %1387 = vmatmul.mubr.f32.gmra.mrb[0].mxu0 %v1205
        %v1388 = vpop.f32.mrb[0].mxu0
        %v1389 = vadd.f32 0.0, %v1388
        %v1390 = vpop.f32.mrb[0].mxu0
        %1391 = vmatprep.mubr.f32.mxu0 0.0
        %1392 = vmatmul.mubr.f32.gmra.mrb[0].mxu0 %v1208
        %v1393 = vpop.f32.mrb[0].mxu0
        %v1394 = vadd.f32 0.0, %v1393
        %v1395 = vpop.f32.mrb[0].mxu0
        %1396 = vmatprep.mubr.f32.mxu0 0.0
        %1397 = vmatmul.mubr.f32.gmra.mrb[0].mxu0 %v1211
        %v1398 = vpop.f32.mrb[0].mxu0
        %v1399 = vadd.f32 0.0, %v1398
        %v1400 = vpop.f32.mrb[0].mxu0
        %1401 = vmatprep.mubr.f32.mxu0 0.0
        %1402 = vmatmul.mubr.f32.gmra.mrb[0].mxu0 %v1214
        %v1403 = vpop.f32.mrb[0].mxu0
        %v1404 = vadd.f32 0.0, %v1403
        %v1405 = vpop.f32.mrb[0].mxu0
        %1406 = vmatprep.mubr.f32.mxu0 0.0
        %1407 = vmatmul.mubr.f32.gmra.mrb[0].mxu0 %v1217
        %v1408 = vpop.f32.mrb[0].mxu0
        %v1409 = vadd.f32 0.0, %v1408
        %v1410 = vpop.f32.mrb[0].mxu0
        %1411 = vmatprep.mubr.f32.mxu0 0.0
        %1412 = vmatmul.mubr.f32.gmra.mrb[0].mxu0 %v1220
        %v1413 = vpop.f32.mrb[0].mxu0
        %v1414 = vadd.f32 0.0, %v1413
        %v1415 = vpop.f32.mrb[0].mxu0
        %1416 = vmatprep.mubr.f32.mxu0 0.0
        %1417 = vmatmul.mubr.f32.gmra.mrb[0].mxu0 %v1223
        %v1418 = vpop.f32.mrb[0].mxu0
        %v1419 = vadd.f32 0.0, %v1418
        %v1420 = vpop.f32.mrb[0].mxu0
        %1421 = vmatprep.mubr.f32.mxu0 0.0
        %1422 = vmatmul.mubr.f32.gmra.mrb[0].mxu0 %v1226
        %v1423 = vpop.f32.mrb[0].mxu0
        %v1424 = vadd.f32 0.0, %v1423
        %v1425 = vpop.f32.mrb[0].mxu0
        %1426 = vmatprep.mubr.f32.mxu0 0.0
        %1427 = vmatmul.mubr.f32.gmra.mrb[0].mxu0 %v1229
        %v1428 = vpop.f32.mrb[0].mxu0
        %v1429 = vadd.f32 0.0, %v1428
        %v1430 = vpop.f32.mrb[0].mxu0
        %1431 = vmatprep.mubr.f32.mxu0 0.0
        %1432 = vmatmul.mubr.f32.gmra.mrb[0].mxu0 %v1232
        %v1433 = vpop.f32.mrb[0].mxu0
        %v1434 = vadd.f32 0.0, %v1433
        %v1435 = vpop.f32.mrb[0].mxu0
        %1436 = vmatprep.mubr.f32.mxu0 0.0
        %1437 = vmatmul.mubr.f32.gmra.mrb[0].mxu0 %v1235
        %v1438 = vpop.f32.mrb[0].mxu0
        %v1439 = vadd.f32 0.0, %v1438
        %v1440 = vpop.f32.mrb[0].mxu0
        %1441 = vmatprep.mubr.f32.mxu0 0.0
        %1442 = vmatmul.mubr.f32.gmra.mrb[0].mxu0 %v1238
        %v1443 = vpop.f32.mrb[0].mxu0
        %v1444 = vadd.f32 0.0, %v1443
        %v1445 = vpop.f32.mrb[0].mxu0
        %1446 = vmatprep.mubr.f32.mxu0 0.0
        %1447 = vmatmul.mubr.f32.gmra.mrb[0].mxu0 %v1241
        %v1448 = vpop.f32.mrb[0].mxu0
        %v1449 = vadd.f32 0.0, %v1448
        %v1450 = vpop.f32.mrb[0].mxu0
        %1451 = vmatprep.mubr.f32.mxu0 0.0
        %1452 = vmatmul.mubr.f32.gmra.mrb[0].mxu0 %v1244
        %v1453 = vpop.f32.mrb[0].mxu0
        %v1454 = vadd.f32 0.0, %v1453
        %v1455 = vpop.f32.mrb[0].mxu0
        %1456 = vmatprep.mubr.f32.mxu0 0.0
        %1457 = vmatmul.mubr.f32.gmra.mrb[0].mxu0 %v1247
        %v1458 = vpop.f32.mrb[0].mxu0
        %v1459 = vadd.f32 0.0, %v1458
        %v1460 = vpop.f32.mrb[0].mxu0
        %1461 = vmatprep.mubr.f32.mxu0 0.0
        %1462 = vmatmul.mubr.f32.gmra.mrb[0].mxu0 %v1250
        %v1463 = vpop.f32.mrb[0].mxu0
        %v1464 = vadd.f32 0.0, %v1463
        %v1465 = vpop.f32.mrb[0].mxu0
        %1466 = vmatprep.mubr.f32.mxu0 0.0
        %1467 = vmatmul.mubr.f32.gmra.mrb[0].mxu0 %v1253
        %v1468 = vpop.f32.mrb[0].mxu0
        %v1469 = vadd.f32 0.0, %v1468
        %v1470 = vpop.f32.mrb[0].mxu0
        %1471 = vmatprep.mubr.f32.mxu0 0.0
        %1472 = vmatmul.mubr.f32.gmra.mrb[0].mxu0 %v1256
        %v1473 = vpop.f32.mrb[0].mxu0
        %v1474 = vadd.f32 0.0, %v1473
        %v1475 = vpop.f32.mrb[0].mxu0
        %1476 = vmatprep.mubr.f32.mxu0 0.0
        %1477 = vmatmul.mubr.f32.gmra.mrb[0].mxu0 %v1259
        %v1478 = vpop.f32.mrb[0].mxu0
        %v1479 = vadd.f32 0.0, %v1478
        %v1480 = vpop.f32.mrb[0].mxu0
        %1481 = vmatprep.mubr.f32.mxu0 0.0
        %1482 = vmatmul.mubr.f32.gmra.mrb[0].mxu0 %v1262
        %v1483 = vpop.f32.mrb[0].mxu0
        %v1484 = vadd.f32 0.0, %v1483
        %v1485 = vpop.f32.mrb[0].mxu0
        %1486 = vmatprep.mubr.f32.mxu0 0.0
        %1487 = vmatmul.mubr.f32.gmra.mrb[0].mxu0 %v1265
        %v1488 = vpop.f32.mrb[0].mxu0
        %v1489 = vadd.f32 0.0, %v1488
        %v1490 = vpop.f32.mrb[0].mxu0
        %1491 = vdwg.mxu0
        %v1492 = vadd.f32 %v1131, %v1334
        %v1493 = vadd.f32 %v1132, %v1339
        %v1494 = vadd.f32 %v1133, %v1344
        %v1495 = vadd.f32 %v1134, %v1349
        %v1496 = vadd.f32 %v1135, %v1354
        %v1497 = vadd.f32 %v1136, %v1359
        %v1498 = vadd.f32 %v1137, %v1364
        %v1499 = vadd.f32 %v1138, %v1369
        %v1500 = vadd.f32 %v1139, %v1374
        %v1501 = vadd.f32 %v1140, %v1379
        %v1502 = vadd.f32 %v1141, %v1384
        %v1503 = vadd.f32 %v1142, %v1389
        %v1504 = vadd.f32 %v1143, %v1394
        %v1505 = vadd.f32 %v1144, %v1399
        %v1506 = vadd.f32 %v1145, %v1404
        %v1507 = vadd.f32 %v1146, %v1409
        %v1508 = vadd.f32 %v1147, %v1414
        %v1509 = vadd.f32 %v1148, %v1419
        %v1510 = vadd.f32 %v1149, %v1424
        %v1511 = vadd.f32 %v1150, %v1429
        %v1512 = vadd.f32 %v1151, %v1434
        %v1513 = vadd.f32 %v1152, %v1439
        %v1514 = vadd.f32 %v1153, %v1444
        %v1515 = vadd.f32 %v1154, %v1449
        %v1516 = vadd.f32 %v1155, %v1454
        %v1517 = vadd.f32 %v1156, %v1459
        %v1518 = vadd.f32 %v1157, %v1464
        %v1519 = vadd.f32 %v1158, %v1469
        %v1520 = vadd.f32 %v1159, %v1474
        %v1521 = vadd.f32 %v1160, %v1479
        %v1522 = vadd.f32 %v1161, %v1484
        %v1523 = vadd.f32 %v1162, %v1489
        %1524 = vst.msk [vmem:[#allocation5] sm:$0xff] %vm728, %v1492
        %1525 = vst.msk [vmem:[#allocation5 + $0x8] sm:$0xff] %vm728, %v1493
        %1526 = vst.msk [vmem:[#allocation5 + $0x10] sm:$0xff] %vm728, %v1494
        %1527 = vst.msk [vmem:[#allocation5 + $0x18] sm:$0xff] %vm728, %v1495
        %1528 = vst.msk [vmem:[#allocation5 + $0x20] sm:$0xff] %vm728, %v1496
        %1529 = vst.msk [vmem:[#allocation5 + $0x28] sm:$0xff] %vm728, %v1497
        %1530 = vst.msk [vmem:[#allocation5 + $0x30] sm:$0xff] %vm728, %v1498
        %1531 = vst.msk [vmem:[#allocation5 + $0x38] sm:$0xff] %vm728, %v1499
        %1532 = vst.msk [vmem:[#allocation5 + $0x40] sm:$0xff] %vm728, %v1500
        %1533 = vst.msk [vmem:[#allocation5 + $0x48] sm:$0xff] %vm728, %v1501
        %1534 = vst.msk [vmem:[#allocation5 + $0x50] sm:$0xff] %vm728, %v1502
        %1535 = vst.msk [vmem:[#allocation5 + $0x58] sm:$0xff] %vm728, %v1503
        %1536 = vst.msk [vmem:[#allocation5 + $0x60] sm:$0xff] %vm728, %v1504
        %1537 = vst.msk [vmem:[#allocation5 + $0x68] sm:$0xff] %vm728, %v1505
        %1538 = vst.msk [vmem:[#allocation5 + $0x70] sm:$0xff] %vm728, %v1506
        %1539 = vst.msk [vmem:[#allocation5 + $0x78] sm:$0xff] %vm728, %v1507
        %1540 = vst.msk [vmem:[#allocation5 + $0x80] sm:$0xff] %vm728, %v1508
        %1541 = vst.msk [vmem:[#allocation5 + $0x88] sm:$0xff] %vm728, %v1509
        %1542 = vst.msk [vmem:[#allocation5 + $0x90] sm:$0xff] %vm728, %v1510
        %1543 = vst.msk [vmem:[#allocation5 + $0x98] sm:$0xff] %vm728, %v1511
        %1544 = vst.msk [vmem:[#allocation5 + $0xa0] sm:$0xff] %vm728, %v1512
        %1545 = vst.msk [vmem:[#allocation5 + $0xa8] sm:$0xff] %vm728, %v1513
        %1546 = vst.msk [vmem:[#allocation5 + $0xb0] sm:$0xff] %vm728, %v1514
        %1547 = vst.msk [vmem:[#allocation5 + $0xb8] sm:$0xff] %vm728, %v1515
        %1548 = vst.msk [vmem:[#allocation5 + $0xc0] sm:$0xff] %vm728, %v1516
        %1549 = vst.msk [vmem:[#allocation5 + $0xc8] sm:$0xff] %vm728, %v1517
        %1550 = vst.msk [vmem:[#allocation5 + $0xd0] sm:$0xff] %vm728, %v1518
        %1551 = vst.msk [vmem:[#allocation5 + $0xd8] sm:$0xff] %vm728, %v1519
        %1552 = vst.msk [vmem:[#allocation5 + $0xe0] sm:$0xff] %vm728, %v1520
        %1553 = vst.msk [vmem:[#allocation5 + $0xe8] sm:$0xff] %vm728, %v1521
        %1554 = vst.msk [vmem:[#allocation5 + $0xf0] sm:$0xff] %vm728, %v1522
        %1555 = vst.msk [vmem:[#allocation5 + $0xf8] sm:$0xff] %vm728, %v1523
        %s1556 = scalar_lea.vmem [#allocation2], 288
        %v1557 = vld [vmem:[%s1556] sm:$0xff]
        %v1558 = vld [vmem:[%s1556 + $0x8] sm:$0xff]
        %v1559 = vld [vmem:[%s1556 + $0x10] sm:$0xff]
        %v1560 = vld [vmem:[%s1556 + $0x18] sm:$0xff]
        %v1561 = vld [vmem:[%s1556 + $0x20] sm:$0xff]
        %v1562 = vld [vmem:[%s1556 + $0x28] sm:$0xff]
        %v1563 = vld [vmem:[%s1556 + $0x30] sm:$0xff]
        %v1564 = vld [vmem:[%s1556 + $0x38] sm:$0xff]
        %v1565 = vld [vmem:[%s1556 + $0x40] sm:$0xff]
        %v1566 = vld [vmem:[%s1556 + $0x48] sm:$0xff]
        %v1567 = vld [vmem:[%s1556 + $0x50] sm:$0xff]
        %v1568 = vld [vmem:[%s1556 + $0x58] sm:$0xff]
        %v1569 = vld [vmem:[%s1556 + $0x60] sm:$0xff]
        %v1570 = vld [vmem:[%s1556 + $0x68] sm:$0xff]
        %v1571 = vld [vmem:[%s1556 + $0x70] sm:$0xff]
        %v1572 = vld [vmem:[%s1556 + $0x78] sm:$0xff]
        %v1573 = vld [vmem:[%s1556 + $0x80] sm:$0xff]
        %v1574 = vld [vmem:[%s1556 + $0x88] sm:$0xff]
        %v1575 = vld [vmem:[%s1556 + $0x90] sm:$0xff]
        %v1576 = vld [vmem:[%s1556 + $0x98] sm:$0xff]
        %v1577 = vld [vmem:[%s1556 + $0xa0] sm:$0xff]
        %v1578 = vld [vmem:[%s1556 + $0xa8] sm:$0xff]
        %v1579 = vld [vmem:[%s1556 + $0xb0] sm:$0xff]
        %v1580 = vld [vmem:[%s1556 + $0xb8] sm:$0xff]
        %v1581 = vld [vmem:[%s1556 + $0xc0] sm:$0xff]
        %v1582 = vld [vmem:[%s1556 + $0xc8] sm:$0xff]
        %v1583 = vld [vmem:[%s1556 + $0xd0] sm:$0xff]
        %v1584 = vld [vmem:[%s1556 + $0xd8] sm:$0xff]
        %v1585 = vld [vmem:[%s1556 + $0xe0] sm:$0xff]
        %v1586 = vld [vmem:[%s1556 + $0xe8] sm:$0xff]
        %v1587 = vld [vmem:[%s1556 + $0xf0] sm:$0xff]
        %v1588 = vld [vmem:[%s1556 + $0xf8] sm:$0xff]
        %v1589 = vld [vmem:[#allocation5] sm:$0xff]
        %v1590 = vld [vmem:[#allocation5 + $0x8] sm:$0xff]
        %v1591 = vld [vmem:[#allocation5 + $0x10] sm:$0xff]
        %v1592 = vld [vmem:[#allocation5 + $0x18] sm:$0xff]
        %v1593 = vld [vmem:[#allocation5 + $0x20] sm:$0xff]
        %v1594 = vld [vmem:[#allocation5 + $0x28] sm:$0xff]
        %v1595 = vld [vmem:[#allocation5 + $0x30] sm:$0xff]
        %v1596 = vld [vmem:[#allocation5 + $0x38] sm:$0xff]
        %v1597 = vld [vmem:[#allocation5 + $0x40] sm:$0xff]
        %v1598 = vld [vmem:[#allocation5 + $0x48] sm:$0xff]
        %v1599 = vld [vmem:[#allocation5 + $0x50] sm:$0xff]
        %v1600 = vld [vmem:[#allocation5 + $0x58] sm:$0xff]
        %v1601 = vld [vmem:[#allocation5 + $0x60] sm:$0xff]
        %v1602 = vld [vmem:[#allocation5 + $0x68] sm:$0xff]
        %v1603 = vld [vmem:[#allocation5 + $0x70] sm:$0xff]
        %v1604 = vld [vmem:[#allocation5 + $0x78] sm:$0xff]
        %v1605 = vld [vmem:[#allocation5 + $0x80] sm:$0xff]
        %v1606 = vld [vmem:[#allocation5 + $0x88] sm:$0xff]
        %v1607 = vld [vmem:[#allocation5 + $0x90] sm:$0xff]
        %v1608 = vld [vmem:[#allocation5 + $0x98] sm:$0xff]
        %v1609 = vld [vmem:[#allocation5 + $0xa0] sm:$0xff]
        %v1610 = vld [vmem:[#allocation5 + $0xa8] sm:$0xff]
        %v1611 = vld [vmem:[#allocation5 + $0xb0] sm:$0xff]
        %v1612 = vld [vmem:[#allocation5 + $0xb8] sm:$0xff]
        %v1613 = vld [vmem:[#allocation5 + $0xc0] sm:$0xff]
        %v1614 = vld [vmem:[#allocation5 + $0xc8] sm:$0xff]
        %v1615 = vld [vmem:[#allocation5 + $0xd0] sm:$0xff]
        %v1616 = vld [vmem:[#allocation5 + $0xd8] sm:$0xff]
        %v1617 = vld [vmem:[#allocation5 + $0xe0] sm:$0xff]
        %v1618 = vld [vmem:[#allocation5 + $0xe8] sm:$0xff]
        %v1619 = vld [vmem:[#allocation5 + $0xf0] sm:$0xff]
        %v1620 = vld [vmem:[#allocation5 + $0xf8] sm:$0xff]
        %s1621 = scalar_lea.vmem %s3, 64
        %v1622 = vld [vmem:[%s1621] sm:$0xff]
        %v1623 = vld [vmem:[%s1621 + $0x8] sm:$0xff]
        %v1624 = vld [vmem:[%s1621 + $0x10] sm:$0xff]
        %v1625 = vld [vmem:[%s1621 + $0x18] sm:$0xff]
        %v1626 = vld [vmem:[%s1621 + $0x20] sm:$0xff]
        %v1627 = vld [vmem:[%s1621 + $0x28] sm:$0xff]
        %v1628 = vld [vmem:[%s1621 + $0x30] sm:$0xff]
        %v1629 = vld [vmem:[%s1621 + $0x38] sm:$0xff]
        %v1631 = vsel %vm728, %v1557, 0
        %v1634 = vsel %vm728, %v1558, 0
        %v1637 = vsel %vm728, %v1559, 0
        %v1640 = vsel %vm728, %v1560, 0
        %v1643 = vsel %vm728, %v1561, 0
        %v1646 = vsel %vm728, %v1562, 0
        %v1649 = vsel %vm728, %v1563, 0
        %v1652 = vsel %vm728, %v1564, 0
        %v1655 = vsel %vm728, %v1565, 0
        %v1658 = vsel %vm728, %v1566, 0
        %v1661 = vsel %vm728, %v1567, 0
        %v1664 = vsel %vm728, %v1568, 0
        %v1667 = vsel %vm728, %v1569, 0
        %v1670 = vsel %vm728, %v1570, 0
        %v1673 = vsel %vm728, %v1571, 0
        %v1676 = vsel %vm728, %v1572, 0
        %v1679 = vsel %vm728, %v1573, 0
        %v1682 = vsel %vm728, %v1574, 0
        %v1685 = vsel %vm728, %v1575, 0
        %v1688 = vsel %vm728, %v1576, 0
        %v1691 = vsel %vm728, %v1577, 0
        %v1694 = vsel %vm728, %v1578, 0
        %v1697 = vsel %vm728, %v1579, 0
        %v1700 = vsel %vm728, %v1580, 0
        %v1703 = vsel %vm728, %v1581, 0
        %v1706 = vsel %vm728, %v1582, 0
        %v1709 = vsel %vm728, %v1583, 0
        %v1712 = vsel %vm728, %v1584, 0
        %v1715 = vsel %vm728, %v1585, 0
        %v1718 = vsel %vm728, %v1586, 0
        %v1721 = vsel %vm728, %v1587, 0
        %v1724 = vsel %vm728, %v1588, 0
        %1726 = vmatprep.subr.mxu0 0.0
        %1727 = vmatpush1.msra.mxu0 %v1622
        %1728 = vmatprep.subr.mxu0 0.0
        %1729 = vmatpush1.msra.mxu0 %v1623
        %1730 = vmatprep.subr.mxu0 0.0
        %1731 = vmatpush1.msra.mxu0 %v1624
        %1732 = vmatprep.subr.mxu0 0.0
        %1733 = vmatpush1.msra.mxu0 %v1625
        %1734 = vmatprep.subr.mxu0 0.0
        %1735 = vmatpush1.msra.mxu0 %v1626
        %1736 = vmatprep.subr.mxu0 0.0
        %1737 = vmatpush1.msra.mxu0 %v1627
        %1738 = vmatprep.subr.mxu0 0.0
        %1739 = vmatpush1.msra.mxu0 %v1628
        %1740 = vmatprep.subr.mxu0 0.0
        %1741 = vmatpush1.msra.mxu0 %v1629
        %1742 = vmatprep.subr.mxu0 0.0
        %1743 = vmatpush1.msra.mxu0 0.0
        %1744 = vmatprep.subr.mxu0 0.0
        %1745 = vmatpush1.msra.mxu0 0.0
        %1746 = vmatprep.subr.mxu0 0.0
        %1747 = vmatpush1.msra.mxu0 0.0
        %1748 = vmatprep.subr.mxu0 0.0
        %1749 = vmatpush1.msra.mxu0 0.0
        %1750 = vmatprep.subr.mxu0 0.0
        %1751 = vmatpush1.msra.mxu0 0.0
        %1752 = vmatprep.subr.mxu0 0.0
        %1753 = vmatpush1.msra.mxu0 0.0
        %1754 = vmatprep.subr.mxu0 0.0
        %1755 = vmatpush1.msra.mxu0 0.0
        %1756 = vmatprep.subr.mxu0 0.0
        %1757 = vmatpush1.msra.mxu0 0.0
        %1758 = vmatprep.subr.mxu0 0.0
        %1759 = vmatpush1.msra.mxu0 0.0
        %1760 = vmatprep.subr.mxu0 0.0
        %1761 = vmatpush1.msra.mxu0 0.0
        %1762 = vmatprep.subr.mxu0 0.0
        %1763 = vmatpush1.msra.mxu0 0.0
        %1764 = vmatprep.subr.mxu0 0.0
        %1765 = vmatpush1.msra.mxu0 0.0
        %1766 = vmatprep.subr.mxu0 0.0
        %1767 = vmatpush1.msra.mxu0 0.0
        %1768 = vmatprep.subr.mxu0 0.0
        %1769 = vmatpush1.msra.mxu0 0.0
        %1770 = vmatprep.subr.mxu0 0.0
        %1771 = vmatpush1.msra.mxu0 0.0
        %1772 = vmatprep.subr.mxu0 0.0
        %1773 = vmatpush1.msra.mxu0 0.0
        %1774 = vmatprep.subr.mxu0 0.0
        %1775 = vmatpush1.msra.mxu0 0.0
        %1776 = vmatprep.subr.mxu0 0.0
        %1777 = vmatpush1.msra.mxu0 0.0
        %1778 = vmatprep.subr.mxu0 0.0
        %1779 = vmatpush1.msra.mxu0 0.0
        %1780 = vmatprep.subr.mxu0 0.0
        %1781 = vmatpush1.msra.mxu0 0.0
        %1782 = vmatprep.subr.mxu0 0.0
        %1783 = vmatpush1.msra.mxu0 0.0
        %1784 = vmatprep.subr.mxu0 0.0
        %1785 = vmatpush1.msra.mxu0 0.0
        %1786 = vmatprep.subr.mxu0 0.0
        %1787 = vmatpush1.msra.mxu0 0.0
        %1788 = vmatprep.subr.mxu0 0.0
        %1789 = vmatpush1.msra.mxu0 0.0
        %1790 = vmatprep.mubr.f32.mxu0 0.0
        %1791 = vmatmul.mubr.f32.gmra.mrb[0].mxu0 %v1631
        %v1792 = vpop.f32.mrb[0].mxu0
        %v1793 = vadd.f32 0.0, %v1792
        %v1794 = vpop.f32.mrb[0].mxu0
        %1795 = vmatprep.mubr.f32.mxu0 0.0
        %1796 = vmatmul.mubr.f32.gmra.mrb[0].mxu0 %v1634
        %v1797 = vpop.f32.mrb[0].mxu0
        %v1798 = vadd.f32 0.0, %v1797
        %v1799 = vpop.f32.mrb[0].mxu0
        %1800 = vmatprep.mubr.f32.mxu0 0.0
        %1801 = vmatmul.mubr.f32.gmra.mrb[0].mxu0 %v1637
        %v1802 = vpop.f32.mrb[0].mxu0
        %v1803 = vadd.f32 0.0, %v1802
        %v1804 = vpop.f32.mrb[0].mxu0
        %1805 = vmatprep.mubr.f32.mxu0 0.0
        %1806 = vmatmul.mubr.f32.gmra.mrb[0].mxu0 %v1640
        %v1807 = vpop.f32.mrb[0].mxu0
        %v1808 = vadd.f32 0.0, %v1807
        %v1809 = vpop.f32.mrb[0].mxu0
        %1810 = vmatprep.mubr.f32.mxu0 0.0
        %1811 = vmatmul.mubr.f32.gmra.mrb[0].mxu0 %v1643
        %v1812 = vpop.f32.mrb[0].mxu0
        %v1813 = vadd.f32 0.0, %v1812
        %v1814 = vpop.f32.mrb[0].mxu0
        %1815 = vmatprep.mubr.f32.mxu0 0.0
        %1816 = vmatmul.mubr.f32.gmra.mrb[0].mxu0 %v1646
        %v1817 = vpop.f32.mrb[0].mxu0
        %v1818 = vadd.f32 0.0, %v1817
        %v1819 = vpop.f32.mrb[0].mxu0
        %1820 = vmatprep.mubr.f32.mxu0 0.0
        %1821 = vmatmul.mubr.f32.gmra.mrb[0].mxu0 %v1649
        %v1822 = vpop.f32.mrb[0].mxu0
        %v1823 = vadd.f32 0.0, %v1822
        %v1824 = vpop.f32.mrb[0].mxu0
        %1825 = vmatprep.mubr.f32.mxu0 0.0
        %1826 = vmatmul.mubr.f32.gmra.mrb[0].mxu0 %v1652
        %v1827 = vpop.f32.mrb[0].mxu0
        %v1828 = vadd.f32 0.0, %v1827
        %v1829 = vpop.f32.mrb[0].mxu0
        %1830 = vmatprep.mubr.f32.mxu0 0.0
        %1831 = vmatmul.mubr.f32.gmra.mrb[0].mxu0 %v1655
        %v1832 = vpop.f32.mrb[0].mxu0
        %v1833 = vadd.f32 0.0, %v1832
        %v1834 = vpop.f32.mrb[0].mxu0
        %1835 = vmatprep.mubr.f32.mxu0 0.0
        %1836 = vmatmul.mubr.f32.gmra.mrb[0].mxu0 %v1658
        %v1837 = vpop.f32.mrb[0].mxu0
        %v1838 = vadd.f32 0.0, %v1837
        %v1839 = vpop.f32.mrb[0].mxu0
        %1840 = vmatprep.mubr.f32.mxu0 0.0
        %1841 = vmatmul.mubr.f32.gmra.mrb[0].mxu0 %v1661
        %v1842 = vpop.f32.mrb[0].mxu0
        %v1843 = vadd.f32 0.0, %v1842
        %v1844 = vpop.f32.mrb[0].mxu0
        %1845 = vmatprep.mubr.f32.mxu0 0.0
        %1846 = vmatmul.mubr.f32.gmra.mrb[0].mxu0 %v1664
        %v1847 = vpop.f32.mrb[0].mxu0
        %v1848 = vadd.f32 0.0, %v1847
        %v1849 = vpop.f32.mrb[0].mxu0
        %1850 = vmatprep.mubr.f32.mxu0 0.0
        %1851 = vmatmul.mubr.f32.gmra.mrb[0].mxu0 %v1667
        %v1852 = vpop.f32.mrb[0].mxu0
        %v1853 = vadd.f32 0.0, %v1852
        %v1854 = vpop.f32.mrb[0].mxu0
        %1855 = vmatprep.mubr.f32.mxu0 0.0
        %1856 = vmatmul.mubr.f32.gmra.mrb[0].mxu0 %v1670
        %v1857 = vpop.f32.mrb[0].mxu0
        %v1858 = vadd.f32 0.0, %v1857
        %v1859 = vpop.f32.mrb[0].mxu0
        %1860 = vmatprep.mubr.f32.mxu0 0.0
        %1861 = vmatmul.mubr.f32.gmra.mrb[0].mxu0 %v1673
        %v1862 = vpop.f32.mrb[0].mxu0
        %v1863 = vadd.f32 0.0, %v1862
        %v1864 = vpop.f32.mrb[0].mxu0
        %1865 = vmatprep.mubr.f32.mxu0 0.0
        %1866 = vmatmul.mubr.f32.gmra.mrb[0].mxu0 %v1676
        %v1867 = vpop.f32.mrb[0].mxu0
        %v1868 = vadd.f32 0.0, %v1867
        %v1869 = vpop.f32.mrb[0].mxu0
        %1870 = vmatprep.mubr.f32.mxu0 0.0
        %1871 = vmatmul.mubr.f32.gmra.mrb[0].mxu0 %v1679
        %v1872 = vpop.f32.mrb[0].mxu0
        %v1873 = vadd.f32 0.0, %v1872
        %v1874 = vpop.f32.mrb[0].mxu0
        %1875 = vmatprep.mubr.f32.mxu0 0.0
        %1876 = vmatmul.mubr.f32.gmra.mrb[0].mxu0 %v1682
        %v1877 = vpop.f32.mrb[0].mxu0
        %v1878 = vadd.f32 0.0, %v1877
        %v1879 = vpop.f32.mrb[0].mxu0
        %1880 = vmatprep.mubr.f32.mxu0 0.0
        %1881 = vmatmul.mubr.f32.gmra.mrb[0].mxu0 %v1685
        %v1882 = vpop.f32.mrb[0].mxu0
        %v1883 = vadd.f32 0.0, %v1882
        %v1884 = vpop.f32.mrb[0].mxu0
        %1885 = vmatprep.mubr.f32.mxu0 0.0
        %1886 = vmatmul.mubr.f32.gmra.mrb[0].mxu0 %v1688
        %v1887 = vpop.f32.mrb[0].mxu0
        %v1888 = vadd.f32 0.0, %v1887
        %v1889 = vpop.f32.mrb[0].mxu0
        %1890 = vmatprep.mubr.f32.mxu0 0.0
        %1891 = vmatmul.mubr.f32.gmra.mrb[0].mxu0 %v1691
        %v1892 = vpop.f32.mrb[0].mxu0
        %v1893 = vadd.f32 0.0, %v1892
        %v1894 = vpop.f32.mrb[0].mxu0
        %1895 = vmatprep.mubr.f32.mxu0 0.0
        %1896 = vmatmul.mubr.f32.gmra.mrb[0].mxu0 %v1694
        %v1897 = vpop.f32.mrb[0].mxu0
        %v1898 = vadd.f32 0.0, %v1897
        %v1899 = vpop.f32.mrb[0].mxu0
        %1900 = vmatprep.mubr.f32.mxu0 0.0
        %1901 = vmatmul.mubr.f32.gmra.mrb[0].mxu0 %v1697
        %v1902 = vpop.f32.mrb[0].mxu0
        %v1903 = vadd.f32 0.0, %v1902
        %v1904 = vpop.f32.mrb[0].mxu0
        %1905 = vmatprep.mubr.f32.mxu0 0.0
        %1906 = vmatmul.mubr.f32.gmra.mrb[0].mxu0 %v1700
        %v1907 = vpop.f32.mrb[0].mxu0
        %v1908 = vadd.f32 0.0, %v1907
        %v1909 = vpop.f32.mrb[0].mxu0
        %1910 = vmatprep.mubr.f32.mxu0 0.0
        %1911 = vmatmul.mubr.f32.gmra.mrb[0].mxu0 %v1703
        %v1912 = vpop.f32.mrb[0].mxu0
        %v1913 = vadd.f32 0.0, %v1912
        %v1914 = vpop.f32.mrb[0].mxu0
        %1915 = vmatprep.mubr.f32.mxu0 0.0
        %1916 = vmatmul.mubr.f32.gmra.mrb[0].mxu0 %v1706
        %v1917 = vpop.f32.mrb[0].mxu0
        %v1918 = vadd.f32 0.0, %v1917
        %v1919 = vpop.f32.mrb[0].mxu0
        %1920 = vmatprep.mubr.f32.mxu0 0.0
        %1921 = vmatmul.mubr.f32.gmra.mrb[0].mxu0 %v1709
        %v1922 = vpop.f32.mrb[0].mxu0
        %v1923 = vadd.f32 0.0, %v1922
        %v1924 = vpop.f32.mrb[0].mxu0
        %1925 = vmatprep.mubr.f32.mxu0 0.0
        %1926 = vmatmul.mubr.f32.gmra.mrb[0].mxu0 %v1712
        %v1927 = vpop.f32.mrb[0].mxu0
        %v1928 = vadd.f32 0.0, %v1927
        %v1929 = vpop.f32.mrb[0].mxu0
        %1930 = vmatprep.mubr.f32.mxu0 0.0
        %1931 = vmatmul.mubr.f32.gmra.mrb[0].mxu0 %v1715
        %v1932 = vpop.f32.mrb[0].mxu0
        %v1933 = vadd.f32 0.0, %v1932
        %v1934 = vpop.f32.mrb[0].mxu0
        %1935 = vmatprep.mubr.f32.mxu0 0.0
        %1936 = vmatmul.mubr.f32.gmra.mrb[0].mxu0 %v1718
        %v1937 = vpop.f32.mrb[0].mxu0
        %v1938 = vadd.f32 0.0, %v1937
        %v1939 = vpop.f32.mrb[0].mxu0
        %1940 = vmatprep.mubr.f32.mxu0 0.0
        %1941 = vmatmul.mubr.f32.gmra.mrb[0].mxu0 %v1721
        %v1942 = vpop.f32.mrb[0].mxu0
        %v1943 = vadd.f32 0.0, %v1942
        %v1944 = vpop.f32.mrb[0].mxu0
        %1945 = vmatprep.mubr.f32.mxu0 0.0
        %1946 = vmatmul.mubr.f32.gmra.mrb[0].mxu0 %v1724
        %v1947 = vpop.f32.mrb[0].mxu0
        %v1948 = vadd.f32 0.0, %v1947
        %v1949 = vpop.f32.mrb[0].mxu0
        %1950 = vdwg.mxu0
        %v1951 = vadd.f32 %v1589, %v1793
        %v1952 = vadd.f32 %v1590, %v1798
        %v1953 = vadd.f32 %v1591, %v1803
        %v1954 = vadd.f32 %v1592, %v1808
        %v1955 = vadd.f32 %v1593, %v1813
        %v1956 = vadd.f32 %v1594, %v1818
        %v1957 = vadd.f32 %v1595, %v1823
        %v1958 = vadd.f32 %v1596, %v1828
        %v1959 = vadd.f32 %v1597, %v1833
        %v1960 = vadd.f32 %v1598, %v1838
        %v1961 = vadd.f32 %v1599, %v1843
        %v1962 = vadd.f32 %v1600, %v1848
        %v1963 = vadd.f32 %v1601, %v1853
        %v1964 = vadd.f32 %v1602, %v1858
        %v1965 = vadd.f32 %v1603, %v1863
        %v1966 = vadd.f32 %v1604, %v1868
        %v1967 = vadd.f32 %v1605, %v1873
        %v1968 = vadd.f32 %v1606, %v1878
        %v1969 = vadd.f32 %v1607, %v1883
        %v1970 = vadd.f32 %v1608, %v1888
        %v1971 = vadd.f32 %v1609, %v1893
        %v1972 = vadd.f32 %v1610, %v1898
        %v1973 = vadd.f32 %v1611, %v1903
        %v1974 = vadd.f32 %v1612, %v1908
        %v1975 = vadd.f32 %v1613, %v1913
        %v1976 = vadd.f32 %v1614, %v1918
        %v1977 = vadd.f32 %v1615, %v1923
        %v1978 = vadd.f32 %v1616, %v1928
        %v1979 = vadd.f32 %v1617, %v1933
        %v1980 = vadd.f32 %v1618, %v1938
        %v1981 = vadd.f32 %v1619, %v1943
        %v1982 = vadd.f32 %v1620, %v1948
        %1983 = vst.msk [vmem:[#allocation5] sm:$0xff] %vm728, %v1951
        %1984 = vst.msk [vmem:[#allocation5 + $0x8] sm:$0xff] %vm728, %v1952
        %1985 = vst.msk [vmem:[#allocation5 + $0x10] sm:$0xff] %vm728, %v1953
        %1986 = vst.msk [vmem:[#allocation5 + $0x18] sm:$0xff] %vm728, %v1954
        %1987 = vst.msk [vmem:[#allocation5 + $0x20] sm:$0xff] %vm728, %v1955
        %1988 = vst.msk [vmem:[#allocation5 + $0x28] sm:$0xff] %vm728, %v1956
        %1989 = vst.msk [vmem:[#allocation5 + $0x30] sm:$0xff] %vm728, %v1957
        %1990 = vst.msk [vmem:[#allocation5 + $0x38] sm:$0xff] %vm728, %v1958
        %1991 = vst.msk [vmem:[#allocation5 + $0x40] sm:$0xff] %vm728, %v1959
        %1992 = vst.msk [vmem:[#allocation5 + $0x48] sm:$0xff] %vm728, %v1960
        %1993 = vst.msk [vmem:[#allocation5 + $0x50] sm:$0xff] %vm728, %v1961
        %1994 = vst.msk [vmem:[#allocation5 + $0x58] sm:$0xff] %vm728, %v1962
        %1995 = vst.msk [vmem:[#allocation5 + $0x60] sm:$0xff] %vm728, %v1963
        %1996 = vst.msk [vmem:[#allocation5 + $0x68] sm:$0xff] %vm728, %v1964
        %1997 = vst.msk [vmem:[#allocation5 + $0x70] sm:$0xff] %vm728, %v1965
        %1998 = vst.msk [vmem:[#allocation5 + $0x78] sm:$0xff] %vm728, %v1966
        %1999 = vst.msk [vmem:[#allocation5 + $0x80] sm:$0xff] %vm728, %v1967
        %2000 = vst.msk [vmem:[#allocation5 + $0x88] sm:$0xff] %vm728, %v1968
        %2001 = vst.msk [vmem:[#allocation5 + $0x90] sm:$0xff] %vm728, %v1969
        %2002 = vst.msk [vmem:[#allocation5 + $0x98] sm:$0xff] %vm728, %v1970
        %2003 = vst.msk [vmem:[#allocation5 + $0xa0] sm:$0xff] %vm728, %v1971
        %2004 = vst.msk [vmem:[#allocation5 + $0xa8] sm:$0xff] %vm728, %v1972
        %2005 = vst.msk [vmem:[#allocation5 + $0xb0] sm:$0xff] %vm728, %v1973
        %2006 = vst.msk [vmem:[#allocation5 + $0xb8] sm:$0xff] %vm728, %v1974
        %2007 = vst.msk [vmem:[#allocation5 + $0xc0] sm:$0xff] %vm728, %v1975
        %2008 = vst.msk [vmem:[#allocation5 + $0xc8] sm:$0xff] %vm728, %v1976
        %2009 = vst.msk [vmem:[#allocation5 + $0xd0] sm:$0xff] %vm728, %v1977
        %2010 = vst.msk [vmem:[#allocation5 + $0xd8] sm:$0xff] %vm728, %v1978
        %2011 = vst.msk [vmem:[#allocation5 + $0xe0] sm:$0xff] %vm728, %v1979
        %2012 = vst.msk [vmem:[#allocation5 + $0xe8] sm:$0xff] %vm728, %v1980
        %2013 = vst.msk [vmem:[#allocation5 + $0xf0] sm:$0xff] %vm728, %v1981
        %2014 = vst.msk [vmem:[#allocation5 + $0xf8] sm:$0xff] %vm728, %v1982
        %s2015 = scalar_lea.vmem [#allocation2], 576
        %v2016 = vld [vmem:[%s2015] sm:$0xff]
        %v2017 = vld [vmem:[%s2015 + $0x8] sm:$0xff]
        %v2018 = vld [vmem:[%s2015 + $0x10] sm:$0xff]
        %v2019 = vld [vmem:[%s2015 + $0x18] sm:$0xff]
        %v2020 = vld [vmem:[%s2015 + $0x20] sm:$0xff]
        %v2021 = vld [vmem:[%s2015 + $0x28] sm:$0xff]
        %v2022 = vld [vmem:[%s2015 + $0x30] sm:$0xff]
        %v2023 = vld [vmem:[%s2015 + $0x38] sm:$0xff]
        %v2024 = vld [vmem:[%s2015 + $0x40] sm:$0xff]
        %v2025 = vld [vmem:[%s2015 + $0x48] sm:$0xff]
        %v2026 = vld [vmem:[%s2015 + $0x50] sm:$0xff]
        %v2027 = vld [vmem:[%s2015 + $0x58] sm:$0xff]
        %v2028 = vld [vmem:[%s2015 + $0x60] sm:$0xff]
        %v2029 = vld [vmem:[%s2015 + $0x68] sm:$0xff]
        %v2030 = vld [vmem:[%s2015 + $0x70] sm:$0xff]
        %v2031 = vld [vmem:[%s2015 + $0x78] sm:$0xff]
        %v2032 = vld [vmem:[%s2015 + $0x80] sm:$0xff]
        %v2033 = vld [vmem:[%s2015 + $0x88] sm:$0xff]
        %v2034 = vld [vmem:[%s2015 + $0x90] sm:$0xff]
        %v2035 = vld [vmem:[%s2015 + $0x98] sm:$0xff]
        %v2036 = vld [vmem:[%s2015 + $0xa0] sm:$0xff]
        %v2037 = vld [vmem:[%s2015 + $0xa8] sm:$0xff]
        %v2038 = vld [vmem:[%s2015 + $0xb0] sm:$0xff]
        %v2039 = vld [vmem:[%s2015 + $0xb8] sm:$0xff]
        %v2040 = vld [vmem:[%s2015 + $0xc0] sm:$0xff]
        %v2041 = vld [vmem:[%s2015 + $0xc8] sm:$0xff]
        %v2042 = vld [vmem:[%s2015 + $0xd0] sm:$0xff]
        %v2043 = vld [vmem:[%s2015 + $0xd8] sm:$0xff]
        %v2044 = vld [vmem:[%s2015 + $0xe0] sm:$0xff]
        %v2045 = vld [vmem:[%s2015 + $0xe8] sm:$0xff]
        %v2046 = vld [vmem:[%s2015 + $0xf0] sm:$0xff]
        %v2047 = vld [vmem:[%s2015 + $0xf8] sm:$0xff]
        %v2048 = vld [vmem:[#allocation5] sm:$0xff]
        %v2049 = vld [vmem:[#allocation5 + $0x8] sm:$0xff]
        %v2050 = vld [vmem:[#allocation5 + $0x10] sm:$0xff]
        %v2051 = vld [vmem:[#allocation5 + $0x18] sm:$0xff]
        %v2052 = vld [vmem:[#allocation5 + $0x20] sm:$0xff]
        %v2053 = vld [vmem:[#allocation5 + $0x28] sm:$0xff]
        %v2054 = vld [vmem:[#allocation5 + $0x30] sm:$0xff]
        %v2055 = vld [vmem:[#allocation5 + $0x38] sm:$0xff]
        %v2056 = vld [vmem:[#allocation5 + $0x40] sm:$0xff]
        %v2057 = vld [vmem:[#allocation5 + $0x48] sm:$0xff]
        %v2058 = vld [vmem:[#allocation5 + $0x50] sm:$0xff]
        %v2059 = vld [vmem:[#allocation5 + $0x58] sm:$0xff]
        %v2060 = vld [vmem:[#allocation5 + $0x60] sm:$0xff]
        %v2061 = vld [vmem:[#allocation5 + $0x68] sm:$0xff]
        %v2062 = vld [vmem:[#allocation5 + $0x70] sm:$0xff]
        %v2063 = vld [vmem:[#allocation5 + $0x78] sm:$0xff]
        %v2064 = vld [vmem:[#allocation5 + $0x80] sm:$0xff]
        %v2065 = vld [vmem:[#allocation5 + $0x88] sm:$0xff]
        %v2066 = vld [vmem:[#allocation5 + $0x90] sm:$0xff]
        %v2067 = vld [vmem:[#allocation5 + $0x98] sm:$0xff]
        %v2068 = vld [vmem:[#allocation5 + $0xa0] sm:$0xff]
        %v2069 = vld [vmem:[#allocation5 + $0xa8] sm:$0xff]
        %v2070 = vld [vmem:[#allocation5 + $0xb0] sm:$0xff]
        %v2071 = vld [vmem:[#allocation5 + $0xb8] sm:$0xff]
        %v2072 = vld [vmem:[#allocation5 + $0xc0] sm:$0xff]
        %v2073 = vld [vmem:[#allocation5 + $0xc8] sm:$0xff]
        %v2074 = vld [vmem:[#allocation5 + $0xd0] sm:$0xff]
        %v2075 = vld [vmem:[#allocation5 + $0xd8] sm:$0xff]
        %v2076 = vld [vmem:[#allocation5 + $0xe0] sm:$0xff]
        %v2077 = vld [vmem:[#allocation5 + $0xe8] sm:$0xff]
        %v2078 = vld [vmem:[#allocation5 + $0xf0] sm:$0xff]
        %v2079 = vld [vmem:[#allocation5 + $0xf8] sm:$0xff]
        %s2080 = scalar_lea.vmem %s3, 128
        %v2081 = vld [vmem:[%s2080] sm:$0xff]
        %v2082 = vld [vmem:[%s2080 + $0x8] sm:$0xff]
        %v2083 = vld [vmem:[%s2080 + $0x10] sm:$0xff]
        %v2084 = vld [vmem:[%s2080 + $0x18] sm:$0xff]
        %v2085 = vld [vmem:[%s2080 + $0x20] sm:$0xff]
        %v2086 = vld [vmem:[%s2080 + $0x28] sm:$0xff]
        %v2087 = vld [vmem:[%s2080 + $0x30] sm:$0xff]
        %v2088 = vld [vmem:[%s2080 + $0x38] sm:$0xff]
        %v2090 = vsel %vm728, %v2016, 0
        %v2093 = vsel %vm728, %v2017, 0
        %v2096 = vsel %vm728, %v2018, 0
        %v2099 = vsel %vm728, %v2019, 0
        %v2102 = vsel %vm728, %v2020, 0
        %v2105 = vsel %vm728, %v2021, 0
        %v2108 = vsel %vm728, %v2022, 0
        %v2111 = vsel %vm728, %v2023, 0
        %v2114 = vsel %vm728, %v2024, 0
        %v2117 = vsel %vm728, %v2025, 0
        %v2120 = vsel %vm728, %v2026, 0
        %v2123 = vsel %vm728, %v2027, 0
        %v2126 = vsel %vm728, %v2028, 0
        %v2129 = vsel %vm728, %v2029, 0
        %v2132 = vsel %vm728, %v2030, 0
        %v2135 = vsel %vm728, %v2031, 0
        %v2138 = vsel %vm728, %v2032, 0
        %v2141 = vsel %vm728, %v2033, 0
        %v2144 = vsel %vm728, %v2034, 0
        %v2147 = vsel %vm728, %v2035, 0
        %v2150 = vsel %vm728, %v2036, 0
        %v2153 = vsel %vm728, %v2037, 0
        %v2156 = vsel %vm728, %v2038, 0
        %v2159 = vsel %vm728, %v2039, 0
        %v2162 = vsel %vm728, %v2040, 0
        %v2165 = vsel %vm728, %v2041, 0
        %v2168 = vsel %vm728, %v2042, 0
        %v2171 = vsel %vm728, %v2043, 0
        %v2174 = vsel %vm728, %v2044, 0
        %v2177 = vsel %vm728, %v2045, 0
        %v2180 = vsel %vm728, %v2046, 0
        %v2183 = vsel %vm728, %v2047, 0
        %2185 = vmatprep.subr.mxu0 0.0
        %2186 = vmatpush1.msra.mxu0 %v2081
        %2187 = vmatprep.subr.mxu0 0.0
        %2188 = vmatpush1.msra.mxu0 %v2082
        %2189 = vmatprep.subr.mxu0 0.0
        %2190 = vmatpush1.msra.mxu0 %v2083
        %2191 = vmatprep.subr.mxu0 0.0
        %2192 = vmatpush1.msra.mxu0 %v2084
        %2193 = vmatprep.subr.mxu0 0.0
        %2194 = vmatpush1.msra.mxu0 %v2085
        %2195 = vmatprep.subr.mxu0 0.0
        %2196 = vmatpush1.msra.mxu0 %v2086
        %2197 = vmatprep.subr.mxu0 0.0
        %2198 = vmatpush1.msra.mxu0 %v2087
        %2199 = vmatprep.subr.mxu0 0.0
        %2200 = vmatpush1.msra.mxu0 %v2088
        %2201 = vmatprep.subr.mxu0 0.0
        %2202 = vmatpush1.msra.mxu0 0.0
        %2203 = vmatprep.subr.mxu0 0.0
        %2204 = vmatpush1.msra.mxu0 0.0
        %2205 = vmatprep.subr.mxu0 0.0
        %2206 = vmatpush1.msra.mxu0 0.0
        %2207 = vmatprep.subr.mxu0 0.0
        %2208 = vmatpush1.msra.mxu0 0.0
        %2209 = vmatprep.subr.mxu0 0.0
        %2210 = vmatpush1.msra.mxu0 0.0
        %2211 = vmatprep.subr.mxu0 0.0
        %2212 = vmatpush1.msra.mxu0 0.0
        %2213 = vmatprep.subr.mxu0 0.0
        %2214 = vmatpush1.msra.mxu0 0.0
        %2215 = vmatprep.subr.mxu0 0.0
        %2216 = vmatpush1.msra.mxu0 0.0
        %2217 = vmatprep.subr.mxu0 0.0
        %2218 = vmatpush1.msra.mxu0 0.0
        %2219 = vmatprep.subr.mxu0 0.0
        %2220 = vmatpush1.msra.mxu0 0.0
        %2221 = vmatprep.subr.mxu0 0.0
        %2222 = vmatpush1.msra.mxu0 0.0
        %2223 = vmatprep.subr.mxu0 0.0
        %2224 = vmatpush1.msra.mxu0 0.0
        %2225 = vmatprep.subr.mxu0 0.0
        %2226 = vmatpush1.msra.mxu0 0.0
        %2227 = vmatprep.subr.mxu0 0.0
        %2228 = vmatpush1.msra.mxu0 0.0
        %2229 = vmatprep.subr.mxu0 0.0
        %2230 = vmatpush1.msra.mxu0 0.0
        %2231 = vmatprep.subr.mxu0 0.0
        %2232 = vmatpush1.msra.mxu0 0.0
        %2233 = vmatprep.subr.mxu0 0.0
        %2234 = vmatpush1.msra.mxu0 0.0
        %2235 = vmatprep.subr.mxu0 0.0
        %2236 = vmatpush1.msra.mxu0 0.0
        %2237 = vmatprep.subr.mxu0 0.0
        %2238 = vmatpush1.msra.mxu0 0.0
        %2239 = vmatprep.subr.mxu0 0.0
        %2240 = vmatpush1.msra.mxu0 0.0
        %2241 = vmatprep.subr.mxu0 0.0
        %2242 = vmatpush1.msra.mxu0 0.0
        %2243 = vmatprep.subr.mxu0 0.0
        %2244 = vmatpush1.msra.mxu0 0.0
        %2245 = vmatprep.subr.mxu0 0.0
        %2246 = vmatpush1.msra.mxu0 0.0
        %2247 = vmatprep.subr.mxu0 0.0
        %2248 = vmatpush1.msra.mxu0 0.0
        %2249 = vmatprep.mubr.f32.mxu0 0.0
        %2250 = vmatmul.mubr.f32.gmra.mrb[0].mxu0 %v2090
        %v2251 = vpop.f32.mrb[0].mxu0
        %v2252 = vadd.f32 0.0, %v2251
        %v2253 = vpop.f32.mrb[0].mxu0
        %2254 = vmatprep.mubr.f32.mxu0 0.0
        %2255 = vmatmul.mubr.f32.gmra.mrb[0].mxu0 %v2093
        %v2256 = vpop.f32.mrb[0].mxu0
        %v2257 = vadd.f32 0.0, %v2256
        %v2258 = vpop.f32.mrb[0].mxu0
        %2259 = vmatprep.mubr.f32.mxu0 0.0
        %2260 = vmatmul.mubr.f32.gmra.mrb[0].mxu0 %v2096
        %v2261 = vpop.f32.mrb[0].mxu0
        %v2262 = vadd.f32 0.0, %v2261
        %v2263 = vpop.f32.mrb[0].mxu0
        %2264 = vmatprep.mubr.f32.mxu0 0.0
        %2265 = vmatmul.mubr.f32.gmra.mrb[0].mxu0 %v2099
        %v2266 = vpop.f32.mrb[0].mxu0
        %v2267 = vadd.f32 0.0, %v2266
        %v2268 = vpop.f32.mrb[0].mxu0
        %2269 = vmatprep.mubr.f32.mxu0 0.0
        %2270 = vmatmul.mubr.f32.gmra.mrb[0].mxu0 %v2102
        %v2271 = vpop.f32.mrb[0].mxu0
        %v2272 = vadd.f32 0.0, %v2271
        %v2273 = vpop.f32.mrb[0].mxu0
        %2274 = vmatprep.mubr.f32.mxu0 0.0
        %2275 = vmatmul.mubr.f32.gmra.mrb[0].mxu0 %v2105
        %v2276 = vpop.f32.mrb[0].mxu0
        %v2277 = vadd.f32 0.0, %v2276
        %v2278 = vpop.f32.mrb[0].mxu0
        %2279 = vmatprep.mubr.f32.mxu0 0.0
        %2280 = vmatmul.mubr.f32.gmra.mrb[0].mxu0 %v2108
        %v2281 = vpop.f32.mrb[0].mxu0
        %v2282 = vadd.f32 0.0, %v2281
        %v2283 = vpop.f32.mrb[0].mxu0
        %2284 = vmatprep.mubr.f32.mxu0 0.0
        %2285 = vmatmul.mubr.f32.gmra.mrb[0].mxu0 %v2111
        %v2286 = vpop.f32.mrb[0].mxu0
        %v2287 = vadd.f32 0.0, %v2286
        %v2288 = vpop.f32.mrb[0].mxu0
        %2289 = vmatprep.mubr.f32.mxu0 0.0
        %2290 = vmatmul.mubr.f32.gmra.mrb[0].mxu0 %v2114
        %v2291 = vpop.f32.mrb[0].mxu0
        %v2292 = vadd.f32 0.0, %v2291
        %v2293 = vpop.f32.mrb[0].mxu0
        %2294 = vmatprep.mubr.f32.mxu0 0.0
        %2295 = vmatmul.mubr.f32.gmra.mrb[0].mxu0 %v2117
        %v2296 = vpop.f32.mrb[0].mxu0
        %v2297 = vadd.f32 0.0, %v2296
        %v2298 = vpop.f32.mrb[0].mxu0
        %2299 = vmatprep.mubr.f32.mxu0 0.0
        %2300 = vmatmul.mubr.f32.gmra.mrb[0].mxu0 %v2120
        %v2301 = vpop.f32.mrb[0].mxu0
        %v2302 = vadd.f32 0.0, %v2301
        %v2303 = vpop.f32.mrb[0].mxu0
        %2304 = vmatprep.mubr.f32.mxu0 0.0
        %2305 = vmatmul.mubr.f32.gmra.mrb[0].mxu0 %v2123
        %v2306 = vpop.f32.mrb[0].mxu0
        %v2307 = vadd.f32 0.0, %v2306
        %v2308 = vpop.f32.mrb[0].mxu0
        %2309 = vmatprep.mubr.f32.mxu0 0.0
        %2310 = vmatmul.mubr.f32.gmra.mrb[0].mxu0 %v2126
        %v2311 = vpop.f32.mrb[0].mxu0
        %v2312 = vadd.f32 0.0, %v2311
        %v2313 = vpop.f32.mrb[0].mxu0
        %2314 = vmatprep.mubr.f32.mxu0 0.0
        %2315 = vmatmul.mubr.f32.gmra.mrb[0].mxu0 %v2129
        %v2316 = vpop.f32.mrb[0].mxu0
        %v2317 = vadd.f32 0.0, %v2316
        %v2318 = vpop.f32.mrb[0].mxu0
        %2319 = vmatprep.mubr.f32.mxu0 0.0
        %2320 = vmatmul.mubr.f32.gmra.mrb[0].mxu0 %v2132
        %v2321 = vpop.f32.mrb[0].mxu0
        %v2322 = vadd.f32 0.0, %v2321
        %v2323 = vpop.f32.mrb[0].mxu0
        %2324 = vmatprep.mubr.f32.mxu0 0.0
        %2325 = vmatmul.mubr.f32.gmra.mrb[0].mxu0 %v2135
        %v2326 = vpop.f32.mrb[0].mxu0
        %v2327 = vadd.f32 0.0, %v2326
        %v2328 = vpop.f32.mrb[0].mxu0
        %2329 = vmatprep.mubr.f32.mxu0 0.0
        %2330 = vmatmul.mubr.f32.gmra.mrb[0].mxu0 %v2138
        %v2331 = vpop.f32.mrb[0].mxu0
        %v2332 = vadd.f32 0.0, %v2331
        %v2333 = vpop.f32.mrb[0].mxu0
        %2334 = vmatprep.mubr.f32.mxu0 0.0
        %2335 = vmatmul.mubr.f32.gmra.mrb[0].mxu0 %v2141
        %v2336 = vpop.f32.mrb[0].mxu0
        %v2337 = vadd.f32 0.0, %v2336
        %v2338 = vpop.f32.mrb[0].mxu0
        %2339 = vmatprep.mubr.f32.mxu0 0.0
        %2340 = vmatmul.mubr.f32.gmra.mrb[0].mxu0 %v2144
        %v2341 = vpop.f32.mrb[0].mxu0
        %v2342 = vadd.f32 0.0, %v2341
        %v2343 = vpop.f32.mrb[0].mxu0
        %2344 = vmatprep.mubr.f32.mxu0 0.0
        %2345 = vmatmul.mubr.f32.gmra.mrb[0].mxu0 %v2147
        %v2346 = vpop.f32.mrb[0].mxu0
        %v2347 = vadd.f32 0.0, %v2346
        %v2348 = vpop.f32.mrb[0].mxu0
        %2349 = vmatprep.mubr.f32.mxu0 0.0
        %2350 = vmatmul.mubr.f32.gmra.mrb[0].mxu0 %v2150
        %v2351 = vpop.f32.mrb[0].mxu0
        %v2352 = vadd.f32 0.0, %v2351
        %v2353 = vpop.f32.mrb[0].mxu0
        %2354 = vmatprep.mubr.f32.mxu0 0.0
        %2355 = vmatmul.mubr.f32.gmra.mrb[0].mxu0 %v2153
        %v2356 = vpop.f32.mrb[0].mxu0
        %v2357 = vadd.f32 0.0, %v2356
        %v2358 = vpop.f32.mrb[0].mxu0
        %2359 = vmatprep.mubr.f32.mxu0 0.0
        %2360 = vmatmul.mubr.f32.gmra.mrb[0].mxu0 %v2156
        %v2361 = vpop.f32.mrb[0].mxu0
        %v2362 = vadd.f32 0.0, %v2361
        %v2363 = vpop.f32.mrb[0].mxu0
        %2364 = vmatprep.mubr.f32.mxu0 0.0
        %2365 = vmatmul.mubr.f32.gmra.mrb[0].mxu0 %v2159
        %v2366 = vpop.f32.mrb[0].mxu0
        %v2367 = vadd.f32 0.0, %v2366
        %v2368 = vpop.f32.mrb[0].mxu0
        %2369 = vmatprep.mubr.f32.mxu0 0.0
        %2370 = vmatmul.mubr.f32.gmra.mrb[0].mxu0 %v2162
        %v2371 = vpop.f32.mrb[0].mxu0
        %v2372 = vadd.f32 0.0, %v2371
        %v2373 = vpop.f32.mrb[0].mxu0
        %2374 = vmatprep.mubr.f32.mxu0 0.0
        %2375 = vmatmul.mubr.f32.gmra.mrb[0].mxu0 %v2165
        %v2376 = vpop.f32.mrb[0].mxu0
        %v2377 = vadd.f32 0.0, %v2376
        %v2378 = vpop.f32.mrb[0].mxu0
        %2379 = vmatprep.mubr.f32.mxu0 0.0
        %2380 = vmatmul.mubr.f32.gmra.mrb[0].mxu0 %v2168
        %v2381 = vpop.f32.mrb[0].mxu0
        %v2382 = vadd.f32 0.0, %v2381
        %v2383 = vpop.f32.mrb[0].mxu0
        %2384 = vmatprep.mubr.f32.mxu0 0.0
        %2385 = vmatmul.mubr.f32.gmra.mrb[0].mxu0 %v2171
        %v2386 = vpop.f32.mrb[0].mxu0
        %v2387 = vadd.f32 0.0, %v2386
        %v2388 = vpop.f32.mrb[0].mxu0
        %2389 = vmatprep.mubr.f32.mxu0 0.0
        %2390 = vmatmul.mubr.f32.gmra.mrb[0].mxu0 %v2174
        %v2391 = vpop.f32.mrb[0].mxu0
        %v2392 = vadd.f32 0.0, %v2391
        %v2393 = vpop.f32.mrb[0].mxu0
        %2394 = vmatprep.mubr.f32.mxu0 0.0
        %2395 = vmatmul.mubr.f32.gmra.mrb[0].mxu0 %v2177
        %v2396 = vpop.f32.mrb[0].mxu0
        %v2397 = vadd.f32 0.0, %v2396
        %v2398 = vpop.f32.mrb[0].mxu0
        %2399 = vmatprep.mubr.f32.mxu0 0.0
        %2400 = vmatmul.mubr.f32.gmra.mrb[0].mxu0 %v2180
        %v2401 = vpop.f32.mrb[0].mxu0
        %v2402 = vadd.f32 0.0, %v2401
        %v2403 = vpop.f32.mrb[0].mxu0
        %2404 = vmatprep.mubr.f32.mxu0 0.0
        %2405 = vmatmul.mubr.f32.gmra.mrb[0].mxu0 %v2183
        %v2406 = vpop.f32.mrb[0].mxu0
        %v2407 = vadd.f32 0.0, %v2406
        %v2408 = vpop.f32.mrb[0].mxu0
        %2409 = vdwg.mxu0
        %v2410 = vadd.f32 %v2048, %v2252
        %v2411 = vadd.f32 %v2049, %v2257
        %v2412 = vadd.f32 %v2050, %v2262
        %v2413 = vadd.f32 %v2051, %v2267
        %v2414 = vadd.f32 %v2052, %v2272
        %v2415 = vadd.f32 %v2053, %v2277
        %v2416 = vadd.f32 %v2054, %v2282
        %v2417 = vadd.f32 %v2055, %v2287
        %v2418 = vadd.f32 %v2056, %v2292
        %v2419 = vadd.f32 %v2057, %v2297
        %v2420 = vadd.f32 %v2058, %v2302
        %v2421 = vadd.f32 %v2059, %v2307
        %v2422 = vadd.f32 %v2060, %v2312
        %v2423 = vadd.f32 %v2061, %v2317
        %v2424 = vadd.f32 %v2062, %v2322
        %v2425 = vadd.f32 %v2063, %v2327
        %v2426 = vadd.f32 %v2064, %v2332
        %v2427 = vadd.f32 %v2065, %v2337
        %v2428 = vadd.f32 %v2066, %v2342
        %v2429 = vadd.f32 %v2067, %v2347
        %v2430 = vadd.f32 %v2068, %v2352
        %v2431 = vadd.f32 %v2069, %v2357
        %v2432 = vadd.f32 %v2070, %v2362
        %v2433 = vadd.f32 %v2071, %v2367
        %v2434 = vadd.f32 %v2072, %v2372
        %v2435 = vadd.f32 %v2073, %v2377
        %v2436 = vadd.f32 %v2074, %v2382
        %v2437 = vadd.f32 %v2075, %v2387
        %v2438 = vadd.f32 %v2076, %v2392
        %v2439 = vadd.f32 %v2077, %v2397
        %v2440 = vadd.f32 %v2078, %v2402
        %v2441 = vadd.f32 %v2079, %v2407
        %2442 = vst.msk [vmem:[#allocation5] sm:$0xff] %vm728, %v2410
        %2443 = vst.msk [vmem:[#allocation5 + $0x8] sm:$0xff] %vm728, %v2411
        %2444 = vst.msk [vmem:[#allocation5 + $0x10] sm:$0xff] %vm728, %v2412
        %2445 = vst.msk [vmem:[#allocation5 + $0x18] sm:$0xff] %vm728, %v2413
        %2446 = vst.msk [vmem:[#allocation5 + $0x20] sm:$0xff] %vm728, %v2414
        %2447 = vst.msk [vmem:[#allocation5 + $0x28] sm:$0xff] %vm728, %v2415
        %2448 = vst.msk [vmem:[#allocation5 + $0x30] sm:$0xff] %vm728, %v2416
        %2449 = vst.msk [vmem:[#allocation5 + $0x38] sm:$0xff] %vm728, %v2417
        %2450 = vst.msk [vmem:[#allocation5 + $0x40] sm:$0xff] %vm728, %v2418
        %2451 = vst.msk [vmem:[#allocation5 + $0x48] sm:$0xff] %vm728, %v2419
        %2452 = vst.msk [vmem:[#allocation5 + $0x50] sm:$0xff] %vm728, %v2420
        %2453 = vst.msk [vmem:[#allocation5 + $0x58] sm:$0xff] %vm728, %v2421
        %2454 = vst.msk [vmem:[#allocation5 + $0x60] sm:$0xff] %vm728, %v2422
        %2455 = vst.msk [vmem:[#allocation5 + $0x68] sm:$0xff] %vm728, %v2423
        %2456 = vst.msk [vmem:[#allocation5 + $0x70] sm:$0xff] %vm728, %v2424
        %2457 = vst.msk [vmem:[#allocation5 + $0x78] sm:$0xff] %vm728, %v2425
        %2458 = vst.msk [vmem:[#allocation5 + $0x80] sm:$0xff] %vm728, %v2426
        %2459 = vst.msk [vmem:[#allocation5 + $0x88] sm:$0xff] %vm728, %v2427
        %2460 = vst.msk [vmem:[#allocation5 + $0x90] sm:$0xff] %vm728, %v2428
        %2461 = vst.msk [vmem:[#allocation5 + $0x98] sm:$0xff] %vm728, %v2429
        %2462 = vst.msk [vmem:[#allocation5 + $0xa0] sm:$0xff] %vm728, %v2430
        %2463 = vst.msk [vmem:[#allocation5 + $0xa8] sm:$0xff] %vm728, %v2431
        %2464 = vst.msk [vmem:[#allocation5 + $0xb0] sm:$0xff] %vm728, %v2432
        %2465 = vst.msk [vmem:[#allocation5 + $0xb8] sm:$0xff] %vm728, %v2433
        %2466 = vst.msk [vmem:[#allocation5 + $0xc0] sm:$0xff] %vm728, %v2434
        %2467 = vst.msk [vmem:[#allocation5 + $0xc8] sm:$0xff] %vm728, %v2435
        %2468 = vst.msk [vmem:[#allocation5 + $0xd0] sm:$0xff] %vm728, %v2436
        %2469 = vst.msk [vmem:[#allocation5 + $0xd8] sm:$0xff] %vm728, %v2437
        %2470 = vst.msk [vmem:[#allocation5 + $0xe0] sm:$0xff] %vm728, %v2438
        %2471 = vst.msk [vmem:[#allocation5 + $0xe8] sm:$0xff] %vm728, %v2439
        %2472 = vst.msk [vmem:[#allocation5 + $0xf0] sm:$0xff] %vm728, %v2440
        %2473 = vst.msk [vmem:[#allocation5 + $0xf8] sm:$0xff] %vm728, %v2441
        %v2474 = vld [vmem:[%s871] sm:$0xff]
        %v2475 = vld [vmem:[%s871 + $0x8] sm:$0xff]
        %v2476 = vld [vmem:[%s871 + $0x10] sm:$0xff]
        %v2477 = vld [vmem:[%s871 + $0x18] sm:$0xff]
        %v2478 = vld [vmem:[%s871 + $0x20] sm:$0xff]
        %v2479 = vld [vmem:[%s871 + $0x28] sm:$0xff]
        %v2480 = vld [vmem:[%s871 + $0x30] sm:$0xff]
        %v2481 = vld [vmem:[%s871 + $0x38] sm:$0xff]
        %v2482 = vld [vmem:[%s871 + $0x40] sm:$0xff]
        %v2483 = vld [vmem:[%s871 + $0x48] sm:$0xff]
        %v2484 = vld [vmem:[%s871 + $0x50] sm:$0xff]
        %v2485 = vld [vmem:[%s871 + $0x58] sm:$0xff]
        %v2486 = vld [vmem:[%s871 + $0x60] sm:$0xff]
        %v2487 = vld [vmem:[%s871 + $0x68] sm:$0xff]
        %v2488 = vld [vmem:[%s871 + $0x70] sm:$0xff]
        %v2489 = vld [vmem:[%s871 + $0x78] sm:$0xff]
        %v2490 = vld [vmem:[%s871 + $0x80] sm:$0xff]
        %v2491 = vld [vmem:[%s871 + $0x88] sm:$0xff]
        %v2492 = vld [vmem:[%s871 + $0x90] sm:$0xff]
        %v2493 = vld [vmem:[%s871 + $0x98] sm:$0xff]
        %v2494 = vld [vmem:[%s871 + $0xa0] sm:$0xff]
        %v2495 = vld [vmem:[%s871 + $0xa8] sm:$0xff]
        %v2496 = vld [vmem:[%s871 + $0xb0] sm:$0xff]
        %v2497 = vld [vmem:[%s871 + $0xb8] sm:$0xff]
        %v2498 = vld [vmem:[%s871 + $0xc0] sm:$0xff]
        %v2499 = vld [vmem:[%s871 + $0xc8] sm:$0xff]
        %v2500 = vld [vmem:[%s871 + $0xd0] sm:$0xff]
        %v2501 = vld [vmem:[%s871 + $0xd8] sm:$0xff]
        %v2502 = vld [vmem:[%s871 + $0xe0] sm:$0xff]
        %v2503 = vld [vmem:[%s871 + $0xe8] sm:$0xff]
        %v2504 = vld [vmem:[%s871 + $0xf0] sm:$0xff]
        %v2505 = vld [vmem:[%s871 + $0xf8] sm:$0xff]
        %v2506 = vld [vmem:[#allocation5] sm:$0xff]
        %v2507 = vld [vmem:[#allocation5 + $0x8] sm:$0xff]
        %v2508 = vld [vmem:[#allocation5 + $0x10] sm:$0xff]
        %v2509 = vld [vmem:[#allocation5 + $0x18] sm:$0xff]
        %v2510 = vld [vmem:[#allocation5 + $0x20] sm:$0xff]
        %v2511 = vld [vmem:[#allocation5 + $0x28] sm:$0xff]
        %v2512 = vld [vmem:[#allocation5 + $0x30] sm:$0xff]
        %v2513 = vld [vmem:[#allocation5 + $0x38] sm:$0xff]
        %v2514 = vld [vmem:[#allocation5 + $0x40] sm:$0xff]
        %v2515 = vld [vmem:[#allocation5 + $0x48] sm:$0xff]
        %v2516 = vld [vmem:[#allocation5 + $0x50] sm:$0xff]
        %v2517 = vld [vmem:[#allocation5 + $0x58] sm:$0xff]
        %v2518 = vld [vmem:[#allocation5 + $0x60] sm:$0xff]
        %v2519 = vld [vmem:[#allocation5 + $0x68] sm:$0xff]
        %v2520 = vld [vmem:[#allocation5 + $0x70] sm:$0xff]
        %v2521 = vld [vmem:[#allocation5 + $0x78] sm:$0xff]
        %v2522 = vld [vmem:[#allocation5 + $0x80] sm:$0xff]
        %v2523 = vld [vmem:[#allocation5 + $0x88] sm:$0xff]
        %v2524 = vld [vmem:[#allocation5 + $0x90] sm:$0xff]
        %v2525 = vld [vmem:[#allocation5 + $0x98] sm:$0xff]
        %v2526 = vld [vmem:[#allocation5 + $0xa0] sm:$0xff]
        %v2527 = vld [vmem:[#allocation5 + $0xa8] sm:$0xff]
        %v2528 = vld [vmem:[#allocation5 + $0xb0] sm:$0xff]
        %v2529 = vld [vmem:[#allocation5 + $0xb8] sm:$0xff]
        %v2530 = vld [vmem:[#allocation5 + $0xc0] sm:$0xff]
        %v2531 = vld [vmem:[#allocation5 + $0xc8] sm:$0xff]
        %v2532 = vld [vmem:[#allocation5 + $0xd0] sm:$0xff]
        %v2533 = vld [vmem:[#allocation5 + $0xd8] sm:$0xff]
        %v2534 = vld [vmem:[#allocation5 + $0xe0] sm:$0xff]
        %v2535 = vld [vmem:[#allocation5 + $0xe8] sm:$0xff]
        %v2536 = vld [vmem:[#allocation5 + $0xf0] sm:$0xff]
        %v2537 = vld [vmem:[#allocation5 + $0xf8] sm:$0xff]
        %s2538 = scalar_lea.vmem %s3, 192
        %v2539 = vld [vmem:[%s2538] sm:$0xff]
        %v2540 = vld [vmem:[%s2538 + $0x8] sm:$0xff]
        %v2541 = vld [vmem:[%s2538 + $0x10] sm:$0xff]
        %v2542 = vld [vmem:[%s2538 + $0x18] sm:$0xff]
        %v2543 = vld [vmem:[%s2538 + $0x20] sm:$0xff]
        %v2544 = vld [vmem:[%s2538 + $0x28] sm:$0xff]
        %v2545 = vld [vmem:[%s2538 + $0x30] sm:$0xff]
        %v2546 = vld [vmem:[%s2538 + $0x38] sm:$0xff]
        %v2548 = vsel %vm728, %v2474, 0
        %v2551 = vsel %vm728, %v2475, 0
        %v2554 = vsel %vm728, %v2476, 0
        %v2557 = vsel %vm728, %v2477, 0
        %v2560 = vsel %vm728, %v2478, 0
        %v2563 = vsel %vm728, %v2479, 0
        %v2566 = vsel %vm728, %v2480, 0
        %v2569 = vsel %vm728, %v2481, 0
        %v2572 = vsel %vm728, %v2482, 0
        %v2575 = vsel %vm728, %v2483, 0
        %v2578 = vsel %vm728, %v2484, 0
        %v2581 = vsel %vm728, %v2485, 0
        %v2584 = vsel %vm728, %v2486, 0
        %v2587 = vsel %vm728, %v2487, 0
        %v2590 = vsel %vm728, %v2488, 0
        %v2593 = vsel %vm728, %v2489, 0
        %v2596 = vsel %vm728, %v2490, 0
        %v2599 = vsel %vm728, %v2491, 0
        %v2602 = vsel %vm728, %v2492, 0
        %v2605 = vsel %vm728, %v2493, 0
        %v2608 = vsel %vm728, %v2494, 0
        %v2611 = vsel %vm728, %v2495, 0
        %v2614 = vsel %vm728, %v2496, 0
        %v2617 = vsel %vm728, %v2497, 0
        %v2620 = vsel %vm728, %v2498, 0
        %v2623 = vsel %vm728, %v2499, 0
        %v2626 = vsel %vm728, %v2500, 0
        %v2629 = vsel %vm728, %v2501, 0
        %v2632 = vsel %vm728, %v2502, 0
        %v2635 = vsel %vm728, %v2503, 0
        %v2638 = vsel %vm728, %v2504, 0
        %v2641 = vsel %vm728, %v2505, 0
        %2643 = vmatprep.subr.mxu0 0.0
        %2644 = vmatpush1.msra.mxu0 %v2539
        %2645 = vmatprep.subr.mxu0 0.0
        %2646 = vmatpush1.msra.mxu0 %v2540
        %2647 = vmatprep.subr.mxu0 0.0
        %2648 = vmatpush1.msra.mxu0 %v2541
        %2649 = vmatprep.subr.mxu0 0.0
        %2650 = vmatpush1.msra.mxu0 %v2542
        %2651 = vmatprep.subr.mxu0 0.0
        %2652 = vmatpush1.msra.mxu0 %v2543
        %2653 = vmatprep.subr.mxu0 0.0
        %2654 = vmatpush1.msra.mxu0 %v2544
        %2655 = vmatprep.subr.mxu0 0.0
        %2656 = vmatpush1.msra.mxu0 %v2545
        %2657 = vmatprep.subr.mxu0 0.0
        %2658 = vmatpush1.msra.mxu0 %v2546
        %2659 = vmatprep.subr.mxu0 0.0
        %2660 = vmatpush1.msra.mxu0 0.0
        %2661 = vmatprep.subr.mxu0 0.0
        %2662 = vmatpush1.msra.mxu0 0.0
        %2663 = vmatprep.subr.mxu0 0.0
        %2664 = vmatpush1.msra.mxu0 0.0
        %2665 = vmatprep.subr.mxu0 0.0
        %2666 = vmatpush1.msra.mxu0 0.0
        %2667 = vmatprep.subr.mxu0 0.0
        %2668 = vmatpush1.msra.mxu0 0.0
        %2669 = vmatprep.subr.mxu0 0.0
        %2670 = vmatpush1.msra.mxu0 0.0
        %2671 = vmatprep.subr.mxu0 0.0
        %2672 = vmatpush1.msra.mxu0 0.0
        %2673 = vmatprep.subr.mxu0 0.0
        %2674 = vmatpush1.msra.mxu0 0.0
        %2675 = vmatprep.subr.mxu0 0.0
        %2676 = vmatpush1.msra.mxu0 0.0
        %2677 = vmatprep.subr.mxu0 0.0
        %2678 = vmatpush1.msra.mxu0 0.0
        %2679 = vmatprep.subr.mxu0 0.0
        %2680 = vmatpush1.msra.mxu0 0.0
        %2681 = vmatprep.subr.mxu0 0.0
        %2682 = vmatpush1.msra.mxu0 0.0
        %2683 = vmatprep.subr.mxu0 0.0
        %2684 = vmatpush1.msra.mxu0 0.0
        %2685 = vmatprep.subr.mxu0 0.0
        %2686 = vmatpush1.msra.mxu0 0.0
        %2687 = vmatprep.subr.mxu0 0.0
        %2688 = vmatpush1.msra.mxu0 0.0
        %2689 = vmatprep.subr.mxu0 0.0
        %2690 = vmatpush1.msra.mxu0 0.0
        %2691 = vmatprep.subr.mxu0 0.0
        %2692 = vmatpush1.msra.mxu0 0.0
        %2693 = vmatprep.subr.mxu0 0.0
        %2694 = vmatpush1.msra.mxu0 0.0
        %2695 = vmatprep.subr.mxu0 0.0
        %2696 = vmatpush1.msra.mxu0 0.0
        %2697 = vmatprep.subr.mxu0 0.0
        %2698 = vmatpush1.msra.mxu0 0.0
        %2699 = vmatprep.subr.mxu0 0.0
        %2700 = vmatpush1.msra.mxu0 0.0
        %2701 = vmatprep.subr.mxu0 0.0
        %2702 = vmatpush1.msra.mxu0 0.0
        %2703 = vmatprep.subr.mxu0 0.0
        %2704 = vmatpush1.msra.mxu0 0.0
        %2705 = vmatprep.subr.mxu0 0.0
        %2706 = vmatpush1.msra.mxu0 0.0
        %2707 = vmatprep.mubr.f32.mxu0 0.0
        %2708 = vmatmul.mubr.f32.gmra.mrb[0].mxu0 %v2548
        %v2709 = vpop.f32.mrb[0].mxu0
        %v2710 = vadd.f32 0.0, %v2709
        %v2711 = vpop.f32.mrb[0].mxu0
        %2712 = vmatprep.mubr.f32.mxu0 0.0
        %2713 = vmatmul.mubr.f32.gmra.mrb[0].mxu0 %v2551
        %v2714 = vpop.f32.mrb[0].mxu0
        %v2715 = vadd.f32 0.0, %v2714
        %v2716 = vpop.f32.mrb[0].mxu0
        %2717 = vmatprep.mubr.f32.mxu0 0.0
        %2718 = vmatmul.mubr.f32.gmra.mrb[0].mxu0 %v2554
        %v2719 = vpop.f32.mrb[0].mxu0
        %v2720 = vadd.f32 0.0, %v2719
        %v2721 = vpop.f32.mrb[0].mxu0
        %2722 = vmatprep.mubr.f32.mxu0 0.0
        %2723 = vmatmul.mubr.f32.gmra.mrb[0].mxu0 %v2557
        %v2724 = vpop.f32.mrb[0].mxu0
        %v2725 = vadd.f32 0.0, %v2724
        %v2726 = vpop.f32.mrb[0].mxu0
        %2727 = vmatprep.mubr.f32.mxu0 0.0
        %2728 = vmatmul.mubr.f32.gmra.mrb[0].mxu0 %v2560
        %v2729 = vpop.f32.mrb[0].mxu0
        %v2730 = vadd.f32 0.0, %v2729
        %v2731 = vpop.f32.mrb[0].mxu0
        %2732 = vmatprep.mubr.f32.mxu0 0.0
        %2733 = vmatmul.mubr.f32.gmra.mrb[0].mxu0 %v2563
        %v2734 = vpop.f32.mrb[0].mxu0
        %v2735 = vadd.f32 0.0, %v2734
        %v2736 = vpop.f32.mrb[0].mxu0
        %2737 = vmatprep.mubr.f32.mxu0 0.0
        %2738 = vmatmul.mubr.f32.gmra.mrb[0].mxu0 %v2566
        %v2739 = vpop.f32.mrb[0].mxu0
        %v2740 = vadd.f32 0.0, %v2739
        %v2741 = vpop.f32.mrb[0].mxu0
        %2742 = vmatprep.mubr.f32.mxu0 0.0
        %2743 = vmatmul.mubr.f32.gmra.mrb[0].mxu0 %v2569
        %v2744 = vpop.f32.mrb[0].mxu0
        %v2745 = vadd.f32 0.0, %v2744
        %v2746 = vpop.f32.mrb[0].mxu0
        %2747 = vmatprep.mubr.f32.mxu0 0.0
        %2748 = vmatmul.mubr.f32.gmra.mrb[0].mxu0 %v2572
        %v2749 = vpop.f32.mrb[0].mxu0
        %v2750 = vadd.f32 0.0, %v2749
        %v2751 = vpop.f32.mrb[0].mxu0
        %2752 = vmatprep.mubr.f32.mxu0 0.0
        %2753 = vmatmul.mubr.f32.gmra.mrb[0].mxu0 %v2575
        %v2754 = vpop.f32.mrb[0].mxu0
        %v2755 = vadd.f32 0.0, %v2754
        %v2756 = vpop.f32.mrb[0].mxu0
        %2757 = vmatprep.mubr.f32.mxu0 0.0
        %2758 = vmatmul.mubr.f32.gmra.mrb[0].mxu0 %v2578
        %v2759 = vpop.f32.mrb[0].mxu0
        %v2760 = vadd.f32 0.0, %v2759
        %v2761 = vpop.f32.mrb[0].mxu0
        %2762 = vmatprep.mubr.f32.mxu0 0.0
        %2763 = vmatmul.mubr.f32.gmra.mrb[0].mxu0 %v2581
        %v2764 = vpop.f32.mrb[0].mxu0
        %v2765 = vadd.f32 0.0, %v2764
        %v2766 = vpop.f32.mrb[0].mxu0
        %2767 = vmatprep.mubr.f32.mxu0 0.0
        %2768 = vmatmul.mubr.f32.gmra.mrb[0].mxu0 %v2584
        %v2769 = vpop.f32.mrb[0].mxu0
        %v2770 = vadd.f32 0.0, %v2769
        %v2771 = vpop.f32.mrb[0].mxu0
        %2772 = vmatprep.mubr.f32.mxu0 0.0
        %2773 = vmatmul.mubr.f32.gmra.mrb[0].mxu0 %v2587
        %v2774 = vpop.f32.mrb[0].mxu0
        %v2775 = vadd.f32 0.0, %v2774
        %v2776 = vpop.f32.mrb[0].mxu0
        %2777 = vmatprep.mubr.f32.mxu0 0.0
        %2778 = vmatmul.mubr.f32.gmra.mrb[0].mxu0 %v2590
        %v2779 = vpop.f32.mrb[0].mxu0
        %v2780 = vadd.f32 0.0, %v2779
        %v2781 = vpop.f32.mrb[0].mxu0
        %2782 = vmatprep.mubr.f32.mxu0 0.0
        %2783 = vmatmul.mubr.f32.gmra.mrb[0].mxu0 %v2593
        %v2784 = vpop.f32.mrb[0].mxu0
        %v2785 = vadd.f32 0.0, %v2784
        %v2786 = vpop.f32.mrb[0].mxu0
        %2787 = vmatprep.mubr.f32.mxu0 0.0
        %2788 = vmatmul.mubr.f32.gmra.mrb[0].mxu0 %v2596
        %v2789 = vpop.f32.mrb[0].mxu0
        %v2790 = vadd.f32 0.0, %v2789
        %v2791 = vpop.f32.mrb[0].mxu0
        %2792 = vmatprep.mubr.f32.mxu0 0.0
        %2793 = vmatmul.mubr.f32.gmra.mrb[0].mxu0 %v2599
        %v2794 = vpop.f32.mrb[0].mxu0
        %v2795 = vadd.f32 0.0, %v2794
        %v2796 = vpop.f32.mrb[0].mxu0
        %2797 = vmatprep.mubr.f32.mxu0 0.0
        %2798 = vmatmul.mubr.f32.gmra.mrb[0].mxu0 %v2602
        %v2799 = vpop.f32.mrb[0].mxu0
        %v2800 = vadd.f32 0.0, %v2799
        %v2801 = vpop.f32.mrb[0].mxu0
        %2802 = vmatprep.mubr.f32.mxu0 0.0
        %2803 = vmatmul.mubr.f32.gmra.mrb[0].mxu0 %v2605
        %v2804 = vpop.f32.mrb[0].mxu0
        %v2805 = vadd.f32 0.0, %v2804
        %v2806 = vpop.f32.mrb[0].mxu0
        %2807 = vmatprep.mubr.f32.mxu0 0.0
        %2808 = vmatmul.mubr.f32.gmra.mrb[0].mxu0 %v2608
        %v2809 = vpop.f32.mrb[0].mxu0
        %v2810 = vadd.f32 0.0, %v2809
        %v2811 = vpop.f32.mrb[0].mxu0
        %2812 = vmatprep.mubr.f32.mxu0 0.0
        %2813 = vmatmul.mubr.f32.gmra.mrb[0].mxu0 %v2611
        %v2814 = vpop.f32.mrb[0].mxu0
        %v2815 = vadd.f32 0.0, %v2814
        %v2816 = vpop.f32.mrb[0].mxu0
        %2817 = vmatprep.mubr.f32.mxu0 0.0
        %2818 = vmatmul.mubr.f32.gmra.mrb[0].mxu0 %v2614
        %v2819 = vpop.f32.mrb[0].mxu0
        %v2820 = vadd.f32 0.0, %v2819
        %v2821 = vpop.f32.mrb[0].mxu0
        %2822 = vmatprep.mubr.f32.mxu0 0.0
        %2823 = vmatmul.mubr.f32.gmra.mrb[0].mxu0 %v2617
        %v2824 = vpop.f32.mrb[0].mxu0
        %v2825 = vadd.f32 0.0, %v2824
        %v2826 = vpop.f32.mrb[0].mxu0
        %2827 = vmatprep.mubr.f32.mxu0 0.0
        %2828 = vmatmul.mubr.f32.gmra.mrb[0].mxu0 %v2620
        %v2829 = vpop.f32.mrb[0].mxu0
        %v2830 = vadd.f32 0.0, %v2829
        %v2831 = vpop.f32.mrb[0].mxu0
        %2832 = vmatprep.mubr.f32.mxu0 0.0
        %2833 = vmatmul.mubr.f32.gmra.mrb[0].mxu0 %v2623
        %v2834 = vpop.f32.mrb[0].mxu0
        %v2835 = vadd.f32 0.0, %v2834
        %v2836 = vpop.f32.mrb[0].mxu0
        %2837 = vmatprep.mubr.f32.mxu0 0.0
        %2838 = vmatmul.mubr.f32.gmra.mrb[0].mxu0 %v2626
        %v2839 = vpop.f32.mrb[0].mxu0
        %v2840 = vadd.f32 0.0, %v2839
        %v2841 = vpop.f32.mrb[0].mxu0
        %2842 = vmatprep.mubr.f32.mxu0 0.0
        %2843 = vmatmul.mubr.f32.gmra.mrb[0].mxu0 %v2629
        %v2844 = vpop.f32.mrb[0].mxu0
        %v2845 = vadd.f32 0.0, %v2844
        %v2846 = vpop.f32.mrb[0].mxu0
        %2847 = vmatprep.mubr.f32.mxu0 0.0
        %2848 = vmatmul.mubr.f32.gmra.mrb[0].mxu0 %v2632
        %v2849 = vpop.f32.mrb[0].mxu0
        %v2850 = vadd.f32 0.0, %v2849
        %v2851 = vpop.f32.mrb[0].mxu0
        %2852 = vmatprep.mubr.f32.mxu0 0.0
        %2853 = vmatmul.mubr.f32.gmra.mrb[0].mxu0 %v2635
        %v2854 = vpop.f32.mrb[0].mxu0
        %v2855 = vadd.f32 0.0, %v2854
        %v2856 = vpop.f32.mrb[0].mxu0
        %2857 = vmatprep.mubr.f32.mxu0 0.0
        %2858 = vmatmul.mubr.f32.gmra.mrb[0].mxu0 %v2638
        %v2859 = vpop.f32.mrb[0].mxu0
        %v2860 = vadd.f32 0.0, %v2859
        %v2861 = vpop.f32.mrb[0].mxu0
        %2862 = vmatprep.mubr.f32.mxu0 0.0
        %2863 = vmatmul.mubr.f32.gmra.mrb[0].mxu0 %v2641
        %v2864 = vpop.f32.mrb[0].mxu0
        %v2865 = vadd.f32 0.0, %v2864
        %v2866 = vpop.f32.mrb[0].mxu0
        %2867 = vdwg.mxu0
        %v2868 = vadd.f32 %v2506, %v2710
        %v2869 = vadd.f32 %v2507, %v2715
        %v2870 = vadd.f32 %v2508, %v2720
        %v2871 = vadd.f32 %v2509, %v2725
        %v2872 = vadd.f32 %v2510, %v2730
        %v2873 = vadd.f32 %v2511, %v2735
        %v2874 = vadd.f32 %v2512, %v2740
        %v2875 = vadd.f32 %v2513, %v2745
        %v2876 = vadd.f32 %v2514, %v2750
        %v2877 = vadd.f32 %v2515, %v2755
        %v2878 = vadd.f32 %v2516, %v2760
        %v2879 = vadd.f32 %v2517, %v2765
        %v2880 = vadd.f32 %v2518, %v2770
        %v2881 = vadd.f32 %v2519, %v2775
        %v2882 = vadd.f32 %v2520, %v2780
        %v2883 = vadd.f32 %v2521, %v2785
        %v2884 = vadd.f32 %v2522, %v2790
        %v2885 = vadd.f32 %v2523, %v2795
        %v2886 = vadd.f32 %v2524, %v2800
        %v2887 = vadd.f32 %v2525, %v2805
        %v2888 = vadd.f32 %v2526, %v2810
        %v2889 = vadd.f32 %v2527, %v2815
        %v2890 = vadd.f32 %v2528, %v2820
        %v2891 = vadd.f32 %v2529, %v2825
        %v2892 = vadd.f32 %v2530, %v2830
        %v2893 = vadd.f32 %v2531, %v2835
        %v2894 = vadd.f32 %v2532, %v2840
        %v2895 = vadd.f32 %v2533, %v2845
        %v2896 = vadd.f32 %v2534, %v2850
        %v2897 = vadd.f32 %v2535, %v2855
        %v2898 = vadd.f32 %v2536, %v2860
        %v2899 = vadd.f32 %v2537, %v2865
        %2900 = vst.msk [vmem:[#allocation5] sm:$0xff] %vm728, %v2868
        %2901 = vst.msk [vmem:[#allocation5 + $0x8] sm:$0xff] %vm728, %v2869
        %2902 = vst.msk [vmem:[#allocation5 + $0x10] sm:$0xff] %vm728, %v2870
        %2903 = vst.msk [vmem:[#allocation5 + $0x18] sm:$0xff] %vm728, %v2871
        %2904 = vst.msk [vmem:[#allocation5 + $0x20] sm:$0xff] %vm728, %v2872
        %2905 = vst.msk [vmem:[#allocation5 + $0x28] sm:$0xff] %vm728, %v2873
        %2906 = vst.msk [vmem:[#allocation5 + $0x30] sm:$0xff] %vm728, %v2874
        %2907 = vst.msk [vmem:[#allocation5 + $0x38] sm:$0xff] %vm728, %v2875
        %2908 = vst.msk [vmem:[#allocation5 + $0x40] sm:$0xff] %vm728, %v2876
        %2909 = vst.msk [vmem:[#allocation5 + $0x48] sm:$0xff] %vm728, %v2877
        %2910 = vst.msk [vmem:[#allocation5 + $0x50] sm:$0xff] %vm728, %v2878
        %2911 = vst.msk [vmem:[#allocation5 + $0x58] sm:$0xff] %vm728, %v2879
        %2912 = vst.msk [vmem:[#allocation5 + $0x60] sm:$0xff] %vm728, %v2880
        %2913 = vst.msk [vmem:[#allocation5 + $0x68] sm:$0xff] %vm728, %v2881
        %2914 = vst.msk [vmem:[#allocation5 + $0x70] sm:$0xff] %vm728, %v2882
        %2915 = vst.msk [vmem:[#allocation5 + $0x78] sm:$0xff] %vm728, %v2883
        %2916 = vst.msk [vmem:[#allocation5 + $0x80] sm:$0xff] %vm728, %v2884
        %2917 = vst.msk [vmem:[#allocation5 + $0x88] sm:$0xff] %vm728, %v2885
        %2918 = vst.msk [vmem:[#allocation5 + $0x90] sm:$0xff] %vm728, %v2886
        %2919 = vst.msk [vmem:[#allocation5 + $0x98] sm:$0xff] %vm728, %v2887
        %2920 = vst.msk [vmem:[#allocation5 + $0xa0] sm:$0xff] %vm728, %v2888
        %2921 = vst.msk [vmem:[#allocation5 + $0xa8] sm:$0xff] %vm728, %v2889
        %2922 = vst.msk [vmem:[#allocation5 + $0xb0] sm:$0xff] %vm728, %v2890
        %2923 = vst.msk [vmem:[#allocation5 + $0xb8] sm:$0xff] %vm728, %v2891
        %2924 = vst.msk [vmem:[#allocation5 + $0xc0] sm:$0xff] %vm728, %v2892
        %2925 = vst.msk [vmem:[#allocation5 + $0xc8] sm:$0xff] %vm728, %v2893
        %2926 = vst.msk [vmem:[#allocation5 + $0xd0] sm:$0xff] %vm728, %v2894
        %2927 = vst.msk [vmem:[#allocation5 + $0xd8] sm:$0xff] %vm728, %v2895
        %2928 = vst.msk [vmem:[#allocation5 + $0xe0] sm:$0xff] %vm728, %v2896
        %2929 = vst.msk [vmem:[#allocation5 + $0xe8] sm:$0xff] %vm728, %v2897
        %2930 = vst.msk [vmem:[#allocation5 + $0xf0] sm:$0xff] %vm728, %v2898
        %2931 = vst.msk [vmem:[#allocation5 + $0xf8] sm:$0xff] %vm728, %v2899
        %v2932 = vld [vmem:[%s904] sm:$0xff]
        %v2933 = vld [vmem:[%s904 + $0x8] sm:$0xff]
        %v2934 = vld [vmem:[%s904 + $0x10] sm:$0xff]
        %v2935 = vld [vmem:[%s904 + $0x18] sm:$0xff]
        %v2936 = vld [vmem:[%s904 + $0x20] sm:$0xff]
        %v2937 = vld [vmem:[%s904 + $0x28] sm:$0xff]
        %v2938 = vld [vmem:[%s904 + $0x30] sm:$0xff]
        %v2939 = vld [vmem:[%s904 + $0x38] sm:$0xff]
        %v2940 = vld [vmem:[%s904 + $0x40] sm:$0xff]
        %v2941 = vld [vmem:[%s904 + $0x48] sm:$0xff]
        %v2942 = vld [vmem:[%s904 + $0x50] sm:$0xff]
        %v2943 = vld [vmem:[%s904 + $0x58] sm:$0xff]
        %v2944 = vld [vmem:[%s904 + $0x60] sm:$0xff]
        %v2945 = vld [vmem:[%s904 + $0x68] sm:$0xff]
        %v2946 = vld [vmem:[%s904 + $0x70] sm:$0xff]
        %v2947 = vld [vmem:[%s904 + $0x78] sm:$0xff]
        %v2948 = vld [vmem:[%s904 + $0x80] sm:$0xff]
        %v2949 = vld [vmem:[%s904 + $0x88] sm:$0xff]
        %v2950 = vld [vmem:[%s904 + $0x90] sm:$0xff]
        %v2951 = vld [vmem:[%s904 + $0x98] sm:$0xff]
        %v2952 = vld [vmem:[%s904 + $0xa0] sm:$0xff]
        %v2953 = vld [vmem:[%s904 + $0xa8] sm:$0xff]
        %v2954 = vld [vmem:[%s904 + $0xb0] sm:$0xff]
        %v2955 = vld [vmem:[%s904 + $0xb8] sm:$0xff]
        %v2956 = vld [vmem:[%s904 + $0xc0] sm:$0xff]
        %v2957 = vld [vmem:[%s904 + $0xc8] sm:$0xff]
        %v2958 = vld [vmem:[%s904 + $0xd0] sm:$0xff]
        %v2959 = vld [vmem:[%s904 + $0xd8] sm:$0xff]
        %v2960 = vld [vmem:[%s904 + $0xe0] sm:$0xff]
        %v2961 = vld [vmem:[%s904 + $0xe8] sm:$0xff]
        %v2962 = vld [vmem:[%s904 + $0xf0] sm:$0xff]
        %v2963 = vld [vmem:[%s904 + $0xf8] sm:$0xff]
        %v2964 = vld [vmem:[#allocation5] sm:$0xff]
        %v2965 = vld [vmem:[#allocation5 + $0x8] sm:$0xff]
        %v2966 = vld [vmem:[#allocation5 + $0x10] sm:$0xff]
        %v2967 = vld [vmem:[#allocation5 + $0x18] sm:$0xff]
        %v2968 = vld [vmem:[#allocation5 + $0x20] sm:$0xff]
        %v2969 = vld [vmem:[#allocation5 + $0x28] sm:$0xff]
        %v2970 = vld [vmem:[#allocation5 + $0x30] sm:$0xff]
        %v2971 = vld [vmem:[#allocation5 + $0x38] sm:$0xff]
        %v2972 = vld [vmem:[#allocation5 + $0x40] sm:$0xff]
        %v2973 = vld [vmem:[#allocation5 + $0x48] sm:$0xff]
        %v2974 = vld [vmem:[#allocation5 + $0x50] sm:$0xff]
        %v2975 = vld [vmem:[#allocation5 + $0x58] sm:$0xff]
        %v2976 = vld [vmem:[#allocation5 + $0x60] sm:$0xff]
        %v2977 = vld [vmem:[#allocation5 + $0x68] sm:$0xff]
        %v2978 = vld [vmem:[#allocation5 + $0x70] sm:$0xff]
        %v2979 = vld [vmem:[#allocation5 + $0x78] sm:$0xff]
        %v2980 = vld [vmem:[#allocation5 + $0x80] sm:$0xff]
        %v2981 = vld [vmem:[#allocation5 + $0x88] sm:$0xff]
        %v2982 = vld [vmem:[#allocation5 + $0x90] sm:$0xff]
        %v2983 = vld [vmem:[#allocation5 + $0x98] sm:$0xff]
        %v2984 = vld [vmem:[#allocation5 + $0xa0] sm:$0xff]
        %v2985 = vld [vmem:[#allocation5 + $0xa8] sm:$0xff]
        %v2986 = vld [vmem:[#allocation5 + $0xb0] sm:$0xff]
        %v2987 = vld [vmem:[#allocation5 + $0xb8] sm:$0xff]
        %v2988 = vld [vmem:[#allocation5 + $0xc0] sm:$0xff]
        %v2989 = vld [vmem:[#allocation5 + $0xc8] sm:$0xff]
        %v2990 = vld [vmem:[#allocation5 + $0xd0] sm:$0xff]
        %v2991 = vld [vmem:[#allocation5 + $0xd8] sm:$0xff]
        %v2992 = vld [vmem:[#allocation5 + $0xe0] sm:$0xff]
        %v2993 = vld [vmem:[#allocation5 + $0xe8] sm:$0xff]
        %v2994 = vld [vmem:[#allocation5 + $0xf0] sm:$0xff]
        %v2995 = vld [vmem:[#allocation5 + $0xf8] sm:$0xff]
        %s2996 = scalar_lea.vmem %s3, 256
        %v2997 = vld [vmem:[%s2996] sm:$0xff]
        %v2998 = vld [vmem:[%s2996 + $0x8] sm:$0xff]
        %v2999 = vld [vmem:[%s2996 + $0x10] sm:$0xff]
        %v3000 = vld [vmem:[%s2996 + $0x18] sm:$0xff]
        %v3001 = vld [vmem:[%s2996 + $0x20] sm:$0xff]
        %v3002 = vld [vmem:[%s2996 + $0x28] sm:$0xff]
        %v3003 = vld [vmem:[%s2996 + $0x30] sm:$0xff]
        %v3004 = vld [vmem:[%s2996 + $0x38] sm:$0xff]
        %v3006 = vsel %vm728, %v2932, 0
        %v3009 = vsel %vm728, %v2933, 0
        %v3012 = vsel %vm728, %v2934, 0
        %v3015 = vsel %vm728, %v2935, 0
        %v3018 = vsel %vm728, %v2936, 0
        %v3021 = vsel %vm728, %v2937, 0
        %v3024 = vsel %vm728, %v2938, 0
        %v3027 = vsel %vm728, %v2939, 0
        %v3030 = vsel %vm728, %v2940, 0
        %v3033 = vsel %vm728, %v2941, 0
        %v3036 = vsel %vm728, %v2942, 0
        %v3039 = vsel %vm728, %v2943, 0
        %v3042 = vsel %vm728, %v2944, 0
        %v3045 = vsel %vm728, %v2945, 0
        %v3048 = vsel %vm728, %v2946, 0
        %v3051 = vsel %vm728, %v2947, 0
        %v3054 = vsel %vm728, %v2948, 0
        %v3057 = vsel %vm728, %v2949, 0
        %v3060 = vsel %vm728, %v2950, 0
        %v3063 = vsel %vm728, %v2951, 0
        %v3066 = vsel %vm728, %v2952, 0
        %v3069 = vsel %vm728, %v2953, 0
        %v3072 = vsel %vm728, %v2954, 0
        %v3075 = vsel %vm728, %v2955, 0
        %v3078 = vsel %vm728, %v2956, 0
        %v3081 = vsel %vm728, %v2957, 0
        %v3084 = vsel %vm728, %v2958, 0
        %v3087 = vsel %vm728, %v2959, 0
        %v3090 = vsel %vm728, %v2960, 0
        %v3093 = vsel %vm728, %v2961, 0
        %v3096 = vsel %vm728, %v2962, 0
        %v3099 = vsel %vm728, %v2963, 0
        %3101 = vmatprep.subr.mxu0 0.0
        %3102 = vmatpush1.msra.mxu0 %v2997
        %3103 = vmatprep.subr.mxu0 0.0
        %3104 = vmatpush1.msra.mxu0 %v2998
        %3105 = vmatprep.subr.mxu0 0.0
        %3106 = vmatpush1.msra.mxu0 %v2999
        %3107 = vmatprep.subr.mxu0 0.0
        %3108 = vmatpush1.msra.mxu0 %v3000
        %3109 = vmatprep.subr.mxu0 0.0
        %3110 = vmatpush1.msra.mxu0 %v3001
        %3111 = vmatprep.subr.mxu0 0.0
        %3112 = vmatpush1.msra.mxu0 %v3002
        %3113 = vmatprep.subr.mxu0 0.0
        %3114 = vmatpush1.msra.mxu0 %v3003
        %3115 = vmatprep.subr.mxu0 0.0
        %3116 = vmatpush1.msra.mxu0 %v3004
        %3117 = vmatprep.subr.mxu0 0.0
        %3118 = vmatpush1.msra.mxu0 0.0
        %3119 = vmatprep.subr.mxu0 0.0
        %3120 = vmatpush1.msra.mxu0 0.0
        %3121 = vmatprep.subr.mxu0 0.0
        %3122 = vmatpush1.msra.mxu0 0.0
        %3123 = vmatprep.subr.mxu0 0.0
        %3124 = vmatpush1.msra.mxu0 0.0
        %3125 = vmatprep.subr.mxu0 0.0
        %3126 = vmatpush1.msra.mxu0 0.0
        %3127 = vmatprep.subr.mxu0 0.0
        %3128 = vmatpush1.msra.mxu0 0.0
        %3129 = vmatprep.subr.mxu0 0.0
        %3130 = vmatpush1.msra.mxu0 0.0
        %3131 = vmatprep.subr.mxu0 0.0
        %3132 = vmatpush1.msra.mxu0 0.0
        %3133 = vmatprep.subr.mxu0 0.0
        %3134 = vmatpush1.msra.mxu0 0.0
        %3135 = vmatprep.subr.mxu0 0.0
        %3136 = vmatpush1.msra.mxu0 0.0
        %3137 = vmatprep.subr.mxu0 0.0
        %3138 = vmatpush1.msra.mxu0 0.0
        %3139 = vmatprep.subr.mxu0 0.0
        %3140 = vmatpush1.msra.mxu0 0.0
        %3141 = vmatprep.subr.mxu0 0.0
        %3142 = vmatpush1.msra.mxu0 0.0
        %3143 = vmatprep.subr.mxu0 0.0
        %3144 = vmatpush1.msra.mxu0 0.0
        %3145 = vmatprep.subr.mxu0 0.0
        %3146 = vmatpush1.msra.mxu0 0.0
        %3147 = vmatprep.subr.mxu0 0.0
        %3148 = vmatpush1.msra.mxu0 0.0
        %3149 = vmatprep.subr.mxu0 0.0
        %3150 = vmatpush1.msra.mxu0 0.0
        %3151 = vmatprep.subr.mxu0 0.0
        %3152 = vmatpush1.msra.mxu0 0.0
        %3153 = vmatprep.subr.mxu0 0.0
        %3154 = vmatpush1.msra.mxu0 0.0
        %3155 = vmatprep.subr.mxu0 0.0
        %3156 = vmatpush1.msra.mxu0 0.0
        %3157 = vmatprep.subr.mxu0 0.0
        %3158 = vmatpush1.msra.mxu0 0.0
        %3159 = vmatprep.subr.mxu0 0.0
        %3160 = vmatpush1.msra.mxu0 0.0
        %3161 = vmatprep.subr.mxu0 0.0
        %3162 = vmatpush1.msra.mxu0 0.0
        %3163 = vmatprep.subr.mxu0 0.0
        %3164 = vmatpush1.msra.mxu0 0.0
        %3165 = vmatprep.mubr.f32.mxu0 0.0
        %3166 = vmatmul.mubr.f32.gmra.mrb[0].mxu0 %v3006
        %v3167 = vpop.f32.mrb[0].mxu0
        %v3168 = vadd.f32 0.0, %v3167
        %v3169 = vpop.f32.mrb[0].mxu0
        %3170 = vmatprep.mubr.f32.mxu0 0.0
        %3171 = vmatmul.mubr.f32.gmra.mrb[0].mxu0 %v3009
        %v3172 = vpop.f32.mrb[0].mxu0
        %v3173 = vadd.f32 0.0, %v3172
        %v3174 = vpop.f32.mrb[0].mxu0
        %3175 = vmatprep.mubr.f32.mxu0 0.0
        %3176 = vmatmul.mubr.f32.gmra.mrb[0].mxu0 %v3012
        %v3177 = vpop.f32.mrb[0].mxu0
        %v3178 = vadd.f32 0.0, %v3177
        %v3179 = vpop.f32.mrb[0].mxu0
        %3180 = vmatprep.mubr.f32.mxu0 0.0
        %3181 = vmatmul.mubr.f32.gmra.mrb[0].mxu0 %v3015
        %v3182 = vpop.f32.mrb[0].mxu0
        %v3183 = vadd.f32 0.0, %v3182
        %v3184 = vpop.f32.mrb[0].mxu0
        %3185 = vmatprep.mubr.f32.mxu0 0.0
        %3186 = vmatmul.mubr.f32.gmra.mrb[0].mxu0 %v3018
        %v3187 = vpop.f32.mrb[0].mxu0
        %v3188 = vadd.f32 0.0, %v3187
        %v3189 = vpop.f32.mrb[0].mxu0
        %3190 = vmatprep.mubr.f32.mxu0 0.0
        %3191 = vmatmul.mubr.f32.gmra.mrb[0].mxu0 %v3021
        %v3192 = vpop.f32.mrb[0].mxu0
        %v3193 = vadd.f32 0.0, %v3192
        %v3194 = vpop.f32.mrb[0].mxu0
        %3195 = vmatprep.mubr.f32.mxu0 0.0
        %3196 = vmatmul.mubr.f32.gmra.mrb[0].mxu0 %v3024
        %v3197 = vpop.f32.mrb[0].mxu0
        %v3198 = vadd.f32 0.0, %v3197
        %v3199 = vpop.f32.mrb[0].mxu0
        %3200 = vmatprep.mubr.f32.mxu0 0.0
        %3201 = vmatmul.mubr.f32.gmra.mrb[0].mxu0 %v3027
        %v3202 = vpop.f32.mrb[0].mxu0
        %v3203 = vadd.f32 0.0, %v3202
        %v3204 = vpop.f32.mrb[0].mxu0
        %3205 = vmatprep.mubr.f32.mxu0 0.0
        %3206 = vmatmul.mubr.f32.gmra.mrb[0].mxu0 %v3030
        %v3207 = vpop.f32.mrb[0].mxu0
        %v3208 = vadd.f32 0.0, %v3207
        %v3209 = vpop.f32.mrb[0].mxu0
        %3210 = vmatprep.mubr.f32.mxu0 0.0
        %3211 = vmatmul.mubr.f32.gmra.mrb[0].mxu0 %v3033
        %v3212 = vpop.f32.mrb[0].mxu0
        %v3213 = vadd.f32 0.0, %v3212
        %v3214 = vpop.f32.mrb[0].mxu0
        %3215 = vmatprep.mubr.f32.mxu0 0.0
        %3216 = vmatmul.mubr.f32.gmra.mrb[0].mxu0 %v3036
        %v3217 = vpop.f32.mrb[0].mxu0
        %v3218 = vadd.f32 0.0, %v3217
        %v3219 = vpop.f32.mrb[0].mxu0
        %3220 = vmatprep.mubr.f32.mxu0 0.0
        %3221 = vmatmul.mubr.f32.gmra.mrb[0].mxu0 %v3039
        %v3222 = vpop.f32.mrb[0].mxu0
        %v3223 = vadd.f32 0.0, %v3222
        %v3224 = vpop.f32.mrb[0].mxu0
        %3225 = vmatprep.mubr.f32.mxu0 0.0
        %3226 = vmatmul.mubr.f32.gmra.mrb[0].mxu0 %v3042
        %v3227 = vpop.f32.mrb[0].mxu0
        %v3228 = vadd.f32 0.0, %v3227
        %v3229 = vpop.f32.mrb[0].mxu0
        %3230 = vmatprep.mubr.f32.mxu0 0.0
        %3231 = vmatmul.mubr.f32.gmra.mrb[0].mxu0 %v3045
        %v3232 = vpop.f32.mrb[0].mxu0
        %v3233 = vadd.f32 0.0, %v3232
        %v3234 = vpop.f32.mrb[0].mxu0
        %3235 = vmatprep.mubr.f32.mxu0 0.0
        %3236 = vmatmul.mubr.f32.gmra.mrb[0].mxu0 %v3048
        %v3237 = vpop.f32.mrb[0].mxu0
        %v3238 = vadd.f32 0.0, %v3237
        %v3239 = vpop.f32.mrb[0].mxu0
        %3240 = vmatprep.mubr.f32.mxu0 0.0
        %3241 = vmatmul.mubr.f32.gmra.mrb[0].mxu0 %v3051
        %v3242 = vpop.f32.mrb[0].mxu0
        %v3243 = vadd.f32 0.0, %v3242
        %v3244 = vpop.f32.mrb[0].mxu0
        %3245 = vmatprep.mubr.f32.mxu0 0.0
        %3246 = vmatmul.mubr.f32.gmra.mrb[0].mxu0 %v3054
        %v3247 = vpop.f32.mrb[0].mxu0
        %v3248 = vadd.f32 0.0, %v3247
        %v3249 = vpop.f32.mrb[0].mxu0
        %3250 = vmatprep.mubr.f32.mxu0 0.0
        %3251 = vmatmul.mubr.f32.gmra.mrb[0].mxu0 %v3057
        %v3252 = vpop.f32.mrb[0].mxu0
        %v3253 = vadd.f32 0.0, %v3252
        %v3254 = vpop.f32.mrb[0].mxu0
        %3255 = vmatprep.mubr.f32.mxu0 0.0
        %3256 = vmatmul.mubr.f32.gmra.mrb[0].mxu0 %v3060
        %v3257 = vpop.f32.mrb[0].mxu0
        %v3258 = vadd.f32 0.0, %v3257
        %v3259 = vpop.f32.mrb[0].mxu0
        %3260 = vmatprep.mubr.f32.mxu0 0.0
        %3261 = vmatmul.mubr.f32.gmra.mrb[0].mxu0 %v3063
        %v3262 = vpop.f32.mrb[0].mxu0
        %v3263 = vadd.f32 0.0, %v3262
        %v3264 = vpop.f32.mrb[0].mxu0
        %3265 = vmatprep.mubr.f32.mxu0 0.0
        %3266 = vmatmul.mubr.f32.gmra.mrb[0].mxu0 %v3066
        %v3267 = vpop.f32.mrb[0].mxu0
        %v3268 = vadd.f32 0.0, %v3267
        %v3269 = vpop.f32.mrb[0].mxu0
        %3270 = vmatprep.mubr.f32.mxu0 0.0
        %3271 = vmatmul.mubr.f32.gmra.mrb[0].mxu0 %v3069
        %v3272 = vpop.f32.mrb[0].mxu0
        %v3273 = vadd.f32 0.0, %v3272
        %v3274 = vpop.f32.mrb[0].mxu0
        %3275 = vmatprep.mubr.f32.mxu0 0.0
        %3276 = vmatmul.mubr.f32.gmra.mrb[0].mxu0 %v3072
        %v3277 = vpop.f32.mrb[0].mxu0
        %v3278 = vadd.f32 0.0, %v3277
        %v3279 = vpop.f32.mrb[0].mxu0
        %3280 = vmatprep.mubr.f32.mxu0 0.0
        %3281 = vmatmul.mubr.f32.gmra.mrb[0].mxu0 %v3075
        %v3282 = vpop.f32.mrb[0].mxu0
        %v3283 = vadd.f32 0.0, %v3282
        %v3284 = vpop.f32.mrb[0].mxu0
        %3285 = vmatprep.mubr.f32.mxu0 0.0
        %3286 = vmatmul.mubr.f32.gmra.mrb[0].mxu0 %v3078
        %v3287 = vpop.f32.mrb[0].mxu0
        %v3288 = vadd.f32 0.0, %v3287
        %v3289 = vpop.f32.mrb[0].mxu0
        %3290 = vmatprep.mubr.f32.mxu0 0.0
        %3291 = vmatmul.mubr.f32.gmra.mrb[0].mxu0 %v3081
        %v3292 = vpop.f32.mrb[0].mxu0
        %v3293 = vadd.f32 0.0, %v3292
        %v3294 = vpop.f32.mrb[0].mxu0
        %3295 = vmatprep.mubr.f32.mxu0 0.0
        %3296 = vmatmul.mubr.f32.gmra.mrb[0].mxu0 %v3084
        %v3297 = vpop.f32.mrb[0].mxu0
        %v3298 = vadd.f32 0.0, %v3297
        %v3299 = vpop.f32.mrb[0].mxu0
        %3300 = vmatprep.mubr.f32.mxu0 0.0
        %3301 = vmatmul.mubr.f32.gmra.mrb[0].mxu0 %v3087
        %v3302 = vpop.f32.mrb[0].mxu0
        %v3303 = vadd.f32 0.0, %v3302
        %v3304 = vpop.f32.mrb[0].mxu0
        %3305 = vmatprep.mubr.f32.mxu0 0.0
        %3306 = vmatmul.mubr.f32.gmra.mrb[0].mxu0 %v3090
        %v3307 = vpop.f32.mrb[0].mxu0
        %v3308 = vadd.f32 0.0, %v3307
        %v3309 = vpop.f32.mrb[0].mxu0
        %3310 = vmatprep.mubr.f32.mxu0 0.0
        %3311 = vmatmul.mubr.f32.gmra.mrb[0].mxu0 %v3093
        %v3312 = vpop.f32.mrb[0].mxu0
        %v3313 = vadd.f32 0.0, %v3312
        %v3314 = vpop.f32.mrb[0].mxu0
        %3315 = vmatprep.mubr.f32.mxu0 0.0
        %3316 = vmatmul.mubr.f32.gmra.mrb[0].mxu0 %v3096
        %v3317 = vpop.f32.mrb[0].mxu0
        %v3318 = vadd.f32 0.0, %v3317
        %v3319 = vpop.f32.mrb[0].mxu0
        %3320 = vmatprep.mubr.f32.mxu0 0.0
        %3321 = vmatmul.mubr.f32.gmra.mrb[0].mxu0 %v3099
        %v3322 = vpop.f32.mrb[0].mxu0
        %v3323 = vadd.f32 0.0, %v3322
        %v3324 = vpop.f32.mrb[0].mxu0
        %3325 = vdwg.mxu0
        %v3326 = vadd.f32 %v2964, %v3168
        %v3327 = vadd.f32 %v2965, %v3173
        %v3328 = vadd.f32 %v2966, %v3178
        %v3329 = vadd.f32 %v2967, %v3183
        %v3330 = vadd.f32 %v2968, %v3188
        %v3331 = vadd.f32 %v2969, %v3193
        %v3332 = vadd.f32 %v2970, %v3198
        %v3333 = vadd.f32 %v2971, %v3203
        %v3334 = vadd.f32 %v2972, %v3208
        %v3335 = vadd.f32 %v2973, %v3213
        %v3336 = vadd.f32 %v2974, %v3218
        %v3337 = vadd.f32 %v2975, %v3223
        %v3338 = vadd.f32 %v2976, %v3228
        %v3339 = vadd.f32 %v2977, %v3233
        %v3340 = vadd.f32 %v2978, %v3238
        %v3341 = vadd.f32 %v2979, %v3243
        %v3342 = vadd.f32 %v2980, %v3248
        %v3343 = vadd.f32 %v2981, %v3253
        %v3344 = vadd.f32 %v2982, %v3258
        %v3345 = vadd.f32 %v2983, %v3263
        %v3346 = vadd.f32 %v2984, %v3268
        %v3347 = vadd.f32 %v2985, %v3273
        %v3348 = vadd.f32 %v2986, %v3278
        %v3349 = vadd.f32 %v2987, %v3283
        %v3350 = vadd.f32 %v2988, %v3288
        %v3351 = vadd.f32 %v2989, %v3293
        %v3352 = vadd.f32 %v2990, %v3298
        %v3353 = vadd.f32 %v2991, %v3303
        %v3354 = vadd.f32 %v2992, %v3308
        %v3355 = vadd.f32 %v2993, %v3313
        %v3356 = vadd.f32 %v2994, %v3318
        %v3357 = vadd.f32 %v2995, %v3323
        %3358 = vst.msk [vmem:[#allocation5] sm:$0xff] %vm728, %v3326
        %3359 = vst.msk [vmem:[#allocation5 + $0x8] sm:$0xff] %vm728, %v3327
        %3360 = vst.msk [vmem:[#allocation5 + $0x10] sm:$0xff] %vm728, %v3328
        %3361 = vst.msk [vmem:[#allocation5 + $0x18] sm:$0xff] %vm728, %v3329
        %3362 = vst.msk [vmem:[#allocation5 + $0x20] sm:$0xff] %vm728, %v3330
        %3363 = vst.msk [vmem:[#allocation5 + $0x28] sm:$0xff] %vm728, %v3331
        %3364 = vst.msk [vmem:[#allocation5 + $0x30] sm:$0xff] %vm728, %v3332
        %3365 = vst.msk [vmem:[#allocation5 + $0x38] sm:$0xff] %vm728, %v3333
        %3366 = vst.msk [vmem:[#allocation5 + $0x40] sm:$0xff] %vm728, %v3334
        %3367 = vst.msk [vmem:[#allocation5 + $0x48] sm:$0xff] %vm728, %v3335
        %3368 = vst.msk [vmem:[#allocation5 + $0x50] sm:$0xff] %vm728, %v3336
        %3369 = vst.msk [vmem:[#allocation5 + $0x58] sm:$0xff] %vm728, %v3337
        %3370 = vst.msk [vmem:[#allocation5 + $0x60] sm:$0xff] %vm728, %v3338
        %3371 = vst.msk [vmem:[#allocation5 + $0x68] sm:$0xff] %vm728, %v3339
        %3372 = vst.msk [vmem:[#allocation5 + $0x70] sm:$0xff] %vm728, %v3340
        %3373 = vst.msk [vmem:[#allocation5 + $0x78] sm:$0xff] %vm728, %v3341
        %3374 = vst.msk [vmem:[#allocation5 + $0x80] sm:$0xff] %vm728, %v3342
        %3375 = vst.msk [vmem:[#allocation5 + $0x88] sm:$0xff] %vm728, %v3343
        %3376 = vst.msk [vmem:[#allocation5 + $0x90] sm:$0xff] %vm728, %v3344
        %3377 = vst.msk [vmem:[#allocation5 + $0x98] sm:$0xff] %vm728, %v3345
        %3378 = vst.msk [vmem:[#allocation5 + $0xa0] sm:$0xff] %vm728, %v3346
        %3379 = vst.msk [vmem:[#allocation5 + $0xa8] sm:$0xff] %vm728, %v3347
        %3380 = vst.msk [vmem:[#allocation5 + $0xb0] sm:$0xff] %vm728, %v3348
        %3381 = vst.msk [vmem:[#allocation5 + $0xb8] sm:$0xff] %vm728, %v3349
        %3382 = vst.msk [vmem:[#allocation5 + $0xc0] sm:$0xff] %vm728, %v3350
        %3383 = vst.msk [vmem:[#allocation5 + $0xc8] sm:$0xff] %vm728, %v3351
        %3384 = vst.msk [vmem:[#allocation5 + $0xd0] sm:$0xff] %vm728, %v3352
        %3385 = vst.msk [vmem:[#allocation5 + $0xd8] sm:$0xff] %vm728, %v3353
        %3386 = vst.msk [vmem:[#allocation5 + $0xe0] sm:$0xff] %vm728, %v3354
        %3387 = vst.msk [vmem:[#allocation5 + $0xe8] sm:$0xff] %vm728, %v3355
        %3388 = vst.msk [vmem:[#allocation5 + $0xf0] sm:$0xff] %vm728, %v3356
        %3389 = vst.msk [vmem:[#allocation5 + $0xf8] sm:$0xff] %vm728, %v3357
        %v3390 = vld [vmem:[%s1034] sm:$0xff]
        %v3391 = vld [vmem:[%s1034 + $0x8] sm:$0xff]
        %v3392 = vld [vmem:[%s1034 + $0x10] sm:$0xff]
        %v3393 = vld [vmem:[%s1034 + $0x18] sm:$0xff]
        %v3394 = vld [vmem:[%s1034 + $0x20] sm:$0xff]
        %v3395 = vld [vmem:[%s1034 + $0x28] sm:$0xff]
        %v3396 = vld [vmem:[%s1034 + $0x30] sm:$0xff]
        %v3397 = vld [vmem:[%s1034 + $0x38] sm:$0xff]
        %v3398 = vld [vmem:[%s1034 + $0x40] sm:$0xff]
        %v3399 = vld [vmem:[%s1034 + $0x48] sm:$0xff]
        %v3400 = vld [vmem:[%s1034 + $0x50] sm:$0xff]
        %v3401 = vld [vmem:[%s1034 + $0x58] sm:$0xff]
        %v3402 = vld [vmem:[%s1034 + $0x60] sm:$0xff]
        %v3403 = vld [vmem:[%s1034 + $0x68] sm:$0xff]
        %v3404 = vld [vmem:[%s1034 + $0x70] sm:$0xff]
        %v3405 = vld [vmem:[%s1034 + $0x78] sm:$0xff]
        %v3406 = vld [vmem:[%s1034 + $0x80] sm:$0xff]
        %v3407 = vld [vmem:[%s1034 + $0x88] sm:$0xff]
        %v3408 = vld [vmem:[%s1034 + $0x90] sm:$0xff]
        %v3409 = vld [vmem:[%s1034 + $0x98] sm:$0xff]
        %v3410 = vld [vmem:[%s1034 + $0xa0] sm:$0xff]
        %v3411 = vld [vmem:[%s1034 + $0xa8] sm:$0xff]
        %v3412 = vld [vmem:[%s1034 + $0xb0] sm:$0xff]
        %v3413 = vld [vmem:[%s1034 + $0xb8] sm:$0xff]
        %v3414 = vld [vmem:[%s1034 + $0xc0] sm:$0xff]
        %v3415 = vld [vmem:[%s1034 + $0xc8] sm:$0xff]
        %v3416 = vld [vmem:[%s1034 + $0xd0] sm:$0xff]
        %v3417 = vld [vmem:[%s1034 + $0xd8] sm:$0xff]
        %v3418 = vld [vmem:[%s1034 + $0xe0] sm:$0xff]
        %v3419 = vld [vmem:[%s1034 + $0xe8] sm:$0xff]
        %v3420 = vld [vmem:[%s1034 + $0xf0] sm:$0xff]
        %v3421 = vld [vmem:[%s1034 + $0xf8] sm:$0xff]
        %v3422 = vld [vmem:[#allocation5] sm:$0xff]
        %v3423 = vld [vmem:[#allocation5 + $0x8] sm:$0xff]
        %v3424 = vld [vmem:[#allocation5 + $0x10] sm:$0xff]
        %v3425 = vld [vmem:[#allocation5 + $0x18] sm:$0xff]
        %v3426 = vld [vmem:[#allocation5 + $0x20] sm:$0xff]
        %v3427 = vld [vmem:[#allocation5 + $0x28] sm:$0xff]
        %v3428 = vld [vmem:[#allocation5 + $0x30] sm:$0xff]
        %v3429 = vld [vmem:[#allocation5 + $0x38] sm:$0xff]
        %v3430 = vld [vmem:[#allocation5 + $0x40] sm:$0xff]
        %v3431 = vld [vmem:[#allocation5 + $0x48] sm:$0xff]
        %v3432 = vld [vmem:[#allocation5 + $0x50] sm:$0xff]
        %v3433 = vld [vmem:[#allocation5 + $0x58] sm:$0xff]
        %v3434 = vld [vmem:[#allocation5 + $0x60] sm:$0xff]
        %v3435 = vld [vmem:[#allocation5 + $0x68] sm:$0xff]
        %v3436 = vld [vmem:[#allocation5 + $0x70] sm:$0xff]
        %v3437 = vld [vmem:[#allocation5 + $0x78] sm:$0xff]
        %v3438 = vld [vmem:[#allocation5 + $0x80] sm:$0xff]
        %v3439 = vld [vmem:[#allocation5 + $0x88] sm:$0xff]
        %v3440 = vld [vmem:[#allocation5 + $0x90] sm:$0xff]
        %v3441 = vld [vmem:[#allocation5 + $0x98] sm:$0xff]
        %v3442 = vld [vmem:[#allocation5 + $0xa0] sm:$0xff]
        %v3443 = vld [vmem:[#allocation5 + $0xa8] sm:$0xff]
        %v3444 = vld [vmem:[#allocation5 + $0xb0] sm:$0xff]
        %v3445 = vld [vmem:[#allocation5 + $0xb8] sm:$0xff]
        %v3446 = vld [vmem:[#allocation5 + $0xc0] sm:$0xff]
        %v3447 = vld [vmem:[#allocation5 + $0xc8] sm:$0xff]
        %v3448 = vld [vmem:[#allocation5 + $0xd0] sm:$0xff]
        %v3449 = vld [vmem:[#allocation5 + $0xd8] sm:$0xff]
        %v3450 = vld [vmem:[#allocation5 + $0xe0] sm:$0xff]
        %v3451 = vld [vmem:[#allocation5 + $0xe8] sm:$0xff]
        %v3452 = vld [vmem:[#allocation5 + $0xf0] sm:$0xff]
        %v3453 = vld [vmem:[#allocation5 + $0xf8] sm:$0xff]
        %s3454 = scalar_lea.vmem %s3, 320
        %v3455 = vld [vmem:[%s3454] sm:$0xff]
        %v3456 = vld [vmem:[%s3454 + $0x8] sm:$0xff]
        %v3457 = vld [vmem:[%s3454 + $0x10] sm:$0xff]
        %v3458 = vld [vmem:[%s3454 + $0x18] sm:$0xff]
        %v3459 = vld [vmem:[%s3454 + $0x20] sm:$0xff]
        %v3460 = vld [vmem:[%s3454 + $0x28] sm:$0xff]
        %v3461 = vld [vmem:[%s3454 + $0x30] sm:$0xff]
        %v3462 = vld [vmem:[%s3454 + $0x38] sm:$0xff]
        %v3464 = vsel %vm728, %v3390, 0
        %v3467 = vsel %vm728, %v3391, 0
        %v3470 = vsel %vm728, %v3392, 0
        %v3473 = vsel %vm728, %v3393, 0
        %v3476 = vsel %vm728, %v3394, 0
        %v3479 = vsel %vm728, %v3395, 0
        %v3482 = vsel %vm728, %v3396, 0
        %v3485 = vsel %vm728, %v3397, 0
        %v3488 = vsel %vm728, %v3398, 0
        %v3491 = vsel %vm728, %v3399, 0
        %v3494 = vsel %vm728, %v3400, 0
        %v3497 = vsel %vm728, %v3401, 0
        %v3500 = vsel %vm728, %v3402, 0
        %v3503 = vsel %vm728, %v3403, 0
        %v3506 = vsel %vm728, %v3404, 0
        %v3509 = vsel %vm728, %v3405, 0
        %v3512 = vsel %vm728, %v3406, 0
        %v3515 = vsel %vm728, %v3407, 0
        %v3518 = vsel %vm728, %v3408, 0
        %v3521 = vsel %vm728, %v3409, 0
        %v3524 = vsel %vm728, %v3410, 0
        %v3527 = vsel %vm728, %v3411, 0
        %v3530 = vsel %vm728, %v3412, 0
        %v3533 = vsel %vm728, %v3413, 0
        %v3536 = vsel %vm728, %v3414, 0
        %v3539 = vsel %vm728, %v3415, 0
        %v3542 = vsel %vm728, %v3416, 0
        %v3545 = vsel %vm728, %v3417, 0
        %v3548 = vsel %vm728, %v3418, 0
        %v3551 = vsel %vm728, %v3419, 0
        %v3554 = vsel %vm728, %v3420, 0
        %v3557 = vsel %vm728, %v3421, 0
        %3559 = vmatprep.subr.mxu0 0.0
        %3560 = vmatpush1.msra.mxu0 %v3455
        %3561 = vmatprep.subr.mxu0 0.0
        %3562 = vmatpush1.msra.mxu0 %v3456
        %3563 = vmatprep.subr.mxu0 0.0
        %3564 = vmatpush1.msra.mxu0 %v3457
        %3565 = vmatprep.subr.mxu0 0.0
        %3566 = vmatpush1.msra.mxu0 %v3458
        %3567 = vmatprep.subr.mxu0 0.0
        %3568 = vmatpush1.msra.mxu0 %v3459
        %3569 = vmatprep.subr.mxu0 0.0
        %3570 = vmatpush1.msra.mxu0 %v3460
        %3571 = vmatprep.subr.mxu0 0.0
        %3572 = vmatpush1.msra.mxu0 %v3461
        %3573 = vmatprep.subr.mxu0 0.0
        %3574 = vmatpush1.msra.mxu0 %v3462
        %3575 = vmatprep.subr.mxu0 0.0
        %3576 = vmatpush1.msra.mxu0 0.0
        %3577 = vmatprep.subr.mxu0 0.0
        %3578 = vmatpush1.msra.mxu0 0.0
        %3579 = vmatprep.subr.mxu0 0.0
        %3580 = vmatpush1.msra.mxu0 0.0
        %3581 = vmatprep.subr.mxu0 0.0
        %3582 = vmatpush1.msra.mxu0 0.0
        %3583 = vmatprep.subr.mxu0 0.0
        %3584 = vmatpush1.msra.mxu0 0.0
        %3585 = vmatprep.subr.mxu0 0.0
        %3586 = vmatpush1.msra.mxu0 0.0
        %3587 = vmatprep.subr.mxu0 0.0
        %3588 = vmatpush1.msra.mxu0 0.0
        %3589 = vmatprep.subr.mxu0 0.0
        %3590 = vmatpush1.msra.mxu0 0.0
        %3591 = vmatprep.subr.mxu0 0.0
        %3592 = vmatpush1.msra.mxu0 0.0
        %3593 = vmatprep.subr.mxu0 0.0
        %3594 = vmatpush1.msra.mxu0 0.0
        %3595 = vmatprep.subr.mxu0 0.0
        %3596 = vmatpush1.msra.mxu0 0.0
        %3597 = vmatprep.subr.mxu0 0.0
        %3598 = vmatpush1.msra.mxu0 0.0
        %3599 = vmatprep.subr.mxu0 0.0
        %3600 = vmatpush1.msra.mxu0 0.0
        %3601 = vmatprep.subr.mxu0 0.0
        %3602 = vmatpush1.msra.mxu0 0.0
        %3603 = vmatprep.subr.mxu0 0.0
        %3604 = vmatpush1.msra.mxu0 0.0
        %3605 = vmatprep.subr.mxu0 0.0
        %3606 = vmatpush1.msra.mxu0 0.0
        %3607 = vmatprep.subr.mxu0 0.0
        %3608 = vmatpush1.msra.mxu0 0.0
        %3609 = vmatprep.subr.mxu0 0.0
        %3610 = vmatpush1.msra.mxu0 0.0
        %3611 = vmatprep.subr.mxu0 0.0
        %3612 = vmatpush1.msra.mxu0 0.0
        %3613 = vmatprep.subr.mxu0 0.0
        %3614 = vmatpush1.msra.mxu0 0.0
        %3615 = vmatprep.subr.mxu0 0.0
        %3616 = vmatpush1.msra.mxu0 0.0
        %3617 = vmatprep.subr.mxu0 0.0
        %3618 = vmatpush1.msra.mxu0 0.0
        %3619 = vmatprep.subr.mxu0 0.0
        %3620 = vmatpush1.msra.mxu0 0.0
        %3621 = vmatprep.subr.mxu0 0.0
        %3622 = vmatpush1.msra.mxu0 0.0
        %3623 = vmatprep.mubr.f32.mxu0 0.0
        %3624 = vmatmul.mubr.f32.gmra.mrb[0].mxu0 %v3464
        %v3625 = vpop.f32.mrb[0].mxu0
        %v3626 = vadd.f32 0.0, %v3625
        %v3627 = vpop.f32.mrb[0].mxu0
        %3628 = vmatprep.mubr.f32.mxu0 0.0
        %3629 = vmatmul.mubr.f32.gmra.mrb[0].mxu0 %v3467
        %v3630 = vpop.f32.mrb[0].mxu0
        %v3631 = vadd.f32 0.0, %v3630
        %v3632 = vpop.f32.mrb[0].mxu0
        %3633 = vmatprep.mubr.f32.mxu0 0.0
        %3634 = vmatmul.mubr.f32.gmra.mrb[0].mxu0 %v3470
        %v3635 = vpop.f32.mrb[0].mxu0
        %v3636 = vadd.f32 0.0, %v3635
        %v3637 = vpop.f32.mrb[0].mxu0
        %3638 = vmatprep.mubr.f32.mxu0 0.0
        %3639 = vmatmul.mubr.f32.gmra.mrb[0].mxu0 %v3473
        %v3640 = vpop.f32.mrb[0].mxu0
        %v3641 = vadd.f32 0.0, %v3640
        %v3642 = vpop.f32.mrb[0].mxu0
        %3643 = vmatprep.mubr.f32.mxu0 0.0
        %3644 = vmatmul.mubr.f32.gmra.mrb[0].mxu0 %v3476
        %v3645 = vpop.f32.mrb[0].mxu0
        %v3646 = vadd.f32 0.0, %v3645
        %v3647 = vpop.f32.mrb[0].mxu0
        %3648 = vmatprep.mubr.f32.mxu0 0.0
        %3649 = vmatmul.mubr.f32.gmra.mrb[0].mxu0 %v3479
        %v3650 = vpop.f32.mrb[0].mxu0
        %v3651 = vadd.f32 0.0, %v3650
        %v3652 = vpop.f32.mrb[0].mxu0
        %3653 = vmatprep.mubr.f32.mxu0 0.0
        %3654 = vmatmul.mubr.f32.gmra.mrb[0].mxu0 %v3482
        %v3655 = vpop.f32.mrb[0].mxu0
        %v3656 = vadd.f32 0.0, %v3655
        %v3657 = vpop.f32.mrb[0].mxu0
        %3658 = vmatprep.mubr.f32.mxu0 0.0
        %3659 = vmatmul.mubr.f32.gmra.mrb[0].mxu0 %v3485
        %v3660 = vpop.f32.mrb[0].mxu0
        %v3661 = vadd.f32 0.0, %v3660
        %v3662 = vpop.f32.mrb[0].mxu0
        %3663 = vmatprep.mubr.f32.mxu0 0.0
        %3664 = vmatmul.mubr.f32.gmra.mrb[0].mxu0 %v3488
        %v3665 = vpop.f32.mrb[0].mxu0
        %v3666 = vadd.f32 0.0, %v3665
        %v3667 = vpop.f32.mrb[0].mxu0
        %3668 = vmatprep.mubr.f32.mxu0 0.0
        %3669 = vmatmul.mubr.f32.gmra.mrb[0].mxu0 %v3491
        %v3670 = vpop.f32.mrb[0].mxu0
        %v3671 = vadd.f32 0.0, %v3670
        %v3672 = vpop.f32.mrb[0].mxu0
        %3673 = vmatprep.mubr.f32.mxu0 0.0
        %3674 = vmatmul.mubr.f32.gmra.mrb[0].mxu0 %v3494
        %v3675 = vpop.f32.mrb[0].mxu0
        %v3676 = vadd.f32 0.0, %v3675
        %v3677 = vpop.f32.mrb[0].mxu0
        %3678 = vmatprep.mubr.f32.mxu0 0.0
        %3679 = vmatmul.mubr.f32.gmra.mrb[0].mxu0 %v3497
        %v3680 = vpop.f32.mrb[0].mxu0
        %v3681 = vadd.f32 0.0, %v3680
        %v3682 = vpop.f32.mrb[0].mxu0
        %3683 = vmatprep.mubr.f32.mxu0 0.0
        %3684 = vmatmul.mubr.f32.gmra.mrb[0].mxu0 %v3500
        %v3685 = vpop.f32.mrb[0].mxu0
        %v3686 = vadd.f32 0.0, %v3685
        %v3687 = vpop.f32.mrb[0].mxu0
        %3688 = vmatprep.mubr.f32.mxu0 0.0
        %3689 = vmatmul.mubr.f32.gmra.mrb[0].mxu0 %v3503
        %v3690 = vpop.f32.mrb[0].mxu0
        %v3691 = vadd.f32 0.0, %v3690
        %v3692 = vpop.f32.mrb[0].mxu0
        %3693 = vmatprep.mubr.f32.mxu0 0.0
        %3694 = vmatmul.mubr.f32.gmra.mrb[0].mxu0 %v3506
        %v3695 = vpop.f32.mrb[0].mxu0
        %v3696 = vadd.f32 0.0, %v3695
        %v3697 = vpop.f32.mrb[0].mxu0
        %3698 = vmatprep.mubr.f32.mxu0 0.0
        %3699 = vmatmul.mubr.f32.gmra.mrb[0].mxu0 %v3509
        %v3700 = vpop.f32.mrb[0].mxu0
        %v3701 = vadd.f32 0.0, %v3700
        %v3702 = vpop.f32.mrb[0].mxu0
        %3703 = vmatprep.mubr.f32.mxu0 0.0
        %3704 = vmatmul.mubr.f32.gmra.mrb[0].mxu0 %v3512
        %v3705 = vpop.f32.mrb[0].mxu0
        %v3706 = vadd.f32 0.0, %v3705
        %v3707 = vpop.f32.mrb[0].mxu0
        %3708 = vmatprep.mubr.f32.mxu0 0.0
        %3709 = vmatmul.mubr.f32.gmra.mrb[0].mxu0 %v3515
        %v3710 = vpop.f32.mrb[0].mxu0
        %v3711 = vadd.f32 0.0, %v3710
        %v3712 = vpop.f32.mrb[0].mxu0
        %3713 = vmatprep.mubr.f32.mxu0 0.0
        %3714 = vmatmul.mubr.f32.gmra.mrb[0].mxu0 %v3518
        %v3715 = vpop.f32.mrb[0].mxu0
        %v3716 = vadd.f32 0.0, %v3715
        %v3717 = vpop.f32.mrb[0].mxu0
        %3718 = vmatprep.mubr.f32.mxu0 0.0
        %3719 = vmatmul.mubr.f32.gmra.mrb[0].mxu0 %v3521
        %v3720 = vpop.f32.mrb[0].mxu0
        %v3721 = vadd.f32 0.0, %v3720
        %v3722 = vpop.f32.mrb[0].mxu0
        %3723 = vmatprep.mubr.f32.mxu0 0.0
        %3724 = vmatmul.mubr.f32.gmra.mrb[0].mxu0 %v3524
        %v3725 = vpop.f32.mrb[0].mxu0
        %v3726 = vadd.f32 0.0, %v3725
        %v3727 = vpop.f32.mrb[0].mxu0
        %3728 = vmatprep.mubr.f32.mxu0 0.0
        %3729 = vmatmul.mubr.f32.gmra.mrb[0].mxu0 %v3527
        %v3730 = vpop.f32.mrb[0].mxu0
        %v3731 = vadd.f32 0.0, %v3730
        %v3732 = vpop.f32.mrb[0].mxu0
        %3733 = vmatprep.mubr.f32.mxu0 0.0
        %3734 = vmatmul.mubr.f32.gmra.mrb[0].mxu0 %v3530
        %v3735 = vpop.f32.mrb[0].mxu0
        %v3736 = vadd.f32 0.0, %v3735
        %v3737 = vpop.f32.mrb[0].mxu0
        %3738 = vmatprep.mubr.f32.mxu0 0.0
        %3739 = vmatmul.mubr.f32.gmra.mrb[0].mxu0 %v3533
        %v3740 = vpop.f32.mrb[0].mxu0
        %v3741 = vadd.f32 0.0, %v3740
        %v3742 = vpop.f32.mrb[0].mxu0
        %3743 = vmatprep.mubr.f32.mxu0 0.0
        %3744 = vmatmul.mubr.f32.gmra.mrb[0].mxu0 %v3536
        %v3745 = vpop.f32.mrb[0].mxu0
        %v3746 = vadd.f32 0.0, %v3745
        %v3747 = vpop.f32.mrb[0].mxu0
        %3748 = vmatprep.mubr.f32.mxu0 0.0
        %3749 = vmatmul.mubr.f32.gmra.mrb[0].mxu0 %v3539
        %v3750 = vpop.f32.mrb[0].mxu0
        %v3751 = vadd.f32 0.0, %v3750
        %v3752 = vpop.f32.mrb[0].mxu0
        %3753 = vmatprep.mubr.f32.mxu0 0.0
        %3754 = vmatmul.mubr.f32.gmra.mrb[0].mxu0 %v3542
        %v3755 = vpop.f32.mrb[0].mxu0
        %v3756 = vadd.f32 0.0, %v3755
        %v3757 = vpop.f32.mrb[0].mxu0
        %3758 = vmatprep.mubr.f32.mxu0 0.0
        %3759 = vmatmul.mubr.f32.gmra.mrb[0].mxu0 %v3545
        %v3760 = vpop.f32.mrb[0].mxu0
        %v3761 = vadd.f32 0.0, %v3760
        %v3762 = vpop.f32.mrb[0].mxu0
        %3763 = vmatprep.mubr.f32.mxu0 0.0
        %3764 = vmatmul.mubr.f32.gmra.mrb[0].mxu0 %v3548
        %v3765 = vpop.f32.mrb[0].mxu0
        %v3766 = vadd.f32 0.0, %v3765
        %v3767 = vpop.f32.mrb[0].mxu0
        %3768 = vmatprep.mubr.f32.mxu0 0.0
        %3769 = vmatmul.mubr.f32.gmra.mrb[0].mxu0 %v3551
        %v3770 = vpop.f32.mrb[0].mxu0
        %v3771 = vadd.f32 0.0, %v3770
        %v3772 = vpop.f32.mrb[0].mxu0
        %3773 = vmatprep.mubr.f32.mxu0 0.0
        %3774 = vmatmul.mubr.f32.gmra.mrb[0].mxu0 %v3554
        %v3775 = vpop.f32.mrb[0].mxu0
        %v3776 = vadd.f32 0.0, %v3775
        %v3777 = vpop.f32.mrb[0].mxu0
        %3778 = vmatprep.mubr.f32.mxu0 0.0
        %3779 = vmatmul.mubr.f32.gmra.mrb[0].mxu0 %v3557
        %v3780 = vpop.f32.mrb[0].mxu0
        %v3781 = vadd.f32 0.0, %v3780
        %v3782 = vpop.f32.mrb[0].mxu0
        %3783 = vdwg.mxu0
        %v3784 = vadd.f32 %v3422, %v3626
        %v3785 = vadd.f32 %v3423, %v3631
        %v3786 = vadd.f32 %v3424, %v3636
        %v3787 = vadd.f32 %v3425, %v3641
        %v3788 = vadd.f32 %v3426, %v3646
        %v3789 = vadd.f32 %v3427, %v3651
        %v3790 = vadd.f32 %v3428, %v3656
        %v3791 = vadd.f32 %v3429, %v3661
        %v3792 = vadd.f32 %v3430, %v3666
        %v3793 = vadd.f32 %v3431, %v3671
        %v3794 = vadd.f32 %v3432, %v3676
        %v3795 = vadd.f32 %v3433, %v3681
        %v3796 = vadd.f32 %v3434, %v3686
        %v3797 = vadd.f32 %v3435, %v3691
        %v3798 = vadd.f32 %v3436, %v3696
        %v3799 = vadd.f32 %v3437, %v3701
        %v3800 = vadd.f32 %v3438, %v3706
        %v3801 = vadd.f32 %v3439, %v3711
        %v3802 = vadd.f32 %v3440, %v3716
        %v3803 = vadd.f32 %v3441, %v3721
        %v3804 = vadd.f32 %v3442, %v3726
        %v3805 = vadd.f32 %v3443, %v3731
        %v3806 = vadd.f32 %v3444, %v3736
        %v3807 = vadd.f32 %v3445, %v3741
        %v3808 = vadd.f32 %v3446, %v3746
        %v3809 = vadd.f32 %v3447, %v3751
        %v3810 = vadd.f32 %v3448, %v3756
        %v3811 = vadd.f32 %v3449, %v3761
        %v3812 = vadd.f32 %v3450, %v3766
        %v3813 = vadd.f32 %v3451, %v3771
        %v3814 = vadd.f32 %v3452, %v3776
        %v3815 = vadd.f32 %v3453, %v3781
        %3816 = vst.msk [vmem:[#allocation5] sm:$0xff] %vm728, %v3784
        %3817 = vst.msk [vmem:[#allocation5 + $0x8] sm:$0xff] %vm728, %v3785
        %3818 = vst.msk [vmem:[#allocation5 + $0x10] sm:$0xff] %vm728, %v3786
        %3819 = vst.msk [vmem:[#allocation5 + $0x18] sm:$0xff] %vm728, %v3787
        %3820 = vst.msk [vmem:[#allocation5 + $0x20] sm:$0xff] %vm728, %v3788
        %3821 = vst.msk [vmem:[#allocation5 + $0x28] sm:$0xff] %vm728, %v3789
        %3822 = vst.msk [vmem:[#allocation5 + $0x30] sm:$0xff] %vm728, %v3790
        %3823 = vst.msk [vmem:[#allocation5 + $0x38] sm:$0xff] %vm728, %v3791
        %3824 = vst.msk [vmem:[#allocation5 + $0x40] sm:$0xff] %vm728, %v3792
        %3825 = vst.msk [vmem:[#allocation5 + $0x48] sm:$0xff] %vm728, %v3793
        %3826 = vst.msk [vmem:[#allocation5 + $0x50] sm:$0xff] %vm728, %v3794
        %3827 = vst.msk [vmem:[#allocation5 + $0x58] sm:$0xff] %vm728, %v3795
        %3828 = vst.msk [vmem:[#allocation5 + $0x60] sm:$0xff] %vm728, %v3796
        %3829 = vst.msk [vmem:[#allocation5 + $0x68] sm:$0xff] %vm728, %v3797
        %3830 = vst.msk [vmem:[#allocation5 + $0x70] sm:$0xff] %vm728, %v3798
        %3831 = vst.msk [vmem:[#allocation5 + $0x78] sm:$0xff] %vm728, %v3799
        %3832 = vst.msk [vmem:[#allocation5 + $0x80] sm:$0xff] %vm728, %v3800
        %3833 = vst.msk [vmem:[#allocation5 + $0x88] sm:$0xff] %vm728, %v3801
        %3834 = vst.msk [vmem:[#allocation5 + $0x90] sm:$0xff] %vm728, %v3802
        %3835 = vst.msk [vmem:[#allocation5 + $0x98] sm:$0xff] %vm728, %v3803
        %3836 = vst.msk [vmem:[#allocation5 + $0xa0] sm:$0xff] %vm728, %v3804
        %3837 = vst.msk [vmem:[#allocation5 + $0xa8] sm:$0xff] %vm728, %v3805
        %3838 = vst.msk [vmem:[#allocation5 + $0xb0] sm:$0xff] %vm728, %v3806
        %3839 = vst.msk [vmem:[#allocation5 + $0xb8] sm:$0xff] %vm728, %v3807
        %3840 = vst.msk [vmem:[#allocation5 + $0xc0] sm:$0xff] %vm728, %v3808
        %3841 = vst.msk [vmem:[#allocation5 + $0xc8] sm:$0xff] %vm728, %v3809
        %3842 = vst.msk [vmem:[#allocation5 + $0xd0] sm:$0xff] %vm728, %v3810
        %3843 = vst.msk [vmem:[#allocation5 + $0xd8] sm:$0xff] %vm728, %v3811
        %3844 = vst.msk [vmem:[#allocation5 + $0xe0] sm:$0xff] %vm728, %v3812
        %3845 = vst.msk [vmem:[#allocation5 + $0xe8] sm:$0xff] %vm728, %v3813
        %3846 = vst.msk [vmem:[#allocation5 + $0xf0] sm:$0xff] %vm728, %v3814
        %3847 = vst.msk [vmem:[#allocation5 + $0xf8] sm:$0xff] %vm728, %v3815
        %s3848 = scalar_lea.vmem [#allocation2], 32
        %v3849 = vld [vmem:[%s3848] sm:$0xff]
        %v3850 = vld [vmem:[%s3848 + $0x8] sm:$0xff]
        %v3851 = vld [vmem:[%s3848 + $0x10] sm:$0xff]
        %v3852 = vld [vmem:[%s3848 + $0x18] sm:$0xff]
        %v3853 = vld [vmem:[%s3848 + $0x20] sm:$0xff]
        %v3854 = vld [vmem:[%s3848 + $0x28] sm:$0xff]
        %v3855 = vld [vmem:[%s3848 + $0x30] sm:$0xff]
        %v3856 = vld [vmem:[%s3848 + $0x38] sm:$0xff]
        %v3857 = vld [vmem:[%s3848 + $0x40] sm:$0xff]
        %v3858 = vld [vmem:[%s3848 + $0x48] sm:$0xff]
        %v3859 = vld [vmem:[%s3848 + $0x50] sm:$0xff]
        %v3860 = vld [vmem:[%s3848 + $0x58] sm:$0xff]
        %v3861 = vld [vmem:[%s3848 + $0x60] sm:$0xff]
        %v3862 = vld [vmem:[%s3848 + $0x68] sm:$0xff]
        %v3863 = vld [vmem:[%s3848 + $0x70] sm:$0xff]
        %v3864 = vld [vmem:[%s3848 + $0x78] sm:$0xff]
        %v3865 = vld [vmem:[%s3848 + $0x80] sm:$0xff]
        %v3866 = vld [vmem:[%s3848 + $0x88] sm:$0xff]
        %v3867 = vld [vmem:[%s3848 + $0x90] sm:$0xff]
        %v3868 = vld [vmem:[%s3848 + $0x98] sm:$0xff]
        %v3869 = vld [vmem:[%s3848 + $0xa0] sm:$0xff]
        %v3870 = vld [vmem:[%s3848 + $0xa8] sm:$0xff]
        %v3871 = vld [vmem:[%s3848 + $0xb0] sm:$0xff]
        %v3872 = vld [vmem:[%s3848 + $0xb8] sm:$0xff]
        %v3873 = vld [vmem:[%s3848 + $0xc0] sm:$0xff]
        %v3874 = vld [vmem:[%s3848 + $0xc8] sm:$0xff]
        %v3875 = vld [vmem:[%s3848 + $0xd0] sm:$0xff]
        %v3876 = vld [vmem:[%s3848 + $0xd8] sm:$0xff]
        %v3877 = vld [vmem:[%s3848 + $0xe0] sm:$0xff]
        %v3878 = vld [vmem:[%s3848 + $0xe8] sm:$0xff]
        %v3879 = vld [vmem:[%s3848 + $0xf0] sm:$0xff]
        %v3880 = vld [vmem:[%s3848 + $0xf8] sm:$0xff]
        %v3881 = vld [vmem:[#allocation5] sm:$0xff]
        %v3882 = vld [vmem:[#allocation5 + $0x8] sm:$0xff]
        %v3883 = vld [vmem:[#allocation5 + $0x10] sm:$0xff]
        %v3884 = vld [vmem:[#allocation5 + $0x18] sm:$0xff]
        %v3885 = vld [vmem:[#allocation5 + $0x20] sm:$0xff]
        %v3886 = vld [vmem:[#allocation5 + $0x28] sm:$0xff]
        %v3887 = vld [vmem:[#allocation5 + $0x30] sm:$0xff]
        %v3888 = vld [vmem:[#allocation5 + $0x38] sm:$0xff]
        %v3889 = vld [vmem:[#allocation5 + $0x40] sm:$0xff]
        %v3890 = vld [vmem:[#allocation5 + $0x48] sm:$0xff]
        %v3891 = vld [vmem:[#allocation5 + $0x50] sm:$0xff]
        %v3892 = vld [vmem:[#allocation5 + $0x58] sm:$0xff]
        %v3893 = vld [vmem:[#allocation5 + $0x60] sm:$0xff]
        %v3894 = vld [vmem:[#allocation5 + $0x68] sm:$0xff]
        %v3895 = vld [vmem:[#allocation5 + $0x70] sm:$0xff]
        %v3896 = vld [vmem:[#allocation5 + $0x78] sm:$0xff]
        %v3897 = vld [vmem:[#allocation5 + $0x80] sm:$0xff]
        %v3898 = vld [vmem:[#allocation5 + $0x88] sm:$0xff]
        %v3899 = vld [vmem:[#allocation5 + $0x90] sm:$0xff]
        %v3900 = vld [vmem:[#allocation5 + $0x98] sm:$0xff]
        %v3901 = vld [vmem:[#allocation5 + $0xa0] sm:$0xff]
        %v3902 = vld [vmem:[#allocation5 + $0xa8] sm:$0xff]
        %v3903 = vld [vmem:[#allocation5 + $0xb0] sm:$0xff]
        %v3904 = vld [vmem:[#allocation5 + $0xb8] sm:$0xff]
        %v3905 = vld [vmem:[#allocation5 + $0xc0] sm:$0xff]
        %v3906 = vld [vmem:[#allocation5 + $0xc8] sm:$0xff]
        %v3907 = vld [vmem:[#allocation5 + $0xd0] sm:$0xff]
        %v3908 = vld [vmem:[#allocation5 + $0xd8] sm:$0xff]
        %v3909 = vld [vmem:[#allocation5 + $0xe0] sm:$0xff]
        %v3910 = vld [vmem:[#allocation5 + $0xe8] sm:$0xff]
        %v3911 = vld [vmem:[#allocation5 + $0xf0] sm:$0xff]
        %v3912 = vld [vmem:[#allocation5 + $0xf8] sm:$0xff]
        %s3913 = scalar_lea.vmem %s3, 384
        %v3914 = vld [vmem:[%s3913] sm:$0xff]
        %v3915 = vld [vmem:[%s3913 + $0x8] sm:$0xff]
        %v3916 = vld [vmem:[%s3913 + $0x10] sm:$0xff]
        %v3917 = vld [vmem:[%s3913 + $0x18] sm:$0xff]
        %v3918 = vld [vmem:[%s3913 + $0x20] sm:$0xff]
        %v3919 = vld [vmem:[%s3913 + $0x28] sm:$0xff]
        %v3920 = vld [vmem:[%s3913 + $0x30] sm:$0xff]
        %v3921 = vld [vmem:[%s3913 + $0x38] sm:$0xff]
        %v3923 = vsel %vm728, %v3849, 0
        %v3926 = vsel %vm728, %v3850, 0
        %v3929 = vsel %vm728, %v3851, 0
        %v3932 = vsel %vm728, %v3852, 0
        %v3935 = vsel %vm728, %v3853, 0
        %v3938 = vsel %vm728, %v3854, 0
        %v3941 = vsel %vm728, %v3855, 0
        %v3944 = vsel %vm728, %v3856, 0
        %v3947 = vsel %vm728, %v3857, 0
        %v3950 = vsel %vm728, %v3858, 0
        %v3953 = vsel %vm728, %v3859, 0
        %v3956 = vsel %vm728, %v3860, 0
        %v3959 = vsel %vm728, %v3861, 0
        %v3962 = vsel %vm728, %v3862, 0
        %v3965 = vsel %vm728, %v3863, 0
        %v3968 = vsel %vm728, %v3864, 0
        %v3971 = vsel %vm728, %v3865, 0
        %v3974 = vsel %vm728, %v3866, 0
        %v3977 = vsel %vm728, %v3867, 0
        %v3980 = vsel %vm728, %v3868, 0
        %v3983 = vsel %vm728, %v3869, 0
        %v3986 = vsel %vm728, %v3870, 0
        %v3989 = vsel %vm728, %v3871, 0
        %v3992 = vsel %vm728, %v3872, 0
        %v3995 = vsel %vm728, %v3873, 0
        %v3998 = vsel %vm728, %v3874, 0
        %v4001 = vsel %vm728, %v3875, 0
        %v4004 = vsel %vm728, %v3876, 0
        %v4007 = vsel %vm728, %v3877, 0
        %v4010 = vsel %vm728, %v3878, 0
        %v4013 = vsel %vm728, %v3879, 0
        %v4016 = vsel %vm728, %v3880, 0
        %4018 = vmatprep.subr.mxu0 0.0
        %4019 = vmatpush1.msra.mxu0 %v3914
        %4020 = vmatprep.subr.mxu0 0.0
        %4021 = vmatpush1.msra.mxu0 %v3915
        %4022 = vmatprep.subr.mxu0 0.0
        %4023 = vmatpush1.msra.mxu0 %v3916
        %4024 = vmatprep.subr.mxu0 0.0
        %4025 = vmatpush1.msra.mxu0 %v3917
        %4026 = vmatprep.subr.mxu0 0.0
        %4027 = vmatpush1.msra.mxu0 %v3918
        %4028 = vmatprep.subr.mxu0 0.0
        %4029 = vmatpush1.msra.mxu0 %v3919
        %4030 = vmatprep.subr.mxu0 0.0
        %4031 = vmatpush1.msra.mxu0 %v3920
        %4032 = vmatprep.subr.mxu0 0.0
        %4033 = vmatpush1.msra.mxu0 %v3921
        %4034 = vmatprep.subr.mxu0 0.0
        %4035 = vmatpush1.msra.mxu0 0.0
        %4036 = vmatprep.subr.mxu0 0.0
        %4037 = vmatpush1.msra.mxu0 0.0
        %4038 = vmatprep.subr.mxu0 0.0
        %4039 = vmatpush1.msra.mxu0 0.0
        %4040 = vmatprep.subr.mxu0 0.0
        %4041 = vmatpush1.msra.mxu0 0.0
        %4042 = vmatprep.subr.mxu0 0.0
        %4043 = vmatpush1.msra.mxu0 0.0
        %4044 = vmatprep.subr.mxu0 0.0
        %4045 = vmatpush1.msra.mxu0 0.0
        %4046 = vmatprep.subr.mxu0 0.0
        %4047 = vmatpush1.msra.mxu0 0.0
        %4048 = vmatprep.subr.mxu0 0.0
        %4049 = vmatpush1.msra.mxu0 0.0
        %4050 = vmatprep.subr.mxu0 0.0
        %4051 = vmatpush1.msra.mxu0 0.0
        %4052 = vmatprep.subr.mxu0 0.0
        %4053 = vmatpush1.msra.mxu0 0.0
        %4054 = vmatprep.subr.mxu0 0.0
        %4055 = vmatpush1.msra.mxu0 0.0
        %4056 = vmatprep.subr.mxu0 0.0
        %4057 = vmatpush1.msra.mxu0 0.0
        %4058 = vmatprep.subr.mxu0 0.0
        %4059 = vmatpush1.msra.mxu0 0.0
        %4060 = vmatprep.subr.mxu0 0.0
        %4061 = vmatpush1.msra.mxu0 0.0
        %4062 = vmatprep.subr.mxu0 0.0
        %4063 = vmatpush1.msra.mxu0 0.0
        %4064 = vmatprep.subr.mxu0 0.0
        %4065 = vmatpush1.msra.mxu0 0.0
        %4066 = vmatprep.subr.mxu0 0.0
        %4067 = vmatpush1.msra.mxu0 0.0
        %4068 = vmatprep.subr.mxu0 0.0
        %4069 = vmatpush1.msra.mxu0 0.0
        %4070 = vmatprep.subr.mxu0 0.0
        %4071 = vmatpush1.msra.mxu0 0.0
        %4072 = vmatprep.subr.mxu0 0.0
        %4073 = vmatpush1.msra.mxu0 0.0
        %4074 = vmatprep.subr.mxu0 0.0
        %4075 = vmatpush1.msra.mxu0 0.0
        %4076 = vmatprep.subr.mxu0 0.0
        %4077 = vmatpush1.msra.mxu0 0.0
        %4078 = vmatprep.subr.mxu0 0.0
        %4079 = vmatpush1.msra.mxu0 0.0
        %4080 = vmatprep.subr.mxu0 0.0
        %4081 = vmatpush1.msra.mxu0 0.0
        %4082 = vmatprep.mubr.f32.mxu0 0.0
        %4083 = vmatmul.mubr.f32.gmra.mrb[0].mxu0 %v3923
        %v4084 = vpop.f32.mrb[0].mxu0
        %v4085 = vadd.f32 0.0, %v4084
        %v4086 = vpop.f32.mrb[0].mxu0
        %4087 = vmatprep.mubr.f32.mxu0 0.0
        %4088 = vmatmul.mubr.f32.gmra.mrb[0].mxu0 %v3926
        %v4089 = vpop.f32.mrb[0].mxu0
        %v4090 = vadd.f32 0.0, %v4089
        %v4091 = vpop.f32.mrb[0].mxu0
        %4092 = vmatprep.mubr.f32.mxu0 0.0
        %4093 = vmatmul.mubr.f32.gmra.mrb[0].mxu0 %v3929
        %v4094 = vpop.f32.mrb[0].mxu0
        %v4095 = vadd.f32 0.0, %v4094
        %v4096 = vpop.f32.mrb[0].mxu0
        %4097 = vmatprep.mubr.f32.mxu0 0.0
        %4098 = vmatmul.mubr.f32.gmra.mrb[0].mxu0 %v3932
        %v4099 = vpop.f32.mrb[0].mxu0
        %v4100 = vadd.f32 0.0, %v4099
        %v4101 = vpop.f32.mrb[0].mxu0
        %4102 = vmatprep.mubr.f32.mxu0 0.0
        %4103 = vmatmul.mubr.f32.gmra.mrb[0].mxu0 %v3935
        %v4104 = vpop.f32.mrb[0].mxu0
        %v4105 = vadd.f32 0.0, %v4104
        %v4106 = vpop.f32.mrb[0].mxu0
        %4107 = vmatprep.mubr.f32.mxu0 0.0
        %4108 = vmatmul.mubr.f32.gmra.mrb[0].mxu0 %v3938
        %v4109 = vpop.f32.mrb[0].mxu0
        %v4110 = vadd.f32 0.0, %v4109
        %v4111 = vpop.f32.mrb[0].mxu0
        %4112 = vmatprep.mubr.f32.mxu0 0.0
        %4113 = vmatmul.mubr.f32.gmra.mrb[0].mxu0 %v3941
        %v4114 = vpop.f32.mrb[0].mxu0
        %v4115 = vadd.f32 0.0, %v4114
        %v4116 = vpop.f32.mrb[0].mxu0
        %4117 = vmatprep.mubr.f32.mxu0 0.0
        %4118 = vmatmul.mubr.f32.gmra.mrb[0].mxu0 %v3944
        %v4119 = vpop.f32.mrb[0].mxu0
        %v4120 = vadd.f32 0.0, %v4119
        %v4121 = vpop.f32.mrb[0].mxu0
        %4122 = vmatprep.mubr.f32.mxu0 0.0
        %4123 = vmatmul.mubr.f32.gmra.mrb[0].mxu0 %v3947
        %v4124 = vpop.f32.mrb[0].mxu0
        %v4125 = vadd.f32 0.0, %v4124
        %v4126 = vpop.f32.mrb[0].mxu0
        %4127 = vmatprep.mubr.f32.mxu0 0.0
        %4128 = vmatmul.mubr.f32.gmra.mrb[0].mxu0 %v3950
        %v4129 = vpop.f32.mrb[0].mxu0
        %v4130 = vadd.f32 0.0, %v4129
        %v4131 = vpop.f32.mrb[0].mxu0
        %4132 = vmatprep.mubr.f32.mxu0 0.0
        %4133 = vmatmul.mubr.f32.gmra.mrb[0].mxu0 %v3953
        %v4134 = vpop.f32.mrb[0].mxu0
        %v4135 = vadd.f32 0.0, %v4134
        %v4136 = vpop.f32.mrb[0].mxu0
        %4137 = vmatprep.mubr.f32.mxu0 0.0
        %4138 = vmatmul.mubr.f32.gmra.mrb[0].mxu0 %v3956
        %v4139 = vpop.f32.mrb[0].mxu0
        %v4140 = vadd.f32 0.0, %v4139
        %v4141 = vpop.f32.mrb[0].mxu0
        %4142 = vmatprep.mubr.f32.mxu0 0.0
        %4143 = vmatmul.mubr.f32.gmra.mrb[0].mxu0 %v3959
        %v4144 = vpop.f32.mrb[0].mxu0
        %v4145 = vadd.f32 0.0, %v4144
        %v4146 = vpop.f32.mrb[0].mxu0
        %4147 = vmatprep.mubr.f32.mxu0 0.0
        %4148 = vmatmul.mubr.f32.gmra.mrb[0].mxu0 %v3962
        %v4149 = vpop.f32.mrb[0].mxu0
        %v4150 = vadd.f32 0.0, %v4149
        %v4151 = vpop.f32.mrb[0].mxu0
        %4152 = vmatprep.mubr.f32.mxu0 0.0
        %4153 = vmatmul.mubr.f32.gmra.mrb[0].mxu0 %v3965
        %v4154 = vpop.f32.mrb[0].mxu0
        %v4155 = vadd.f32 0.0, %v4154
        %v4156 = vpop.f32.mrb[0].mxu0
        %4157 = vmatprep.mubr.f32.mxu0 0.0
        %4158 = vmatmul.mubr.f32.gmra.mrb[0].mxu0 %v3968
        %v4159 = vpop.f32.mrb[0].mxu0
        %v4160 = vadd.f32 0.0, %v4159
        %v4161 = vpop.f32.mrb[0].mxu0
        %4162 = vmatprep.mubr.f32.mxu0 0.0
        %4163 = vmatmul.mubr.f32.gmra.mrb[0].mxu0 %v3971
        %v4164 = vpop.f32.mrb[0].mxu0
        %v4165 = vadd.f32 0.0, %v4164
        %v4166 = vpop.f32.mrb[0].mxu0
        %4167 = vmatprep.mubr.f32.mxu0 0.0
        %4168 = vmatmul.mubr.f32.gmra.mrb[0].mxu0 %v3974
        %v4169 = vpop.f32.mrb[0].mxu0
        %v4170 = vadd.f32 0.0, %v4169
        %v4171 = vpop.f32.mrb[0].mxu0
        %4172 = vmatprep.mubr.f32.mxu0 0.0
        %4173 = vmatmul.mubr.f32.gmra.mrb[0].mxu0 %v3977
        %v4174 = vpop.f32.mrb[0].mxu0
        %v4175 = vadd.f32 0.0, %v4174
        %v4176 = vpop.f32.mrb[0].mxu0
        %4177 = vmatprep.mubr.f32.mxu0 0.0
        %4178 = vmatmul.mubr.f32.gmra.mrb[0].mxu0 %v3980
        %v4179 = vpop.f32.mrb[0].mxu0
        %v4180 = vadd.f32 0.0, %v4179
        %v4181 = vpop.f32.mrb[0].mxu0
        %4182 = vmatprep.mubr.f32.mxu0 0.0
        %4183 = vmatmul.mubr.f32.gmra.mrb[0].mxu0 %v3983
        %v4184 = vpop.f32.mrb[0].mxu0
        %v4185 = vadd.f32 0.0, %v4184
        %v4186 = vpop.f32.mrb[0].mxu0
        %4187 = vmatprep.mubr.f32.mxu0 0.0
        %4188 = vmatmul.mubr.f32.gmra.mrb[0].mxu0 %v3986
        %v4189 = vpop.f32.mrb[0].mxu0
        %v4190 = vadd.f32 0.0, %v4189
        %v4191 = vpop.f32.mrb[0].mxu0
        %4192 = vmatprep.mubr.f32.mxu0 0.0
        %4193 = vmatmul.mubr.f32.gmra.mrb[0].mxu0 %v3989
        %v4194 = vpop.f32.mrb[0].mxu0
        %v4195 = vadd.f32 0.0, %v4194
        %v4196 = vpop.f32.mrb[0].mxu0
        %4197 = vmatprep.mubr.f32.mxu0 0.0
        %4198 = vmatmul.mubr.f32.gmra.mrb[0].mxu0 %v3992
        %v4199 = vpop.f32.mrb[0].mxu0
        %v4200 = vadd.f32 0.0, %v4199
        %v4201 = vpop.f32.mrb[0].mxu0
        %4202 = vmatprep.mubr.f32.mxu0 0.0
        %4203 = vmatmul.mubr.f32.gmra.mrb[0].mxu0 %v3995
        %v4204 = vpop.f32.mrb[0].mxu0
        %v4205 = vadd.f32 0.0, %v4204
        %v4206 = vpop.f32.mrb[0].mxu0
        %4207 = vmatprep.mubr.f32.mxu0 0.0
        %4208 = vmatmul.mubr.f32.gmra.mrb[0].mxu0 %v3998
        %v4209 = vpop.f32.mrb[0].mxu0
        %v4210 = vadd.f32 0.0, %v4209
        %v4211 = vpop.f32.mrb[0].mxu0
        %4212 = vmatprep.mubr.f32.mxu0 0.0
        %4213 = vmatmul.mubr.f32.gmra.mrb[0].mxu0 %v4001
        %v4214 = vpop.f32.mrb[0].mxu0
        %v4215 = vadd.f32 0.0, %v4214
        %v4216 = vpop.f32.mrb[0].mxu0
        %4217 = vmatprep.mubr.f32.mxu0 0.0
        %4218 = vmatmul.mubr.f32.gmra.mrb[0].mxu0 %v4004
        %v4219 = vpop.f32.mrb[0].mxu0
        %v4220 = vadd.f32 0.0, %v4219
        %v4221 = vpop.f32.mrb[0].mxu0
        %4222 = vmatprep.mubr.f32.mxu0 0.0
        %4223 = vmatmul.mubr.f32.gmra.mrb[0].mxu0 %v4007
        %v4224 = vpop.f32.mrb[0].mxu0
        %v4225 = vadd.f32 0.0, %v4224
        %v4226 = vpop.f32.mrb[0].mxu0
        %4227 = vmatprep.mubr.f32.mxu0 0.0
        %4228 = vmatmul.mubr.f32.gmra.mrb[0].mxu0 %v4010
        %v4229 = vpop.f32.mrb[0].mxu0
        %v4230 = vadd.f32 0.0, %v4229
        %v4231 = vpop.f32.mrb[0].mxu0
        %4232 = vmatprep.mubr.f32.mxu0 0.0
        %4233 = vmatmul.mubr.f32.gmra.mrb[0].mxu0 %v4013
        %v4234 = vpop.f32.mrb[0].mxu0
        %v4235 = vadd.f32 0.0, %v4234
        %v4236 = vpop.f32.mrb[0].mxu0
        %4237 = vmatprep.mubr.f32.mxu0 0.0
        %4238 = vmatmul.mubr.f32.gmra.mrb[0].mxu0 %v4016
        %v4239 = vpop.f32.mrb[0].mxu0
        %v4240 = vadd.f32 0.0, %v4239
        %v4241 = vpop.f32.mrb[0].mxu0
        %4242 = vdwg.mxu0
        %v4243 = vadd.f32 %v3881, %v4085
        %v4244 = vadd.f32 %v3882, %v4090
        %v4245 = vadd.f32 %v3883, %v4095
        %v4246 = vadd.f32 %v3884, %v4100
        %v4247 = vadd.f32 %v3885, %v4105
        %v4248 = vadd.f32 %v3886, %v4110
        %v4249 = vadd.f32 %v3887, %v4115
        %v4250 = vadd.f32 %v3888, %v4120
        %v4251 = vadd.f32 %v3889, %v4125
        %v4252 = vadd.f32 %v3890, %v4130
        %v4253 = vadd.f32 %v3891, %v4135
        %v4254 = vadd.f32 %v3892, %v4140
        %v4255 = vadd.f32 %v3893, %v4145
        %v4256 = vadd.f32 %v3894, %v4150
        %v4257 = vadd.f32 %v3895, %v4155
        %v4258 = vadd.f32 %v3896, %v4160
        %v4259 = vadd.f32 %v3897, %v4165
        %v4260 = vadd.f32 %v3898, %v4170
        %v4261 = vadd.f32 %v3899, %v4175
        %v4262 = vadd.f32 %v3900, %v4180
        %v4263 = vadd.f32 %v3901, %v4185
        %v4264 = vadd.f32 %v3902, %v4190
        %v4265 = vadd.f32 %v3903, %v4195
        %v4266 = vadd.f32 %v3904, %v4200
        %v4267 = vadd.f32 %v3905, %v4205
        %v4268 = vadd.f32 %v3906, %v4210
        %v4269 = vadd.f32 %v3907, %v4215
        %v4270 = vadd.f32 %v3908, %v4220
        %v4271 = vadd.f32 %v3909, %v4225
        %v4272 = vadd.f32 %v3910, %v4230
        %v4273 = vadd.f32 %v3911, %v4235
        %v4274 = vadd.f32 %v3912, %v4240
        %4275 = vst.msk [vmem:[#allocation5] sm:$0xff] %vm728, %v4243
        %4276 = vst.msk [vmem:[#allocation5 + $0x8] sm:$0xff] %vm728, %v4244
        %4277 = vst.msk [vmem:[#allocation5 + $0x10] sm:$0xff] %vm728, %v4245
        %4278 = vst.msk [vmem:[#allocation5 + $0x18] sm:$0xff] %vm728, %v4246
        %4279 = vst.msk [vmem:[#allocation5 + $0x20] sm:$0xff] %vm728, %v4247
        %4280 = vst.msk [vmem:[#allocation5 + $0x28] sm:$0xff] %vm728, %v4248
        %4281 = vst.msk [vmem:[#allocation5 + $0x30] sm:$0xff] %vm728, %v4249
        %4282 = vst.msk [vmem:[#allocation5 + $0x38] sm:$0xff] %vm728, %v4250
        %4283 = vst.msk [vmem:[#allocation5 + $0x40] sm:$0xff] %vm728, %v4251
        %4284 = vst.msk [vmem:[#allocation5 + $0x48] sm:$0xff] %vm728, %v4252
        %4285 = vst.msk [vmem:[#allocation5 + $0x50] sm:$0xff] %vm728, %v4253
        %4286 = vst.msk [vmem:[#allocation5 + $0x58] sm:$0xff] %vm728, %v4254
        %4287 = vst.msk [vmem:[#allocation5 + $0x60] sm:$0xff] %vm728, %v4255
        %4288 = vst.msk [vmem:[#allocation5 + $0x68] sm:$0xff] %vm728, %v4256
        %4289 = vst.msk [vmem:[#allocation5 + $0x70] sm:$0xff] %vm728, %v4257
        %4290 = vst.msk [vmem:[#allocation5 + $0x78] sm:$0xff] %vm728, %v4258
        %4291 = vst.msk [vmem:[#allocation5 + $0x80] sm:$0xff] %vm728, %v4259
        %4292 = vst.msk [vmem:[#allocation5 + $0x88] sm:$0xff] %vm728, %v4260
        %4293 = vst.msk [vmem:[#allocation5 + $0x90] sm:$0xff] %vm728, %v4261
        %4294 = vst.msk [vmem:[#allocation5 + $0x98] sm:$0xff] %vm728, %v4262
        %4295 = vst.msk [vmem:[#allocation5 + $0xa0] sm:$0xff] %vm728, %v4263
        %4296 = vst.msk [vmem:[#allocation5 + $0xa8] sm:$0xff] %vm728, %v4264
        %4297 = vst.msk [vmem:[#allocation5 + $0xb0] sm:$0xff] %vm728, %v4265
        %4298 = vst.msk [vmem:[#allocation5 + $0xb8] sm:$0xff] %vm728, %v4266
        %4299 = vst.msk [vmem:[#allocation5 + $0xc0] sm:$0xff] %vm728, %v4267
        %4300 = vst.msk [vmem:[#allocation5 + $0xc8] sm:$0xff] %vm728, %v4268
        %4301 = vst.msk [vmem:[#allocation5 + $0xd0] sm:$0xff] %vm728, %v4269
        %4302 = vst.msk [vmem:[#allocation5 + $0xd8] sm:$0xff] %vm728, %v4270
        %4303 = vst.msk [vmem:[#allocation5 + $0xe0] sm:$0xff] %vm728, %v4271
        %4304 = vst.msk [vmem:[#allocation5 + $0xe8] sm:$0xff] %vm728, %v4272
        %4305 = vst.msk [vmem:[#allocation5 + $0xf0] sm:$0xff] %vm728, %v4273
        %4306 = vst.msk [vmem:[#allocation5 + $0xf8] sm:$0xff] %vm728, %v4274
        %s4307 = scalar_lea.vmem [#allocation2], 320
        %v4308 = vld [vmem:[%s4307] sm:$0xff]
        %v4309 = vld [vmem:[%s4307 + $0x8] sm:$0xff]
        %v4310 = vld [vmem:[%s4307 + $0x10] sm:$0xff]
        %v4311 = vld [vmem:[%s4307 + $0x18] sm:$0xff]
        %v4312 = vld [vmem:[%s4307 + $0x20] sm:$0xff]
        %v4313 = vld [vmem:[%s4307 + $0x28] sm:$0xff]
        %v4314 = vld [vmem:[%s4307 + $0x30] sm:$0xff]
        %v4315 = vld [vmem:[%s4307 + $0x38] sm:$0xff]
        %v4316 = vld [vmem:[%s4307 + $0x40] sm:$0xff]
        %v4317 = vld [vmem:[%s4307 + $0x48] sm:$0xff]
        %v4318 = vld [vmem:[%s4307 + $0x50] sm:$0xff]
        %v4319 = vld [vmem:[%s4307 + $0x58] sm:$0xff]
        %v4320 = vld [vmem:[%s4307 + $0x60] sm:$0xff]
        %v4321 = vld [vmem:[%s4307 + $0x68] sm:$0xff]
        %v4322 = vld [vmem:[%s4307 + $0x70] sm:$0xff]
        %v4323 = vld [vmem:[%s4307 + $0x78] sm:$0xff]
        %v4324 = vld [vmem:[%s4307 + $0x80] sm:$0xff]
        %v4325 = vld [vmem:[%s4307 + $0x88] sm:$0xff]
        %v4326 = vld [vmem:[%s4307 + $0x90] sm:$0xff]
        %v4327 = vld [vmem:[%s4307 + $0x98] sm:$0xff]
        %v4328 = vld [vmem:[%s4307 + $0xa0] sm:$0xff]
        %v4329 = vld [vmem:[%s4307 + $0xa8] sm:$0xff]
        %v4330 = vld [vmem:[%s4307 + $0xb0] sm:$0xff]
        %v4331 = vld [vmem:[%s4307 + $0xb8] sm:$0xff]
        %v4332 = vld [vmem:[%s4307 + $0xc0] sm:$0xff]
        %v4333 = vld [vmem:[%s4307 + $0xc8] sm:$0xff]
        %v4334 = vld [vmem:[%s4307 + $0xd0] sm:$0xff]
        %v4335 = vld [vmem:[%s4307 + $0xd8] sm:$0xff]
        %v4336 = vld [vmem:[%s4307 + $0xe0] sm:$0xff]
        %v4337 = vld [vmem:[%s4307 + $0xe8] sm:$0xff]
        %v4338 = vld [vmem:[%s4307 + $0xf0] sm:$0xff]
        %v4339 = vld [vmem:[%s4307 + $0xf8] sm:$0xff]
        %v4340 = vld [vmem:[#allocation5] sm:$0xff]
        %v4341 = vld [vmem:[#allocation5 + $0x8] sm:$0xff]
        %v4342 = vld [vmem:[#allocation5 + $0x10] sm:$0xff]
        %v4343 = vld [vmem:[#allocation5 + $0x18] sm:$0xff]
        %v4344 = vld [vmem:[#allocation5 + $0x20] sm:$0xff]
        %v4345 = vld [vmem:[#allocation5 + $0x28] sm:$0xff]
        %v4346 = vld [vmem:[#allocation5 + $0x30] sm:$0xff]
        %v4347 = vld [vmem:[#allocation5 + $0x38] sm:$0xff]
        %v4348 = vld [vmem:[#allocation5 + $0x40] sm:$0xff]
        %v4349 = vld [vmem:[#allocation5 + $0x48] sm:$0xff]
        %v4350 = vld [vmem:[#allocation5 + $0x50] sm:$0xff]
        %v4351 = vld [vmem:[#allocation5 + $0x58] sm:$0xff]
        %v4352 = vld [vmem:[#allocation5 + $0x60] sm:$0xff]
        %v4353 = vld [vmem:[#allocation5 + $0x68] sm:$0xff]
        %v4354 = vld [vmem:[#allocation5 + $0x70] sm:$0xff]
        %v4355 = vld [vmem:[#allocation5 + $0x78] sm:$0xff]
        %v4356 = vld [vmem:[#allocation5 + $0x80] sm:$0xff]
        %v4357 = vld [vmem:[#allocation5 + $0x88] sm:$0xff]
        %v4358 = vld [vmem:[#allocation5 + $0x90] sm:$0xff]
        %v4359 = vld [vmem:[#allocation5 + $0x98] sm:$0xff]
        %v4360 = vld [vmem:[#allocation5 + $0xa0] sm:$0xff]
        %v4361 = vld [vmem:[#allocation5 + $0xa8] sm:$0xff]
        %v4362 = vld [vmem:[#allocation5 + $0xb0] sm:$0xff]
        %v4363 = vld [vmem:[#allocation5 + $0xb8] sm:$0xff]
        %v4364 = vld [vmem:[#allocation5 + $0xc0] sm:$0xff]
        %v4365 = vld [vmem:[#allocation5 + $0xc8] sm:$0xff]
        %v4366 = vld [vmem:[#allocation5 + $0xd0] sm:$0xff]
        %v4367 = vld [vmem:[#allocation5 + $0xd8] sm:$0xff]
        %v4368 = vld [vmem:[#allocation5 + $0xe0] sm:$0xff]
        %v4369 = vld [vmem:[#allocation5 + $0xe8] sm:$0xff]
        %v4370 = vld [vmem:[#allocation5 + $0xf0] sm:$0xff]
        %v4371 = vld [vmem:[#allocation5 + $0xf8] sm:$0xff]
        %s4372 = scalar_lea.vmem %s3, 448
        %v4373 = vld [vmem:[%s4372] sm:$0xff]
        %v4374 = vld [vmem:[%s4372 + $0x8] sm:$0xff]
        %v4375 = vld [vmem:[%s4372 + $0x10] sm:$0xff]
        %v4376 = vld [vmem:[%s4372 + $0x18] sm:$0xff]
        %v4377 = vld [vmem:[%s4372 + $0x20] sm:$0xff]
        %v4378 = vld [vmem:[%s4372 + $0x28] sm:$0xff]
        %v4379 = vld [vmem:[%s4372 + $0x30] sm:$0xff]
        %v4380 = vld [vmem:[%s4372 + $0x38] sm:$0xff]
        %v4382 = vsel %vm728, %v4308, 0
        %v4385 = vsel %vm728, %v4309, 0
        %v4388 = vsel %vm728, %v4310, 0
        %v4391 = vsel %vm728, %v4311, 0
        %v4394 = vsel %vm728, %v4312, 0
        %v4397 = vsel %vm728, %v4313, 0
        %v4400 = vsel %vm728, %v4314, 0
        %v4403 = vsel %vm728, %v4315, 0
        %v4406 = vsel %vm728, %v4316, 0
        %v4409 = vsel %vm728, %v4317, 0
        %v4412 = vsel %vm728, %v4318, 0
        %v4415 = vsel %vm728, %v4319, 0
        %v4418 = vsel %vm728, %v4320, 0
        %v4421 = vsel %vm728, %v4321, 0
        %v4424 = vsel %vm728, %v4322, 0
        %v4427 = vsel %vm728, %v4323, 0
        %v4430 = vsel %vm728, %v4324, 0
        %v4433 = vsel %vm728, %v4325, 0
        %v4436 = vsel %vm728, %v4326, 0
        %v4439 = vsel %vm728, %v4327, 0
        %v4442 = vsel %vm728, %v4328, 0
        %v4445 = vsel %vm728, %v4329, 0
        %v4448 = vsel %vm728, %v4330, 0
        %v4451 = vsel %vm728, %v4331, 0
        %v4454 = vsel %vm728, %v4332, 0
        %v4457 = vsel %vm728, %v4333, 0
        %v4460 = vsel %vm728, %v4334, 0
        %v4463 = vsel %vm728, %v4335, 0
        %v4466 = vsel %vm728, %v4336, 0
        %v4469 = vsel %vm728, %v4337, 0
        %v4472 = vsel %vm728, %v4338, 0
        %v4475 = vsel %vm728, %v4339, 0
        %4477 = vmatprep.subr.mxu0 0.0
        %4478 = vmatpush1.msra.mxu0 %v4373
        %4479 = vmatprep.subr.mxu0 0.0
        %4480 = vmatpush1.msra.mxu0 %v4374
        %4481 = vmatprep.subr.mxu0 0.0
        %4482 = vmatpush1.msra.mxu0 %v4375
        %4483 = vmatprep.subr.mxu0 0.0
        %4484 = vmatpush1.msra.mxu0 %v4376
        %4485 = vmatprep.subr.mxu0 0.0
        %4486 = vmatpush1.msra.mxu0 %v4377
        %4487 = vmatprep.subr.mxu0 0.0
        %4488 = vmatpush1.msra.mxu0 %v4378
        %4489 = vmatprep.subr.mxu0 0.0
        %4490 = vmatpush1.msra.mxu0 %v4379
        %4491 = vmatprep.subr.mxu0 0.0
        %4492 = vmatpush1.msra.mxu0 %v4380
        %4493 = vmatprep.subr.mxu0 0.0
        %4494 = vmatpush1.msra.mxu0 0.0
        %4495 = vmatprep.subr.mxu0 0.0
        %4496 = vmatpush1.msra.mxu0 0.0
        %4497 = vmatprep.subr.mxu0 0.0
        %4498 = vmatpush1.msra.mxu0 0.0
        %4499 = vmatprep.subr.mxu0 0.0
        %4500 = vmatpush1.msra.mxu0 0.0
        %4501 = vmatprep.subr.mxu0 0.0
        %4502 = vmatpush1.msra.mxu0 0.0
        %4503 = vmatprep.subr.mxu0 0.0
        %4504 = vmatpush1.msra.mxu0 0.0
        %4505 = vmatprep.subr.mxu0 0.0
        %4506 = vmatpush1.msra.mxu0 0.0
        %4507 = vmatprep.subr.mxu0 0.0
        %4508 = vmatpush1.msra.mxu0 0.0
        %4509 = vmatprep.subr.mxu0 0.0
        %4510 = vmatpush1.msra.mxu0 0.0
        %4511 = vmatprep.subr.mxu0 0.0
        %4512 = vmatpush1.msra.mxu0 0.0
        %4513 = vmatprep.subr.mxu0 0.0
        %4514 = vmatpush1.msra.mxu0 0.0
        %4515 = vmatprep.subr.mxu0 0.0
        %4516 = vmatpush1.msra.mxu0 0.0
        %4517 = vmatprep.subr.mxu0 0.0
        %4518 = vmatpush1.msra.mxu0 0.0
        %4519 = vmatprep.subr.mxu0 0.0
        %4520 = vmatpush1.msra.mxu0 0.0
        %4521 = vmatprep.subr.mxu0 0.0
        %4522 = vmatpush1.msra.mxu0 0.0
        %4523 = vmatprep.subr.mxu0 0.0
        %4524 = vmatpush1.msra.mxu0 0.0
        %4525 = vmatprep.subr.mxu0 0.0
        %4526 = vmatpush1.msra.mxu0 0.0
        %4527 = vmatprep.subr.mxu0 0.0
        %4528 = vmatpush1.msra.mxu0 0.0
        %4529 = vmatprep.subr.mxu0 0.0
        %4530 = vmatpush1.msra.mxu0 0.0
        %4531 = vmatprep.subr.mxu0 0.0
        %4532 = vmatpush1.msra.mxu0 0.0
        %4533 = vmatprep.subr.mxu0 0.0
        %4534 = vmatpush1.msra.mxu0 0.0
        %4535 = vmatprep.subr.mxu0 0.0
        %4536 = vmatpush1.msra.mxu0 0.0
        %4537 = vmatprep.subr.mxu0 0.0
        %4538 = vmatpush1.msra.mxu0 0.0
        %4539 = vmatprep.subr.mxu0 0.0
        %4540 = vmatpush1.msra.mxu0 0.0
        %4541 = vmatprep.mubr.f32.mxu0 0.0
        %4542 = vmatmul.mubr.f32.gmra.mrb[0].mxu0 %v4382
        %v4543 = vpop.f32.mrb[0].mxu0
        %v4544 = vadd.f32 0.0, %v4543
        %v4545 = vpop.f32.mrb[0].mxu0
        %4546 = vmatprep.mubr.f32.mxu0 0.0
        %4547 = vmatmul.mubr.f32.gmra.mrb[0].mxu0 %v4385
        %v4548 = vpop.f32.mrb[0].mxu0
        %v4549 = vadd.f32 0.0, %v4548
        %v4550 = vpop.f32.mrb[0].mxu0
        %4551 = vmatprep.mubr.f32.mxu0 0.0
        %4552 = vmatmul.mubr.f32.gmra.mrb[0].mxu0 %v4388
        %v4553 = vpop.f32.mrb[0].mxu0
        %v4554 = vadd.f32 0.0, %v4553
        %v4555 = vpop.f32.mrb[0].mxu0
        %4556 = vmatprep.mubr.f32.mxu0 0.0
        %4557 = vmatmul.mubr.f32.gmra.mrb[0].mxu0 %v4391
        %v4558 = vpop.f32.mrb[0].mxu0
        %v4559 = vadd.f32 0.0, %v4558
        %v4560 = vpop.f32.mrb[0].mxu0
        %4561 = vmatprep.mubr.f32.mxu0 0.0
        %4562 = vmatmul.mubr.f32.gmra.mrb[0].mxu0 %v4394
        %v4563 = vpop.f32.mrb[0].mxu0
        %v4564 = vadd.f32 0.0, %v4563
        %v4565 = vpop.f32.mrb[0].mxu0
        %4566 = vmatprep.mubr.f32.mxu0 0.0
        %4567 = vmatmul.mubr.f32.gmra.mrb[0].mxu0 %v4397
        %v4568 = vpop.f32.mrb[0].mxu0
        %v4569 = vadd.f32 0.0, %v4568
        %v4570 = vpop.f32.mrb[0].mxu0
        %4571 = vmatprep.mubr.f32.mxu0 0.0
        %4572 = vmatmul.mubr.f32.gmra.mrb[0].mxu0 %v4400
        %v4573 = vpop.f32.mrb[0].mxu0
        %v4574 = vadd.f32 0.0, %v4573
        %v4575 = vpop.f32.mrb[0].mxu0
        %4576 = vmatprep.mubr.f32.mxu0 0.0
        %4577 = vmatmul.mubr.f32.gmra.mrb[0].mxu0 %v4403
        %v4578 = vpop.f32.mrb[0].mxu0
        %v4579 = vadd.f32 0.0, %v4578
        %v4580 = vpop.f32.mrb[0].mxu0
        %4581 = vmatprep.mubr.f32.mxu0 0.0
        %4582 = vmatmul.mubr.f32.gmra.mrb[0].mxu0 %v4406
        %v4583 = vpop.f32.mrb[0].mxu0
        %v4584 = vadd.f32 0.0, %v4583
        %v4585 = vpop.f32.mrb[0].mxu0
        %4586 = vmatprep.mubr.f32.mxu0 0.0
        %4587 = vmatmul.mubr.f32.gmra.mrb[0].mxu0 %v4409
        %v4588 = vpop.f32.mrb[0].mxu0
        %v4589 = vadd.f32 0.0, %v4588
        %v4590 = vpop.f32.mrb[0].mxu0
        %4591 = vmatprep.mubr.f32.mxu0 0.0
        %4592 = vmatmul.mubr.f32.gmra.mrb[0].mxu0 %v4412
        %v4593 = vpop.f32.mrb[0].mxu0
        %v4594 = vadd.f32 0.0, %v4593
        %v4595 = vpop.f32.mrb[0].mxu0
        %4596 = vmatprep.mubr.f32.mxu0 0.0
        %4597 = vmatmul.mubr.f32.gmra.mrb[0].mxu0 %v4415
        %v4598 = vpop.f32.mrb[0].mxu0
        %v4599 = vadd.f32 0.0, %v4598
        %v4600 = vpop.f32.mrb[0].mxu0
        %4601 = vmatprep.mubr.f32.mxu0 0.0
        %4602 = vmatmul.mubr.f32.gmra.mrb[0].mxu0 %v4418
        %v4603 = vpop.f32.mrb[0].mxu0
        %v4604 = vadd.f32 0.0, %v4603
        %v4605 = vpop.f32.mrb[0].mxu0
        %4606 = vmatprep.mubr.f32.mxu0 0.0
        %4607 = vmatmul.mubr.f32.gmra.mrb[0].mxu0 %v4421
        %v4608 = vpop.f32.mrb[0].mxu0
        %v4609 = vadd.f32 0.0, %v4608
        %v4610 = vpop.f32.mrb[0].mxu0
        %4611 = vmatprep.mubr.f32.mxu0 0.0
        %4612 = vmatmul.mubr.f32.gmra.mrb[0].mxu0 %v4424
        %v4613 = vpop.f32.mrb[0].mxu0
        %v4614 = vadd.f32 0.0, %v4613
        %v4615 = vpop.f32.mrb[0].mxu0
        %4616 = vmatprep.mubr.f32.mxu0 0.0
        %4617 = vmatmul.mubr.f32.gmra.mrb[0].mxu0 %v4427
        %v4618 = vpop.f32.mrb[0].mxu0
        %v4619 = vadd.f32 0.0, %v4618
        %v4620 = vpop.f32.mrb[0].mxu0
        %4621 = vmatprep.mubr.f32.mxu0 0.0
        %4622 = vmatmul.mubr.f32.gmra.mrb[0].mxu0 %v4430
        %v4623 = vpop.f32.mrb[0].mxu0
        %v4624 = vadd.f32 0.0, %v4623
        %v4625 = vpop.f32.mrb[0].mxu0
        %4626 = vmatprep.mubr.f32.mxu0 0.0
        %4627 = vmatmul.mubr.f32.gmra.mrb[0].mxu0 %v4433
        %v4628 = vpop.f32.mrb[0].mxu0
        %v4629 = vadd.f32 0.0, %v4628
        %v4630 = vpop.f32.mrb[0].mxu0
        %4631 = vmatprep.mubr.f32.mxu0 0.0
        %4632 = vmatmul.mubr.f32.gmra.mrb[0].mxu0 %v4436
        %v4633 = vpop.f32.mrb[0].mxu0
        %v4634 = vadd.f32 0.0, %v4633
        %v4635 = vpop.f32.mrb[0].mxu0
        %4636 = vmatprep.mubr.f32.mxu0 0.0
        %4637 = vmatmul.mubr.f32.gmra.mrb[0].mxu0 %v4439
        %v4638 = vpop.f32.mrb[0].mxu0
        %v4639 = vadd.f32 0.0, %v4638
        %v4640 = vpop.f32.mrb[0].mxu0
        %4641 = vmatprep.mubr.f32.mxu0 0.0
        %4642 = vmatmul.mubr.f32.gmra.mrb[0].mxu0 %v4442
        %v4643 = vpop.f32.mrb[0].mxu0
        %v4644 = vadd.f32 0.0, %v4643
        %v4645 = vpop.f32.mrb[0].mxu0
        %4646 = vmatprep.mubr.f32.mxu0 0.0
        %4647 = vmatmul.mubr.f32.gmra.mrb[0].mxu0 %v4445
        %v4648 = vpop.f32.mrb[0].mxu0
        %v4649 = vadd.f32 0.0, %v4648
        %v4650 = vpop.f32.mrb[0].mxu0
        %4651 = vmatprep.mubr.f32.mxu0 0.0
        %4652 = vmatmul.mubr.f32.gmra.mrb[0].mxu0 %v4448
        %v4653 = vpop.f32.mrb[0].mxu0
        %v4654 = vadd.f32 0.0, %v4653
        %v4655 = vpop.f32.mrb[0].mxu0
        %4656 = vmatprep.mubr.f32.mxu0 0.0
        %4657 = vmatmul.mubr.f32.gmra.mrb[0].mxu0 %v4451
        %v4658 = vpop.f32.mrb[0].mxu0
        %v4659 = vadd.f32 0.0, %v4658
        %v4660 = vpop.f32.mrb[0].mxu0
        %4661 = vmatprep.mubr.f32.mxu0 0.0
        %4662 = vmatmul.mubr.f32.gmra.mrb[0].mxu0 %v4454
        %v4663 = vpop.f32.mrb[0].mxu0
        %v4664 = vadd.f32 0.0, %v4663
        %v4665 = vpop.f32.mrb[0].mxu0
        %4666 = vmatprep.mubr.f32.mxu0 0.0
        %4667 = vmatmul.mubr.f32.gmra.mrb[0].mxu0 %v4457
        %v4668 = vpop.f32.mrb[0].mxu0
        %v4669 = vadd.f32 0.0, %v4668
        %v4670 = vpop.f32.mrb[0].mxu0
        %4671 = vmatprep.mubr.f32.mxu0 0.0
        %4672 = vmatmul.mubr.f32.gmra.mrb[0].mxu0 %v4460
        %v4673 = vpop.f32.mrb[0].mxu0
        %v4674 = vadd.f32 0.0, %v4673
        %v4675 = vpop.f32.mrb[0].mxu0
        %4676 = vmatprep.mubr.f32.mxu0 0.0
        %4677 = vmatmul.mubr.f32.gmra.mrb[0].mxu0 %v4463
        %v4678 = vpop.f32.mrb[0].mxu0
        %v4679 = vadd.f32 0.0, %v4678
        %v4680 = vpop.f32.mrb[0].mxu0
        %4681 = vmatprep.mubr.f32.mxu0 0.0
        %4682 = vmatmul.mubr.f32.gmra.mrb[0].mxu0 %v4466
        %v4683 = vpop.f32.mrb[0].mxu0
        %v4684 = vadd.f32 0.0, %v4683
        %v4685 = vpop.f32.mrb[0].mxu0
        %4686 = vmatprep.mubr.f32.mxu0 0.0
        %4687 = vmatmul.mubr.f32.gmra.mrb[0].mxu0 %v4469
        %v4688 = vpop.f32.mrb[0].mxu0
        %v4689 = vadd.f32 0.0, %v4688
        %v4690 = vpop.f32.mrb[0].mxu0
        %4691 = vmatprep.mubr.f32.mxu0 0.0
        %4692 = vmatmul.mubr.f32.gmra.mrb[0].mxu0 %v4472
        %v4693 = vpop.f32.mrb[0].mxu0
        %v4694 = vadd.f32 0.0, %v4693
        %v4695 = vpop.f32.mrb[0].mxu0
        %4696 = vmatprep.mubr.f32.mxu0 0.0
        %4697 = vmatmul.mubr.f32.gmra.mrb[0].mxu0 %v4475
        %v4698 = vpop.f32.mrb[0].mxu0
        %v4699 = vadd.f32 0.0, %v4698
        %v4700 = vpop.f32.mrb[0].mxu0
        %4701 = vdwg.mxu0
        %v4702 = vadd.f32 %v4340, %v4544
        %v4703 = vadd.f32 %v4341, %v4549
        %v4704 = vadd.f32 %v4342, %v4554
        %v4705 = vadd.f32 %v4343, %v4559
        %v4706 = vadd.f32 %v4344, %v4564
        %v4707 = vadd.f32 %v4345, %v4569
        %v4708 = vadd.f32 %v4346, %v4574
        %v4709 = vadd.f32 %v4347, %v4579
        %v4710 = vadd.f32 %v4348, %v4584
        %v4711 = vadd.f32 %v4349, %v4589
        %v4712 = vadd.f32 %v4350, %v4594
        %v4713 = vadd.f32 %v4351, %v4599
        %v4714 = vadd.f32 %v4352, %v4604
        %v4715 = vadd.f32 %v4353, %v4609
        %v4716 = vadd.f32 %v4354, %v4614
        %v4717 = vadd.f32 %v4355, %v4619
        %v4718 = vadd.f32 %v4356, %v4624
        %v4719 = vadd.f32 %v4357, %v4629
        %v4720 = vadd.f32 %v4358, %v4634
        %v4721 = vadd.f32 %v4359, %v4639
        %v4722 = vadd.f32 %v4360, %v4644
        %v4723 = vadd.f32 %v4361, %v4649
        %v4724 = vadd.f32 %v4362, %v4654
        %v4725 = vadd.f32 %v4363, %v4659
        %v4726 = vadd.f32 %v4364, %v4664
        %v4727 = vadd.f32 %v4365, %v4669
        %v4728 = vadd.f32 %v4366, %v4674
        %v4729 = vadd.f32 %v4367, %v4679
        %v4730 = vadd.f32 %v4368, %v4684
        %v4731 = vadd.f32 %v4369, %v4689
        %v4732 = vadd.f32 %v4370, %v4694
        %v4733 = vadd.f32 %v4371, %v4699
        %4734 = vst.msk [vmem:[#allocation5] sm:$0xff] %vm728, %v4702
        %4735 = vst.msk [vmem:[#allocation5 + $0x8] sm:$0xff] %vm728, %v4703
        %4736 = vst.msk [vmem:[#allocation5 + $0x10] sm:$0xff] %vm728, %v4704
        %4737 = vst.msk [vmem:[#allocation5 + $0x18] sm:$0xff] %vm728, %v4705
        %4738 = vst.msk [vmem:[#allocation5 + $0x20] sm:$0xff] %vm728, %v4706
        %4739 = vst.msk [vmem:[#allocation5 + $0x28] sm:$0xff] %vm728, %v4707
        %4740 = vst.msk [vmem:[#allocation5 + $0x30] sm:$0xff] %vm728, %v4708
        %4741 = vst.msk [vmem:[#allocation5 + $0x38] sm:$0xff] %vm728, %v4709
        %4742 = vst.msk [vmem:[#allocation5 + $0x40] sm:$0xff] %vm728, %v4710
        %4743 = vst.msk [vmem:[#allocation5 + $0x48] sm:$0xff] %vm728, %v4711
        %4744 = vst.msk [vmem:[#allocation5 + $0x50] sm:$0xff] %vm728, %v4712
        %4745 = vst.msk [vmem:[#allocation5 + $0x58] sm:$0xff] %vm728, %v4713
        %4746 = vst.msk [vmem:[#allocation5 + $0x60] sm:$0xff] %vm728, %v4714
        %4747 = vst.msk [vmem:[#allocation5 + $0x68] sm:$0xff] %vm728, %v4715
        %4748 = vst.msk [vmem:[#allocation5 + $0x70] sm:$0xff] %vm728, %v4716
        %4749 = vst.msk [vmem:[#allocation5 + $0x78] sm:$0xff] %vm728, %v4717
        %4750 = vst.msk [vmem:[#allocation5 + $0x80] sm:$0xff] %vm728, %v4718
        %4751 = vst.msk [vmem:[#allocation5 + $0x88] sm:$0xff] %vm728, %v4719
        %4752 = vst.msk [vmem:[#allocation5 + $0x90] sm:$0xff] %vm728, %v4720
        %4753 = vst.msk [vmem:[#allocation5 + $0x98] sm:$0xff] %vm728, %v4721
        %4754 = vst.msk [vmem:[#allocation5 + $0xa0] sm:$0xff] %vm728, %v4722
        %4755 = vst.msk [vmem:[#allocation5 + $0xa8] sm:$0xff] %vm728, %v4723
        %4756 = vst.msk [vmem:[#allocation5 + $0xb0] sm:$0xff] %vm728, %v4724
        %4757 = vst.msk [vmem:[#allocation5 + $0xb8] sm:$0xff] %vm728, %v4725
        %4758 = vst.msk [vmem:[#allocation5 + $0xc0] sm:$0xff] %vm728, %v4726
        %4759 = vst.msk [vmem:[#allocation5 + $0xc8] sm:$0xff] %vm728, %v4727
        %4760 = vst.msk [vmem:[#allocation5 + $0xd0] sm:$0xff] %vm728, %v4728
        %4761 = vst.msk [vmem:[#allocation5 + $0xd8] sm:$0xff] %vm728, %v4729
        %4762 = vst.msk [vmem:[#allocation5 + $0xe0] sm:$0xff] %vm728, %v4730
        %4763 = vst.msk [vmem:[#allocation5 + $0xe8] sm:$0xff] %vm728, %v4731
        %4764 = vst.msk [vmem:[#allocation5 + $0xf0] sm:$0xff] %vm728, %v4732
        %4765 = vst.msk [vmem:[#allocation5 + $0xf8] sm:$0xff] %vm728, %v4733
        %s4766 = scalar_lea.vmem [#allocation2], 608
        %v4767 = vld [vmem:[%s4766] sm:$0xff]
        %v4768 = vld [vmem:[%s4766 + $0x8] sm:$0xff]
        %v4769 = vld [vmem:[%s4766 + $0x10] sm:$0xff]
        %v4770 = vld [vmem:[%s4766 + $0x18] sm:$0xff]
        %v4771 = vld [vmem:[%s4766 + $0x20] sm:$0xff]
        %v4772 = vld [vmem:[%s4766 + $0x28] sm:$0xff]
        %v4773 = vld [vmem:[%s4766 + $0x30] sm:$0xff]
        %v4774 = vld [vmem:[%s4766 + $0x38] sm:$0xff]
        %v4775 = vld [vmem:[%s4766 + $0x40] sm:$0xff]
        %v4776 = vld [vmem:[%s4766 + $0x48] sm:$0xff]
        %v4777 = vld [vmem:[%s4766 + $0x50] sm:$0xff]
        %v4778 = vld [vmem:[%s4766 + $0x58] sm:$0xff]
        %v4779 = vld [vmem:[%s4766 + $0x60] sm:$0xff]
        %v4780 = vld [vmem:[%s4766 + $0x68] sm:$0xff]
        %v4781 = vld [vmem:[%s4766 + $0x70] sm:$0xff]
        %v4782 = vld [vmem:[%s4766 + $0x78] sm:$0xff]
        %v4783 = vld [vmem:[%s4766 + $0x80] sm:$0xff]
        %v4784 = vld [vmem:[%s4766 + $0x88] sm:$0xff]
        %v4785 = vld [vmem:[%s4766 + $0x90] sm:$0xff]
        %v4786 = vld [vmem:[%s4766 + $0x98] sm:$0xff]
        %v4787 = vld [vmem:[%s4766 + $0xa0] sm:$0xff]
        %v4788 = vld [vmem:[%s4766 + $0xa8] sm:$0xff]
        %v4789 = vld [vmem:[%s4766 + $0xb0] sm:$0xff]
        %v4790 = vld [vmem:[%s4766 + $0xb8] sm:$0xff]
        %v4791 = vld [vmem:[%s4766 + $0xc0] sm:$0xff]
        %v4792 = vld [vmem:[%s4766 + $0xc8] sm:$0xff]
        %v4793 = vld [vmem:[%s4766 + $0xd0] sm:$0xff]
        %v4794 = vld [vmem:[%s4766 + $0xd8] sm:$0xff]
        %v4795 = vld [vmem:[%s4766 + $0xe0] sm:$0xff]
        %v4796 = vld [vmem:[%s4766 + $0xe8] sm:$0xff]
        %v4797 = vld [vmem:[%s4766 + $0xf0] sm:$0xff]
        %v4798 = vld [vmem:[%s4766 + $0xf8] sm:$0xff]
        %v4799 = vld [vmem:[#allocation5] sm:$0xff]
        %v4800 = vld [vmem:[#allocation5 + $0x8] sm:$0xff]
        %v4801 = vld [vmem:[#allocation5 + $0x10] sm:$0xff]
        %v4802 = vld [vmem:[#allocation5 + $0x18] sm:$0xff]
        %v4803 = vld [vmem:[#allocation5 + $0x20] sm:$0xff]
        %v4804 = vld [vmem:[#allocation5 + $0x28] sm:$0xff]
        %v4805 = vld [vmem:[#allocation5 + $0x30] sm:$0xff]
        %v4806 = vld [vmem:[#allocation5 + $0x38] sm:$0xff]
        %v4807 = vld [vmem:[#allocation5 + $0x40] sm:$0xff]
        %v4808 = vld [vmem:[#allocation5 + $0x48] sm:$0xff]
        %v4809 = vld [vmem:[#allocation5 + $0x50] sm:$0xff]
        %v4810 = vld [vmem:[#allocation5 + $0x58] sm:$0xff]
        %v4811 = vld [vmem:[#allocation5 + $0x60] sm:$0xff]
        %v4812 = vld [vmem:[#allocation5 + $0x68] sm:$0xff]
        %v4813 = vld [vmem:[#allocation5 + $0x70] sm:$0xff]
        %v4814 = vld [vmem:[#allocation5 + $0x78] sm:$0xff]
        %v4815 = vld [vmem:[#allocation5 + $0x80] sm:$0xff]
        %v4816 = vld [vmem:[#allocation5 + $0x88] sm:$0xff]
        %v4817 = vld [vmem:[#allocation5 + $0x90] sm:$0xff]
        %v4818 = vld [vmem:[#allocation5 + $0x98] sm:$0xff]
        %v4819 = vld [vmem:[#allocation5 + $0xa0] sm:$0xff]
        %v4820 = vld [vmem:[#allocation5 + $0xa8] sm:$0xff]
        %v4821 = vld [vmem:[#allocation5 + $0xb0] sm:$0xff]
        %v4822 = vld [vmem:[#allocation5 + $0xb8] sm:$0xff]
        %v4823 = vld [vmem:[#allocation5 + $0xc0] sm:$0xff]
        %v4824 = vld [vmem:[#allocation5 + $0xc8] sm:$0xff]
        %v4825 = vld [vmem:[#allocation5 + $0xd0] sm:$0xff]
        %v4826 = vld [vmem:[#allocation5 + $0xd8] sm:$0xff]
        %v4827 = vld [vmem:[#allocation5 + $0xe0] sm:$0xff]
        %v4828 = vld [vmem:[#allocation5 + $0xe8] sm:$0xff]
        %v4829 = vld [vmem:[#allocation5 + $0xf0] sm:$0xff]
        %v4830 = vld [vmem:[#allocation5 + $0xf8] sm:$0xff]
        %s4831 = scalar_lea.vmem %s3, 512
        %v4832 = vld [vmem:[%s4831] sm:$0xff]
        %v4833 = vld [vmem:[%s4831 + $0x8] sm:$0xff]
        %v4834 = vld [vmem:[%s4831 + $0x10] sm:$0xff]
        %v4835 = vld [vmem:[%s4831 + $0x18] sm:$0xff]
        %v4836 = vld [vmem:[%s4831 + $0x20] sm:$0xff]
        %v4837 = vld [vmem:[%s4831 + $0x28] sm:$0xff]
        %v4838 = vld [vmem:[%s4831 + $0x30] sm:$0xff]
        %v4839 = vld [vmem:[%s4831 + $0x38] sm:$0xff]
        %v4841 = vsel %vm728, %v4767, 0
        %v4844 = vsel %vm728, %v4768, 0
        %v4847 = vsel %vm728, %v4769, 0
        %v4850 = vsel %vm728, %v4770, 0
        %v4853 = vsel %vm728, %v4771, 0
        %v4856 = vsel %vm728, %v4772, 0
        %v4859 = vsel %vm728, %v4773, 0
        %v4862 = vsel %vm728, %v4774, 0
        %v4865 = vsel %vm728, %v4775, 0
        %v4868 = vsel %vm728, %v4776, 0
        %v4871 = vsel %vm728, %v4777, 0
        %v4874 = vsel %vm728, %v4778, 0
        %v4877 = vsel %vm728, %v4779, 0
        %v4880 = vsel %vm728, %v4780, 0
        %v4883 = vsel %vm728, %v4781, 0
        %v4886 = vsel %vm728, %v4782, 0
        %v4889 = vsel %vm728, %v4783, 0
        %v4892 = vsel %vm728, %v4784, 0
        %v4895 = vsel %vm728, %v4785, 0
        %v4898 = vsel %vm728, %v4786, 0
        %v4901 = vsel %vm728, %v4787, 0
        %v4904 = vsel %vm728, %v4788, 0
        %v4907 = vsel %vm728, %v4789, 0
        %v4910 = vsel %vm728, %v4790, 0
        %v4913 = vsel %vm728, %v4791, 0
        %v4916 = vsel %vm728, %v4792, 0
        %v4919 = vsel %vm728, %v4793, 0
        %v4922 = vsel %vm728, %v4794, 0
        %v4925 = vsel %vm728, %v4795, 0
        %v4928 = vsel %vm728, %v4796, 0
        %v4931 = vsel %vm728, %v4797, 0
        %v4934 = vsel %vm728, %v4798, 0
        %4936 = vmatprep.subr.mxu0 0.0
        %4937 = vmatpush1.msra.mxu0 %v4832
        %4938 = vmatprep.subr.mxu0 0.0
        %4939 = vmatpush1.msra.mxu0 %v4833
        %4940 = vmatprep.subr.mxu0 0.0
        %4941 = vmatpush1.msra.mxu0 %v4834
        %4942 = vmatprep.subr.mxu0 0.0
        %4943 = vmatpush1.msra.mxu0 %v4835
        %4944 = vmatprep.subr.mxu0 0.0
        %4945 = vmatpush1.msra.mxu0 %v4836
        %4946 = vmatprep.subr.mxu0 0.0
        %4947 = vmatpush1.msra.mxu0 %v4837
        %4948 = vmatprep.subr.mxu0 0.0
        %4949 = vmatpush1.msra.mxu0 %v4838
        %4950 = vmatprep.subr.mxu0 0.0
        %4951 = vmatpush1.msra.mxu0 %v4839
        %4952 = vmatprep.subr.mxu0 0.0
        %4953 = vmatpush1.msra.mxu0 0.0
        %4954 = vmatprep.subr.mxu0 0.0
        %4955 = vmatpush1.msra.mxu0 0.0
        %4956 = vmatprep.subr.mxu0 0.0
        %4957 = vmatpush1.msra.mxu0 0.0
        %4958 = vmatprep.subr.mxu0 0.0
        %4959 = vmatpush1.msra.mxu0 0.0
        %4960 = vmatprep.subr.mxu0 0.0
        %4961 = vmatpush1.msra.mxu0 0.0
        %4962 = vmatprep.subr.mxu0 0.0
        %4963 = vmatpush1.msra.mxu0 0.0
        %4964 = vmatprep.subr.mxu0 0.0
        %4965 = vmatpush1.msra.mxu0 0.0
        %4966 = vmatprep.subr.mxu0 0.0
        %4967 = vmatpush1.msra.mxu0 0.0
        %4968 = vmatprep.subr.mxu0 0.0
        %4969 = vmatpush1.msra.mxu0 0.0
        %4970 = vmatprep.subr.mxu0 0.0
        %4971 = vmatpush1.msra.mxu0 0.0
        %4972 = vmatprep.subr.mxu0 0.0
        %4973 = vmatpush1.msra.mxu0 0.0
        %4974 = vmatprep.subr.mxu0 0.0
        %4975 = vmatpush1.msra.mxu0 0.0
        %4976 = vmatprep.subr.mxu0 0.0
        %4977 = vmatpush1.msra.mxu0 0.0
        %4978 = vmatprep.subr.mxu0 0.0
        %4979 = vmatpush1.msra.mxu0 0.0
        %4980 = vmatprep.subr.mxu0 0.0
        %4981 = vmatpush1.msra.mxu0 0.0
        %4982 = vmatprep.subr.mxu0 0.0
        %4983 = vmatpush1.msra.mxu0 0.0
        %4984 = vmatprep.subr.mxu0 0.0
        %4985 = vmatpush1.msra.mxu0 0.0
        %4986 = vmatprep.subr.mxu0 0.0
        %4987 = vmatpush1.msra.mxu0 0.0
        %4988 = vmatprep.subr.mxu0 0.0
        %4989 = vmatpush1.msra.mxu0 0.0
        %4990 = vmatprep.subr.mxu0 0.0
        %4991 = vmatpush1.msra.mxu0 0.0
        %4992 = vmatprep.subr.mxu0 0.0
        %4993 = vmatpush1.msra.mxu0 0.0
        %4994 = vmatprep.subr.mxu0 0.0
        %4995 = vmatpush1.msra.mxu0 0.0
        %4996 = vmatprep.subr.mxu0 0.0
        %4997 = vmatpush1.msra.mxu0 0.0
        %4998 = vmatprep.subr.mxu0 0.0
        %4999 = vmatpush1.msra.mxu0 0.0
        %5000 = vmatprep.mubr.f32.mxu0 0.0
        %5001 = vmatmul.mubr.f32.gmra.mrb[0].mxu0 %v4841
        %v5002 = vpop.f32.mrb[0].mxu0
        %v5003 = vadd.f32 0.0, %v5002
        %v5004 = vpop.f32.mrb[0].mxu0
        %5005 = vmatprep.mubr.f32.mxu0 0.0
        %5006 = vmatmul.mubr.f32.gmra.mrb[0].mxu0 %v4844
        %v5007 = vpop.f32.mrb[0].mxu0
        %v5008 = vadd.f32 0.0, %v5007
        %v5009 = vpop.f32.mrb[0].mxu0
        %5010 = vmatprep.mubr.f32.mxu0 0.0
        %5011 = vmatmul.mubr.f32.gmra.mrb[0].mxu0 %v4847
        %v5012 = vpop.f32.mrb[0].mxu0
        %v5013 = vadd.f32 0.0, %v5012
        %v5014 = vpop.f32.mrb[0].mxu0
        %5015 = vmatprep.mubr.f32.mxu0 0.0
        %5016 = vmatmul.mubr.f32.gmra.mrb[0].mxu0 %v4850
        %v5017 = vpop.f32.mrb[0].mxu0
        %v5018 = vadd.f32 0.0, %v5017
        %v5019 = vpop.f32.mrb[0].mxu0
        %5020 = vmatprep.mubr.f32.mxu0 0.0
        %5021 = vmatmul.mubr.f32.gmra.mrb[0].mxu0 %v4853
        %v5022 = vpop.f32.mrb[0].mxu0
        %v5023 = vadd.f32 0.0, %v5022
        %v5024 = vpop.f32.mrb[0].mxu0
        %5025 = vmatprep.mubr.f32.mxu0 0.0
        %5026 = vmatmul.mubr.f32.gmra.mrb[0].mxu0 %v4856
        %v5027 = vpop.f32.mrb[0].mxu0
        %v5028 = vadd.f32 0.0, %v5027
        %v5029 = vpop.f32.mrb[0].mxu0
        %5030 = vmatprep.mubr.f32.mxu0 0.0
        %5031 = vmatmul.mubr.f32.gmra.mrb[0].mxu0 %v4859
        %v5032 = vpop.f32.mrb[0].mxu0
        %v5033 = vadd.f32 0.0, %v5032
        %v5034 = vpop.f32.mrb[0].mxu0
        %5035 = vmatprep.mubr.f32.mxu0 0.0
        %5036 = vmatmul.mubr.f32.gmra.mrb[0].mxu0 %v4862
        %v5037 = vpop.f32.mrb[0].mxu0
        %v5038 = vadd.f32 0.0, %v5037
        %v5039 = vpop.f32.mrb[0].mxu0
        %5040 = vmatprep.mubr.f32.mxu0 0.0
        %5041 = vmatmul.mubr.f32.gmra.mrb[0].mxu0 %v4865
        %v5042 = vpop.f32.mrb[0].mxu0
        %v5043 = vadd.f32 0.0, %v5042
        %v5044 = vpop.f32.mrb[0].mxu0
        %5045 = vmatprep.mubr.f32.mxu0 0.0
        %5046 = vmatmul.mubr.f32.gmra.mrb[0].mxu0 %v4868
        %v5047 = vpop.f32.mrb[0].mxu0
        %v5048 = vadd.f32 0.0, %v5047
        %v5049 = vpop.f32.mrb[0].mxu0
        %5050 = vmatprep.mubr.f32.mxu0 0.0
        %5051 = vmatmul.mubr.f32.gmra.mrb[0].mxu0 %v4871
        %v5052 = vpop.f32.mrb[0].mxu0
        %v5053 = vadd.f32 0.0, %v5052
        %v5054 = vpop.f32.mrb[0].mxu0
        %5055 = vmatprep.mubr.f32.mxu0 0.0
        %5056 = vmatmul.mubr.f32.gmra.mrb[0].mxu0 %v4874
        %v5057 = vpop.f32.mrb[0].mxu0
        %v5058 = vadd.f32 0.0, %v5057
        %v5059 = vpop.f32.mrb[0].mxu0
        %5060 = vmatprep.mubr.f32.mxu0 0.0
        %5061 = vmatmul.mubr.f32.gmra.mrb[0].mxu0 %v4877
        %v5062 = vpop.f32.mrb[0].mxu0
        %v5063 = vadd.f32 0.0, %v5062
        %v5064 = vpop.f32.mrb[0].mxu0
        %5065 = vmatprep.mubr.f32.mxu0 0.0
        %5066 = vmatmul.mubr.f32.gmra.mrb[0].mxu0 %v4880
        %v5067 = vpop.f32.mrb[0].mxu0
        %v5068 = vadd.f32 0.0, %v5067
        %v5069 = vpop.f32.mrb[0].mxu0
        %5070 = vmatprep.mubr.f32.mxu0 0.0
        %5071 = vmatmul.mubr.f32.gmra.mrb[0].mxu0 %v4883
        %v5072 = vpop.f32.mrb[0].mxu0
        %v5073 = vadd.f32 0.0, %v5072
        %v5074 = vpop.f32.mrb[0].mxu0
        %5075 = vmatprep.mubr.f32.mxu0 0.0
        %5076 = vmatmul.mubr.f32.gmra.mrb[0].mxu0 %v4886
        %v5077 = vpop.f32.mrb[0].mxu0
        %v5078 = vadd.f32 0.0, %v5077
        %v5079 = vpop.f32.mrb[0].mxu0
        %5080 = vmatprep.mubr.f32.mxu0 0.0
        %5081 = vmatmul.mubr.f32.gmra.mrb[0].mxu0 %v4889
        %v5082 = vpop.f32.mrb[0].mxu0
        %v5083 = vadd.f32 0.0, %v5082
        %v5084 = vpop.f32.mrb[0].mxu0
        %5085 = vmatprep.mubr.f32.mxu0 0.0
        %5086 = vmatmul.mubr.f32.gmra.mrb[0].mxu0 %v4892
        %v5087 = vpop.f32.mrb[0].mxu0
        %v5088 = vadd.f32 0.0, %v5087
        %v5089 = vpop.f32.mrb[0].mxu0
        %5090 = vmatprep.mubr.f32.mxu0 0.0
        %5091 = vmatmul.mubr.f32.gmra.mrb[0].mxu0 %v4895
        %v5092 = vpop.f32.mrb[0].mxu0
        %v5093 = vadd.f32 0.0, %v5092
        %v5094 = vpop.f32.mrb[0].mxu0
        %5095 = vmatprep.mubr.f32.mxu0 0.0
        %5096 = vmatmul.mubr.f32.gmra.mrb[0].mxu0 %v4898
        %v5097 = vpop.f32.mrb[0].mxu0
        %v5098 = vadd.f32 0.0, %v5097
        %v5099 = vpop.f32.mrb[0].mxu0
        %5100 = vmatprep.mubr.f32.mxu0 0.0
        %5101 = vmatmul.mubr.f32.gmra.mrb[0].mxu0 %v4901
        %v5102 = vpop.f32.mrb[0].mxu0
        %v5103 = vadd.f32 0.0, %v5102
        %v5104 = vpop.f32.mrb[0].mxu0
        %5105 = vmatprep.mubr.f32.mxu0 0.0
        %5106 = vmatmul.mubr.f32.gmra.mrb[0].mxu0 %v4904
        %v5107 = vpop.f32.mrb[0].mxu0
        %v5108 = vadd.f32 0.0, %v5107
        %v5109 = vpop.f32.mrb[0].mxu0
        %5110 = vmatprep.mubr.f32.mxu0 0.0
        %5111 = vmatmul.mubr.f32.gmra.mrb[0].mxu0 %v4907
        %v5112 = vpop.f32.mrb[0].mxu0
        %v5113 = vadd.f32 0.0, %v5112
        %v5114 = vpop.f32.mrb[0].mxu0
        %5115 = vmatprep.mubr.f32.mxu0 0.0
        %5116 = vmatmul.mubr.f32.gmra.mrb[0].mxu0 %v4910
        %v5117 = vpop.f32.mrb[0].mxu0
        %v5118 = vadd.f32 0.0, %v5117
        %v5119 = vpop.f32.mrb[0].mxu0
        %5120 = vmatprep.mubr.f32.mxu0 0.0
        %5121 = vmatmul.mubr.f32.gmra.mrb[0].mxu0 %v4913
        %v5122 = vpop.f32.mrb[0].mxu0
        %v5123 = vadd.f32 0.0, %v5122
        %v5124 = vpop.f32.mrb[0].mxu0
        %5125 = vmatprep.mubr.f32.mxu0 0.0
        %5126 = vmatmul.mubr.f32.gmra.mrb[0].mxu0 %v4916
        %v5127 = vpop.f32.mrb[0].mxu0
        %v5128 = vadd.f32 0.0, %v5127
        %v5129 = vpop.f32.mrb[0].mxu0
        %5130 = vmatprep.mubr.f32.mxu0 0.0
        %5131 = vmatmul.mubr.f32.gmra.mrb[0].mxu0 %v4919
        %v5132 = vpop.f32.mrb[0].mxu0
        %v5133 = vadd.f32 0.0, %v5132
        %v5134 = vpop.f32.mrb[0].mxu0
        %5135 = vmatprep.mubr.f32.mxu0 0.0
        %5136 = vmatmul.mubr.f32.gmra.mrb[0].mxu0 %v4922
        %v5137 = vpop.f32.mrb[0].mxu0
        %v5138 = vadd.f32 0.0, %v5137
        %v5139 = vpop.f32.mrb[0].mxu0
        %5140 = vmatprep.mubr.f32.mxu0 0.0
        %5141 = vmatmul.mubr.f32.gmra.mrb[0].mxu0 %v4925
        %v5142 = vpop.f32.mrb[0].mxu0
        %v5143 = vadd.f32 0.0, %v5142
        %v5144 = vpop.f32.mrb[0].mxu0
        %5145 = vmatprep.mubr.f32.mxu0 0.0
        %5146 = vmatmul.mubr.f32.gmra.mrb[0].mxu0 %v4928
        %v5147 = vpop.f32.mrb[0].mxu0
        %v5148 = vadd.f32 0.0, %v5147
        %v5149 = vpop.f32.mrb[0].mxu0
        %5150 = vmatprep.mubr.f32.mxu0 0.0
        %5151 = vmatmul.mubr.f32.gmra.mrb[0].mxu0 %v4931
        %v5152 = vpop.f32.mrb[0].mxu0
        %v5153 = vadd.f32 0.0, %v5152
        %v5154 = vpop.f32.mrb[0].mxu0
        %5155 = vmatprep.mubr.f32.mxu0 0.0
        %5156 = vmatmul.mubr.f32.gmra.mrb[0].mxu0 %v4934
        %v5157 = vpop.f32.mrb[0].mxu0
        %v5158 = vadd.f32 0.0, %v5157
        %v5159 = vpop.f32.mrb[0].mxu0
        %5160 = vdwg.mxu0
        %v5161 = vadd.f32 %v4799, %v5003
        %v5162 = vadd.f32 %v4800, %v5008
        %v5163 = vadd.f32 %v4801, %v5013
        %v5164 = vadd.f32 %v4802, %v5018
        %v5165 = vadd.f32 %v4803, %v5023
        %v5166 = vadd.f32 %v4804, %v5028
        %v5167 = vadd.f32 %v4805, %v5033
        %v5168 = vadd.f32 %v4806, %v5038
        %v5169 = vadd.f32 %v4807, %v5043
        %v5170 = vadd.f32 %v4808, %v5048
        %v5171 = vadd.f32 %v4809, %v5053
        %v5172 = vadd.f32 %v4810, %v5058
        %v5173 = vadd.f32 %v4811, %v5063
        %v5174 = vadd.f32 %v4812, %v5068
        %v5175 = vadd.f32 %v4813, %v5073
        %v5176 = vadd.f32 %v4814, %v5078
        %v5177 = vadd.f32 %v4815, %v5083
        %v5178 = vadd.f32 %v4816, %v5088
        %v5179 = vadd.f32 %v4817, %v5093
        %v5180 = vadd.f32 %v4818, %v5098
        %v5181 = vadd.f32 %v4819, %v5103
        %v5182 = vadd.f32 %v4820, %v5108
        %v5183 = vadd.f32 %v4821, %v5113
        %v5184 = vadd.f32 %v4822, %v5118
        %v5185 = vadd.f32 %v4823, %v5123
        %v5186 = vadd.f32 %v4824, %v5128
        %v5187 = vadd.f32 %v4825, %v5133
        %v5188 = vadd.f32 %v4826, %v5138
        %v5189 = vadd.f32 %v4827, %v5143
        %v5190 = vadd.f32 %v4828, %v5148
        %v5191 = vadd.f32 %v4829, %v5153
        %v5192 = vadd.f32 %v4830, %v5158
        %5193 = vst.msk [vmem:[#allocation5] sm:$0xff] %vm728, %v5161
        %5194 = vst.msk [vmem:[#allocation5 + $0x8] sm:$0xff] %vm728, %v5162
        %5195 = vst.msk [vmem:[#allocation5 + $0x10] sm:$0xff] %vm728, %v5163
        %5196 = vst.msk [vmem:[#allocation5 + $0x18] sm:$0xff] %vm728, %v5164
        %5197 = vst.msk [vmem:[#allocation5 + $0x20] sm:$0xff] %vm728, %v5165
        %5198 = vst.msk [vmem:[#allocation5 + $0x28] sm:$0xff] %vm728, %v5166
        %5199 = vst.msk [vmem:[#allocation5 + $0x30] sm:$0xff] %vm728, %v5167
        %5200 = vst.msk [vmem:[#allocation5 + $0x38] sm:$0xff] %vm728, %v5168
        %5201 = vst.msk [vmem:[#allocation5 + $0x40] sm:$0xff] %vm728, %v5169
        %5202 = vst.msk [vmem:[#allocation5 + $0x48] sm:$0xff] %vm728, %v5170
        %5203 = vst.msk [vmem:[#allocation5 + $0x50] sm:$0xff] %vm728, %v5171
        %5204 = vst.msk [vmem:[#allocation5 + $0x58] sm:$0xff] %vm728, %v5172
        %5205 = vst.msk [vmem:[#allocation5 + $0x60] sm:$0xff] %vm728, %v5173
        %5206 = vst.msk [vmem:[#allocation5 + $0x68] sm:$0xff] %vm728, %v5174
        %5207 = vst.msk [vmem:[#allocation5 + $0x70] sm:$0xff] %vm728, %v5175
        %5208 = vst.msk [vmem:[#allocation5 + $0x78] sm:$0xff] %vm728, %v5176
        %5209 = vst.msk [vmem:[#allocation5 + $0x80] sm:$0xff] %vm728, %v5177
        %5210 = vst.msk [vmem:[#allocation5 + $0x88] sm:$0xff] %vm728, %v5178
        %5211 = vst.msk [vmem:[#allocation5 + $0x90] sm:$0xff] %vm728, %v5179
        %5212 = vst.msk [vmem:[#allocation5 + $0x98] sm:$0xff] %vm728, %v5180
        %5213 = vst.msk [vmem:[#allocation5 + $0xa0] sm:$0xff] %vm728, %v5181
        %5214 = vst.msk [vmem:[#allocation5 + $0xa8] sm:$0xff] %vm728, %v5182
        %5215 = vst.msk [vmem:[#allocation5 + $0xb0] sm:$0xff] %vm728, %v5183
        %5216 = vst.msk [vmem:[#allocation5 + $0xb8] sm:$0xff] %vm728, %v5184
        %5217 = vst.msk [vmem:[#allocation5 + $0xc0] sm:$0xff] %vm728, %v5185
        %5218 = vst.msk [vmem:[#allocation5 + $0xc8] sm:$0xff] %vm728, %v5186
        %5219 = vst.msk [vmem:[#allocation5 + $0xd0] sm:$0xff] %vm728, %v5187
        %5220 = vst.msk [vmem:[#allocation5 + $0xd8] sm:$0xff] %vm728, %v5188
        %5221 = vst.msk [vmem:[#allocation5 + $0xe0] sm:$0xff] %vm728, %v5189
        %5222 = vst.msk [vmem:[#allocation5 + $0xe8] sm:$0xff] %vm728, %v5190
        %5223 = vst.msk [vmem:[#allocation5 + $0xf0] sm:$0xff] %vm728, %v5191
        %5224 = vst.msk [vmem:[#allocation5 + $0xf8] sm:$0xff] %vm728, %v5192
        %v5225 = vld [vmem:[#allocation5] sm:$0xff]
        %v5226 = vld [vmem:[#allocation5 + $0x8] sm:$0xff]
        %v5227 = vld [vmem:[#allocation5 + $0x10] sm:$0xff]
        %v5228 = vld [vmem:[#allocation5 + $0x18] sm:$0xff]
        %v5229 = vld [vmem:[#allocation5 + $0x20] sm:$0xff]
        %v5230 = vld [vmem:[#allocation5 + $0x28] sm:$0xff]
        %v5231 = vld [vmem:[#allocation5 + $0x30] sm:$0xff]
        %v5232 = vld [vmem:[#allocation5 + $0x38] sm:$0xff]
        %v5233 = vld [vmem:[#allocation5 + $0x40] sm:$0xff]
        %v5234 = vld [vmem:[#allocation5 + $0x48] sm:$0xff]
        %v5235 = vld [vmem:[#allocation5 + $0x50] sm:$0xff]
        %v5236 = vld [vmem:[#allocation5 + $0x58] sm:$0xff]
        %v5237 = vld [vmem:[#allocation5 + $0x60] sm:$0xff]
        %v5238 = vld [vmem:[#allocation5 + $0x68] sm:$0xff]
        %v5239 = vld [vmem:[#allocation5 + $0x70] sm:$0xff]
        %v5240 = vld [vmem:[#allocation5 + $0x78] sm:$0xff]
        %v5241 = vld [vmem:[#allocation5 + $0x80] sm:$0xff]
        %v5242 = vld [vmem:[#allocation5 + $0x88] sm:$0xff]
        %v5243 = vld [vmem:[#allocation5 + $0x90] sm:$0xff]
        %v5244 = vld [vmem:[#allocation5 + $0x98] sm:$0xff]
        %v5245 = vld [vmem:[#allocation5 + $0xa0] sm:$0xff]
        %v5246 = vld [vmem:[#allocation5 + $0xa8] sm:$0xff]
        %v5247 = vld [vmem:[#allocation5 + $0xb0] sm:$0xff]
        %v5248 = vld [vmem:[#allocation5 + $0xb8] sm:$0xff]
        %v5249 = vld [vmem:[#allocation5 + $0xc0] sm:$0xff]
        %v5250 = vld [vmem:[#allocation5 + $0xc8] sm:$0xff]
        %v5251 = vld [vmem:[#allocation5 + $0xd0] sm:$0xff]
        %v5252 = vld [vmem:[#allocation5 + $0xd8] sm:$0xff]
        %v5253 = vld [vmem:[#allocation5 + $0xe0] sm:$0xff]
        %v5254 = vld [vmem:[#allocation5 + $0xe8] sm:$0xff]
        %v5255 = vld [vmem:[#allocation5 + $0xf0] sm:$0xff]
        %v5256 = vld [vmem:[#allocation5 + $0xf8] sm:$0xff]
        %v5257 = vld [vmem:[%s4] sm:$0x1]
        %v5259 = vlaneseq
        %v5260 = vshrl.u32 %v5259, 7
        %v5261 = vsub.s32 0, %v5260
        %v5262 = vrot.slane %v5257, %v5261
        %v5264 = vadd.f32 %v5225, %v5262
        %v5265 = vadd.f32 %v5226, %v5262
        %v5266 = vadd.f32 %v5227, %v5262
        %v5267 = vadd.f32 %v5228, %v5262
        %v5268 = vadd.f32 %v5229, %v5262
        %v5269 = vadd.f32 %v5230, %v5262
        %v5270 = vadd.f32 %v5231, %v5262
        %v5271 = vadd.f32 %v5232, %v5262
        %v5272 = vadd.f32 %v5233, %v5262
        %v5273 = vadd.f32 %v5234, %v5262
        %v5274 = vadd.f32 %v5235, %v5262
        %v5275 = vadd.f32 %v5236, %v5262
        %v5276 = vadd.f32 %v5237, %v5262
        %v5277 = vadd.f32 %v5238, %v5262
        %v5278 = vadd.f32 %v5239, %v5262
        %v5279 = vadd.f32 %v5240, %v5262
        %v5280 = vadd.f32 %v5241, %v5262
        %v5281 = vadd.f32 %v5242, %v5262
        %v5282 = vadd.f32 %v5243, %v5262
        %v5283 = vadd.f32 %v5244, %v5262
        %v5284 = vadd.f32 %v5245, %v5262
        %v5285 = vadd.f32 %v5246, %v5262
        %v5286 = vadd.f32 %v5247, %v5262
        %v5287 = vadd.f32 %v5248, %v5262
        %v5288 = vadd.f32 %v5249, %v5262
        %v5289 = vadd.f32 %v5250, %v5262
        %v5290 = vadd.f32 %v5251, %v5262
        %v5291 = vadd.f32 %v5252, %v5262
        %v5292 = vadd.f32 %v5253, %v5262
        %v5293 = vadd.f32 %v5254, %v5262
        %v5294 = vadd.f32 %v5255, %v5262
        %v5295 = vadd.f32 %v5256, %v5262
        %v5296 = vmax.f32 %v5264, 0.0
        %v5297 = vmax.f32 %v5265, 0.0
        %v5298 = vmax.f32 %v5266, 0.0
        %v5299 = vmax.f32 %v5267, 0.0
        %v5300 = vmax.f32 %v5268, 0.0
        %v5301 = vmax.f32 %v5269, 0.0
        %v5302 = vmax.f32 %v5270, 0.0
        %v5303 = vmax.f32 %v5271, 0.0
        %v5304 = vmax.f32 %v5272, 0.0
        %v5305 = vmax.f32 %v5273, 0.0
        %v5306 = vmax.f32 %v5274, 0.0
        %v5307 = vmax.f32 %v5275, 0.0
        %v5308 = vmax.f32 %v5276, 0.0
        %v5309 = vmax.f32 %v5277, 0.0
        %v5310 = vmax.f32 %v5278, 0.0
        %v5311 = vmax.f32 %v5279, 0.0
        %v5312 = vmax.f32 %v5280, 0.0
        %v5313 = vmax.f32 %v5281, 0.0
        %v5314 = vmax.f32 %v5282, 0.0
        %v5315 = vmax.f32 %v5283, 0.0
        %v5316 = vmax.f32 %v5284, 0.0
        %v5317 = vmax.f32 %v5285, 0.0
        %v5318 = vmax.f32 %v5286, 0.0
        %v5319 = vmax.f32 %v5287, 0.0
        %v5320 = vmax.f32 %v5288, 0.0
        %v5321 = vmax.f32 %v5289, 0.0
        %v5322 = vmax.f32 %v5290, 0.0
        %v5323 = vmax.f32 %v5291, 0.0
        %v5324 = vmax.f32 %v5292, 0.0
        %v5325 = vmax.f32 %v5293, 0.0
        %v5326 = vmax.f32 %v5294, 0.0
        %v5327 = vmax.f32 %v5295, 0.0
        %5328 = vst.msk [vmem:[#allocation5] sm:$0xff] %vm728, %v5296
        %5329 = vst.msk [vmem:[#allocation5 + $0x8] sm:$0xff] %vm728, %v5297
        %5330 = vst.msk [vmem:[#allocation5 + $0x10] sm:$0xff] %vm728, %v5298
        %5331 = vst.msk [vmem:[#allocation5 + $0x18] sm:$0xff] %vm728, %v5299
        %5332 = vst.msk [vmem:[#allocation5 + $0x20] sm:$0xff] %vm728, %v5300
        %5333 = vst.msk [vmem:[#allocation5 + $0x28] sm:$0xff] %vm728, %v5301
        %5334 = vst.msk [vmem:[#allocation5 + $0x30] sm:$0xff] %vm728, %v5302
        %5335 = vst.msk [vmem:[#allocation5 + $0x38] sm:$0xff] %vm728, %v5303
        %5336 = vst.msk [vmem:[#allocation5 + $0x40] sm:$0xff] %vm728, %v5304
        %5337 = vst.msk [vmem:[#allocation5 + $0x48] sm:$0xff] %vm728, %v5305
        %5338 = vst.msk [vmem:[#allocation5 + $0x50] sm:$0xff] %vm728, %v5306
        %5339 = vst.msk [vmem:[#allocation5 + $0x58] sm:$0xff] %vm728, %v5307
        %5340 = vst.msk [vmem:[#allocation5 + $0x60] sm:$0xff] %vm728, %v5308
        %5341 = vst.msk [vmem:[#allocation5 + $0x68] sm:$0xff] %vm728, %v5309
        %5342 = vst.msk [vmem:[#allocation5 + $0x70] sm:$0xff] %vm728, %v5310
        %5343 = vst.msk [vmem:[#allocation5 + $0x78] sm:$0xff] %vm728, %v5311
        %5344 = vst.msk [vmem:[#allocation5 + $0x80] sm:$0xff] %vm728, %v5312
        %5345 = vst.msk [vmem:[#allocation5 + $0x88] sm:$0xff] %vm728, %v5313
        %5346 = vst.msk [vmem:[#allocation5 + $0x90] sm:$0xff] %vm728, %v5314
        %5347 = vst.msk [vmem:[#allocation5 + $0x98] sm:$0xff] %vm728, %v5315
        %5348 = vst.msk [vmem:[#allocation5 + $0xa0] sm:$0xff] %vm728, %v5316
        %5349 = vst.msk [vmem:[#allocation5 + $0xa8] sm:$0xff] %vm728, %v5317
        %5350 = vst.msk [vmem:[#allocation5 + $0xb0] sm:$0xff] %vm728, %v5318
        %5351 = vst.msk [vmem:[#allocation5 + $0xb8] sm:$0xff] %vm728, %v5319
        %5352 = vst.msk [vmem:[#allocation5 + $0xc0] sm:$0xff] %vm728, %v5320
        %5353 = vst.msk [vmem:[#allocation5 + $0xc8] sm:$0xff] %vm728, %v5321
        %5354 = vst.msk [vmem:[#allocation5 + $0xd0] sm:$0xff] %vm728, %v5322
        %5355 = vst.msk [vmem:[#allocation5 + $0xd8] sm:$0xff] %vm728, %v5323
        %5356 = vst.msk [vmem:[#allocation5 + $0xe0] sm:$0xff] %vm728, %v5324
        %5357 = vst.msk [vmem:[#allocation5 + $0xe8] sm:$0xff] %vm728, %v5325
        %5358 = vst.msk [vmem:[#allocation5 + $0xf0] sm:$0xff] %vm728, %v5326
        %5359 = vst.msk [vmem:[#allocation5 + $0xf8] sm:$0xff] %vm728, %v5327
        %v5360 = vld [vmem:[#allocation5] ss:$2 sm:$0xff]
        %s5361 = scalar_lea.vmem [#allocation5], 16
        %v5362 = vld [vmem:[%s5361] ss:$2 sm:$0xff]
        %s5363 = scalar_lea.vmem [#allocation5], 32
        %v5364 = vld [vmem:[%s5363] ss:$2 sm:$0xff]
        %s5365 = scalar_lea.vmem [#allocation5], 48
        %v5366 = vld [vmem:[%s5365] ss:$2 sm:$0xff]
        %s5367 = scalar_lea.vmem [#allocation5], 64
        %v5368 = vld [vmem:[%s5367] ss:$2 sm:$0xff]
        %s5369 = scalar_lea.vmem [#allocation5], 80
        %v5370 = vld [vmem:[%s5369] ss:$2 sm:$0xff]
        %s5371 = scalar_lea.vmem [#allocation5], 96
        %v5372 = vld [vmem:[%s5371] ss:$2 sm:$0xff]
        %s5373 = scalar_lea.vmem [#allocation5], 112
        %v5374 = vld [vmem:[%s5373] ss:$2 sm:$0xff]
        %s5375 = scalar_lea.vmem [#allocation5], 128
        %v5376 = vld [vmem:[%s5375] ss:$2 sm:$0xff]
        %s5377 = scalar_lea.vmem [#allocation5], 144
        %v5378 = vld [vmem:[%s5377] ss:$2 sm:$0xff]
        %s5379 = scalar_lea.vmem [#allocation5], 160
        %v5380 = vld [vmem:[%s5379] ss:$2 sm:$0xff]
        %s5381 = scalar_lea.vmem [#allocation5], 176
        %v5382 = vld [vmem:[%s5381] ss:$2 sm:$0xff]
        %s5383 = scalar_lea.vmem [#allocation5], 192
        %v5384 = vld [vmem:[%s5383] ss:$2 sm:$0xff]
        %s5385 = scalar_lea.vmem [#allocation5], 208
        %v5386 = vld [vmem:[%s5385] ss:$2 sm:$0xff]
        %s5387 = scalar_lea.vmem [#allocation5], 224
        %v5388 = vld [vmem:[%s5387] ss:$2 sm:$0xff]
        %s5389 = scalar_lea.vmem [#allocation5], 240
        %v5390 = vld [vmem:[%s5389] ss:$2 sm:$0xff]
        %s5391 = scalar_lea.vmem [#allocation5], 1
        %v5392 = vld [vmem:[%s5391] ss:$2 sm:$0xff]
        %s5393 = scalar_lea.vmem [#allocation5], 17
        %v5394 = vld [vmem:[%s5393] ss:$2 sm:$0xff]
        %s5395 = scalar_lea.vmem [#allocation5], 33
        %v5396 = vld [vmem:[%s5395] ss:$2 sm:$0xff]
        %s5397 = scalar_lea.vmem [#allocation5], 49
        %v5398 = vld [vmem:[%s5397] ss:$2 sm:$0xff]
        %s5399 = scalar_lea.vmem [#allocation5], 65
        %v5400 = vld [vmem:[%s5399] ss:$2 sm:$0xff]
        %s5401 = scalar_lea.vmem [#allocation5], 81
        %v5402 = vld [vmem:[%s5401] ss:$2 sm:$0xff]
        %s5403 = scalar_lea.vmem [#allocation5], 97
        %v5404 = vld [vmem:[%s5403] ss:$2 sm:$0xff]
        %s5405 = scalar_lea.vmem [#allocation5], 113
        %v5406 = vld [vmem:[%s5405] ss:$2 sm:$0xff]
        %s5407 = scalar_lea.vmem [#allocation5], 129
        %v5408 = vld [vmem:[%s5407] ss:$2 sm:$0xff]
        %s5409 = scalar_lea.vmem [#allocation5], 145
        %v5410 = vld [vmem:[%s5409] ss:$2 sm:$0xff]
        %s5411 = scalar_lea.vmem [#allocation5], 161
        %v5412 = vld [vmem:[%s5411] ss:$2 sm:$0xff]
        %s5413 = scalar_lea.vmem [#allocation5], 177
        %v5414 = vld [vmem:[%s5413] ss:$2 sm:$0xff]
        %s5415 = scalar_lea.vmem [#allocation5], 193
        %v5416 = vld [vmem:[%s5415] ss:$2 sm:$0xff]
        %s5417 = scalar_lea.vmem [#allocation5], 209
        %v5418 = vld [vmem:[%s5417] ss:$2 sm:$0xff]
        %s5419 = scalar_lea.vmem [#allocation5], 225
        %v5420 = vld [vmem:[%s5419] ss:$2 sm:$0xff]
        %s5421 = scalar_lea.vmem [#allocation5], 241
        %v5422 = vld [vmem:[%s5421] ss:$2 sm:$0xff]
        %v5423 = vmax.f32 %v5360, %v5392
        %v5424 = vmax.f32 %v5362, %v5394
        %v5425 = vmax.f32 %v5364, %v5396
        %v5426 = vmax.f32 %v5366, %v5398
        %v5427 = vmax.f32 %v5368, %v5400
        %v5428 = vmax.f32 %v5370, %v5402
        %v5429 = vmax.f32 %v5372, %v5404
        %v5430 = vmax.f32 %v5374, %v5406
        %v5431 = vmax.f32 %v5376, %v5408
        %v5432 = vmax.f32 %v5378, %v5410
        %v5433 = vmax.f32 %v5380, %v5412
        %v5434 = vmax.f32 %v5382, %v5414
        %v5435 = vmax.f32 %v5384, %v5416
        %v5436 = vmax.f32 %v5386, %v5418
        %v5437 = vmax.f32 %v5388, %v5420
        %v5438 = vmax.f32 %v5390, %v5422
        %v5439 = vmax.f32 %v5423, %v5424
        %v5440 = vmax.f32 %v5425, %v5426
        %v5441 = vmax.f32 %v5427, %v5428
        %v5442 = vmax.f32 %v5429, %v5430
        %v5443 = vmax.f32 %v5431, %v5432
        %v5444 = vmax.f32 %v5433, %v5434
        %v5445 = vmax.f32 %v5435, %v5436
        %v5446 = vmax.f32 %v5437, %v5438
        %5447 = vst.msk [vmem:[#allocation3] sm:$0xff] %vm728, 0.0
        %5448 = vst.msk [vmem:[#allocation3 + $0x50] sm:$0xff] %vm728, 0.0
        %5449 = vst.msk [vmem:[#allocation3 + $0xa0] sm:$0xff] %vm728, 0.0
        %s5450 = scalar_lea.vmem [#allocation3], 72
        %5451 = vst.msk [vmem:[%s5450] sm:$0xff] %vm728, 0.0
        %5452 = vst.msk [vmem:[%s5450 + $0x50] sm:$0xff] %vm728, 0.0
        %5453 = vst.msk [vmem:[%s5450 + $0xa0] sm:$0xff] %vm728, 0.0
        %v5462 = vrot.slane %v5439, 7
        %v5463 = vrot.slane %v5440, 7
        %v5464 = vrot.slane %v5441, 7
        %v5465 = vrot.slane %v5442, 7
        %v5466 = vrot.slane %v5443, 7
        %v5467 = vrot.slane %v5444, 7
        %v5468 = vrot.slane %v5445, 7
        %v5469 = vrot.slane %v5446, 7
        %v5478 = vsel %vm774, 0.0, %v5462
        %v5479 = vsel %vm774, 0.0, %v5463
        %v5480 = vsel %vm774, 0.0, %v5464
        %v5481 = vsel %vm774, 0.0, %v5465
        %v5482 = vsel %vm774, 0.0, %v5466
        %v5483 = vsel %vm774, 0.0, %v5467
        %v5484 = vsel %vm774, 0.0, %v5468
        %v5485 = vsel %vm774, 0.0, %v5469
        %s5486 = scalar_lea.vmem [#allocation3], 8
        %5487 = vst.msk [vmem:[%s5486] sm:$0xff] %vm728, %v5478
        %5488 = vst.msk [vmem:[%s5486 + $0x8] sm:$0xff] %vm728, %v5479
        %5489 = vst.msk [vmem:[%s5486 + $0x10] sm:$0xff] %vm728, %v5480
        %5490 = vst.msk [vmem:[%s5486 + $0x18] sm:$0xff] %vm728, %v5481
        %5491 = vst.msk [vmem:[%s5486 + $0x20] sm:$0xff] %vm728, %v5482
        %5492 = vst.msk [vmem:[%s5486 + $0x28] sm:$0xff] %vm728, %v5483
        %5493 = vst.msk [vmem:[%s5486 + $0x30] sm:$0xff] %vm728, %v5484
        %5494 = vst.msk [vmem:[%s5486 + $0x38] sm:$0xff] %vm728, %v5485
        %s5495 = scalar_lea.vmem [#allocation3], 88
        %5496 = vst.msk [vmem:[%s5495] sm:$0xff] %vm728, %v5439
        %5497 = vst.msk [vmem:[%s5495 + $0x8] sm:$0xff] %vm728, %v5440
        %5498 = vst.msk [vmem:[%s5495 + $0x10] sm:$0xff] %vm728, %v5441
        %5499 = vst.msk [vmem:[%s5495 + $0x18] sm:$0xff] %vm728, %v5442
        %5500 = vst.msk [vmem:[%s5495 + $0x20] sm:$0xff] %vm728, %v5443
        %5501 = vst.msk [vmem:[%s5495 + $0x28] sm:$0xff] %vm728, %v5444
        %5502 = vst.msk [vmem:[%s5495 + $0x30] sm:$0xff] %vm728, %v5445
        %5503 = vst.msk [vmem:[%s5495 + $0x38] sm:$0xff] %vm728, %v5446
        %v5504 = vrot.slane %v5439, 1
        %v5505 = vrot.slane %v5440, 1
        %v5506 = vrot.slane %v5441, 1
        %v5507 = vrot.slane %v5442, 1
        %v5508 = vrot.slane %v5443, 1
        %v5509 = vrot.slane %v5444, 1
        %v5510 = vrot.slane %v5445, 1
        %v5511 = vrot.slane %v5446, 1
        %v5520 = vsel %vm937, %v5504, 0.0
        %v5521 = vsel %vm937, %v5505, 0.0
        %v5522 = vsel %vm937, %v5506, 0.0
        %v5523 = vsel %vm937, %v5507, 0.0
        %v5524 = vsel %vm937, %v5508, 0.0
        %v5525 = vsel %vm937, %v5509, 0.0
        %v5526 = vsel %vm937, %v5510, 0.0
        %v5527 = vsel %vm937, %v5511, 0.0
        %s5528 = scalar_lea.vmem [#allocation3], 168
        %5529 = vst.msk [vmem:[%s5528] sm:$0xff] %vm728, %v5520
        %5530 = vst.msk [vmem:[%s5528 + $0x8] sm:$0xff] %vm728, %v5521
        %5531 = vst.msk [vmem:[%s5528 + $0x10] sm:$0xff] %vm728, %v5522
        %5532 = vst.msk [vmem:[%s5528 + $0x18] sm:$0xff] %vm728, %v5523
        %5533 = vst.msk [vmem:[%s5528 + $0x20] sm:$0xff] %vm728, %v5524
        %5534 = vst.msk [vmem:[%s5528 + $0x28] sm:$0xff] %vm728, %v5525
        %5535 = vst.msk [vmem:[%s5528 + $0x30] sm:$0xff] %vm728, %v5526
        %5536 = vst.msk [vmem:[%s5528 + $0x38] sm:$0xff] %vm728, %v5527
        %5537 = vst [vmem:[#allocation6] sm:$0xff] 0.0
        %5538 = vst [vmem:[#allocation6 + $0x8] sm:$0xff] 0.0
        %5539 = vst [vmem:[#allocation6 + $0x10] sm:$0xff] 0.0
        %5540 = vst [vmem:[#allocation6 + $0x18] sm:$0xff] 0.0
        %5541 = vst [vmem:[#allocation6 + $0x20] sm:$0xff] 0.0
        %5542 = vst [vmem:[#allocation6 + $0x28] sm:$0xff] 0.0
        %5543 = vst [vmem:[#allocation6 + $0x30] sm:$0xff] 0.0
        %5544 = vst [vmem:[#allocation6 + $0x38] sm:$0xff] 0.0
        %v5545 = vld [vmem:[#allocation3] sm:$0xff]
        %v5546 = vld [vmem:[#allocation3 + $0x8] sm:$0xff]
        %v5547 = vld [vmem:[#allocation3 + $0x10] sm:$0xff]
        %v5548 = vld [vmem:[#allocation3 + $0x18] sm:$0xff]
        %v5549 = vld [vmem:[#allocation3 + $0x20] sm:$0xff]
        %v5550 = vld [vmem:[#allocation3 + $0x28] sm:$0xff]
        %v5551 = vld [vmem:[#allocation3 + $0x30] sm:$0xff]
        %v5552 = vld [vmem:[#allocation3 + $0x38] sm:$0xff]
        %v5553 = vld [vmem:[#allocation6] sm:$0xff]
        %v5554 = vld [vmem:[#allocation6 + $0x8] sm:$0xff]
        %v5555 = vld [vmem:[#allocation6 + $0x10] sm:$0xff]
        %v5556 = vld [vmem:[#allocation6 + $0x18] sm:$0xff]
        %v5557 = vld [vmem:[#allocation6 + $0x20] sm:$0xff]
        %v5558 = vld [vmem:[#allocation6 + $0x28] sm:$0xff]
        %v5559 = vld [vmem:[#allocation6 + $0x30] sm:$0xff]
        %v5560 = vld [vmem:[#allocation6 + $0x38] sm:$0xff]
        %v5561 = vld [vmem:[%s5] sm:$0xff]
        %v5562 = vld [vmem:[%s5 + $0x8] sm:$0xff]
        %v5563 = vld [vmem:[%s5 + $0x10] sm:$0xff]
        %v5564 = vld [vmem:[%s5 + $0x18] sm:$0xff]
        %v5565 = vld [vmem:[%s5 + $0x20] sm:$0xff]
        %v5566 = vld [vmem:[%s5 + $0x28] sm:$0xff]
        %v5567 = vld [vmem:[%s5 + $0x30] sm:$0xff]
        %v5568 = vld [vmem:[%s5 + $0x38] sm:$0xff]
        %v5570 = vsel %vm728, %v5545, 0
        %v5573 = vsel %vm728, %v5546, 0
        %v5576 = vsel %vm728, %v5547, 0
        %v5579 = vsel %vm728, %v5548, 0
        %v5582 = vsel %vm728, %v5549, 0
        %v5585 = vsel %vm728, %v5550, 0
        %v5588 = vsel %vm728, %v5551, 0
        %v5591 = vsel %vm728, %v5552, 0
        %5593 = vmatprep.subr.mxu0 0.0
        %5594 = vmatpush1.msra.mxu0 %v5561
        %5595 = vmatprep.subr.mxu0 0.0
        %5596 = vmatpush1.msra.mxu0 %v5562
        %5597 = vmatprep.subr.mxu0 0.0
        %5598 = vmatpush1.msra.mxu0 %v5563
        %5599 = vmatprep.subr.mxu0 0.0
        %5600 = vmatpush1.msra.mxu0 %v5564
        %5601 = vmatprep.subr.mxu0 0.0
        %5602 = vmatpush1.msra.mxu0 %v5565
        %5603 = vmatprep.subr.mxu0 0.0
        %5604 = vmatpush1.msra.mxu0 %v5566
        %5605 = vmatprep.subr.mxu0 0.0
        %5606 = vmatpush1.msra.mxu0 %v5567
        %5607 = vmatprep.subr.mxu0 0.0
        %5608 = vmatpush1.msra.mxu0 %v5568
        %5609 = vmatprep.subr.mxu0 0.0
        %5610 = vmatpush1.msra.mxu0 0.0
        %5611 = vmatprep.subr.mxu0 0.0
        %5612 = vmatpush1.msra.mxu0 0.0
        %5613 = vmatprep.subr.mxu0 0.0
        %5614 = vmatpush1.msra.mxu0 0.0
        %5615 = vmatprep.subr.mxu0 0.0
        %5616 = vmatpush1.msra.mxu0 0.0
        %5617 = vmatprep.subr.mxu0 0.0
        %5618 = vmatpush1.msra.mxu0 0.0
        %5619 = vmatprep.subr.mxu0 0.0
        %5620 = vmatpush1.msra.mxu0 0.0
        %5621 = vmatprep.subr.mxu0 0.0
        %5622 = vmatpush1.msra.mxu0 0.0
        %5623 = vmatprep.subr.mxu0 0.0
        %5624 = vmatpush1.msra.mxu0 0.0
        %5625 = vmatprep.subr.mxu0 0.0
        %5626 = vmatpush1.msra.mxu0 0.0
        %5627 = vmatprep.subr.mxu0 0.0
        %5628 = vmatpush1.msra.mxu0 0.0
        %5629 = vmatprep.subr.mxu0 0.0
        %5630 = vmatpush1.msra.mxu0 0.0
        %5631 = vmatprep.subr.mxu0 0.0
        %5632 = vmatpush1.msra.mxu0 0.0
        %5633 = vmatprep.subr.mxu0 0.0
        %5634 = vmatpush1.msra.mxu0 0.0
        %5635 = vmatprep.subr.mxu0 0.0
        %5636 = vmatpush1.msra.mxu0 0.0
        %5637 = vmatprep.subr.mxu0 0.0
        %5638 = vmatpush1.msra.mxu0 0.0
        %5639 = vmatprep.subr.mxu0 0.0
        %5640 = vmatpush1.msra.mxu0 0.0
        %5641 = vmatprep.subr.mxu0 0.0
        %5642 = vmatpush1.msra.mxu0 0.0
        %5643 = vmatprep.subr.mxu0 0.0
        %5644 = vmatpush1.msra.mxu0 0.0
        %5645 = vmatprep.subr.mxu0 0.0
        %5646 = vmatpush1.msra.mxu0 0.0
        %5647 = vmatprep.subr.mxu0 0.0
        %5648 = vmatpush1.msra.mxu0 0.0
        %5649 = vmatprep.subr.mxu0 0.0
        %5650 = vmatpush1.msra.mxu0 0.0
        %5651 = vmatprep.subr.mxu0 0.0
        %5652 = vmatpush1.msra.mxu0 0.0
        %5653 = vmatprep.subr.mxu0 0.0
        %5654 = vmatpush1.msra.mxu0 0.0
        %5655 = vmatprep.subr.mxu0 0.0
        %5656 = vmatpush1.msra.mxu0 0.0
        %5657 = vmatprep.mubr.f32.mxu0 0.0
        %5658 = vmatmul.mubr.f32.gmra.mrb[0].mxu0 %v5570
        %v5659 = vpop.f32.mrb[0].mxu0
        %v5660 = vadd.f32 0.0, %v5659
        %v5661 = vpop.f32.mrb[0].mxu0
        %5662 = vmatprep.mubr.f32.mxu0 0.0
        %5663 = vmatmul.mubr.f32.gmra.mrb[0].mxu0 %v5573
        %v5664 = vpop.f32.mrb[0].mxu0
        %v5665 = vadd.f32 0.0, %v5664
        %v5666 = vpop.f32.mrb[0].mxu0
        %5667 = vmatprep.mubr.f32.mxu0 0.0
        %5668 = vmatmul.mubr.f32.gmra.mrb[0].mxu0 %v5576
        %v5669 = vpop.f32.mrb[0].mxu0
        %v5670 = vadd.f32 0.0, %v5669
        %v5671 = vpop.f32.mrb[0].mxu0
        %5672 = vmatprep.mubr.f32.mxu0 0.0
        %5673 = vmatmul.mubr.f32.gmra.mrb[0].mxu0 %v5579
        %v5674 = vpop.f32.mrb[0].mxu0
        %v5675 = vadd.f32 0.0, %v5674
        %v5676 = vpop.f32.mrb[0].mxu0
        %5677 = vmatprep.mubr.f32.mxu0 0.0
        %5678 = vmatmul.mubr.f32.gmra.mrb[0].mxu0 %v5582
        %v5679 = vpop.f32.mrb[0].mxu0
        %v5680 = vadd.f32 0.0, %v5679
        %v5681 = vpop.f32.mrb[0].mxu0
        %5682 = vmatprep.mubr.f32.mxu0 0.0
        %5683 = vmatmul.mubr.f32.gmra.mrb[0].mxu0 %v5585
        %v5684 = vpop.f32.mrb[0].mxu0
        %v5685 = vadd.f32 0.0, %v5684
        %v5686 = vpop.f32.mrb[0].mxu0
        %5687 = vmatprep.mubr.f32.mxu0 0.0
        %5688 = vmatmul.mubr.f32.gmra.mrb[0].mxu0 %v5588
        %v5689 = vpop.f32.mrb[0].mxu0
        %v5690 = vadd.f32 0.0, %v5689
        %v5691 = vpop.f32.mrb[0].mxu0
        %5692 = vmatprep.mubr.f32.mxu0 0.0
        %5693 = vmatmul.mubr.f32.gmra.mrb[0].mxu0 %v5591
        %v5694 = vpop.f32.mrb[0].mxu0
        %v5695 = vadd.f32 0.0, %v5694
        %v5696 = vpop.f32.mrb[0].mxu0
        %5697 = vdwg.mxu0
        %v5698 = vadd.f32 %v5553, %v5660
        %v5699 = vadd.f32 %v5554, %v5665
        %v5700 = vadd.f32 %v5555, %v5670
        %v5701 = vadd.f32 %v5556, %v5675
        %v5702 = vadd.f32 %v5557, %v5680
        %v5703 = vadd.f32 %v5558, %v5685
        %v5704 = vadd.f32 %v5559, %v5690
        %v5705 = vadd.f32 %v5560, %v5695
        %5706 = vst [vmem:[#allocation6] sm:$0xff] %v5698
        %5707 = vst [vmem:[#allocation6 + $0x8] sm:$0xff] %v5699
        %5708 = vst [vmem:[#allocation6 + $0x10] sm:$0xff] %v5700
        %5709 = vst [vmem:[#allocation6 + $0x18] sm:$0xff] %v5701
        %5710 = vst [vmem:[#allocation6 + $0x20] sm:$0xff] %v5702
        %5711 = vst [vmem:[#allocation6 + $0x28] sm:$0xff] %v5703
        %5712 = vst [vmem:[#allocation6 + $0x30] sm:$0xff] %v5704
        %5713 = vst [vmem:[#allocation6 + $0x38] sm:$0xff] %v5705
        %s5714 = scalar_lea.vmem [#allocation3], 80
        %v5715 = vld [vmem:[%s5714] sm:$0xff]
        %v5716 = vld [vmem:[%s5714 + $0x8] sm:$0xff]
        %v5717 = vld [vmem:[%s5714 + $0x10] sm:$0xff]
        %v5718 = vld [vmem:[%s5714 + $0x18] sm:$0xff]
        %v5719 = vld [vmem:[%s5714 + $0x20] sm:$0xff]
        %v5720 = vld [vmem:[%s5714 + $0x28] sm:$0xff]
        %v5721 = vld [vmem:[%s5714 + $0x30] sm:$0xff]
        %v5722 = vld [vmem:[%s5714 + $0x38] sm:$0xff]
        %v5723 = vld [vmem:[#allocation6] sm:$0xff]
        %v5724 = vld [vmem:[#allocation6 + $0x8] sm:$0xff]
        %v5725 = vld [vmem:[#allocation6 + $0x10] sm:$0xff]
        %v5726 = vld [vmem:[#allocation6 + $0x18] sm:$0xff]
        %v5727 = vld [vmem:[#allocation6 + $0x20] sm:$0xff]
        %v5728 = vld [vmem:[#allocation6 + $0x28] sm:$0xff]
        %v5729 = vld [vmem:[#allocation6 + $0x30] sm:$0xff]
        %v5730 = vld [vmem:[#allocation6 + $0x38] sm:$0xff]
        %s5731 = scalar_lea.vmem %s5, 64
        %v5732 = vld [vmem:[%s5731] sm:$0xff]
        %v5733 = vld [vmem:[%s5731 + $0x8] sm:$0xff]
        %v5734 = vld [vmem:[%s5731 + $0x10] sm:$0xff]
        %v5735 = vld [vmem:[%s5731 + $0x18] sm:$0xff]
        %v5736 = vld [vmem:[%s5731 + $0x20] sm:$0xff]
        %v5737 = vld [vmem:[%s5731 + $0x28] sm:$0xff]
        %v5738 = vld [vmem:[%s5731 + $0x30] sm:$0xff]
        %v5739 = vld [vmem:[%s5731 + $0x38] sm:$0xff]
        %v5741 = vsel %vm728, %v5715, 0
        %v5744 = vsel %vm728, %v5716, 0
        %v5747 = vsel %vm728, %v5717, 0
        %v5750 = vsel %vm728, %v5718, 0
        %v5753 = vsel %vm728, %v5719, 0
        %v5756 = vsel %vm728, %v5720, 0
        %v5759 = vsel %vm728, %v5721, 0
        %v5762 = vsel %vm728, %v5722, 0
        %5764 = vmatprep.subr.mxu0 0.0
        %5765 = vmatpush1.msra.mxu0 %v5732
        %5766 = vmatprep.subr.mxu0 0.0
        %5767 = vmatpush1.msra.mxu0 %v5733
        %5768 = vmatprep.subr.mxu0 0.0
        %5769 = vmatpush1.msra.mxu0 %v5734
        %5770 = vmatprep.subr.mxu0 0.0
        %5771 = vmatpush1.msra.mxu0 %v5735
        %5772 = vmatprep.subr.mxu0 0.0
        %5773 = vmatpush1.msra.mxu0 %v5736
        %5774 = vmatprep.subr.mxu0 0.0
        %5775 = vmatpush1.msra.mxu0 %v5737
        %5776 = vmatprep.subr.mxu0 0.0
        %5777 = vmatpush1.msra.mxu0 %v5738
        %5778 = vmatprep.subr.mxu0 0.0
        %5779 = vmatpush1.msra.mxu0 %v5739
        %5780 = vmatprep.subr.mxu0 0.0
        %5781 = vmatpush1.msra.mxu0 0.0
        %5782 = vmatprep.subr.mxu0 0.0
        %5783 = vmatpush1.msra.mxu0 0.0
        %5784 = vmatprep.subr.mxu0 0.0
        %5785 = vmatpush1.msra.mxu0 0.0
        %5786 = vmatprep.subr.mxu0 0.0
        %5787 = vmatpush1.msra.mxu0 0.0
        %5788 = vmatprep.subr.mxu0 0.0
        %5789 = vmatpush1.msra.mxu0 0.0
        %5790 = vmatprep.subr.mxu0 0.0
        %5791 = vmatpush1.msra.mxu0 0.0
        %5792 = vmatprep.subr.mxu0 0.0
        %5793 = vmatpush1.msra.mxu0 0.0
        %5794 = vmatprep.subr.mxu0 0.0
        %5795 = vmatpush1.msra.mxu0 0.0
        %5796 = vmatprep.subr.mxu0 0.0
        %5797 = vmatpush1.msra.mxu0 0.0
        %5798 = vmatprep.subr.mxu0 0.0
        %5799 = vmatpush1.msra.mxu0 0.0
        %5800 = vmatprep.subr.mxu0 0.0
        %5801 = vmatpush1.msra.mxu0 0.0
        %5802 = vmatprep.subr.mxu0 0.0
        %5803 = vmatpush1.msra.mxu0 0.0
        %5804 = vmatprep.subr.mxu0 0.0
        %5805 = vmatpush1.msra.mxu0 0.0
        %5806 = vmatprep.subr.mxu0 0.0
        %5807 = vmatpush1.msra.mxu0 0.0
        %5808 = vmatprep.subr.mxu0 0.0
        %5809 = vmatpush1.msra.mxu0 0.0
        %5810 = vmatprep.subr.mxu0 0.0
        %5811 = vmatpush1.msra.mxu0 0.0
        %5812 = vmatprep.subr.mxu0 0.0
        %5813 = vmatpush1.msra.mxu0 0.0
        %5814 = vmatprep.subr.mxu0 0.0
        %5815 = vmatpush1.msra.mxu0 0.0
        %5816 = vmatprep.subr.mxu0 0.0
        %5817 = vmatpush1.msra.mxu0 0.0
        %5818 = vmatprep.subr.mxu0 0.0
        %5819 = vmatpush1.msra.mxu0 0.0
        %5820 = vmatprep.subr.mxu0 0.0
        %5821 = vmatpush1.msra.mxu0 0.0
        %5822 = vmatprep.subr.mxu0 0.0
        %5823 = vmatpush1.msra.mxu0 0.0
        %5824 = vmatprep.subr.mxu0 0.0
        %5825 = vmatpush1.msra.mxu0 0.0
        %5826 = vmatprep.subr.mxu0 0.0
        %5827 = vmatpush1.msra.mxu0 0.0
        %5828 = vmatprep.mubr.f32.mxu0 0.0
        %5829 = vmatmul.mubr.f32.gmra.mrb[0].mxu0 %v5741
        %v5830 = vpop.f32.mrb[0].mxu0
        %v5831 = vadd.f32 0.0, %v5830
        %v5832 = vpop.f32.mrb[0].mxu0
        %5833 = vmatprep.mubr.f32.mxu0 0.0
        %5834 = vmatmul.mubr.f32.gmra.mrb[0].mxu0 %v5744
        %v5835 = vpop.f32.mrb[0].mxu0
        %v5836 = vadd.f32 0.0, %v5835
        %v5837 = vpop.f32.mrb[0].mxu0
        %5838 = vmatprep.mubr.f32.mxu0 0.0
        %5839 = vmatmul.mubr.f32.gmra.mrb[0].mxu0 %v5747
        %v5840 = vpop.f32.mrb[0].mxu0
        %v5841 = vadd.f32 0.0, %v5840
        %v5842 = vpop.f32.mrb[0].mxu0
        %5843 = vmatprep.mubr.f32.mxu0 0.0
        %5844 = vmatmul.mubr.f32.gmra.mrb[0].mxu0 %v5750
        %v5845 = vpop.f32.mrb[0].mxu0
        %v5846 = vadd.f32 0.0, %v5845
        %v5847 = vpop.f32.mrb[0].mxu0
        %5848 = vmatprep.mubr.f32.mxu0 0.0
        %5849 = vmatmul.mubr.f32.gmra.mrb[0].mxu0 %v5753
        %v5850 = vpop.f32.mrb[0].mxu0
        %v5851 = vadd.f32 0.0, %v5850
        %v5852 = vpop.f32.mrb[0].mxu0
        %5853 = vmatprep.mubr.f32.mxu0 0.0
        %5854 = vmatmul.mubr.f32.gmra.mrb[0].mxu0 %v5756
        %v5855 = vpop.f32.mrb[0].mxu0
        %v5856 = vadd.f32 0.0, %v5855
        %v5857 = vpop.f32.mrb[0].mxu0
        %5858 = vmatprep.mubr.f32.mxu0 0.0
        %5859 = vmatmul.mubr.f32.gmra.mrb[0].mxu0 %v5759
        %v5860 = vpop.f32.mrb[0].mxu0
        %v5861 = vadd.f32 0.0, %v5860
        %v5862 = vpop.f32.mrb[0].mxu0
        %5863 = vmatprep.mubr.f32.mxu0 0.0
        %5864 = vmatmul.mubr.f32.gmra.mrb[0].mxu0 %v5762
        %v5865 = vpop.f32.mrb[0].mxu0
        %v5866 = vadd.f32 0.0, %v5865
        %v5867 = vpop.f32.mrb[0].mxu0
        %5868 = vdwg.mxu0
        %v5869 = vadd.f32 %v5723, %v5831
        %v5870 = vadd.f32 %v5724, %v5836
        %v5871 = vadd.f32 %v5725, %v5841
        %v5872 = vadd.f32 %v5726, %v5846
        %v5873 = vadd.f32 %v5727, %v5851
        %v5874 = vadd.f32 %v5728, %v5856
        %v5875 = vadd.f32 %v5729, %v5861
        %v5876 = vadd.f32 %v5730, %v5866
        %5877 = vst [vmem:[#allocation6] sm:$0xff] %v5869
        %5878 = vst [vmem:[#allocation6 + $0x8] sm:$0xff] %v5870
        %5879 = vst [vmem:[#allocation6 + $0x10] sm:$0xff] %v5871
        %5880 = vst [vmem:[#allocation6 + $0x18] sm:$0xff] %v5872
        %5881 = vst [vmem:[#allocation6 + $0x20] sm:$0xff] %v5873
        %5882 = vst [vmem:[#allocation6 + $0x28] sm:$0xff] %v5874
        %5883 = vst [vmem:[#allocation6 + $0x30] sm:$0xff] %v5875
        %5884 = vst [vmem:[#allocation6 + $0x38] sm:$0xff] %v5876
        %s5885 = scalar_lea.vmem [#allocation3], 160
        %v5886 = vld [vmem:[%s5885] sm:$0xff]
        %v5887 = vld [vmem:[%s5885 + $0x8] sm:$0xff]
        %v5888 = vld [vmem:[%s5885 + $0x10] sm:$0xff]
        %v5889 = vld [vmem:[%s5885 + $0x18] sm:$0xff]
        %v5890 = vld [vmem:[%s5885 + $0x20] sm:$0xff]
        %v5891 = vld [vmem:[%s5885 + $0x28] sm:$0xff]
        %v5892 = vld [vmem:[%s5885 + $0x30] sm:$0xff]
        %v5893 = vld [vmem:[%s5885 + $0x38] sm:$0xff]
        %v5894 = vld [vmem:[#allocation6] sm:$0xff]
        %v5895 = vld [vmem:[#allocation6 + $0x8] sm:$0xff]
        %v5896 = vld [vmem:[#allocation6 + $0x10] sm:$0xff]
        %v5897 = vld [vmem:[#allocation6 + $0x18] sm:$0xff]
        %v5898 = vld [vmem:[#allocation6 + $0x20] sm:$0xff]
        %v5899 = vld [vmem:[#allocation6 + $0x28] sm:$0xff]
        %v5900 = vld [vmem:[#allocation6 + $0x30] sm:$0xff]
        %v5901 = vld [vmem:[#allocation6 + $0x38] sm:$0xff]
        %s5902 = scalar_lea.vmem %s5, 128
        %v5903 = vld [vmem:[%s5902] sm:$0xff]
        %v5904 = vld [vmem:[%s5902 + $0x8] sm:$0xff]
        %v5905 = vld [vmem:[%s5902 + $0x10] sm:$0xff]
        %v5906 = vld [vmem:[%s5902 + $0x18] sm:$0xff]
        %v5907 = vld [vmem:[%s5902 + $0x20] sm:$0xff]
        %v5908 = vld [vmem:[%s5902 + $0x28] sm:$0xff]
        %v5909 = vld [vmem:[%s5902 + $0x30] sm:$0xff]
        %v5910 = vld [vmem:[%s5902 + $0x38] sm:$0xff]
        %v5912 = vsel %vm728, %v5886, 0
        %v5915 = vsel %vm728, %v5887, 0
        %v5918 = vsel %vm728, %v5888, 0
        %v5921 = vsel %vm728, %v5889, 0
        %v5924 = vsel %vm728, %v5890, 0
        %v5927 = vsel %vm728, %v5891, 0
        %v5930 = vsel %vm728, %v5892, 0
        %v5933 = vsel %vm728, %v5893, 0
        %5935 = vmatprep.subr.mxu0 0.0
        %5936 = vmatpush1.msra.mxu0 %v5903
        %5937 = vmatprep.subr.mxu0 0.0
        %5938 = vmatpush1.msra.mxu0 %v5904
        %5939 = vmatprep.subr.mxu0 0.0
        %5940 = vmatpush1.msra.mxu0 %v5905
        %5941 = vmatprep.subr.mxu0 0.0
        %5942 = vmatpush1.msra.mxu0 %v5906
        %5943 = vmatprep.subr.mxu0 0.0
        %5944 = vmatpush1.msra.mxu0 %v5907
        %5945 = vmatprep.subr.mxu0 0.0
        %5946 = vmatpush1.msra.mxu0 %v5908
        %5947 = vmatprep.subr.mxu0 0.0
        %5948 = vmatpush1.msra.mxu0 %v5909
        %5949 = vmatprep.subr.mxu0 0.0
        %5950 = vmatpush1.msra.mxu0 %v5910
        %5951 = vmatprep.subr.mxu0 0.0
        %5952 = vmatpush1.msra.mxu0 0.0
        %5953 = vmatprep.subr.mxu0 0.0
        %5954 = vmatpush1.msra.mxu0 0.0
        %5955 = vmatprep.subr.mxu0 0.0
        %5956 = vmatpush1.msra.mxu0 0.0
        %5957 = vmatprep.subr.mxu0 0.0
        %5958 = vmatpush1.msra.mxu0 0.0
        %5959 = vmatprep.subr.mxu0 0.0
        %5960 = vmatpush1.msra.mxu0 0.0
        %5961 = vmatprep.subr.mxu0 0.0
        %5962 = vmatpush1.msra.mxu0 0.0
        %5963 = vmatprep.subr.mxu0 0.0
        %5964 = vmatpush1.msra.mxu0 0.0
        %5965 = vmatprep.subr.mxu0 0.0
        %5966 = vmatpush1.msra.mxu0 0.0
        %5967 = vmatprep.subr.mxu0 0.0
        %5968 = vmatpush1.msra.mxu0 0.0
        %5969 = vmatprep.subr.mxu0 0.0
        %5970 = vmatpush1.msra.mxu0 0.0
        %5971 = vmatprep.subr.mxu0 0.0
        %5972 = vmatpush1.msra.mxu0 0.0
        %5973 = vmatprep.subr.mxu0 0.0
        %5974 = vmatpush1.msra.mxu0 0.0
        %5975 = vmatprep.subr.mxu0 0.0
        %5976 = vmatpush1.msra.mxu0 0.0
        %5977 = vmatprep.subr.mxu0 0.0
        %5978 = vmatpush1.msra.mxu0 0.0
        %5979 = vmatprep.subr.mxu0 0.0
        %5980 = vmatpush1.msra.mxu0 0.0
        %5981 = vmatprep.subr.mxu0 0.0
        %5982 = vmatpush1.msra.mxu0 0.0
        %5983 = vmatprep.subr.mxu0 0.0
        %5984 = vmatpush1.msra.mxu0 0.0
        %5985 = vmatprep.subr.mxu0 0.0
        %5986 = vmatpush1.msra.mxu0 0.0
        %5987 = vmatprep.subr.mxu0 0.0
        %5988 = vmatpush1.msra.mxu0 0.0
        %5989 = vmatprep.subr.mxu0 0.0
        %5990 = vmatpush1.msra.mxu0 0.0
        %5991 = vmatprep.subr.mxu0 0.0
        %5992 = vmatpush1.msra.mxu0 0.0
        %5993 = vmatprep.subr.mxu0 0.0
        %5994 = vmatpush1.msra.mxu0 0.0
        %5995 = vmatprep.subr.mxu0 0.0
        %5996 = vmatpush1.msra.mxu0 0.0
        %5997 = vmatprep.subr.mxu0 0.0
        %5998 = vmatpush1.msra.mxu0 0.0
        %5999 = vmatprep.mubr.f32.mxu0 0.0
        %6000 = vmatmul.mubr.f32.gmra.mrb[0].mxu0 %v5912
        %v6001 = vpop.f32.mrb[0].mxu0
        %v6002 = vadd.f32 0.0, %v6001
        %v6003 = vpop.f32.mrb[0].mxu0
        %6004 = vmatprep.mubr.f32.mxu0 0.0
        %6005 = vmatmul.mubr.f32.gmra.mrb[0].mxu0 %v5915
        %v6006 = vpop.f32.mrb[0].mxu0
        %v6007 = vadd.f32 0.0, %v6006
        %v6008 = vpop.f32.mrb[0].mxu0
        %6009 = vmatprep.mubr.f32.mxu0 0.0
        %6010 = vmatmul.mubr.f32.gmra.mrb[0].mxu0 %v5918
        %v6011 = vpop.f32.mrb[0].mxu0
        %v6012 = vadd.f32 0.0, %v6011
        %v6013 = vpop.f32.mrb[0].mxu0
        %6014 = vmatprep.mubr.f32.mxu0 0.0
        %6015 = vmatmul.mubr.f32.gmra.mrb[0].mxu0 %v5921
        %v6016 = vpop.f32.mrb[0].mxu0
        %v6017 = vadd.f32 0.0, %v6016
        %v6018 = vpop.f32.mrb[0].mxu0
        %6019 = vmatprep.mubr.f32.mxu0 0.0
        %6020 = vmatmul.mubr.f32.gmra.mrb[0].mxu0 %v5924
        %v6021 = vpop.f32.mrb[0].mxu0
        %v6022 = vadd.f32 0.0, %v6021
        %v6023 = vpop.f32.mrb[0].mxu0
        %6024 = vmatprep.mubr.f32.mxu0 0.0
        %6025 = vmatmul.mubr.f32.gmra.mrb[0].mxu0 %v5927
        %v6026 = vpop.f32.mrb[0].mxu0
        %v6027 = vadd.f32 0.0, %v6026
        %v6028 = vpop.f32.mrb[0].mxu0
        %6029 = vmatprep.mubr.f32.mxu0 0.0
        %6030 = vmatmul.mubr.f32.gmra.mrb[0].mxu0 %v5930
        %v6031 = vpop.f32.mrb[0].mxu0
        %v6032 = vadd.f32 0.0, %v6031
        %v6033 = vpop.f32.mrb[0].mxu0
        %6034 = vmatprep.mubr.f32.mxu0 0.0
        %6035 = vmatmul.mubr.f32.gmra.mrb[0].mxu0 %v5933
        %v6036 = vpop.f32.mrb[0].mxu0
        %v6037 = vadd.f32 0.0, %v6036
        %v6038 = vpop.f32.mrb[0].mxu0
        %6039 = vdwg.mxu0
        %v6040 = vadd.f32 %v5894, %v6002
        %v6041 = vadd.f32 %v5895, %v6007
        %v6042 = vadd.f32 %v5896, %v6012
        %v6043 = vadd.f32 %v5897, %v6017
        %v6044 = vadd.f32 %v5898, %v6022
        %v6045 = vadd.f32 %v5899, %v6027
        %v6046 = vadd.f32 %v5900, %v6032
        %v6047 = vadd.f32 %v5901, %v6037
        %6048 = vst [vmem:[#allocation6] sm:$0xff] %v6040
        %6049 = vst [vmem:[#allocation6 + $0x8] sm:$0xff] %v6041
        %6050 = vst [vmem:[#allocation6 + $0x10] sm:$0xff] %v6042
        %6051 = vst [vmem:[#allocation6 + $0x18] sm:$0xff] %v6043
        %6052 = vst [vmem:[#allocation6 + $0x20] sm:$0xff] %v6044
        %6053 = vst [vmem:[#allocation6 + $0x28] sm:$0xff] %v6045
        %6054 = vst [vmem:[#allocation6 + $0x30] sm:$0xff] %v6046
        %6055 = vst [vmem:[#allocation6 + $0x38] sm:$0xff] %v6047
        %v6056 = vld [vmem:[%s5486] sm:$0xff]
        %v6057 = vld [vmem:[%s5486 + $0x8] sm:$0xff]
        %v6058 = vld [vmem:[%s5486 + $0x10] sm:$0xff]
        %v6059 = vld [vmem:[%s5486 + $0x18] sm:$0xff]
        %v6060 = vld [vmem:[%s5486 + $0x20] sm:$0xff]
        %v6061 = vld [vmem:[%s5486 + $0x28] sm:$0xff]
        %v6062 = vld [vmem:[%s5486 + $0x30] sm:$0xff]
        %v6063 = vld [vmem:[%s5486 + $0x38] sm:$0xff]
        %v6064 = vld [vmem:[#allocation6] sm:$0xff]
        %v6065 = vld [vmem:[#allocation6 + $0x8] sm:$0xff]
        %v6066 = vld [vmem:[#allocation6 + $0x10] sm:$0xff]
        %v6067 = vld [vmem:[#allocation6 + $0x18] sm:$0xff]
        %v6068 = vld [vmem:[#allocation6 + $0x20] sm:$0xff]
        %v6069 = vld [vmem:[#allocation6 + $0x28] sm:$0xff]
        %v6070 = vld [vmem:[#allocation6 + $0x30] sm:$0xff]
        %v6071 = vld [vmem:[#allocation6 + $0x38] sm:$0xff]
        %s6072 = scalar_lea.vmem %s5, 192
        %v6073 = vld [vmem:[%s6072] sm:$0xff]
        %v6074 = vld [vmem:[%s6072 + $0x8] sm:$0xff]
        %v6075 = vld [vmem:[%s6072 + $0x10] sm:$0xff]
        %v6076 = vld [vmem:[%s6072 + $0x18] sm:$0xff]
        %v6077 = vld [vmem:[%s6072 + $0x20] sm:$0xff]
        %v6078 = vld [vmem:[%s6072 + $0x28] sm:$0xff]
        %v6079 = vld [vmem:[%s6072 + $0x30] sm:$0xff]
        %v6080 = vld [vmem:[%s6072 + $0x38] sm:$0xff]
        %v6082 = vsel %vm728, %v6056, 0
        %v6085 = vsel %vm728, %v6057, 0
        %v6088 = vsel %vm728, %v6058, 0
        %v6091 = vsel %vm728, %v6059, 0
        %v6094 = vsel %vm728, %v6060, 0
        %v6097 = vsel %vm728, %v6061, 0
        %v6100 = vsel %vm728, %v6062, 0
        %v6103 = vsel %vm728, %v6063, 0
        %6105 = vmatprep.subr.mxu0 0.0
        %6106 = vmatpush1.msra.mxu0 %v6073
        %6107 = vmatprep.subr.mxu0 0.0
        %6108 = vmatpush1.msra.mxu0 %v6074
        %6109 = vmatprep.subr.mxu0 0.0
        %6110 = vmatpush1.msra.mxu0 %v6075
        %6111 = vmatprep.subr.mxu0 0.0
        %6112 = vmatpush1.msra.mxu0 %v6076
        %6113 = vmatprep.subr.mxu0 0.0
        %6114 = vmatpush1.msra.mxu0 %v6077
        %6115 = vmatprep.subr.mxu0 0.0
        %6116 = vmatpush1.msra.mxu0 %v6078
        %6117 = vmatprep.subr.mxu0 0.0
        %6118 = vmatpush1.msra.mxu0 %v6079
        %6119 = vmatprep.subr.mxu0 0.0
        %6120 = vmatpush1.msra.mxu0 %v6080
        %6121 = vmatprep.subr.mxu0 0.0
        %6122 = vmatpush1.msra.mxu0 0.0
        %6123 = vmatprep.subr.mxu0 0.0
        %6124 = vmatpush1.msra.mxu0 0.0
        %6125 = vmatprep.subr.mxu0 0.0
        %6126 = vmatpush1.msra.mxu0 0.0
        %6127 = vmatprep.subr.mxu0 0.0
        %6128 = vmatpush1.msra.mxu0 0.0
        %6129 = vmatprep.subr.mxu0 0.0
        %6130 = vmatpush1.msra.mxu0 0.0
        %6131 = vmatprep.subr.mxu0 0.0
        %6132 = vmatpush1.msra.mxu0 0.0
        %6133 = vmatprep.subr.mxu0 0.0
        %6134 = vmatpush1.msra.mxu0 0.0
        %6135 = vmatprep.subr.mxu0 0.0
        %6136 = vmatpush1.msra.mxu0 0.0
        %6137 = vmatprep.subr.mxu0 0.0
        %6138 = vmatpush1.msra.mxu0 0.0
        %6139 = vmatprep.subr.mxu0 0.0
        %6140 = vmatpush1.msra.mxu0 0.0
        %6141 = vmatprep.subr.mxu0 0.0
        %6142 = vmatpush1.msra.mxu0 0.0
        %6143 = vmatprep.subr.mxu0 0.0
        %6144 = vmatpush1.msra.mxu0 0.0
        %6145 = vmatprep.subr.mxu0 0.0
        %6146 = vmatpush1.msra.mxu0 0.0
        %6147 = vmatprep.subr.mxu0 0.0
        %6148 = vmatpush1.msra.mxu0 0.0
        %6149 = vmatprep.subr.mxu0 0.0
        %6150 = vmatpush1.msra.mxu0 0.0
        %6151 = vmatprep.subr.mxu0 0.0
        %6152 = vmatpush1.msra.mxu0 0.0
        %6153 = vmatprep.subr.mxu0 0.0
        %6154 = vmatpush1.msra.mxu0 0.0
        %6155 = vmatprep.subr.mxu0 0.0
        %6156 = vmatpush1.msra.mxu0 0.0
        %6157 = vmatprep.subr.mxu0 0.0
        %6158 = vmatpush1.msra.mxu0 0.0
        %6159 = vmatprep.subr.mxu0 0.0
        %6160 = vmatpush1.msra.mxu0 0.0
        %6161 = vmatprep.subr.mxu0 0.0
        %6162 = vmatpush1.msra.mxu0 0.0
        %6163 = vmatprep.subr.mxu0 0.0
        %6164 = vmatpush1.msra.mxu0 0.0
        %6165 = vmatprep.subr.mxu0 0.0
        %6166 = vmatpush1.msra.mxu0 0.0
        %6167 = vmatprep.subr.mxu0 0.0
        %6168 = vmatpush1.msra.mxu0 0.0
        %6169 = vmatprep.mubr.f32.mxu0 0.0
        %6170 = vmatmul.mubr.f32.gmra.mrb[0].mxu0 %v6082
        %v6171 = vpop.f32.mrb[0].mxu0
        %v6172 = vadd.f32 0.0, %v6171
        %v6173 = vpop.f32.mrb[0].mxu0
        %6174 = vmatprep.mubr.f32.mxu0 0.0
        %6175 = vmatmul.mubr.f32.gmra.mrb[0].mxu0 %v6085
        %v6176 = vpop.f32.mrb[0].mxu0
        %v6177 = vadd.f32 0.0, %v6176
        %v6178 = vpop.f32.mrb[0].mxu0
        %6179 = vmatprep.mubr.f32.mxu0 0.0
        %6180 = vmatmul.mubr.f32.gmra.mrb[0].mxu0 %v6088
        %v6181 = vpop.f32.mrb[0].mxu0
        %v6182 = vadd.f32 0.0, %v6181
        %v6183 = vpop.f32.mrb[0].mxu0
        %6184 = vmatprep.mubr.f32.mxu0 0.0
        %6185 = vmatmul.mubr.f32.gmra.mrb[0].mxu0 %v6091
        %v6186 = vpop.f32.mrb[0].mxu0
        %v6187 = vadd.f32 0.0, %v6186
        %v6188 = vpop.f32.mrb[0].mxu0
        %6189 = vmatprep.mubr.f32.mxu0 0.0
        %6190 = vmatmul.mubr.f32.gmra.mrb[0].mxu0 %v6094
        %v6191 = vpop.f32.mrb[0].mxu0
        %v6192 = vadd.f32 0.0, %v6191
        %v6193 = vpop.f32.mrb[0].mxu0
        %6194 = vmatprep.mubr.f32.mxu0 0.0
        %6195 = vmatmul.mubr.f32.gmra.mrb[0].mxu0 %v6097
        %v6196 = vpop.f32.mrb[0].mxu0
        %v6197 = vadd.f32 0.0, %v6196
        %v6198 = vpop.f32.mrb[0].mxu0
        %6199 = vmatprep.mubr.f32.mxu0 0.0
        %6200 = vmatmul.mubr.f32.gmra.mrb[0].mxu0 %v6100
        %v6201 = vpop.f32.mrb[0].mxu0
        %v6202 = vadd.f32 0.0, %v6201
        %v6203 = vpop.f32.mrb[0].mxu0
        %6204 = vmatprep.mubr.f32.mxu0 0.0
        %6205 = vmatmul.mubr.f32.gmra.mrb[0].mxu0 %v6103
        %v6206 = vpop.f32.mrb[0].mxu0
        %v6207 = vadd.f32 0.0, %v6206
        %v6208 = vpop.f32.mrb[0].mxu0
        %6209 = vdwg.mxu0
        %v6210 = vadd.f32 %v6064, %v6172
        %v6211 = vadd.f32 %v6065, %v6177
        %v6212 = vadd.f32 %v6066, %v6182
        %v6213 = vadd.f32 %v6067, %v6187
        %v6214 = vadd.f32 %v6068, %v6192
        %v6215 = vadd.f32 %v6069, %v6197
        %v6216 = vadd.f32 %v6070, %v6202
        %v6217 = vadd.f32 %v6071, %v6207
        %6218 = vst [vmem:[#allocation6] sm:$0xff] %v6210
        %6219 = vst [vmem:[#allocation6 + $0x8] sm:$0xff] %v6211
        %6220 = vst [vmem:[#allocation6 + $0x10] sm:$0xff] %v6212
        %6221 = vst [vmem:[#allocation6 + $0x18] sm:$0xff] %v6213
        %6222 = vst [vmem:[#allocation6 + $0x20] sm:$0xff] %v6214
        %6223 = vst [vmem:[#allocation6 + $0x28] sm:$0xff] %v6215
        %6224 = vst [vmem:[#allocation6 + $0x30] sm:$0xff] %v6216
        %6225 = vst [vmem:[#allocation6 + $0x38] sm:$0xff] %v6217
        %v6226 = vld [vmem:[%s5495] sm:$0xff]
        %v6227 = vld [vmem:[%s5495 + $0x8] sm:$0xff]
        %v6228 = vld [vmem:[%s5495 + $0x10] sm:$0xff]
        %v6229 = vld [vmem:[%s5495 + $0x18] sm:$0xff]
        %v6230 = vld [vmem:[%s5495 + $0x20] sm:$0xff]
        %v6231 = vld [vmem:[%s5495 + $0x28] sm:$0xff]
        %v6232 = vld [vmem:[%s5495 + $0x30] sm:$0xff]
        %v6233 = vld [vmem:[%s5495 + $0x38] sm:$0xff]
        %v6234 = vld [vmem:[#allocation6] sm:$0xff]
        %v6235 = vld [vmem:[#allocation6 + $0x8] sm:$0xff]
        %v6236 = vld [vmem:[#allocation6 + $0x10] sm:$0xff]
        %v6237 = vld [vmem:[#allocation6 + $0x18] sm:$0xff]
        %v6238 = vld [vmem:[#allocation6 + $0x20] sm:$0xff]
        %v6239 = vld [vmem:[#allocation6 + $0x28] sm:$0xff]
        %v6240 = vld [vmem:[#allocation6 + $0x30] sm:$0xff]
        %v6241 = vld [vmem:[#allocation6 + $0x38] sm:$0xff]
        %s6242 = scalar_lea.vmem %s5, 256
        %v6243 = vld [vmem:[%s6242] sm:$0xff]
        %v6244 = vld [vmem:[%s6242 + $0x8] sm:$0xff]
        %v6245 = vld [vmem:[%s6242 + $0x10] sm:$0xff]
        %v6246 = vld [vmem:[%s6242 + $0x18] sm:$0xff]
        %v6247 = vld [vmem:[%s6242 + $0x20] sm:$0xff]
        %v6248 = vld [vmem:[%s6242 + $0x28] sm:$0xff]
        %v6249 = vld [vmem:[%s6242 + $0x30] sm:$0xff]
        %v6250 = vld [vmem:[%s6242 + $0x38] sm:$0xff]
        %v6252 = vsel %vm728, %v6226, 0
        %v6255 = vsel %vm728, %v6227, 0
        %v6258 = vsel %vm728, %v6228, 0
        %v6261 = vsel %vm728, %v6229, 0
        %v6264 = vsel %vm728, %v6230, 0
        %v6267 = vsel %vm728, %v6231, 0
        %v6270 = vsel %vm728, %v6232, 0
        %v6273 = vsel %vm728, %v6233, 0
        %6275 = vmatprep.subr.mxu0 0.0
        %6276 = vmatpush1.msra.mxu0 %v6243
        %6277 = vmatprep.subr.mxu0 0.0
        %6278 = vmatpush1.msra.mxu0 %v6244
        %6279 = vmatprep.subr.mxu0 0.0
        %6280 = vmatpush1.msra.mxu0 %v6245
        %6281 = vmatprep.subr.mxu0 0.0
        %6282 = vmatpush1.msra.mxu0 %v6246
        %6283 = vmatprep.subr.mxu0 0.0
        %6284 = vmatpush1.msra.mxu0 %v6247
        %6285 = vmatprep.subr.mxu0 0.0
        %6286 = vmatpush1.msra.mxu0 %v6248
        %6287 = vmatprep.subr.mxu0 0.0
        %6288 = vmatpush1.msra.mxu0 %v6249
        %6289 = vmatprep.subr.mxu0 0.0
        %6290 = vmatpush1.msra.mxu0 %v6250
        %6291 = vmatprep.subr.mxu0 0.0
        %6292 = vmatpush1.msra.mxu0 0.0
        %6293 = vmatprep.subr.mxu0 0.0
        %6294 = vmatpush1.msra.mxu0 0.0
        %6295 = vmatprep.subr.mxu0 0.0
        %6296 = vmatpush1.msra.mxu0 0.0
        %6297 = vmatprep.subr.mxu0 0.0
        %6298 = vmatpush1.msra.mxu0 0.0
        %6299 = vmatprep.subr.mxu0 0.0
        %6300 = vmatpush1.msra.mxu0 0.0
        %6301 = vmatprep.subr.mxu0 0.0
        %6302 = vmatpush1.msra.mxu0 0.0
        %6303 = vmatprep.subr.mxu0 0.0
        %6304 = vmatpush1.msra.mxu0 0.0
        %6305 = vmatprep.subr.mxu0 0.0
        %6306 = vmatpush1.msra.mxu0 0.0
        %6307 = vmatprep.subr.mxu0 0.0
        %6308 = vmatpush1.msra.mxu0 0.0
        %6309 = vmatprep.subr.mxu0 0.0
        %6310 = vmatpush1.msra.mxu0 0.0
        %6311 = vmatprep.subr.mxu0 0.0
        %6312 = vmatpush1.msra.mxu0 0.0
        %6313 = vmatprep.subr.mxu0 0.0
        %6314 = vmatpush1.msra.mxu0 0.0
        %6315 = vmatprep.subr.mxu0 0.0
        %6316 = vmatpush1.msra.mxu0 0.0
        %6317 = vmatprep.subr.mxu0 0.0
        %6318 = vmatpush1.msra.mxu0 0.0
        %6319 = vmatprep.subr.mxu0 0.0
        %6320 = vmatpush1.msra.mxu0 0.0
        %6321 = vmatprep.subr.mxu0 0.0
        %6322 = vmatpush1.msra.mxu0 0.0
        %6323 = vmatprep.subr.mxu0 0.0
        %6324 = vmatpush1.msra.mxu0 0.0
        %6325 = vmatprep.subr.mxu0 0.0
        %6326 = vmatpush1.msra.mxu0 0.0
        %6327 = vmatprep.subr.mxu0 0.0
        %6328 = vmatpush1.msra.mxu0 0.0
        %6329 = vmatprep.subr.mxu0 0.0
        %6330 = vmatpush1.msra.mxu0 0.0
        %6331 = vmatprep.subr.mxu0 0.0
        %6332 = vmatpush1.msra.mxu0 0.0
        %6333 = vmatprep.subr.mxu0 0.0
        %6334 = vmatpush1.msra.mxu0 0.0
        %6335 = vmatprep.subr.mxu0 0.0
        %6336 = vmatpush1.msra.mxu0 0.0
        %6337 = vmatprep.subr.mxu0 0.0
        %6338 = vmatpush1.msra.mxu0 0.0
        %6339 = vmatprep.mubr.f32.mxu0 0.0
        %6340 = vmatmul.mubr.f32.gmra.mrb[0].mxu0 %v6252
        %v6341 = vpop.f32.mrb[0].mxu0
        %v6342 = vadd.f32 0.0, %v6341
        %v6343 = vpop.f32.mrb[0].mxu0
        %6344 = vmatprep.mubr.f32.mxu0 0.0
        %6345 = vmatmul.mubr.f32.gmra.mrb[0].mxu0 %v6255
        %v6346 = vpop.f32.mrb[0].mxu0
        %v6347 = vadd.f32 0.0, %v6346
        %v6348 = vpop.f32.mrb[0].mxu0
        %6349 = vmatprep.mubr.f32.mxu0 0.0
        %6350 = vmatmul.mubr.f32.gmra.mrb[0].mxu0 %v6258
        %v6351 = vpop.f32.mrb[0].mxu0
        %v6352 = vadd.f32 0.0, %v6351
        %v6353 = vpop.f32.mrb[0].mxu0
        %6354 = vmatprep.mubr.f32.mxu0 0.0
        %6355 = vmatmul.mubr.f32.gmra.mrb[0].mxu0 %v6261
        %v6356 = vpop.f32.mrb[0].mxu0
        %v6357 = vadd.f32 0.0, %v6356
        %v6358 = vpop.f32.mrb[0].mxu0
        %6359 = vmatprep.mubr.f32.mxu0 0.0
        %6360 = vmatmul.mubr.f32.gmra.mrb[0].mxu0 %v6264
        %v6361 = vpop.f32.mrb[0].mxu0
        %v6362 = vadd.f32 0.0, %v6361
        %v6363 = vpop.f32.mrb[0].mxu0
        %6364 = vmatprep.mubr.f32.mxu0 0.0
        %6365 = vmatmul.mubr.f32.gmra.mrb[0].mxu0 %v6267
        %v6366 = vpop.f32.mrb[0].mxu0
        %v6367 = vadd.f32 0.0, %v6366
        %v6368 = vpop.f32.mrb[0].mxu0
        %6369 = vmatprep.mubr.f32.mxu0 0.0
        %6370 = vmatmul.mubr.f32.gmra.mrb[0].mxu0 %v6270
        %v6371 = vpop.f32.mrb[0].mxu0
        %v6372 = vadd.f32 0.0, %v6371
        %v6373 = vpop.f32.mrb[0].mxu0
        %6374 = vmatprep.mubr.f32.mxu0 0.0
        %6375 = vmatmul.mubr.f32.gmra.mrb[0].mxu0 %v6273
        %v6376 = vpop.f32.mrb[0].mxu0
        %v6377 = vadd.f32 0.0, %v6376
        %v6378 = vpop.f32.mrb[0].mxu0
        %6379 = vdwg.mxu0
        %v6380 = vadd.f32 %v6234, %v6342
        %v6381 = vadd.f32 %v6235, %v6347
        %v6382 = vadd.f32 %v6236, %v6352
        %v6383 = vadd.f32 %v6237, %v6357
        %v6384 = vadd.f32 %v6238, %v6362
        %v6385 = vadd.f32 %v6239, %v6367
        %v6386 = vadd.f32 %v6240, %v6372
        %v6387 = vadd.f32 %v6241, %v6377
        %6388 = vst [vmem:[#allocation6] sm:$0xff] %v6380
        %6389 = vst [vmem:[#allocation6 + $0x8] sm:$0xff] %v6381
        %6390 = vst [vmem:[#allocation6 + $0x10] sm:$0xff] %v6382
        %6391 = vst [vmem:[#allocation6 + $0x18] sm:$0xff] %v6383
        %6392 = vst [vmem:[#allocation6 + $0x20] sm:$0xff] %v6384
        %6393 = vst [vmem:[#allocation6 + $0x28] sm:$0xff] %v6385
        %6394 = vst [vmem:[#allocation6 + $0x30] sm:$0xff] %v6386
        %6395 = vst [vmem:[#allocation6 + $0x38] sm:$0xff] %v6387
        %v6396 = vld [vmem:[%s5528] sm:$0xff]
        %v6397 = vld [vmem:[%s5528 + $0x8] sm:$0xff]
        %v6398 = vld [vmem:[%s5528 + $0x10] sm:$0xff]
        %v6399 = vld [vmem:[%s5528 + $0x18] sm:$0xff]
        %v6400 = vld [vmem:[%s5528 + $0x20] sm:$0xff]
        %v6401 = vld [vmem:[%s5528 + $0x28] sm:$0xff]
        %v6402 = vld [vmem:[%s5528 + $0x30] sm:$0xff]
        %v6403 = vld [vmem:[%s5528 + $0x38] sm:$0xff]
        %v6404 = vld [vmem:[#allocation6] sm:$0xff]
        %v6405 = vld [vmem:[#allocation6 + $0x8] sm:$0xff]
        %v6406 = vld [vmem:[#allocation6 + $0x10] sm:$0xff]
        %v6407 = vld [vmem:[#allocation6 + $0x18] sm:$0xff]
        %v6408 = vld [vmem:[#allocation6 + $0x20] sm:$0xff]
        %v6409 = vld [vmem:[#allocation6 + $0x28] sm:$0xff]
        %v6410 = vld [vmem:[#allocation6 + $0x30] sm:$0xff]
        %v6411 = vld [vmem:[#allocation6 + $0x38] sm:$0xff]
        %s6412 = scalar_lea.vmem %s5, 320
        %v6413 = vld [vmem:[%s6412] sm:$0xff]
        %v6414 = vld [vmem:[%s6412 + $0x8] sm:$0xff]
        %v6415 = vld [vmem:[%s6412 + $0x10] sm:$0xff]
        %v6416 = vld [vmem:[%s6412 + $0x18] sm:$0xff]
        %v6417 = vld [vmem:[%s6412 + $0x20] sm:$0xff]
        %v6418 = vld [vmem:[%s6412 + $0x28] sm:$0xff]
        %v6419 = vld [vmem:[%s6412 + $0x30] sm:$0xff]
        %v6420 = vld [vmem:[%s6412 + $0x38] sm:$0xff]
        %v6422 = vsel %vm728, %v6396, 0
        %v6425 = vsel %vm728, %v6397, 0
        %v6428 = vsel %vm728, %v6398, 0
        %v6431 = vsel %vm728, %v6399, 0
        %v6434 = vsel %vm728, %v6400, 0
        %v6437 = vsel %vm728, %v6401, 0
        %v6440 = vsel %vm728, %v6402, 0
        %v6443 = vsel %vm728, %v6403, 0
        %6445 = vmatprep.subr.mxu0 0.0
        %6446 = vmatpush1.msra.mxu0 %v6413
        %6447 = vmatprep.subr.mxu0 0.0
        %6448 = vmatpush1.msra.mxu0 %v6414
        %6449 = vmatprep.subr.mxu0 0.0
        %6450 = vmatpush1.msra.mxu0 %v6415
        %6451 = vmatprep.subr.mxu0 0.0
        %6452 = vmatpush1.msra.mxu0 %v6416
        %6453 = vmatprep.subr.mxu0 0.0
        %6454 = vmatpush1.msra.mxu0 %v6417
        %6455 = vmatprep.subr.mxu0 0.0
        %6456 = vmatpush1.msra.mxu0 %v6418
        %6457 = vmatprep.subr.mxu0 0.0
        %6458 = vmatpush1.msra.mxu0 %v6419
        %6459 = vmatprep.subr.mxu0 0.0
        %6460 = vmatpush1.msra.mxu0 %v6420
        %6461 = vmatprep.subr.mxu0 0.0
        %6462 = vmatpush1.msra.mxu0 0.0
        %6463 = vmatprep.subr.mxu0 0.0
        %6464 = vmatpush1.msra.mxu0 0.0
        %6465 = vmatprep.subr.mxu0 0.0
        %6466 = vmatpush1.msra.mxu0 0.0
        %6467 = vmatprep.subr.mxu0 0.0
        %6468 = vmatpush1.msra.mxu0 0.0
        %6469 = vmatprep.subr.mxu0 0.0
        %6470 = vmatpush1.msra.mxu0 0.0
        %6471 = vmatprep.subr.mxu0 0.0
        %6472 = vmatpush1.msra.mxu0 0.0
        %6473 = vmatprep.subr.mxu0 0.0
        %6474 = vmatpush1.msra.mxu0 0.0
        %6475 = vmatprep.subr.mxu0 0.0
        %6476 = vmatpush1.msra.mxu0 0.0
        %6477 = vmatprep.subr.mxu0 0.0
        %6478 = vmatpush1.msra.mxu0 0.0
        %6479 = vmatprep.subr.mxu0 0.0
        %6480 = vmatpush1.msra.mxu0 0.0
        %6481 = vmatprep.subr.mxu0 0.0
        %6482 = vmatpush1.msra.mxu0 0.0
        %6483 = vmatprep.subr.mxu0 0.0
        %6484 = vmatpush1.msra.mxu0 0.0
        %6485 = vmatprep.subr.mxu0 0.0
        %6486 = vmatpush1.msra.mxu0 0.0
        %6487 = vmatprep.subr.mxu0 0.0
        %6488 = vmatpush1.msra.mxu0 0.0
        %6489 = vmatprep.subr.mxu0 0.0
        %6490 = vmatpush1.msra.mxu0 0.0
        %6491 = vmatprep.subr.mxu0 0.0
        %6492 = vmatpush1.msra.mxu0 0.0
        %6493 = vmatprep.subr.mxu0 0.0
        %6494 = vmatpush1.msra.mxu0 0.0
        %6495 = vmatprep.subr.mxu0 0.0
        %6496 = vmatpush1.msra.mxu0 0.0
        %6497 = vmatprep.subr.mxu0 0.0
        %6498 = vmatpush1.msra.mxu0 0.0
        %6499 = vmatprep.subr.mxu0 0.0
        %6500 = vmatpush1.msra.mxu0 0.0
        %6501 = vmatprep.subr.mxu0 0.0
        %6502 = vmatpush1.msra.mxu0 0.0
        %6503 = vmatprep.subr.mxu0 0.0
        %6504 = vmatpush1.msra.mxu0 0.0
        %6505 = vmatprep.subr.mxu0 0.0
        %6506 = vmatpush1.msra.mxu0 0.0
        %6507 = vmatprep.subr.mxu0 0.0
        %6508 = vmatpush1.msra.mxu0 0.0
        %6509 = vmatprep.mubr.f32.mxu0 0.0
        %6510 = vmatmul.mubr.f32.gmra.mrb[0].mxu0 %v6422
        %v6511 = vpop.f32.mrb[0].mxu0
        %v6512 = vadd.f32 0.0, %v6511
        %v6513 = vpop.f32.mrb[0].mxu0
        %6514 = vmatprep.mubr.f32.mxu0 0.0
        %6515 = vmatmul.mubr.f32.gmra.mrb[0].mxu0 %v6425
        %v6516 = vpop.f32.mrb[0].mxu0
        %v6517 = vadd.f32 0.0, %v6516
        %v6518 = vpop.f32.mrb[0].mxu0
        %6519 = vmatprep.mubr.f32.mxu0 0.0
        %6520 = vmatmul.mubr.f32.gmra.mrb[0].mxu0 %v6428
        %v6521 = vpop.f32.mrb[0].mxu0
        %v6522 = vadd.f32 0.0, %v6521
        %v6523 = vpop.f32.mrb[0].mxu0
        %6524 = vmatprep.mubr.f32.mxu0 0.0
        %6525 = vmatmul.mubr.f32.gmra.mrb[0].mxu0 %v6431
        %v6526 = vpop.f32.mrb[0].mxu0
        %v6527 = vadd.f32 0.0, %v6526
        %v6528 = vpop.f32.mrb[0].mxu0
        %6529 = vmatprep.mubr.f32.mxu0 0.0
        %6530 = vmatmul.mubr.f32.gmra.mrb[0].mxu0 %v6434
        %v6531 = vpop.f32.mrb[0].mxu0
        %v6532 = vadd.f32 0.0, %v6531
        %v6533 = vpop.f32.mrb[0].mxu0
        %6534 = vmatprep.mubr.f32.mxu0 0.0
        %6535 = vmatmul.mubr.f32.gmra.mrb[0].mxu0 %v6437
        %v6536 = vpop.f32.mrb[0].mxu0
        %v6537 = vadd.f32 0.0, %v6536
        %v6538 = vpop.f32.mrb[0].mxu0
        %6539 = vmatprep.mubr.f32.mxu0 0.0
        %6540 = vmatmul.mubr.f32.gmra.mrb[0].mxu0 %v6440
        %v6541 = vpop.f32.mrb[0].mxu0
        %v6542 = vadd.f32 0.0, %v6541
        %v6543 = vpop.f32.mrb[0].mxu0
        %6544 = vmatprep.mubr.f32.mxu0 0.0
        %6545 = vmatmul.mubr.f32.gmra.mrb[0].mxu0 %v6443
        %v6546 = vpop.f32.mrb[0].mxu0
        %v6547 = vadd.f32 0.0, %v6546
        %v6548 = vpop.f32.mrb[0].mxu0
        %6549 = vdwg.mxu0
        %v6550 = vadd.f32 %v6404, %v6512
        %v6551 = vadd.f32 %v6405, %v6517
        %v6552 = vadd.f32 %v6406, %v6522
        %v6553 = vadd.f32 %v6407, %v6527
        %v6554 = vadd.f32 %v6408, %v6532
        %v6555 = vadd.f32 %v6409, %v6537
        %v6556 = vadd.f32 %v6410, %v6542
        %v6557 = vadd.f32 %v6411, %v6547
        %6558 = vst [vmem:[#allocation6] sm:$0xff] %v6550
        %6559 = vst [vmem:[#allocation6 + $0x8] sm:$0xff] %v6551
        %6560 = vst [vmem:[#allocation6 + $0x10] sm:$0xff] %v6552
        %6561 = vst [vmem:[#allocation6 + $0x18] sm:$0xff] %v6553
        %6562 = vst [vmem:[#allocation6 + $0x20] sm:$0xff] %v6554
        %6563 = vst [vmem:[#allocation6 + $0x28] sm:$0xff] %v6555
        %6564 = vst [vmem:[#allocation6 + $0x30] sm:$0xff] %v6556
        %6565 = vst [vmem:[#allocation6 + $0x38] sm:$0xff] %v6557
        %s6566 = scalar_lea.vmem [#allocation3], 16
        %v6567 = vld [vmem:[%s6566] sm:$0xff]
        %v6568 = vld [vmem:[%s6566 + $0x8] sm:$0xff]
        %v6569 = vld [vmem:[%s6566 + $0x10] sm:$0xff]
        %v6570 = vld [vmem:[%s6566 + $0x18] sm:$0xff]
        %v6571 = vld [vmem:[%s6566 + $0x20] sm:$0xff]
        %v6572 = vld [vmem:[%s6566 + $0x28] sm:$0xff]
        %v6573 = vld [vmem:[%s6566 + $0x30] sm:$0xff]
        %v6574 = vld [vmem:[%s6566 + $0x38] sm:$0xff]
        %v6575 = vld [vmem:[#allocation6] sm:$0xff]
        %v6576 = vld [vmem:[#allocation6 + $0x8] sm:$0xff]
        %v6577 = vld [vmem:[#allocation6 + $0x10] sm:$0xff]
        %v6578 = vld [vmem:[#allocation6 + $0x18] sm:$0xff]
        %v6579 = vld [vmem:[#allocation6 + $0x20] sm:$0xff]
        %v6580 = vld [vmem:[#allocation6 + $0x28] sm:$0xff]
        %v6581 = vld [vmem:[#allocation6 + $0x30] sm:$0xff]
        %v6582 = vld [vmem:[#allocation6 + $0x38] sm:$0xff]
        %s6583 = scalar_lea.vmem %s5, 384
        %v6584 = vld [vmem:[%s6583] sm:$0xff]
        %v6585 = vld [vmem:[%s6583 + $0x8] sm:$0xff]
        %v6586 = vld [vmem:[%s6583 + $0x10] sm:$0xff]
        %v6587 = vld [vmem:[%s6583 + $0x18] sm:$0xff]
        %v6588 = vld [vmem:[%s6583 + $0x20] sm:$0xff]
        %v6589 = vld [vmem:[%s6583 + $0x28] sm:$0xff]
        %v6590 = vld [vmem:[%s6583 + $0x30] sm:$0xff]
        %v6591 = vld [vmem:[%s6583 + $0x38] sm:$0xff]
        %v6593 = vsel %vm728, %v6567, 0
        %v6596 = vsel %vm728, %v6568, 0
        %v6599 = vsel %vm728, %v6569, 0
        %v6602 = vsel %vm728, %v6570, 0
        %v6605 = vsel %vm728, %v6571, 0
        %v6608 = vsel %vm728, %v6572, 0
        %v6611 = vsel %vm728, %v6573, 0
        %v6614 = vsel %vm728, %v6574, 0
        %6616 = vmatprep.subr.mxu0 0.0
        %6617 = vmatpush1.msra.mxu0 %v6584
        %6618 = vmatprep.subr.mxu0 0.0
        %6619 = vmatpush1.msra.mxu0 %v6585
        %6620 = vmatprep.subr.mxu0 0.0
        %6621 = vmatpush1.msra.mxu0 %v6586
        %6622 = vmatprep.subr.mxu0 0.0
        %6623 = vmatpush1.msra.mxu0 %v6587
        %6624 = vmatprep.subr.mxu0 0.0
        %6625 = vmatpush1.msra.mxu0 %v6588
        %6626 = vmatprep.subr.mxu0 0.0
        %6627 = vmatpush1.msra.mxu0 %v6589
        %6628 = vmatprep.subr.mxu0 0.0
        %6629 = vmatpush1.msra.mxu0 %v6590
        %6630 = vmatprep.subr.mxu0 0.0
        %6631 = vmatpush1.msra.mxu0 %v6591
        %6632 = vmatprep.subr.mxu0 0.0
        %6633 = vmatpush1.msra.mxu0 0.0
        %6634 = vmatprep.subr.mxu0 0.0
        %6635 = vmatpush1.msra.mxu0 0.0
        %6636 = vmatprep.subr.mxu0 0.0
        %6637 = vmatpush1.msra.mxu0 0.0
        %6638 = vmatprep.subr.mxu0 0.0
        %6639 = vmatpush1.msra.mxu0 0.0
        %6640 = vmatprep.subr.mxu0 0.0
        %6641 = vmatpush1.msra.mxu0 0.0
        %6642 = vmatprep.subr.mxu0 0.0
        %6643 = vmatpush1.msra.mxu0 0.0
        %6644 = vmatprep.subr.mxu0 0.0
        %6645 = vmatpush1.msra.mxu0 0.0
        %6646 = vmatprep.subr.mxu0 0.0
        %6647 = vmatpush1.msra.mxu0 0.0
        %6648 = vmatprep.subr.mxu0 0.0
        %6649 = vmatpush1.msra.mxu0 0.0
        %6650 = vmatprep.subr.mxu0 0.0
        %6651 = vmatpush1.msra.mxu0 0.0
        %6652 = vmatprep.subr.mxu0 0.0
        %6653 = vmatpush1.msra.mxu0 0.0
        %6654 = vmatprep.subr.mxu0 0.0
        %6655 = vmatpush1.msra.mxu0 0.0
        %6656 = vmatprep.subr.mxu0 0.0
        %6657 = vmatpush1.msra.mxu0 0.0
        %6658 = vmatprep.subr.mxu0 0.0
        %6659 = vmatpush1.msra.mxu0 0.0
        %6660 = vmatprep.subr.mxu0 0.0
        %6661 = vmatpush1.msra.mxu0 0.0
        %6662 = vmatprep.subr.mxu0 0.0
        %6663 = vmatpush1.msra.mxu0 0.0
        %6664 = vmatprep.subr.mxu0 0.0
        %6665 = vmatpush1.msra.mxu0 0.0
        %6666 = vmatprep.subr.mxu0 0.0
        %6667 = vmatpush1.msra.mxu0 0.0
        %6668 = vmatprep.subr.mxu0 0.0
        %6669 = vmatpush1.msra.mxu0 0.0
        %6670 = vmatprep.subr.mxu0 0.0
        %6671 = vmatpush1.msra.mxu0 0.0
        %6672 = vmatprep.subr.mxu0 0.0
        %6673 = vmatpush1.msra.mxu0 0.0
        %6674 = vmatprep.subr.mxu0 0.0
        %6675 = vmatpush1.msra.mxu0 0.0
        %6676 = vmatprep.subr.mxu0 0.0
        %6677 = vmatpush1.msra.mxu0 0.0
        %6678 = vmatprep.subr.mxu0 0.0
        %6679 = vmatpush1.msra.mxu0 0.0
        %6680 = vmatprep.mubr.f32.mxu0 0.0
        %6681 = vmatmul.mubr.f32.gmra.mrb[0].mxu0 %v6593
        %v6682 = vpop.f32.mrb[0].mxu0
        %v6683 = vadd.f32 0.0, %v6682
        %v6684 = vpop.f32.mrb[0].mxu0
        %6685 = vmatprep.mubr.f32.mxu0 0.0
        %6686 = vmatmul.mubr.f32.gmra.mrb[0].mxu0 %v6596
        %v6687 = vpop.f32.mrb[0].mxu0
        %v6688 = vadd.f32 0.0, %v6687
        %v6689 = vpop.f32.mrb[0].mxu0
        %6690 = vmatprep.mubr.f32.mxu0 0.0
        %6691 = vmatmul.mubr.f32.gmra.mrb[0].mxu0 %v6599
        %v6692 = vpop.f32.mrb[0].mxu0
        %v6693 = vadd.f32 0.0, %v6692
        %v6694 = vpop.f32.mrb[0].mxu0
        %6695 = vmatprep.mubr.f32.mxu0 0.0
        %6696 = vmatmul.mubr.f32.gmra.mrb[0].mxu0 %v6602
        %v6697 = vpop.f32.mrb[0].mxu0
        %v6698 = vadd.f32 0.0, %v6697
        %v6699 = vpop.f32.mrb[0].mxu0
        %6700 = vmatprep.mubr.f32.mxu0 0.0
        %6701 = vmatmul.mubr.f32.gmra.mrb[0].mxu0 %v6605
        %v6702 = vpop.f32.mrb[0].mxu0
        %v6703 = vadd.f32 0.0, %v6702
        %v6704 = vpop.f32.mrb[0].mxu0
        %6705 = vmatprep.mubr.f32.mxu0 0.0
        %6706 = vmatmul.mubr.f32.gmra.mrb[0].mxu0 %v6608
        %v6707 = vpop.f32.mrb[0].mxu0
        %v6708 = vadd.f32 0.0, %v6707
        %v6709 = vpop.f32.mrb[0].mxu0
        %6710 = vmatprep.mubr.f32.mxu0 0.0
        %6711 = vmatmul.mubr.f32.gmra.mrb[0].mxu0 %v6611
        %v6712 = vpop.f32.mrb[0].mxu0
        %v6713 = vadd.f32 0.0, %v6712
        %v6714 = vpop.f32.mrb[0].mxu0
        %6715 = vmatprep.mubr.f32.mxu0 0.0
        %6716 = vmatmul.mubr.f32.gmra.mrb[0].mxu0 %v6614
        %v6717 = vpop.f32.mrb[0].mxu0
        %v6718 = vadd.f32 0.0, %v6717
        %v6719 = vpop.f32.mrb[0].mxu0
        %6720 = vdwg.mxu0
        %v6721 = vadd.f32 %v6575, %v6683
        %v6722 = vadd.f32 %v6576, %v6688
        %v6723 = vadd.f32 %v6577, %v6693
        %v6724 = vadd.f32 %v6578, %v6698
        %v6725 = vadd.f32 %v6579, %v6703
        %v6726 = vadd.f32 %v6580, %v6708
        %v6727 = vadd.f32 %v6581, %v6713
        %v6728 = vadd.f32 %v6582, %v6718
        %6729 = vst [vmem:[#allocation6] sm:$0xff] %v6721
        %6730 = vst [vmem:[#allocation6 + $0x8] sm:$0xff] %v6722
        %6731 = vst [vmem:[#allocation6 + $0x10] sm:$0xff] %v6723
        %6732 = vst [vmem:[#allocation6 + $0x18] sm:$0xff] %v6724
        %6733 = vst [vmem:[#allocation6 + $0x20] sm:$0xff] %v6725
        %6734 = vst [vmem:[#allocation6 + $0x28] sm:$0xff] %v6726
        %6735 = vst [vmem:[#allocation6 + $0x30] sm:$0xff] %v6727
        %6736 = vst [vmem:[#allocation6 + $0x38] sm:$0xff] %v6728
        %s6737 = scalar_lea.vmem [#allocation3], 96
        %v6738 = vld [vmem:[%s6737] sm:$0xff]
        %v6739 = vld [vmem:[%s6737 + $0x8] sm:$0xff]
        %v6740 = vld [vmem:[%s6737 + $0x10] sm:$0xff]
        %v6741 = vld [vmem:[%s6737 + $0x18] sm:$0xff]
        %v6742 = vld [vmem:[%s6737 + $0x20] sm:$0xff]
        %v6743 = vld [vmem:[%s6737 + $0x28] sm:$0xff]
        %v6744 = vld [vmem:[%s6737 + $0x30] sm:$0xff]
        %v6745 = vld [vmem:[%s6737 + $0x38] sm:$0xff]
        %v6746 = vld [vmem:[#allocation6] sm:$0xff]
        %v6747 = vld [vmem:[#allocation6 + $0x8] sm:$0xff]
        %v6748 = vld [vmem:[#allocation6 + $0x10] sm:$0xff]
        %v6749 = vld [vmem:[#allocation6 + $0x18] sm:$0xff]
        %v6750 = vld [vmem:[#allocation6 + $0x20] sm:$0xff]
        %v6751 = vld [vmem:[#allocation6 + $0x28] sm:$0xff]
        %v6752 = vld [vmem:[#allocation6 + $0x30] sm:$0xff]
        %v6753 = vld [vmem:[#allocation6 + $0x38] sm:$0xff]
        %s6754 = scalar_lea.vmem %s5, 448
        %v6755 = vld [vmem:[%s6754] sm:$0xff]
        %v6756 = vld [vmem:[%s6754 + $0x8] sm:$0xff]
        %v6757 = vld [vmem:[%s6754 + $0x10] sm:$0xff]
        %v6758 = vld [vmem:[%s6754 + $0x18] sm:$0xff]
        %v6759 = vld [vmem:[%s6754 + $0x20] sm:$0xff]
        %v6760 = vld [vmem:[%s6754 + $0x28] sm:$0xff]
        %v6761 = vld [vmem:[%s6754 + $0x30] sm:$0xff]
        %v6762 = vld [vmem:[%s6754 + $0x38] sm:$0xff]
        %v6764 = vsel %vm728, %v6738, 0
        %v6767 = vsel %vm728, %v6739, 0
        %v6770 = vsel %vm728, %v6740, 0
        %v6773 = vsel %vm728, %v6741, 0
        %v6776 = vsel %vm728, %v6742, 0
        %v6779 = vsel %vm728, %v6743, 0
        %v6782 = vsel %vm728, %v6744, 0
        %v6785 = vsel %vm728, %v6745, 0
        %6787 = vmatprep.subr.mxu0 0.0
        %6788 = vmatpush1.msra.mxu0 %v6755
        %6789 = vmatprep.subr.mxu0 0.0
        %6790 = vmatpush1.msra.mxu0 %v6756
        %6791 = vmatprep.subr.mxu0 0.0
        %6792 = vmatpush1.msra.mxu0 %v6757
        %6793 = vmatprep.subr.mxu0 0.0
        %6794 = vmatpush1.msra.mxu0 %v6758
        %6795 = vmatprep.subr.mxu0 0.0
        %6796 = vmatpush1.msra.mxu0 %v6759
        %6797 = vmatprep.subr.mxu0 0.0
        %6798 = vmatpush1.msra.mxu0 %v6760
        %6799 = vmatprep.subr.mxu0 0.0
        %6800 = vmatpush1.msra.mxu0 %v6761
        %6801 = vmatprep.subr.mxu0 0.0
        %6802 = vmatpush1.msra.mxu0 %v6762
        %6803 = vmatprep.subr.mxu0 0.0
        %6804 = vmatpush1.msra.mxu0 0.0
        %6805 = vmatprep.subr.mxu0 0.0
        %6806 = vmatpush1.msra.mxu0 0.0
        %6807 = vmatprep.subr.mxu0 0.0
        %6808 = vmatpush1.msra.mxu0 0.0
        %6809 = vmatprep.subr.mxu0 0.0
        %6810 = vmatpush1.msra.mxu0 0.0
        %6811 = vmatprep.subr.mxu0 0.0
        %6812 = vmatpush1.msra.mxu0 0.0
        %6813 = vmatprep.subr.mxu0 0.0
        %6814 = vmatpush1.msra.mxu0 0.0
        %6815 = vmatprep.subr.mxu0 0.0
        %6816 = vmatpush1.msra.mxu0 0.0
        %6817 = vmatprep.subr.mxu0 0.0
        %6818 = vmatpush1.msra.mxu0 0.0
        %6819 = vmatprep.subr.mxu0 0.0
        %6820 = vmatpush1.msra.mxu0 0.0
        %6821 = vmatprep.subr.mxu0 0.0
        %6822 = vmatpush1.msra.mxu0 0.0
        %6823 = vmatprep.subr.mxu0 0.0
        %6824 = vmatpush1.msra.mxu0 0.0
        %6825 = vmatprep.subr.mxu0 0.0
        %6826 = vmatpush1.msra.mxu0 0.0
        %6827 = vmatprep.subr.mxu0 0.0
        %6828 = vmatpush1.msra.mxu0 0.0
        %6829 = vmatprep.subr.mxu0 0.0
        %6830 = vmatpush1.msra.mxu0 0.0
        %6831 = vmatprep.subr.mxu0 0.0
        %6832 = vmatpush1.msra.mxu0 0.0
        %6833 = vmatprep.subr.mxu0 0.0
        %6834 = vmatpush1.msra.mxu0 0.0
        %6835 = vmatprep.subr.mxu0 0.0
        %6836 = vmatpush1.msra.mxu0 0.0
        %6837 = vmatprep.subr.mxu0 0.0
        %6838 = vmatpush1.msra.mxu0 0.0
        %6839 = vmatprep.subr.mxu0 0.0
        %6840 = vmatpush1.msra.mxu0 0.0
        %6841 = vmatprep.subr.mxu0 0.0
        %6842 = vmatpush1.msra.mxu0 0.0
        %6843 = vmatprep.subr.mxu0 0.0
        %6844 = vmatpush1.msra.mxu0 0.0
        %6845 = vmatprep.subr.mxu0 0.0
        %6846 = vmatpush1.msra.mxu0 0.0
        %6847 = vmatprep.subr.mxu0 0.0
        %6848 = vmatpush1.msra.mxu0 0.0
        %6849 = vmatprep.subr.mxu0 0.0
        %6850 = vmatpush1.msra.mxu0 0.0
        %6851 = vmatprep.mubr.f32.mxu0 0.0
        %6852 = vmatmul.mubr.f32.gmra.mrb[0].mxu0 %v6764
        %v6853 = vpop.f32.mrb[0].mxu0
        %v6854 = vadd.f32 0.0, %v6853
        %v6855 = vpop.f32.mrb[0].mxu0
        %6856 = vmatprep.mubr.f32.mxu0 0.0
        %6857 = vmatmul.mubr.f32.gmra.mrb[0].mxu0 %v6767
        %v6858 = vpop.f32.mrb[0].mxu0
        %v6859 = vadd.f32 0.0, %v6858
        %v6860 = vpop.f32.mrb[0].mxu0
        %6861 = vmatprep.mubr.f32.mxu0 0.0
        %6862 = vmatmul.mubr.f32.gmra.mrb[0].mxu0 %v6770
        %v6863 = vpop.f32.mrb[0].mxu0
        %v6864 = vadd.f32 0.0, %v6863
        %v6865 = vpop.f32.mrb[0].mxu0
        %6866 = vmatprep.mubr.f32.mxu0 0.0
        %6867 = vmatmul.mubr.f32.gmra.mrb[0].mxu0 %v6773
        %v6868 = vpop.f32.mrb[0].mxu0
        %v6869 = vadd.f32 0.0, %v6868
        %v6870 = vpop.f32.mrb[0].mxu0
        %6871 = vmatprep.mubr.f32.mxu0 0.0
        %6872 = vmatmul.mubr.f32.gmra.mrb[0].mxu0 %v6776
        %v6873 = vpop.f32.mrb[0].mxu0
        %v6874 = vadd.f32 0.0, %v6873
        %v6875 = vpop.f32.mrb[0].mxu0
        %6876 = vmatprep.mubr.f32.mxu0 0.0
        %6877 = vmatmul.mubr.f32.gmra.mrb[0].mxu0 %v6779
        %v6878 = vpop.f32.mrb[0].mxu0
        %v6879 = vadd.f32 0.0, %v6878
        %v6880 = vpop.f32.mrb[0].mxu0
        %6881 = vmatprep.mubr.f32.mxu0 0.0
        %6882 = vmatmul.mubr.f32.gmra.mrb[0].mxu0 %v6782
        %v6883 = vpop.f32.mrb[0].mxu0
        %v6884 = vadd.f32 0.0, %v6883
        %v6885 = vpop.f32.mrb[0].mxu0
        %6886 = vmatprep.mubr.f32.mxu0 0.0
        %6887 = vmatmul.mubr.f32.gmra.mrb[0].mxu0 %v6785
        %v6888 = vpop.f32.mrb[0].mxu0
        %v6889 = vadd.f32 0.0, %v6888
        %v6890 = vpop.f32.mrb[0].mxu0
        %6891 = vdwg.mxu0
        %v6892 = vadd.f32 %v6746, %v6854
        %v6893 = vadd.f32 %v6747, %v6859
        %v6894 = vadd.f32 %v6748, %v6864
        %v6895 = vadd.f32 %v6749, %v6869
        %v6896 = vadd.f32 %v6750, %v6874
        %v6897 = vadd.f32 %v6751, %v6879
        %v6898 = vadd.f32 %v6752, %v6884
        %v6899 = vadd.f32 %v6753, %v6889
        %6900 = vst [vmem:[#allocation6] sm:$0xff] %v6892
        %6901 = vst [vmem:[#allocation6 + $0x8] sm:$0xff] %v6893
        %6902 = vst [vmem:[#allocation6 + $0x10] sm:$0xff] %v6894
        %6903 = vst [vmem:[#allocation6 + $0x18] sm:$0xff] %v6895
        %6904 = vst [vmem:[#allocation6 + $0x20] sm:$0xff] %v6896
        %6905 = vst [vmem:[#allocation6 + $0x28] sm:$0xff] %v6897
        %6906 = vst [vmem:[#allocation6 + $0x30] sm:$0xff] %v6898
        %6907 = vst [vmem:[#allocation6 + $0x38] sm:$0xff] %v6899
        %s6908 = scalar_lea.vmem [#allocation3], 176
        %v6909 = vld [vmem:[%s6908] sm:$0xff]
        %v6910 = vld [vmem:[%s6908 + $0x8] sm:$0xff]
        %v6911 = vld [vmem:[%s6908 + $0x10] sm:$0xff]
        %v6912 = vld [vmem:[%s6908 + $0x18] sm:$0xff]
        %v6913 = vld [vmem:[%s6908 + $0x20] sm:$0xff]
        %v6914 = vld [vmem:[%s6908 + $0x28] sm:$0xff]
        %v6915 = vld [vmem:[%s6908 + $0x30] sm:$0xff]
        %v6916 = vld [vmem:[%s6908 + $0x38] sm:$0xff]
        %v6917 = vld [vmem:[#allocation6] sm:$0xff]
        %v6918 = vld [vmem:[#allocation6 + $0x8] sm:$0xff]
        %v6919 = vld [vmem:[#allocation6 + $0x10] sm:$0xff]
        %v6920 = vld [vmem:[#allocation6 + $0x18] sm:$0xff]
        %v6921 = vld [vmem:[#allocation6 + $0x20] sm:$0xff]
        %v6922 = vld [vmem:[#allocation6 + $0x28] sm:$0xff]
        %v6923 = vld [vmem:[#allocation6 + $0x30] sm:$0xff]
        %v6924 = vld [vmem:[#allocation6 + $0x38] sm:$0xff]
        %s6925 = scalar_lea.vmem %s5, 512
        %v6926 = vld [vmem:[%s6925] sm:$0xff]
        %v6927 = vld [vmem:[%s6925 + $0x8] sm:$0xff]
        %v6928 = vld [vmem:[%s6925 + $0x10] sm:$0xff]
        %v6929 = vld [vmem:[%s6925 + $0x18] sm:$0xff]
        %v6930 = vld [vmem:[%s6925 + $0x20] sm:$0xff]
        %v6931 = vld [vmem:[%s6925 + $0x28] sm:$0xff]
        %v6932 = vld [vmem:[%s6925 + $0x30] sm:$0xff]
        %v6933 = vld [vmem:[%s6925 + $0x38] sm:$0xff]
        %v6935 = vsel %vm728, %v6909, 0
        %v6938 = vsel %vm728, %v6910, 0
        %v6941 = vsel %vm728, %v6911, 0
        %v6944 = vsel %vm728, %v6912, 0
        %v6947 = vsel %vm728, %v6913, 0
        %v6950 = vsel %vm728, %v6914, 0
        %v6953 = vsel %vm728, %v6915, 0
        %v6956 = vsel %vm728, %v6916, 0
        %6958 = vmatprep.subr.mxu0 0.0
        %6959 = vmatpush1.msra.mxu0 %v6926
        %6960 = vmatprep.subr.mxu0 0.0
        %6961 = vmatpush1.msra.mxu0 %v6927
        %6962 = vmatprep.subr.mxu0 0.0
        %6963 = vmatpush1.msra.mxu0 %v6928
        %6964 = vmatprep.subr.mxu0 0.0
        %6965 = vmatpush1.msra.mxu0 %v6929
        %6966 = vmatprep.subr.mxu0 0.0
        %6967 = vmatpush1.msra.mxu0 %v6930
        %6968 = vmatprep.subr.mxu0 0.0
        %6969 = vmatpush1.msra.mxu0 %v6931
        %6970 = vmatprep.subr.mxu0 0.0
        %6971 = vmatpush1.msra.mxu0 %v6932
        %6972 = vmatprep.subr.mxu0 0.0
        %6973 = vmatpush1.msra.mxu0 %v6933
        %6974 = vmatprep.subr.mxu0 0.0
        %6975 = vmatpush1.msra.mxu0 0.0
        %6976 = vmatprep.subr.mxu0 0.0
        %6977 = vmatpush1.msra.mxu0 0.0
        %6978 = vmatprep.subr.mxu0 0.0
        %6979 = vmatpush1.msra.mxu0 0.0
        %6980 = vmatprep.subr.mxu0 0.0
        %6981 = vmatpush1.msra.mxu0 0.0
        %6982 = vmatprep.subr.mxu0 0.0
        %6983 = vmatpush1.msra.mxu0 0.0
        %6984 = vmatprep.subr.mxu0 0.0
        %6985 = vmatpush1.msra.mxu0 0.0
        %6986 = vmatprep.subr.mxu0 0.0
        %6987 = vmatpush1.msra.mxu0 0.0
        %6988 = vmatprep.subr.mxu0 0.0
        %6989 = vmatpush1.msra.mxu0 0.0
        %6990 = vmatprep.subr.mxu0 0.0
        %6991 = vmatpush1.msra.mxu0 0.0
        %6992 = vmatprep.subr.mxu0 0.0
        %6993 = vmatpush1.msra.mxu0 0.0
        %6994 = vmatprep.subr.mxu0 0.0
        %6995 = vmatpush1.msra.mxu0 0.0
        %6996 = vmatprep.subr.mxu0 0.0
        %6997 = vmatpush1.msra.mxu0 0.0
        %6998 = vmatprep.subr.mxu0 0.0
        %6999 = vmatpush1.msra.mxu0 0.0
        %7000 = vmatprep.subr.mxu0 0.0
        %7001 = vmatpush1.msra.mxu0 0.0
        %7002 = vmatprep.subr.mxu0 0.0
        %7003 = vmatpush1.msra.mxu0 0.0
        %7004 = vmatprep.subr.mxu0 0.0
        %7005 = vmatpush1.msra.mxu0 0.0
        %7006 = vmatprep.subr.mxu0 0.0
        %7007 = vmatpush1.msra.mxu0 0.0
        %7008 = vmatprep.subr.mxu0 0.0
        %7009 = vmatpush1.msra.mxu0 0.0
        %7010 = vmatprep.subr.mxu0 0.0
        %7011 = vmatpush1.msra.mxu0 0.0
        %7012 = vmatprep.subr.mxu0 0.0
        %7013 = vmatpush1.msra.mxu0 0.0
        %7014 = vmatprep.subr.mxu0 0.0
        %7015 = vmatpush1.msra.mxu0 0.0
        %7016 = vmatprep.subr.mxu0 0.0
        %7017 = vmatpush1.msra.mxu0 0.0
        %7018 = vmatprep.subr.mxu0 0.0
        %7019 = vmatpush1.msra.mxu0 0.0
        %7020 = vmatprep.subr.mxu0 0.0
        %7021 = vmatpush1.msra.mxu0 0.0
        %7022 = vmatprep.mubr.f32.mxu0 0.0
        %7023 = vmatmul.mubr.f32.gmra.mrb[0].mxu0 %v6935
        %v7024 = vpop.f32.mrb[0].mxu0
        %v7025 = vadd.f32 0.0, %v7024
        %v7026 = vpop.f32.mrb[0].mxu0
        %7027 = vmatprep.mubr.f32.mxu0 0.0
        %7028 = vmatmul.mubr.f32.gmra.mrb[0].mxu0 %v6938
        %v7029 = vpop.f32.mrb[0].mxu0
        %v7030 = vadd.f32 0.0, %v7029
        %v7031 = vpop.f32.mrb[0].mxu0
        %7032 = vmatprep.mubr.f32.mxu0 0.0
        %7033 = vmatmul.mubr.f32.gmra.mrb[0].mxu0 %v6941
        %v7034 = vpop.f32.mrb[0].mxu0
        %v7035 = vadd.f32 0.0, %v7034
        %v7036 = vpop.f32.mrb[0].mxu0
        %7037 = vmatprep.mubr.f32.mxu0 0.0
        %7038 = vmatmul.mubr.f32.gmra.mrb[0].mxu0 %v6944
        %v7039 = vpop.f32.mrb[0].mxu0
        %v7040 = vadd.f32 0.0, %v7039
        %v7041 = vpop.f32.mrb[0].mxu0
        %7042 = vmatprep.mubr.f32.mxu0 0.0
        %7043 = vmatmul.mubr.f32.gmra.mrb[0].mxu0 %v6947
        %v7044 = vpop.f32.mrb[0].mxu0
        %v7045 = vadd.f32 0.0, %v7044
        %v7046 = vpop.f32.mrb[0].mxu0
        %7047 = vmatprep.mubr.f32.mxu0 0.0
        %7048 = vmatmul.mubr.f32.gmra.mrb[0].mxu0 %v6950
        %v7049 = vpop.f32.mrb[0].mxu0
        %v7050 = vadd.f32 0.0, %v7049
        %v7051 = vpop.f32.mrb[0].mxu0
        %7052 = vmatprep.mubr.f32.mxu0 0.0
        %7053 = vmatmul.mubr.f32.gmra.mrb[0].mxu0 %v6953
        %v7054 = vpop.f32.mrb[0].mxu0
        %v7055 = vadd.f32 0.0, %v7054
        %v7056 = vpop.f32.mrb[0].mxu0
        %7057 = vmatprep.mubr.f32.mxu0 0.0
        %7058 = vmatmul.mubr.f32.gmra.mrb[0].mxu0 %v6956
        %v7059 = vpop.f32.mrb[0].mxu0
        %v7060 = vadd.f32 0.0, %v7059
        %v7061 = vpop.f32.mrb[0].mxu0
        %7062 = vdwg.mxu0
        %v7063 = vadd.f32 %v6917, %v7025
        %v7064 = vadd.f32 %v6918, %v7030
        %v7065 = vadd.f32 %v6919, %v7035
        %v7066 = vadd.f32 %v6920, %v7040
        %v7067 = vadd.f32 %v6921, %v7045
        %v7068 = vadd.f32 %v6922, %v7050
        %v7069 = vadd.f32 %v6923, %v7055
        %v7070 = vadd.f32 %v6924, %v7060
        %7071 = vst [vmem:[#allocation6] sm:$0xff] %v7063
        %7072 = vst [vmem:[#allocation6 + $0x8] sm:$0xff] %v7064
        %7073 = vst [vmem:[#allocation6 + $0x10] sm:$0xff] %v7065
        %7074 = vst [vmem:[#allocation6 + $0x18] sm:$0xff] %v7066
        %7075 = vst [vmem:[#allocation6 + $0x20] sm:$0xff] %v7067
        %7076 = vst [vmem:[#allocation6 + $0x28] sm:$0xff] %v7068
        %7077 = vst [vmem:[#allocation6 + $0x30] sm:$0xff] %v7069
        %7078 = vst [vmem:[#allocation6 + $0x38] sm:$0xff] %v7070
        %v7079 = vld [vmem:[#allocation6] sm:$0xff]
        %v7080 = vld [vmem:[#allocation6 + $0x8] sm:$0xff]
        %v7081 = vld [vmem:[#allocation6 + $0x10] sm:$0xff]
        %v7082 = vld [vmem:[#allocation6 + $0x18] sm:$0xff]
        %v7083 = vld [vmem:[#allocation6 + $0x20] sm:$0xff]
        %v7084 = vld [vmem:[#allocation6 + $0x28] sm:$0xff]
        %v7085 = vld [vmem:[#allocation6 + $0x30] sm:$0xff]
        %v7086 = vld [vmem:[#allocation6 + $0x38] sm:$0xff]
        %v7087 = vld [vmem:[%s6] sm:$0x1]
        %v7089 = vlaneseq
        %v7090 = vshrl.u32 %v7089, 7
        %v7091 = vsub.s32 0, %v7090
        %v7092 = vrot.slane %v7087, %v7091
        %v7094 = vadd.f32 %v7079, %v7092
        %v7095 = vadd.f32 %v7080, %v7092
        %v7096 = vadd.f32 %v7081, %v7092
        %v7097 = vadd.f32 %v7082, %v7092
        %v7098 = vadd.f32 %v7083, %v7092
        %v7099 = vadd.f32 %v7084, %v7092
        %v7100 = vadd.f32 %v7085, %v7092
        %v7101 = vadd.f32 %v7086, %v7092
        %v7102 = vmax.f32 %v7094, 0.0
        %v7103 = vmax.f32 %v7095, 0.0
        %v7104 = vmax.f32 %v7096, 0.0
        %v7105 = vmax.f32 %v7097, 0.0
        %v7106 = vmax.f32 %v7098, 0.0
        %v7107 = vmax.f32 %v7099, 0.0
        %v7108 = vmax.f32 %v7100, 0.0
        %v7109 = vmax.f32 %v7101, 0.0
        %7110 = vst [vmem:[#allocation4] sm:$0xff] 0.0
        %7111 = vst [vmem:[#allocation4 + $0x50] sm:$0xff] 0.0
        %7112 = vst [vmem:[#allocation4 + $0xa0] sm:$0xff] 0.0
        %s7113 = scalar_lea.vmem [#allocation4], 72
        %7114 = vst [vmem:[%s7113] sm:$0xff] 0.0
        %7115 = vst [vmem:[%s7113 + $0x50] sm:$0xff] 0.0
        %7116 = vst [vmem:[%s7113 + $0xa0] sm:$0xff] 0.0
        %v7125 = vrot.slane %v7102, 7
        %v7126 = vrot.slane %v7103, 7
        %v7127 = vrot.slane %v7104, 7
        %v7128 = vrot.slane %v7105, 7
        %v7129 = vrot.slane %v7106, 7
        %v7130 = vrot.slane %v7107, 7
        %v7131 = vrot.slane %v7108, 7
        %v7132 = vrot.slane %v7109, 7
        %v7141 = vsel %vm774, 0.0, %v7125
        %v7142 = vsel %vm774, 0.0, %v7126
        %v7143 = vsel %vm774, 0.0, %v7127
        %v7144 = vsel %vm774, 0.0, %v7128
        %v7145 = vsel %vm774, 0.0, %v7129
        %v7146 = vsel %vm774, 0.0, %v7130
        %v7147 = vsel %vm774, 0.0, %v7131
        %v7148 = vsel %vm774, 0.0, %v7132
        %s7149 = scalar_lea.vmem [#allocation4], 8
        %7150 = vst [vmem:[%s7149] sm:$0xff] %v7141
        %7151 = vst [vmem:[%s7149 + $0x8] sm:$0xff] %v7142
        %7152 = vst [vmem:[%s7149 + $0x10] sm:$0xff] %v7143
        %7153 = vst [vmem:[%s7149 + $0x18] sm:$0xff] %v7144
        %7154 = vst [vmem:[%s7149 + $0x20] sm:$0xff] %v7145
        %7155 = vst [vmem:[%s7149 + $0x28] sm:$0xff] %v7146
        %7156 = vst [vmem:[%s7149 + $0x30] sm:$0xff] %v7147
        %7157 = vst [vmem:[%s7149 + $0x38] sm:$0xff] %v7148
        %s7158 = scalar_lea.vmem [#allocation4], 88
        %7159 = vst [vmem:[%s7158] sm:$0xff] %v7102
        %7160 = vst [vmem:[%s7158 + $0x8] sm:$0xff] %v7103
        %7161 = vst [vmem:[%s7158 + $0x10] sm:$0xff] %v7104
        %7162 = vst [vmem:[%s7158 + $0x18] sm:$0xff] %v7105
        %7163 = vst [vmem:[%s7158 + $0x20] sm:$0xff] %v7106
        %7164 = vst [vmem:[%s7158 + $0x28] sm:$0xff] %v7107
        %7165 = vst [vmem:[%s7158 + $0x30] sm:$0xff] %v7108
        %7166 = vst [vmem:[%s7158 + $0x38] sm:$0xff] %v7109
        %v7167 = vrot.slane %v7102, 1
        %v7168 = vrot.slane %v7103, 1
        %v7169 = vrot.slane %v7104, 1
        %v7170 = vrot.slane %v7105, 1
        %v7171 = vrot.slane %v7106, 1
        %v7172 = vrot.slane %v7107, 1
        %v7173 = vrot.slane %v7108, 1
        %v7174 = vrot.slane %v7109, 1
        %v7183 = vsel %vm937, %v7167, 0.0
        %v7184 = vsel %vm937, %v7168, 0.0
        %v7185 = vsel %vm937, %v7169, 0.0
        %v7186 = vsel %vm937, %v7170, 0.0
        %v7187 = vsel %vm937, %v7171, 0.0
        %v7188 = vsel %vm937, %v7172, 0.0
        %v7189 = vsel %vm937, %v7173, 0.0
        %v7190 = vsel %vm937, %v7174, 0.0
        %s7191 = scalar_lea.vmem [#allocation4], 168
        %7192 = vst [vmem:[%s7191] sm:$0xff] %v7183
        %7193 = vst [vmem:[%s7191 + $0x8] sm:$0xff] %v7184
        %7194 = vst [vmem:[%s7191 + $0x10] sm:$0xff] %v7185
        %7195 = vst [vmem:[%s7191 + $0x18] sm:$0xff] %v7186
        %7196 = vst [vmem:[%s7191 + $0x20] sm:$0xff] %v7187
        %7197 = vst [vmem:[%s7191 + $0x28] sm:$0xff] %v7188
        %7198 = vst [vmem:[%s7191 + $0x30] sm:$0xff] %v7189
        %7199 = vst [vmem:[%s7191 + $0x38] sm:$0xff] %v7190
        %7200 = vst [vmem:[#allocation6] sm:$0xff] 0.0
        %7201 = vst [vmem:[#allocation6 + $0x8] sm:$0xff] 0.0
        %7202 = vst [vmem:[#allocation6 + $0x10] sm:$0xff] 0.0
        %7203 = vst [vmem:[#allocation6 + $0x18] sm:$0xff] 0.0
        %7204 = vst [vmem:[#allocation6 + $0x20] sm:$0xff] 0.0
        %7205 = vst [vmem:[#allocation6 + $0x28] sm:$0xff] 0.0
        %7206 = vst [vmem:[#allocation6 + $0x30] sm:$0xff] 0.0
        %7207 = vst [vmem:[#allocation6 + $0x38] sm:$0xff] 0.0
        %v7208 = vld [vmem:[#allocation4] sm:$0xff]
        %v7209 = vld [vmem:[#allocation4 + $0x8] sm:$0xff]
        %v7210 = vld [vmem:[#allocation4 + $0x10] sm:$0xff]
        %v7211 = vld [vmem:[#allocation4 + $0x18] sm:$0xff]
        %v7212 = vld [vmem:[#allocation4 + $0x20] sm:$0xff]
        %v7213 = vld [vmem:[#allocation4 + $0x28] sm:$0xff]
        %v7214 = vld [vmem:[#allocation4 + $0x30] sm:$0xff]
        %v7215 = vld [vmem:[#allocation4 + $0x38] sm:$0xff]
        %v7216 = vld [vmem:[#allocation6] sm:$0xff]
        %v7217 = vld [vmem:[#allocation6 + $0x8] sm:$0xff]
        %v7218 = vld [vmem:[#allocation6 + $0x10] sm:$0xff]
        %v7219 = vld [vmem:[#allocation6 + $0x18] sm:$0xff]
        %v7220 = vld [vmem:[#allocation6 + $0x20] sm:$0xff]
        %v7221 = vld [vmem:[#allocation6 + $0x28] sm:$0xff]
        %v7222 = vld [vmem:[#allocation6 + $0x30] sm:$0xff]
        %v7223 = vld [vmem:[#allocation6 + $0x38] sm:$0xff]
        %v7224 = vld [vmem:[%s7] sm:$0xff]
        %v7225 = vld [vmem:[%s7 + $0x8] sm:$0xff]
        %v7226 = vld [vmem:[%s7 + $0x10] sm:$0xff]
        %v7227 = vld [vmem:[%s7 + $0x18] sm:$0xff]
        %v7228 = vld [vmem:[%s7 + $0x20] sm:$0xff]
        %v7229 = vld [vmem:[%s7 + $0x28] sm:$0xff]
        %v7230 = vld [vmem:[%s7 + $0x30] sm:$0xff]
        %v7231 = vld [vmem:[%s7 + $0x38] sm:$0xff]
        %v7232 = vld [vmem:[%s7 + $0x40] sm:$0xff]
        %v7233 = vld [vmem:[%s7 + $0x48] sm:$0xff]
        %v7234 = vld [vmem:[%s7 + $0x50] sm:$0xff]
        %v7235 = vld [vmem:[%s7 + $0x58] sm:$0xff]
        %v7236 = vld [vmem:[%s7 + $0x60] sm:$0xff]
        %v7237 = vld [vmem:[%s7 + $0x68] sm:$0xff]
        %v7238 = vld [vmem:[%s7 + $0x70] sm:$0xff]
        %v7239 = vld [vmem:[%s7 + $0x78] sm:$0xff]
        %7240 = vmatprep.subr.mxu0 0.0
        %7241 = vmatpush1.msra.mxu0 %v7224
        %7242 = vmatprep.subr.mxu0 0.0
        %7243 = vmatpush1.msra.mxu0 %v7225
        %7244 = vmatprep.subr.mxu0 0.0
        %7245 = vmatpush1.msra.mxu0 %v7226
        %7246 = vmatprep.subr.mxu0 0.0
        %7247 = vmatpush1.msra.mxu0 %v7227
        %7248 = vmatprep.subr.mxu0 0.0
        %7249 = vmatpush1.msra.mxu0 %v7228
        %7250 = vmatprep.subr.mxu0 0.0
        %7251 = vmatpush1.msra.mxu0 %v7229
        %7252 = vmatprep.subr.mxu0 0.0
        %7253 = vmatpush1.msra.mxu0 %v7230
        %7254 = vmatprep.subr.mxu0 0.0
        %7255 = vmatpush1.msra.mxu0 %v7231
        %7256 = vmatprep.subr.mxu0 0.0
        %7257 = vmatpush1.msra.mxu0 %v7232
        %7258 = vmatprep.subr.mxu0 0.0
        %7259 = vmatpush1.msra.mxu0 %v7233
        %7260 = vmatprep.subr.mxu0 0.0
        %7261 = vmatpush1.msra.mxu0 %v7234
        %7262 = vmatprep.subr.mxu0 0.0
        %7263 = vmatpush1.msra.mxu0 %v7235
        %7264 = vmatprep.subr.mxu0 0.0
        %7265 = vmatpush1.msra.mxu0 %v7236
        %7266 = vmatprep.subr.mxu0 0.0
        %7267 = vmatpush1.msra.mxu0 %v7237
        %7268 = vmatprep.subr.mxu0 0.0
        %7269 = vmatpush1.msra.mxu0 %v7238
        %7270 = vmatprep.subr.mxu0 0.0
        %7271 = vmatpush1.msra.mxu0 %v7239
        %7272 = vmatprep.subr.mxu0 0.0
        %7273 = vmatpush1.msra.mxu0 0.0
        %7274 = vmatprep.subr.mxu0 0.0
        %7275 = vmatpush1.msra.mxu0 0.0
        %7276 = vmatprep.subr.mxu0 0.0
        %7277 = vmatpush1.msra.mxu0 0.0
        %7278 = vmatprep.subr.mxu0 0.0
        %7279 = vmatpush1.msra.mxu0 0.0
        %7280 = vmatprep.subr.mxu0 0.0
        %7281 = vmatpush1.msra.mxu0 0.0
        %7282 = vmatprep.subr.mxu0 0.0
        %7283 = vmatpush1.msra.mxu0 0.0
        %7284 = vmatprep.subr.mxu0 0.0
        %7285 = vmatpush1.msra.mxu0 0.0
        %7286 = vmatprep.subr.mxu0 0.0
        %7287 = vmatpush1.msra.mxu0 0.0
        %7288 = vmatprep.subr.mxu0 0.0
        %7289 = vmatpush1.msra.mxu0 0.0
        %7290 = vmatprep.subr.mxu0 0.0
        %7291 = vmatpush1.msra.mxu0 0.0
        %7292 = vmatprep.subr.mxu0 0.0
        %7293 = vmatpush1.msra.mxu0 0.0
        %7294 = vmatprep.subr.mxu0 0.0
        %7295 = vmatpush1.msra.mxu0 0.0
        %7296 = vmatprep.subr.mxu0 0.0
        %7297 = vmatpush1.msra.mxu0 0.0
        %7298 = vmatprep.subr.mxu0 0.0
        %7299 = vmatpush1.msra.mxu0 0.0
        %7300 = vmatprep.subr.mxu0 0.0
        %7301 = vmatpush1.msra.mxu0 0.0
        %7302 = vmatprep.subr.mxu0 0.0
        %7303 = vmatpush1.msra.mxu0 0.0
        %7304 = vmatprep.mubr.f32.mxu0 0.0
        %7305 = vmatmul.mubr.f32.gmra.mrb[0].mxu0 %v7208
        %v7306 = vpop.f32.mrb[0].mxu0
        %v7307 = vadd.f32 0.0, %v7306
        %v7308 = vpop.f32.mrb[0].mxu0
        %7309 = vmatprep.mubr.f32.mxu0 0.0
        %7310 = vmatmul.mubr.f32.gmra.mrb[0].mxu0 %v7209
        %v7311 = vpop.f32.mrb[0].mxu0
        %v7312 = vadd.f32 0.0, %v7311
        %v7313 = vpop.f32.mrb[0].mxu0
        %7314 = vmatprep.mubr.f32.mxu0 0.0
        %7315 = vmatmul.mubr.f32.gmra.mrb[0].mxu0 %v7210
        %v7316 = vpop.f32.mrb[0].mxu0
        %v7317 = vadd.f32 0.0, %v7316
        %v7318 = vpop.f32.mrb[0].mxu0
        %7319 = vmatprep.mubr.f32.mxu0 0.0
        %7320 = vmatmul.mubr.f32.gmra.mrb[0].mxu0 %v7211
        %v7321 = vpop.f32.mrb[0].mxu0
        %v7322 = vadd.f32 0.0, %v7321
        %v7323 = vpop.f32.mrb[0].mxu0
        %7324 = vmatprep.mubr.f32.mxu0 0.0
        %7325 = vmatmul.mubr.f32.gmra.mrb[0].mxu0 %v7212
        %v7326 = vpop.f32.mrb[0].mxu0
        %v7327 = vadd.f32 0.0, %v7326
        %v7328 = vpop.f32.mrb[0].mxu0
        %7329 = vmatprep.mubr.f32.mxu0 0.0
        %7330 = vmatmul.mubr.f32.gmra.mrb[0].mxu0 %v7213
        %v7331 = vpop.f32.mrb[0].mxu0
        %v7332 = vadd.f32 0.0, %v7331
        %v7333 = vpop.f32.mrb[0].mxu0
        %7334 = vmatprep.mubr.f32.mxu0 0.0
        %7335 = vmatmul.mubr.f32.gmra.mrb[0].mxu0 %v7214
        %v7336 = vpop.f32.mrb[0].mxu0
        %v7337 = vadd.f32 0.0, %v7336
        %v7338 = vpop.f32.mrb[0].mxu0
        %7339 = vmatprep.mubr.f32.mxu0 0.0
        %7340 = vmatmul.mubr.f32.gmra.mrb[0].mxu0 %v7215
        %v7341 = vpop.f32.mrb[0].mxu0
        %v7342 = vadd.f32 0.0, %v7341
        %v7343 = vpop.f32.mrb[0].mxu0
        %7344 = vdwg.mxu0
        %v7345 = vadd.f32 %v7216, %v7307
        %v7346 = vadd.f32 %v7217, %v7312
        %v7347 = vadd.f32 %v7218, %v7317
        %v7348 = vadd.f32 %v7219, %v7322
        %v7349 = vadd.f32 %v7220, %v7327
        %v7350 = vadd.f32 %v7221, %v7332
        %v7351 = vadd.f32 %v7222, %v7337
        %v7352 = vadd.f32 %v7223, %v7342
        %7353 = vst [vmem:[#allocation6] sm:$0xff] %v7345
        %7354 = vst [vmem:[#allocation6 + $0x8] sm:$0xff] %v7346
        %7355 = vst [vmem:[#allocation6 + $0x10] sm:$0xff] %v7347
        %7356 = vst [vmem:[#allocation6 + $0x18] sm:$0xff] %v7348
        %7357 = vst [vmem:[#allocation6 + $0x20] sm:$0xff] %v7349
        %7358 = vst [vmem:[#allocation6 + $0x28] sm:$0xff] %v7350
        %7359 = vst [vmem:[#allocation6 + $0x30] sm:$0xff] %v7351
        %7360 = vst [vmem:[#allocation6 + $0x38] sm:$0xff] %v7352
        %s7361 = scalar_lea.vmem [#allocation4], 80
        %v7362 = vld [vmem:[%s7361] sm:$0xff]
        %v7363 = vld [vmem:[%s7361 + $0x8] sm:$0xff]
        %v7364 = vld [vmem:[%s7361 + $0x10] sm:$0xff]
        %v7365 = vld [vmem:[%s7361 + $0x18] sm:$0xff]
        %v7366 = vld [vmem:[%s7361 + $0x20] sm:$0xff]
        %v7367 = vld [vmem:[%s7361 + $0x28] sm:$0xff]
        %v7368 = vld [vmem:[%s7361 + $0x30] sm:$0xff]
        %v7369 = vld [vmem:[%s7361 + $0x38] sm:$0xff]
        %v7370 = vld [vmem:[#allocation6] sm:$0xff]
        %v7371 = vld [vmem:[#allocation6 + $0x8] sm:$0xff]
        %v7372 = vld [vmem:[#allocation6 + $0x10] sm:$0xff]
        %v7373 = vld [vmem:[#allocation6 + $0x18] sm:$0xff]
        %v7374 = vld [vmem:[#allocation6 + $0x20] sm:$0xff]
        %v7375 = vld [vmem:[#allocation6 + $0x28] sm:$0xff]
        %v7376 = vld [vmem:[#allocation6 + $0x30] sm:$0xff]
        %v7377 = vld [vmem:[#allocation6 + $0x38] sm:$0xff]
        %s7378 = scalar_lea.vmem %s7, 128
        %v7379 = vld [vmem:[%s7378] sm:$0xff]
        %v7380 = vld [vmem:[%s7378 + $0x8] sm:$0xff]
        %v7381 = vld [vmem:[%s7378 + $0x10] sm:$0xff]
        %v7382 = vld [vmem:[%s7378 + $0x18] sm:$0xff]
        %v7383 = vld [vmem:[%s7378 + $0x20] sm:$0xff]
        %v7384 = vld [vmem:[%s7378 + $0x28] sm:$0xff]
        %v7385 = vld [vmem:[%s7378 + $0x30] sm:$0xff]
        %v7386 = vld [vmem:[%s7378 + $0x38] sm:$0xff]
        %v7387 = vld [vmem:[%s7378 + $0x40] sm:$0xff]
        %v7388 = vld [vmem:[%s7378 + $0x48] sm:$0xff]
        %v7389 = vld [vmem:[%s7378 + $0x50] sm:$0xff]
        %v7390 = vld [vmem:[%s7378 + $0x58] sm:$0xff]
        %v7391 = vld [vmem:[%s7378 + $0x60] sm:$0xff]
        %v7392 = vld [vmem:[%s7378 + $0x68] sm:$0xff]
        %v7393 = vld [vmem:[%s7378 + $0x70] sm:$0xff]
        %v7394 = vld [vmem:[%s7378 + $0x78] sm:$0xff]
        %7395 = vmatprep.subr.mxu0 0.0
        %7396 = vmatpush1.msra.mxu0 %v7379
        %7397 = vmatprep.subr.mxu0 0.0
        %7398 = vmatpush1.msra.mxu0 %v7380
        %7399 = vmatprep.subr.mxu0 0.0
        %7400 = vmatpush1.msra.mxu0 %v7381
        %7401 = vmatprep.subr.mxu0 0.0
        %7402 = vmatpush1.msra.mxu0 %v7382
        %7403 = vmatprep.subr.mxu0 0.0
        %7404 = vmatpush1.msra.mxu0 %v7383
        %7405 = vmatprep.subr.mxu0 0.0
        %7406 = vmatpush1.msra.mxu0 %v7384
        %7407 = vmatprep.subr.mxu0 0.0
        %7408 = vmatpush1.msra.mxu0 %v7385
        %7409 = vmatprep.subr.mxu0 0.0
        %7410 = vmatpush1.msra.mxu0 %v7386
        %7411 = vmatprep.subr.mxu0 0.0
        %7412 = vmatpush1.msra.mxu0 %v7387
        %7413 = vmatprep.subr.mxu0 0.0
        %7414 = vmatpush1.msra.mxu0 %v7388
        %7415 = vmatprep.subr.mxu0 0.0
        %7416 = vmatpush1.msra.mxu0 %v7389
        %7417 = vmatprep.subr.mxu0 0.0
        %7418 = vmatpush1.msra.mxu0 %v7390
        %7419 = vmatprep.subr.mxu0 0.0
        %7420 = vmatpush1.msra.mxu0 %v7391
        %7421 = vmatprep.subr.mxu0 0.0
        %7422 = vmatpush1.msra.mxu0 %v7392
        %7423 = vmatprep.subr.mxu0 0.0
        %7424 = vmatpush1.msra.mxu0 %v7393
        %7425 = vmatprep.subr.mxu0 0.0
        %7426 = vmatpush1.msra.mxu0 %v7394
        %7427 = vmatprep.subr.mxu0 0.0
        %7428 = vmatpush1.msra.mxu0 0.0
        %7429 = vmatprep.subr.mxu0 0.0
        %7430 = vmatpush1.msra.mxu0 0.0
        %7431 = vmatprep.subr.mxu0 0.0
        %7432 = vmatpush1.msra.mxu0 0.0
        %7433 = vmatprep.subr.mxu0 0.0
        %7434 = vmatpush1.msra.mxu0 0.0
        %7435 = vmatprep.subr.mxu0 0.0
        %7436 = vmatpush1.msra.mxu0 0.0
        %7437 = vmatprep.subr.mxu0 0.0
        %7438 = vmatpush1.msra.mxu0 0.0
        %7439 = vmatprep.subr.mxu0 0.0
        %7440 = vmatpush1.msra.mxu0 0.0
        %7441 = vmatprep.subr.mxu0 0.0
        %7442 = vmatpush1.msra.mxu0 0.0
        %7443 = vmatprep.subr.mxu0 0.0
        %7444 = vmatpush1.msra.mxu0 0.0
        %7445 = vmatprep.subr.mxu0 0.0
        %7446 = vmatpush1.msra.mxu0 0.0
        %7447 = vmatprep.subr.mxu0 0.0
        %7448 = vmatpush1.msra.mxu0 0.0
        %7449 = vmatprep.subr.mxu0 0.0
        %7450 = vmatpush1.msra.mxu0 0.0
        %7451 = vmatprep.subr.mxu0 0.0
        %7452 = vmatpush1.msra.mxu0 0.0
        %7453 = vmatprep.subr.mxu0 0.0
        %7454 = vmatpush1.msra.mxu0 0.0
        %7455 = vmatprep.subr.mxu0 0.0
        %7456 = vmatpush1.msra.mxu0 0.0
        %7457 = vmatprep.subr.mxu0 0.0
        %7458 = vmatpush1.msra.mxu0 0.0
        %7459 = vmatprep.mubr.f32.mxu0 0.0
        %7460 = vmatmul.mubr.f32.gmra.mrb[0].mxu0 %v7362
        %v7461 = vpop.f32.mrb[0].mxu0
        %v7462 = vadd.f32 0.0, %v7461
        %v7463 = vpop.f32.mrb[0].mxu0
        %7464 = vmatprep.mubr.f32.mxu0 0.0
        %7465 = vmatmul.mubr.f32.gmra.mrb[0].mxu0 %v7363
        %v7466 = vpop.f32.mrb[0].mxu0
        %v7467 = vadd.f32 0.0, %v7466
        %v7468 = vpop.f32.mrb[0].mxu0
        %7469 = vmatprep.mubr.f32.mxu0 0.0
        %7470 = vmatmul.mubr.f32.gmra.mrb[0].mxu0 %v7364
        %v7471 = vpop.f32.mrb[0].mxu0
        %v7472 = vadd.f32 0.0, %v7471
        %v7473 = vpop.f32.mrb[0].mxu0
        %7474 = vmatprep.mubr.f32.mxu0 0.0
        %7475 = vmatmul.mubr.f32.gmra.mrb[0].mxu0 %v7365
        %v7476 = vpop.f32.mrb[0].mxu0
        %v7477 = vadd.f32 0.0, %v7476
        %v7478 = vpop.f32.mrb[0].mxu0
        %7479 = vmatprep.mubr.f32.mxu0 0.0
        %7480 = vmatmul.mubr.f32.gmra.mrb[0].mxu0 %v7366
        %v7481 = vpop.f32.mrb[0].mxu0
        %v7482 = vadd.f32 0.0, %v7481
        %v7483 = vpop.f32.mrb[0].mxu0
        %7484 = vmatprep.mubr.f32.mxu0 0.0
        %7485 = vmatmul.mubr.f32.gmra.mrb[0].mxu0 %v7367
        %v7486 = vpop.f32.mrb[0].mxu0
        %v7487 = vadd.f32 0.0, %v7486
        %v7488 = vpop.f32.mrb[0].mxu0
        %7489 = vmatprep.mubr.f32.mxu0 0.0
        %7490 = vmatmul.mubr.f32.gmra.mrb[0].mxu0 %v7368
        %v7491 = vpop.f32.mrb[0].mxu0
        %v7492 = vadd.f32 0.0, %v7491
        %v7493 = vpop.f32.mrb[0].mxu0
        %7494 = vmatprep.mubr.f32.mxu0 0.0
        %7495 = vmatmul.mubr.f32.gmra.mrb[0].mxu0 %v7369
        %v7496 = vpop.f32.mrb[0].mxu0
        %v7497 = vadd.f32 0.0, %v7496
        %v7498 = vpop.f32.mrb[0].mxu0
        %7499 = vdwg.mxu0
        %v7500 = vadd.f32 %v7370, %v7462
        %v7501 = vadd.f32 %v7371, %v7467
        %v7502 = vadd.f32 %v7372, %v7472
        %v7503 = vadd.f32 %v7373, %v7477
        %v7504 = vadd.f32 %v7374, %v7482
        %v7505 = vadd.f32 %v7375, %v7487
        %v7506 = vadd.f32 %v7376, %v7492
        %v7507 = vadd.f32 %v7377, %v7497
        %7508 = vst [vmem:[#allocation6] sm:$0xff] %v7500
        %7509 = vst [vmem:[#allocation6 + $0x8] sm:$0xff] %v7501
        %7510 = vst [vmem:[#allocation6 + $0x10] sm:$0xff] %v7502
        %7511 = vst [vmem:[#allocation6 + $0x18] sm:$0xff] %v7503
        %7512 = vst [vmem:[#allocation6 + $0x20] sm:$0xff] %v7504
        %7513 = vst [vmem:[#allocation6 + $0x28] sm:$0xff] %v7505
        %7514 = vst [vmem:[#allocation6 + $0x30] sm:$0xff] %v7506
        %7515 = vst [vmem:[#allocation6 + $0x38] sm:$0xff] %v7507
        %s7516 = scalar_lea.vmem [#allocation4], 160
        %v7517 = vld [vmem:[%s7516] sm:$0xff]
        %v7518 = vld [vmem:[%s7516 + $0x8] sm:$0xff]
        %v7519 = vld [vmem:[%s7516 + $0x10] sm:$0xff]
        %v7520 = vld [vmem:[%s7516 + $0x18] sm:$0xff]
        %v7521 = vld [vmem:[%s7516 + $0x20] sm:$0xff]
        %v7522 = vld [vmem:[%s7516 + $0x28] sm:$0xff]
        %v7523 = vld [vmem:[%s7516 + $0x30] sm:$0xff]
        %v7524 = vld [vmem:[%s7516 + $0x38] sm:$0xff]
        %v7525 = vld [vmem:[#allocation6] sm:$0xff]
        %v7526 = vld [vmem:[#allocation6 + $0x8] sm:$0xff]
        %v7527 = vld [vmem:[#allocation6 + $0x10] sm:$0xff]
        %v7528 = vld [vmem:[#allocation6 + $0x18] sm:$0xff]
        %v7529 = vld [vmem:[#allocation6 + $0x20] sm:$0xff]
        %v7530 = vld [vmem:[#allocation6 + $0x28] sm:$0xff]
        %v7531 = vld [vmem:[#allocation6 + $0x30] sm:$0xff]
        %v7532 = vld [vmem:[#allocation6 + $0x38] sm:$0xff]
        %s7533 = scalar_lea.vmem %s7, 256
        %v7534 = vld [vmem:[%s7533] sm:$0xff]
        %v7535 = vld [vmem:[%s7533 + $0x8] sm:$0xff]
        %v7536 = vld [vmem:[%s7533 + $0x10] sm:$0xff]
        %v7537 = vld [vmem:[%s7533 + $0x18] sm:$0xff]
        %v7538 = vld [vmem:[%s7533 + $0x20] sm:$0xff]
        %v7539 = vld [vmem:[%s7533 + $0x28] sm:$0xff]
        %v7540 = vld [vmem:[%s7533 + $0x30] sm:$0xff]
        %v7541 = vld [vmem:[%s7533 + $0x38] sm:$0xff]
        %v7542 = vld [vmem:[%s7533 + $0x40] sm:$0xff]
        %v7543 = vld [vmem:[%s7533 + $0x48] sm:$0xff]
        %v7544 = vld [vmem:[%s7533 + $0x50] sm:$0xff]
        %v7545 = vld [vmem:[%s7533 + $0x58] sm:$0xff]
        %v7546 = vld [vmem:[%s7533 + $0x60] sm:$0xff]
        %v7547 = vld [vmem:[%s7533 + $0x68] sm:$0xff]
        %v7548 = vld [vmem:[%s7533 + $0x70] sm:$0xff]
        %v7549 = vld [vmem:[%s7533 + $0x78] sm:$0xff]
        %7550 = vmatprep.subr.mxu0 0.0
        %7551 = vmatpush1.msra.mxu0 %v7534
        %7552 = vmatprep.subr.mxu0 0.0
        %7553 = vmatpush1.msra.mxu0 %v7535
        %7554 = vmatprep.subr.mxu0 0.0
        %7555 = vmatpush1.msra.mxu0 %v7536
        %7556 = vmatprep.subr.mxu0 0.0
        %7557 = vmatpush1.msra.mxu0 %v7537
        %7558 = vmatprep.subr.mxu0 0.0
        %7559 = vmatpush1.msra.mxu0 %v7538
        %7560 = vmatprep.subr.mxu0 0.0
        %7561 = vmatpush1.msra.mxu0 %v7539
        %7562 = vmatprep.subr.mxu0 0.0
        %7563 = vmatpush1.msra.mxu0 %v7540
        %7564 = vmatprep.subr.mxu0 0.0
        %7565 = vmatpush1.msra.mxu0 %v7541
        %7566 = vmatprep.subr.mxu0 0.0
        %7567 = vmatpush1.msra.mxu0 %v7542
        %7568 = vmatprep.subr.mxu0 0.0
        %7569 = vmatpush1.msra.mxu0 %v7543
        %7570 = vmatprep.subr.mxu0 0.0
        %7571 = vmatpush1.msra.mxu0 %v7544
        %7572 = vmatprep.subr.mxu0 0.0
        %7573 = vmatpush1.msra.mxu0 %v7545
        %7574 = vmatprep.subr.mxu0 0.0
        %7575 = vmatpush1.msra.mxu0 %v7546
        %7576 = vmatprep.subr.mxu0 0.0
        %7577 = vmatpush1.msra.mxu0 %v7547
        %7578 = vmatprep.subr.mxu0 0.0
        %7579 = vmatpush1.msra.mxu0 %v7548
        %7580 = vmatprep.subr.mxu0 0.0
        %7581 = vmatpush1.msra.mxu0 %v7549
        %7582 = vmatprep.subr.mxu0 0.0
        %7583 = vmatpush1.msra.mxu0 0.0
        %7584 = vmatprep.subr.mxu0 0.0
        %7585 = vmatpush1.msra.mxu0 0.0
        %7586 = vmatprep.subr.mxu0 0.0
        %7587 = vmatpush1.msra.mxu0 0.0
        %7588 = vmatprep.subr.mxu0 0.0
        %7589 = vmatpush1.msra.mxu0 0.0
        %7590 = vmatprep.subr.mxu0 0.0
        %7591 = vmatpush1.msra.mxu0 0.0
        %7592 = vmatprep.subr.mxu0 0.0
        %7593 = vmatpush1.msra.mxu0 0.0
        %7594 = vmatprep.subr.mxu0 0.0
        %7595 = vmatpush1.msra.mxu0 0.0
        %7596 = vmatprep.subr.mxu0 0.0
        %7597 = vmatpush1.msra.mxu0 0.0
        %7598 = vmatprep.subr.mxu0 0.0
        %7599 = vmatpush1.msra.mxu0 0.0
        %7600 = vmatprep.subr.mxu0 0.0
        %7601 = vmatpush1.msra.mxu0 0.0
        %7602 = vmatprep.subr.mxu0 0.0
        %7603 = vmatpush1.msra.mxu0 0.0
        %7604 = vmatprep.subr.mxu0 0.0
        %7605 = vmatpush1.msra.mxu0 0.0
        %7606 = vmatprep.subr.mxu0 0.0
        %7607 = vmatpush1.msra.mxu0 0.0
        %7608 = vmatprep.subr.mxu0 0.0
        %7609 = vmatpush1.msra.mxu0 0.0
        %7610 = vmatprep.subr.mxu0 0.0
        %7611 = vmatpush1.msra.mxu0 0.0
        %7612 = vmatprep.subr.mxu0 0.0
        %7613 = vmatpush1.msra.mxu0 0.0
        %7614 = vmatprep.mubr.f32.mxu0 0.0
        %7615 = vmatmul.mubr.f32.gmra.mrb[0].mxu0 %v7517
        %v7616 = vpop.f32.mrb[0].mxu0
        %v7617 = vadd.f32 0.0, %v7616
        %v7618 = vpop.f32.mrb[0].mxu0
        %7619 = vmatprep.mubr.f32.mxu0 0.0
        %7620 = vmatmul.mubr.f32.gmra.mrb[0].mxu0 %v7518
        %v7621 = vpop.f32.mrb[0].mxu0
        %v7622 = vadd.f32 0.0, %v7621
        %v7623 = vpop.f32.mrb[0].mxu0
        %7624 = vmatprep.mubr.f32.mxu0 0.0
        %7625 = vmatmul.mubr.f32.gmra.mrb[0].mxu0 %v7519
        %v7626 = vpop.f32.mrb[0].mxu0
        %v7627 = vadd.f32 0.0, %v7626
        %v7628 = vpop.f32.mrb[0].mxu0
        %7629 = vmatprep.mubr.f32.mxu0 0.0
        %7630 = vmatmul.mubr.f32.gmra.mrb[0].mxu0 %v7520
        %v7631 = vpop.f32.mrb[0].mxu0
        %v7632 = vadd.f32 0.0, %v7631
        %v7633 = vpop.f32.mrb[0].mxu0
        %7634 = vmatprep.mubr.f32.mxu0 0.0
        %7635 = vmatmul.mubr.f32.gmra.mrb[0].mxu0 %v7521
        %v7636 = vpop.f32.mrb[0].mxu0
        %v7637 = vadd.f32 0.0, %v7636
        %v7638 = vpop.f32.mrb[0].mxu0
        %7639 = vmatprep.mubr.f32.mxu0 0.0
        %7640 = vmatmul.mubr.f32.gmra.mrb[0].mxu0 %v7522
        %v7641 = vpop.f32.mrb[0].mxu0
        %v7642 = vadd.f32 0.0, %v7641
        %v7643 = vpop.f32.mrb[0].mxu0
        %7644 = vmatprep.mubr.f32.mxu0 0.0
        %7645 = vmatmul.mubr.f32.gmra.mrb[0].mxu0 %v7523
        %v7646 = vpop.f32.mrb[0].mxu0
        %v7647 = vadd.f32 0.0, %v7646
        %v7648 = vpop.f32.mrb[0].mxu0
        %7649 = vmatprep.mubr.f32.mxu0 0.0
        %7650 = vmatmul.mubr.f32.gmra.mrb[0].mxu0 %v7524
        %v7651 = vpop.f32.mrb[0].mxu0
        %v7652 = vadd.f32 0.0, %v7651
        %v7653 = vpop.f32.mrb[0].mxu0
        %7654 = vdwg.mxu0
        %v7655 = vadd.f32 %v7525, %v7617
        %v7656 = vadd.f32 %v7526, %v7622
        %v7657 = vadd.f32 %v7527, %v7627
        %v7658 = vadd.f32 %v7528, %v7632
        %v7659 = vadd.f32 %v7529, %v7637
        %v7660 = vadd.f32 %v7530, %v7642
        %v7661 = vadd.f32 %v7531, %v7647
        %v7662 = vadd.f32 %v7532, %v7652
        %7663 = vst [vmem:[#allocation6] sm:$0xff] %v7655
        %7664 = vst [vmem:[#allocation6 + $0x8] sm:$0xff] %v7656
        %7665 = vst [vmem:[#allocation6 + $0x10] sm:$0xff] %v7657
        %7666 = vst [vmem:[#allocation6 + $0x18] sm:$0xff] %v7658
        %7667 = vst [vmem:[#allocation6 + $0x20] sm:$0xff] %v7659
        %7668 = vst [vmem:[#allocation6 + $0x28] sm:$0xff] %v7660
        %7669 = vst [vmem:[#allocation6 + $0x30] sm:$0xff] %v7661
        %7670 = vst [vmem:[#allocation6 + $0x38] sm:$0xff] %v7662
        %v7671 = vld [vmem:[%s7149] sm:$0xff]
        %v7672 = vld [vmem:[%s7149 + $0x8] sm:$0xff]
        %v7673 = vld [vmem:[%s7149 + $0x10] sm:$0xff]
        %v7674 = vld [vmem:[%s7149 + $0x18] sm:$0xff]
        %v7675 = vld [vmem:[%s7149 + $0x20] sm:$0xff]
        %v7676 = vld [vmem:[%s7149 + $0x28] sm:$0xff]
        %v7677 = vld [vmem:[%s7149 + $0x30] sm:$0xff]
        %v7678 = vld [vmem:[%s7149 + $0x38] sm:$0xff]
        %v7679 = vld [vmem:[#allocation6] sm:$0xff]
        %v7680 = vld [vmem:[#allocation6 + $0x8] sm:$0xff]
        %v7681 = vld [vmem:[#allocation6 + $0x10] sm:$0xff]
        %v7682 = vld [vmem:[#allocation6 + $0x18] sm:$0xff]
        %v7683 = vld [vmem:[#allocation6 + $0x20] sm:$0xff]
        %v7684 = vld [vmem:[#allocation6 + $0x28] sm:$0xff]
        %v7685 = vld [vmem:[#allocation6 + $0x30] sm:$0xff]
        %v7686 = vld [vmem:[#allocation6 + $0x38] sm:$0xff]
        %s7687 = scalar_lea.vmem %s7, 384
        %v7688 = vld [vmem:[%s7687] sm:$0xff]
        %v7689 = vld [vmem:[%s7687 + $0x8] sm:$0xff]
        %v7690 = vld [vmem:[%s7687 + $0x10] sm:$0xff]
        %v7691 = vld [vmem:[%s7687 + $0x18] sm:$0xff]
        %v7692 = vld [vmem:[%s7687 + $0x20] sm:$0xff]
        %v7693 = vld [vmem:[%s7687 + $0x28] sm:$0xff]
        %v7694 = vld [vmem:[%s7687 + $0x30] sm:$0xff]
        %v7695 = vld [vmem:[%s7687 + $0x38] sm:$0xff]
        %v7696 = vld [vmem:[%s7687 + $0x40] sm:$0xff]
        %v7697 = vld [vmem:[%s7687 + $0x48] sm:$0xff]
        %v7698 = vld [vmem:[%s7687 + $0x50] sm:$0xff]
        %v7699 = vld [vmem:[%s7687 + $0x58] sm:$0xff]
        %v7700 = vld [vmem:[%s7687 + $0x60] sm:$0xff]
        %v7701 = vld [vmem:[%s7687 + $0x68] sm:$0xff]
        %v7702 = vld [vmem:[%s7687 + $0x70] sm:$0xff]
        %v7703 = vld [vmem:[%s7687 + $0x78] sm:$0xff]
        %7704 = vmatprep.subr.mxu0 0.0
        %7705 = vmatpush1.msra.mxu0 %v7688
        %7706 = vmatprep.subr.mxu0 0.0
        %7707 = vmatpush1.msra.mxu0 %v7689
        %7708 = vmatprep.subr.mxu0 0.0
        %7709 = vmatpush1.msra.mxu0 %v7690
        %7710 = vmatprep.subr.mxu0 0.0
        %7711 = vmatpush1.msra.mxu0 %v7691
        %7712 = vmatprep.subr.mxu0 0.0
        %7713 = vmatpush1.msra.mxu0 %v7692
        %7714 = vmatprep.subr.mxu0 0.0
        %7715 = vmatpush1.msra.mxu0 %v7693
        %7716 = vmatprep.subr.mxu0 0.0
        %7717 = vmatpush1.msra.mxu0 %v7694
        %7718 = vmatprep.subr.mxu0 0.0
        %7719 = vmatpush1.msra.mxu0 %v7695
        %7720 = vmatprep.subr.mxu0 0.0
        %7721 = vmatpush1.msra.mxu0 %v7696
        %7722 = vmatprep.subr.mxu0 0.0
        %7723 = vmatpush1.msra.mxu0 %v7697
        %7724 = vmatprep.subr.mxu0 0.0
        %7725 = vmatpush1.msra.mxu0 %v7698
        %7726 = vmatprep.subr.mxu0 0.0
        %7727 = vmatpush1.msra.mxu0 %v7699
        %7728 = vmatprep.subr.mxu0 0.0
        %7729 = vmatpush1.msra.mxu0 %v7700
        %7730 = vmatprep.subr.mxu0 0.0
        %7731 = vmatpush1.msra.mxu0 %v7701
        %7732 = vmatprep.subr.mxu0 0.0
        %7733 = vmatpush1.msra.mxu0 %v7702
        %7734 = vmatprep.subr.mxu0 0.0
        %7735 = vmatpush1.msra.mxu0 %v7703
        %7736 = vmatprep.subr.mxu0 0.0
        %7737 = vmatpush1.msra.mxu0 0.0
        %7738 = vmatprep.subr.mxu0 0.0
        %7739 = vmatpush1.msra.mxu0 0.0
        %7740 = vmatprep.subr.mxu0 0.0
        %7741 = vmatpush1.msra.mxu0 0.0
        %7742 = vmatprep.subr.mxu0 0.0
        %7743 = vmatpush1.msra.mxu0 0.0
        %7744 = vmatprep.subr.mxu0 0.0
        %7745 = vmatpush1.msra.mxu0 0.0
        %7746 = vmatprep.subr.mxu0 0.0
        %7747 = vmatpush1.msra.mxu0 0.0
        %7748 = vmatprep.subr.mxu0 0.0
        %7749 = vmatpush1.msra.mxu0 0.0
        %7750 = vmatprep.subr.mxu0 0.0
        %7751 = vmatpush1.msra.mxu0 0.0
        %7752 = vmatprep.subr.mxu0 0.0
        %7753 = vmatpush1.msra.mxu0 0.0
        %7754 = vmatprep.subr.mxu0 0.0
        %7755 = vmatpush1.msra.mxu0 0.0
        %7756 = vmatprep.subr.mxu0 0.0
        %7757 = vmatpush1.msra.mxu0 0.0
        %7758 = vmatprep.subr.mxu0 0.0
        %7759 = vmatpush1.msra.mxu0 0.0
        %7760 = vmatprep.subr.mxu0 0.0
        %7761 = vmatpush1.msra.mxu0 0.0
        %7762 = vmatprep.subr.mxu0 0.0
        %7763 = vmatpush1.msra.mxu0 0.0
        %7764 = vmatprep.subr.mxu0 0.0
        %7765 = vmatpush1.msra.mxu0 0.0
        %7766 = vmatprep.subr.mxu0 0.0
        %7767 = vmatpush1.msra.mxu0 0.0
        %7768 = vmatprep.mubr.f32.mxu0 0.0
        %7769 = vmatmul.mubr.f32.gmra.mrb[0].mxu0 %v7671
        %v7770 = vpop.f32.mrb[0].mxu0
        %v7771 = vadd.f32 0.0, %v7770
        %v7772 = vpop.f32.mrb[0].mxu0
        %7773 = vmatprep.mubr.f32.mxu0 0.0
        %7774 = vmatmul.mubr.f32.gmra.mrb[0].mxu0 %v7672
        %v7775 = vpop.f32.mrb[0].mxu0
        %v7776 = vadd.f32 0.0, %v7775
        %v7777 = vpop.f32.mrb[0].mxu0
        %7778 = vmatprep.mubr.f32.mxu0 0.0
        %7779 = vmatmul.mubr.f32.gmra.mrb[0].mxu0 %v7673
        %v7780 = vpop.f32.mrb[0].mxu0
        %v7781 = vadd.f32 0.0, %v7780
        %v7782 = vpop.f32.mrb[0].mxu0
        %7783 = vmatprep.mubr.f32.mxu0 0.0
        %7784 = vmatmul.mubr.f32.gmra.mrb[0].mxu0 %v7674
        %v7785 = vpop.f32.mrb[0].mxu0
        %v7786 = vadd.f32 0.0, %v7785
        %v7787 = vpop.f32.mrb[0].mxu0
        %7788 = vmatprep.mubr.f32.mxu0 0.0
        %7789 = vmatmul.mubr.f32.gmra.mrb[0].mxu0 %v7675
        %v7790 = vpop.f32.mrb[0].mxu0
        %v7791 = vadd.f32 0.0, %v7790
        %v7792 = vpop.f32.mrb[0].mxu0
        %7793 = vmatprep.mubr.f32.mxu0 0.0
        %7794 = vmatmul.mubr.f32.gmra.mrb[0].mxu0 %v7676
        %v7795 = vpop.f32.mrb[0].mxu0
        %v7796 = vadd.f32 0.0, %v7795
        %v7797 = vpop.f32.mrb[0].mxu0
        %7798 = vmatprep.mubr.f32.mxu0 0.0
        %7799 = vmatmul.mubr.f32.gmra.mrb[0].mxu0 %v7677
        %v7800 = vpop.f32.mrb[0].mxu0
        %v7801 = vadd.f32 0.0, %v7800
        %v7802 = vpop.f32.mrb[0].mxu0
        %7803 = vmatprep.mubr.f32.mxu0 0.0
        %7804 = vmatmul.mubr.f32.gmra.mrb[0].mxu0 %v7678
        %v7805 = vpop.f32.mrb[0].mxu0
        %v7806 = vadd.f32 0.0, %v7805
        %v7807 = vpop.f32.mrb[0].mxu0
        %7808 = vdwg.mxu0
        %v7809 = vadd.f32 %v7679, %v7771
        %v7810 = vadd.f32 %v7680, %v7776
        %v7811 = vadd.f32 %v7681, %v7781
        %v7812 = vadd.f32 %v7682, %v7786
        %v7813 = vadd.f32 %v7683, %v7791
        %v7814 = vadd.f32 %v7684, %v7796
        %v7815 = vadd.f32 %v7685, %v7801
        %v7816 = vadd.f32 %v7686, %v7806
        %7817 = vst [vmem:[#allocation6] sm:$0xff] %v7809
        %7818 = vst [vmem:[#allocation6 + $0x8] sm:$0xff] %v7810
        %7819 = vst [vmem:[#allocation6 + $0x10] sm:$0xff] %v7811
        %7820 = vst [vmem:[#allocation6 + $0x18] sm:$0xff] %v7812
        %7821 = vst [vmem:[#allocation6 + $0x20] sm:$0xff] %v7813
        %7822 = vst [vmem:[#allocation6 + $0x28] sm:$0xff] %v7814
        %7823 = vst [vmem:[#allocation6 + $0x30] sm:$0xff] %v7815
        %7824 = vst [vmem:[#allocation6 + $0x38] sm:$0xff] %v7816
        %v7825 = vld [vmem:[%s7158] sm:$0xff]
        %v7826 = vld [vmem:[%s7158 + $0x8] sm:$0xff]
        %v7827 = vld [vmem:[%s7158 + $0x10] sm:$0xff]
        %v7828 = vld [vmem:[%s7158 + $0x18] sm:$0xff]
        %v7829 = vld [vmem:[%s7158 + $0x20] sm:$0xff]
        %v7830 = vld [vmem:[%s7158 + $0x28] sm:$0xff]
        %v7831 = vld [vmem:[%s7158 + $0x30] sm:$0xff]
        %v7832 = vld [vmem:[%s7158 + $0x38] sm:$0xff]
        %v7833 = vld [vmem:[#allocation6] sm:$0xff]
        %v7834 = vld [vmem:[#allocation6 + $0x8] sm:$0xff]
        %v7835 = vld [vmem:[#allocation6 + $0x10] sm:$0xff]
        %v7836 = vld [vmem:[#allocation6 + $0x18] sm:$0xff]
        %v7837 = vld [vmem:[#allocation6 + $0x20] sm:$0xff]
        %v7838 = vld [vmem:[#allocation6 + $0x28] sm:$0xff]
        %v7839 = vld [vmem:[#allocation6 + $0x30] sm:$0xff]
        %v7840 = vld [vmem:[#allocation6 + $0x38] sm:$0xff]
        %s7841 = scalar_lea.vmem %s7, 512
        %v7842 = vld [vmem:[%s7841] sm:$0xff]
        %v7843 = vld [vmem:[%s7841 + $0x8] sm:$0xff]
        %v7844 = vld [vmem:[%s7841 + $0x10] sm:$0xff]
        %v7845 = vld [vmem:[%s7841 + $0x18] sm:$0xff]
        %v7846 = vld [vmem:[%s7841 + $0x20] sm:$0xff]
        %v7847 = vld [vmem:[%s7841 + $0x28] sm:$0xff]
        %v7848 = vld [vmem:[%s7841 + $0x30] sm:$0xff]
        %v7849 = vld [vmem:[%s7841 + $0x38] sm:$0xff]
        %v7850 = vld [vmem:[%s7841 + $0x40] sm:$0xff]
        %v7851 = vld [vmem:[%s7841 + $0x48] sm:$0xff]
        %v7852 = vld [vmem:[%s7841 + $0x50] sm:$0xff]
        %v7853 = vld [vmem:[%s7841 + $0x58] sm:$0xff]
        %v7854 = vld [vmem:[%s7841 + $0x60] sm:$0xff]
        %v7855 = vld [vmem:[%s7841 + $0x68] sm:$0xff]
        %v7856 = vld [vmem:[%s7841 + $0x70] sm:$0xff]
        %v7857 = vld [vmem:[%s7841 + $0x78] sm:$0xff]
        %7858 = vmatprep.subr.mxu0 0.0
        %7859 = vmatpush1.msra.mxu0 %v7842
        %7860 = vmatprep.subr.mxu0 0.0
        %7861 = vmatpush1.msra.mxu0 %v7843
        %7862 = vmatprep.subr.mxu0 0.0
        %7863 = vmatpush1.msra.mxu0 %v7844
        %7864 = vmatprep.subr.mxu0 0.0
        %7865 = vmatpush1.msra.mxu0 %v7845
        %7866 = vmatprep.subr.mxu0 0.0
        %7867 = vmatpush1.msra.mxu0 %v7846
        %7868 = vmatprep.subr.mxu0 0.0
        %7869 = vmatpush1.msra.mxu0 %v7847
        %7870 = vmatprep.subr.mxu0 0.0
        %7871 = vmatpush1.msra.mxu0 %v7848
        %7872 = vmatprep.subr.mxu0 0.0
        %7873 = vmatpush1.msra.mxu0 %v7849
        %7874 = vmatprep.subr.mxu0 0.0
        %7875 = vmatpush1.msra.mxu0 %v7850
        %7876 = vmatprep.subr.mxu0 0.0
        %7877 = vmatpush1.msra.mxu0 %v7851
        %7878 = vmatprep.subr.mxu0 0.0
        %7879 = vmatpush1.msra.mxu0 %v7852
        %7880 = vmatprep.subr.mxu0 0.0
        %7881 = vmatpush1.msra.mxu0 %v7853
        %7882 = vmatprep.subr.mxu0 0.0
        %7883 = vmatpush1.msra.mxu0 %v7854
        %7884 = vmatprep.subr.mxu0 0.0
        %7885 = vmatpush1.msra.mxu0 %v7855
        %7886 = vmatprep.subr.mxu0 0.0
        %7887 = vmatpush1.msra.mxu0 %v7856
        %7888 = vmatprep.subr.mxu0 0.0
        %7889 = vmatpush1.msra.mxu0 %v7857
        %7890 = vmatprep.subr.mxu0 0.0
        %7891 = vmatpush1.msra.mxu0 0.0
        %7892 = vmatprep.subr.mxu0 0.0
        %7893 = vmatpush1.msra.mxu0 0.0
        %7894 = vmatprep.subr.mxu0 0.0
        %7895 = vmatpush1.msra.mxu0 0.0
        %7896 = vmatprep.subr.mxu0 0.0
        %7897 = vmatpush1.msra.mxu0 0.0
        %7898 = vmatprep.subr.mxu0 0.0
        %7899 = vmatpush1.msra.mxu0 0.0
        %7900 = vmatprep.subr.mxu0 0.0
        %7901 = vmatpush1.msra.mxu0 0.0
        %7902 = vmatprep.subr.mxu0 0.0
        %7903 = vmatpush1.msra.mxu0 0.0
        %7904 = vmatprep.subr.mxu0 0.0
        %7905 = vmatpush1.msra.mxu0 0.0
        %7906 = vmatprep.subr.mxu0 0.0
        %7907 = vmatpush1.msra.mxu0 0.0
        %7908 = vmatprep.subr.mxu0 0.0
        %7909 = vmatpush1.msra.mxu0 0.0
        %7910 = vmatprep.subr.mxu0 0.0
        %7911 = vmatpush1.msra.mxu0 0.0
        %7912 = vmatprep.subr.mxu0 0.0
        %7913 = vmatpush1.msra.mxu0 0.0
        %7914 = vmatprep.subr.mxu0 0.0
        %7915 = vmatpush1.msra.mxu0 0.0
        %7916 = vmatprep.subr.mxu0 0.0
        %7917 = vmatpush1.msra.mxu0 0.0
        %7918 = vmatprep.subr.mxu0 0.0
        %7919 = vmatpush1.msra.mxu0 0.0
        %7920 = vmatprep.subr.mxu0 0.0
        %7921 = vmatpush1.msra.mxu0 0.0
        %7922 = vmatprep.mubr.f32.mxu0 0.0
        %7923 = vmatmul.mubr.f32.gmra.mrb[0].mxu0 %v7825
        %v7924 = vpop.f32.mrb[0].mxu0
        %v7925 = vadd.f32 0.0, %v7924
        %v7926 = vpop.f32.mrb[0].mxu0
        %7927 = vmatprep.mubr.f32.mxu0 0.0
        %7928 = vmatmul.mubr.f32.gmra.mrb[0].mxu0 %v7826
        %v7929 = vpop.f32.mrb[0].mxu0
        %v7930 = vadd.f32 0.0, %v7929
        %v7931 = vpop.f32.mrb[0].mxu0
        %7932 = vmatprep.mubr.f32.mxu0 0.0
        %7933 = vmatmul.mubr.f32.gmra.mrb[0].mxu0 %v7827
        %v7934 = vpop.f32.mrb[0].mxu0
        %v7935 = vadd.f32 0.0, %v7934
        %v7936 = vpop.f32.mrb[0].mxu0
        %7937 = vmatprep.mubr.f32.mxu0 0.0
        %7938 = vmatmul.mubr.f32.gmra.mrb[0].mxu0 %v7828
        %v7939 = vpop.f32.mrb[0].mxu0
        %v7940 = vadd.f32 0.0, %v7939
        %v7941 = vpop.f32.mrb[0].mxu0
        %7942 = vmatprep.mubr.f32.mxu0 0.0
        %7943 = vmatmul.mubr.f32.gmra.mrb[0].mxu0 %v7829
        %v7944 = vpop.f32.mrb[0].mxu0
        %v7945 = vadd.f32 0.0, %v7944
        %v7946 = vpop.f32.mrb[0].mxu0
        %7947 = vmatprep.mubr.f32.mxu0 0.0
        %7948 = vmatmul.mubr.f32.gmra.mrb[0].mxu0 %v7830
        %v7949 = vpop.f32.mrb[0].mxu0
        %v7950 = vadd.f32 0.0, %v7949
        %v7951 = vpop.f32.mrb[0].mxu0
        %7952 = vmatprep.mubr.f32.mxu0 0.0
        %7953 = vmatmul.mubr.f32.gmra.mrb[0].mxu0 %v7831
        %v7954 = vpop.f32.mrb[0].mxu0
        %v7955 = vadd.f32 0.0, %v7954
        %v7956 = vpop.f32.mrb[0].mxu0
        %7957 = vmatprep.mubr.f32.mxu0 0.0
        %7958 = vmatmul.mubr.f32.gmra.mrb[0].mxu0 %v7832
        %v7959 = vpop.f32.mrb[0].mxu0
        %v7960 = vadd.f32 0.0, %v7959
        %v7961 = vpop.f32.mrb[0].mxu0
        %7962 = vdwg.mxu0
        %v7963 = vadd.f32 %v7833, %v7925
        %v7964 = vadd.f32 %v7834, %v7930
        %v7965 = vadd.f32 %v7835, %v7935
        %v7966 = vadd.f32 %v7836, %v7940
        %v7967 = vadd.f32 %v7837, %v7945
        %v7968 = vadd.f32 %v7838, %v7950
        %v7969 = vadd.f32 %v7839, %v7955
        %v7970 = vadd.f32 %v7840, %v7960
        %7971 = vst [vmem:[#allocation6] sm:$0xff] %v7963
        %7972 = vst [vmem:[#allocation6 + $0x8] sm:$0xff] %v7964
        %7973 = vst [vmem:[#allocation6 + $0x10] sm:$0xff] %v7965
        %7974 = vst [vmem:[#allocation6 + $0x18] sm:$0xff] %v7966
        %7975 = vst [vmem:[#allocation6 + $0x20] sm:$0xff] %v7967
        %7976 = vst [vmem:[#allocation6 + $0x28] sm:$0xff] %v7968
        %7977 = vst [vmem:[#allocation6 + $0x30] sm:$0xff] %v7969
        %7978 = vst [vmem:[#allocation6 + $0x38] sm:$0xff] %v7970
        %v7979 = vld [vmem:[%s7191] sm:$0xff]
        %v7980 = vld [vmem:[%s7191 + $0x8] sm:$0xff]
        %v7981 = vld [vmem:[%s7191 + $0x10] sm:$0xff]
        %v7982 = vld [vmem:[%s7191 + $0x18] sm:$0xff]
        %v7983 = vld [vmem:[%s7191 + $0x20] sm:$0xff]
        %v7984 = vld [vmem:[%s7191 + $0x28] sm:$0xff]
        %v7985 = vld [vmem:[%s7191 + $0x30] sm:$0xff]
        %v7986 = vld [vmem:[%s7191 + $0x38] sm:$0xff]
        %v7987 = vld [vmem:[#allocation6] sm:$0xff]
        %v7988 = vld [vmem:[#allocation6 + $0x8] sm:$0xff]
        %v7989 = vld [vmem:[#allocation6 + $0x10] sm:$0xff]
        %v7990 = vld [vmem:[#allocation6 + $0x18] sm:$0xff]
        %v7991 = vld [vmem:[#allocation6 + $0x20] sm:$0xff]
        %v7992 = vld [vmem:[#allocation6 + $0x28] sm:$0xff]
        %v7993 = vld [vmem:[#allocation6 + $0x30] sm:$0xff]
        %v7994 = vld [vmem:[#allocation6 + $0x38] sm:$0xff]
        %s7995 = scalar_lea.vmem %s7, 640
        %v7996 = vld [vmem:[%s7995] sm:$0xff]
        %v7997 = vld [vmem:[%s7995 + $0x8] sm:$0xff]
        %v7998 = vld [vmem:[%s7995 + $0x10] sm:$0xff]
        %v7999 = vld [vmem:[%s7995 + $0x18] sm:$0xff]
        %v8000 = vld [vmem:[%s7995 + $0x20] sm:$0xff]
        %v8001 = vld [vmem:[%s7995 + $0x28] sm:$0xff]
        %v8002 = vld [vmem:[%s7995 + $0x30] sm:$0xff]
        %v8003 = vld [vmem:[%s7995 + $0x38] sm:$0xff]
        %v8004 = vld [vmem:[%s7995 + $0x40] sm:$0xff]
        %v8005 = vld [vmem:[%s7995 + $0x48] sm:$0xff]
        %v8006 = vld [vmem:[%s7995 + $0x50] sm:$0xff]
        %v8007 = vld [vmem:[%s7995 + $0x58] sm:$0xff]
        %v8008 = vld [vmem:[%s7995 + $0x60] sm:$0xff]
        %v8009 = vld [vmem:[%s7995 + $0x68] sm:$0xff]
        %v8010 = vld [vmem:[%s7995 + $0x70] sm:$0xff]
        %v8011 = vld [vmem:[%s7995 + $0x78] sm:$0xff]
        %8012 = vmatprep.subr.mxu0 0.0
        %8013 = vmatpush1.msra.mxu0 %v7996
        %8014 = vmatprep.subr.mxu0 0.0
        %8015 = vmatpush1.msra.mxu0 %v7997
        %8016 = vmatprep.subr.mxu0 0.0
        %8017 = vmatpush1.msra.mxu0 %v7998
        %8018 = vmatprep.subr.mxu0 0.0
        %8019 = vmatpush1.msra.mxu0 %v7999
        %8020 = vmatprep.subr.mxu0 0.0
        %8021 = vmatpush1.msra.mxu0 %v8000
        %8022 = vmatprep.subr.mxu0 0.0
        %8023 = vmatpush1.msra.mxu0 %v8001
        %8024 = vmatprep.subr.mxu0 0.0
        %8025 = vmatpush1.msra.mxu0 %v8002
        %8026 = vmatprep.subr.mxu0 0.0
        %8027 = vmatpush1.msra.mxu0 %v8003
        %8028 = vmatprep.subr.mxu0 0.0
        %8029 = vmatpush1.msra.mxu0 %v8004
        %8030 = vmatprep.subr.mxu0 0.0
        %8031 = vmatpush1.msra.mxu0 %v8005
        %8032 = vmatprep.subr.mxu0 0.0
        %8033 = vmatpush1.msra.mxu0 %v8006
        %8034 = vmatprep.subr.mxu0 0.0
        %8035 = vmatpush1.msra.mxu0 %v8007
        %8036 = vmatprep.subr.mxu0 0.0
        %8037 = vmatpush1.msra.mxu0 %v8008
        %8038 = vmatprep.subr.mxu0 0.0
        %8039 = vmatpush1.msra.mxu0 %v8009
        %8040 = vmatprep.subr.mxu0 0.0
        %8041 = vmatpush1.msra.mxu0 %v8010
        %8042 = vmatprep.subr.mxu0 0.0
        %8043 = vmatpush1.msra.mxu0 %v8011
        %8044 = vmatprep.subr.mxu0 0.0
        %8045 = vmatpush1.msra.mxu0 0.0
        %8046 = vmatprep.subr.mxu0 0.0
        %8047 = vmatpush1.msra.mxu0 0.0
        %8048 = vmatprep.subr.mxu0 0.0
        %8049 = vmatpush1.msra.mxu0 0.0
        %8050 = vmatprep.subr.mxu0 0.0
        %8051 = vmatpush1.msra.mxu0 0.0
        %8052 = vmatprep.subr.mxu0 0.0
        %8053 = vmatpush1.msra.mxu0 0.0
        %8054 = vmatprep.subr.mxu0 0.0
        %8055 = vmatpush1.msra.mxu0 0.0
        %8056 = vmatprep.subr.mxu0 0.0
        %8057 = vmatpush1.msra.mxu0 0.0
        %8058 = vmatprep.subr.mxu0 0.0
        %8059 = vmatpush1.msra.mxu0 0.0
        %8060 = vmatprep.subr.mxu0 0.0
        %8061 = vmatpush1.msra.mxu0 0.0
        %8062 = vmatprep.subr.mxu0 0.0
        %8063 = vmatpush1.msra.mxu0 0.0
        %8064 = vmatprep.subr.mxu0 0.0
        %8065 = vmatpush1.msra.mxu0 0.0
        %8066 = vmatprep.subr.mxu0 0.0
        %8067 = vmatpush1.msra.mxu0 0.0
        %8068 = vmatprep.subr.mxu0 0.0
        %8069 = vmatpush1.msra.mxu0 0.0
        %8070 = vmatprep.subr.mxu0 0.0
        %8071 = vmatpush1.msra.mxu0 0.0
        %8072 = vmatprep.subr.mxu0 0.0
        %8073 = vmatpush1.msra.mxu0 0.0
        %8074 = vmatprep.subr.mxu0 0.0
        %8075 = vmatpush1.msra.mxu0 0.0
        %8076 = vmatprep.mubr.f32.mxu0 0.0
        %8077 = vmatmul.mubr.f32.gmra.mrb[0].mxu0 %v7979
        %v8078 = vpop.f32.mrb[0].mxu0
        %v8079 = vadd.f32 0.0, %v8078
        %v8080 = vpop.f32.mrb[0].mxu0
        %8081 = vmatprep.mubr.f32.mxu0 0.0
        %8082 = vmatmul.mubr.f32.gmra.mrb[0].mxu0 %v7980
        %v8083 = vpop.f32.mrb[0].mxu0
        %v8084 = vadd.f32 0.0, %v8083
        %v8085 = vpop.f32.mrb[0].mxu0
        %8086 = vmatprep.mubr.f32.mxu0 0.0
        %8087 = vmatmul.mubr.f32.gmra.mrb[0].mxu0 %v7981
        %v8088 = vpop.f32.mrb[0].mxu0
        %v8089 = vadd.f32 0.0, %v8088
        %v8090 = vpop.f32.mrb[0].mxu0
        %8091 = vmatprep.mubr.f32.mxu0 0.0
        %8092 = vmatmul.mubr.f32.gmra.mrb[0].mxu0 %v7982
        %v8093 = vpop.f32.mrb[0].mxu0
        %v8094 = vadd.f32 0.0, %v8093
        %v8095 = vpop.f32.mrb[0].mxu0
        %8096 = vmatprep.mubr.f32.mxu0 0.0
        %8097 = vmatmul.mubr.f32.gmra.mrb[0].mxu0 %v7983
        %v8098 = vpop.f32.mrb[0].mxu0
        %v8099 = vadd.f32 0.0, %v8098
        %v8100 = vpop.f32.mrb[0].mxu0
        %8101 = vmatprep.mubr.f32.mxu0 0.0
        %8102 = vmatmul.mubr.f32.gmra.mrb[0].mxu0 %v7984
        %v8103 = vpop.f32.mrb[0].mxu0
        %v8104 = vadd.f32 0.0, %v8103
        %v8105 = vpop.f32.mrb[0].mxu0
        %8106 = vmatprep.mubr.f32.mxu0 0.0
        %8107 = vmatmul.mubr.f32.gmra.mrb[0].mxu0 %v7985
        %v8108 = vpop.f32.mrb[0].mxu0
        %v8109 = vadd.f32 0.0, %v8108
        %v8110 = vpop.f32.mrb[0].mxu0
        %8111 = vmatprep.mubr.f32.mxu0 0.0
        %8112 = vmatmul.mubr.f32.gmra.mrb[0].mxu0 %v7986
        %v8113 = vpop.f32.mrb[0].mxu0
        %v8114 = vadd.f32 0.0, %v8113
        %v8115 = vpop.f32.mrb[0].mxu0
        %8116 = vdwg.mxu0
        %v8117 = vadd.f32 %v7987, %v8079
        %v8118 = vadd.f32 %v7988, %v8084
        %v8119 = vadd.f32 %v7989, %v8089
        %v8120 = vadd.f32 %v7990, %v8094
        %v8121 = vadd.f32 %v7991, %v8099
        %v8122 = vadd.f32 %v7992, %v8104
        %v8123 = vadd.f32 %v7993, %v8109
        %v8124 = vadd.f32 %v7994, %v8114
        %8125 = vst [vmem:[#allocation6] sm:$0xff] %v8117
        %8126 = vst [vmem:[#allocation6 + $0x8] sm:$0xff] %v8118
        %8127 = vst [vmem:[#allocation6 + $0x10] sm:$0xff] %v8119
        %8128 = vst [vmem:[#allocation6 + $0x18] sm:$0xff] %v8120
        %8129 = vst [vmem:[#allocation6 + $0x20] sm:$0xff] %v8121
        %8130 = vst [vmem:[#allocation6 + $0x28] sm:$0xff] %v8122
        %8131 = vst [vmem:[#allocation6 + $0x30] sm:$0xff] %v8123
        %8132 = vst [vmem:[#allocation6 + $0x38] sm:$0xff] %v8124
        %s8133 = scalar_lea.vmem [#allocation4], 16
        %v8134 = vld [vmem:[%s8133] sm:$0xff]
        %v8135 = vld [vmem:[%s8133 + $0x8] sm:$0xff]
        %v8136 = vld [vmem:[%s8133 + $0x10] sm:$0xff]
        %v8137 = vld [vmem:[%s8133 + $0x18] sm:$0xff]
        %v8138 = vld [vmem:[%s8133 + $0x20] sm:$0xff]
        %v8139 = vld [vmem:[%s8133 + $0x28] sm:$0xff]
        %v8140 = vld [vmem:[%s8133 + $0x30] sm:$0xff]
        %v8141 = vld [vmem:[%s8133 + $0x38] sm:$0xff]
        %v8142 = vld [vmem:[#allocation6] sm:$0xff]
        %v8143 = vld [vmem:[#allocation6 + $0x8] sm:$0xff]
        %v8144 = vld [vmem:[#allocation6 + $0x10] sm:$0xff]
        %v8145 = vld [vmem:[#allocation6 + $0x18] sm:$0xff]
        %v8146 = vld [vmem:[#allocation6 + $0x20] sm:$0xff]
        %v8147 = vld [vmem:[#allocation6 + $0x28] sm:$0xff]
        %v8148 = vld [vmem:[#allocation6 + $0x30] sm:$0xff]
        %v8149 = vld [vmem:[#allocation6 + $0x38] sm:$0xff]
        %s8150 = scalar_lea.vmem %s7, 768
        %v8151 = vld [vmem:[%s8150] sm:$0xff]
        %v8152 = vld [vmem:[%s8150 + $0x8] sm:$0xff]
        %v8153 = vld [vmem:[%s8150 + $0x10] sm:$0xff]
        %v8154 = vld [vmem:[%s8150 + $0x18] sm:$0xff]
        %v8155 = vld [vmem:[%s8150 + $0x20] sm:$0xff]
        %v8156 = vld [vmem:[%s8150 + $0x28] sm:$0xff]
        %v8157 = vld [vmem:[%s8150 + $0x30] sm:$0xff]
        %v8158 = vld [vmem:[%s8150 + $0x38] sm:$0xff]
        %v8159 = vld [vmem:[%s8150 + $0x40] sm:$0xff]
        %v8160 = vld [vmem:[%s8150 + $0x48] sm:$0xff]
        %v8161 = vld [vmem:[%s8150 + $0x50] sm:$0xff]
        %v8162 = vld [vmem:[%s8150 + $0x58] sm:$0xff]
        %v8163 = vld [vmem:[%s8150 + $0x60] sm:$0xff]
        %v8164 = vld [vmem:[%s8150 + $0x68] sm:$0xff]
        %v8165 = vld [vmem:[%s8150 + $0x70] sm:$0xff]
        %v8166 = vld [vmem:[%s8150 + $0x78] sm:$0xff]
        %8167 = vmatprep.subr.mxu0 0.0
        %8168 = vmatpush1.msra.mxu0 %v8151
        %8169 = vmatprep.subr.mxu0 0.0
        %8170 = vmatpush1.msra.mxu0 %v8152
        %8171 = vmatprep.subr.mxu0 0.0
        %8172 = vmatpush1.msra.mxu0 %v8153
        %8173 = vmatprep.subr.mxu0 0.0
        %8174 = vmatpush1.msra.mxu0 %v8154
        %8175 = vmatprep.subr.mxu0 0.0
        %8176 = vmatpush1.msra.mxu0 %v8155
        %8177 = vmatprep.subr.mxu0 0.0
        %8178 = vmatpush1.msra.mxu0 %v8156
        %8179 = vmatprep.subr.mxu0 0.0
        %8180 = vmatpush1.msra.mxu0 %v8157
        %8181 = vmatprep.subr.mxu0 0.0
        %8182 = vmatpush1.msra.mxu0 %v8158
        %8183 = vmatprep.subr.mxu0 0.0
        %8184 = vmatpush1.msra.mxu0 %v8159
        %8185 = vmatprep.subr.mxu0 0.0
        %8186 = vmatpush1.msra.mxu0 %v8160
        %8187 = vmatprep.subr.mxu0 0.0
        %8188 = vmatpush1.msra.mxu0 %v8161
        %8189 = vmatprep.subr.mxu0 0.0
        %8190 = vmatpush1.msra.mxu0 %v8162
        %8191 = vmatprep.subr.mxu0 0.0
        %8192 = vmatpush1.msra.mxu0 %v8163
        %8193 = vmatprep.subr.mxu0 0.0
        %8194 = vmatpush1.msra.mxu0 %v8164
        %8195 = vmatprep.subr.mxu0 0.0
        %8196 = vmatpush1.msra.mxu0 %v8165
        %8197 = vmatprep.subr.mxu0 0.0
        %8198 = vmatpush1.msra.mxu0 %v8166
        %8199 = vmatprep.subr.mxu0 0.0
        %8200 = vmatpush1.msra.mxu0 0.0
        %8201 = vmatprep.subr.mxu0 0.0
        %8202 = vmatpush1.msra.mxu0 0.0
        %8203 = vmatprep.subr.mxu0 0.0
        %8204 = vmatpush1.msra.mxu0 0.0
        %8205 = vmatprep.subr.mxu0 0.0
        %8206 = vmatpush1.msra.mxu0 0.0
        %8207 = vmatprep.subr.mxu0 0.0
        %8208 = vmatpush1.msra.mxu0 0.0
        %8209 = vmatprep.subr.mxu0 0.0
        %8210 = vmatpush1.msra.mxu0 0.0
        %8211 = vmatprep.subr.mxu0 0.0
        %8212 = vmatpush1.msra.mxu0 0.0
        %8213 = vmatprep.subr.mxu0 0.0
        %8214 = vmatpush1.msra.mxu0 0.0
        %8215 = vmatprep.subr.mxu0 0.0
        %8216 = vmatpush1.msra.mxu0 0.0
        %8217 = vmatprep.subr.mxu0 0.0
        %8218 = vmatpush1.msra.mxu0 0.0
        %8219 = vmatprep.subr.mxu0 0.0
        %8220 = vmatpush1.msra.mxu0 0.0
        %8221 = vmatprep.subr.mxu0 0.0
        %8222 = vmatpush1.msra.mxu0 0.0
        %8223 = vmatprep.subr.mxu0 0.0
        %8224 = vmatpush1.msra.mxu0 0.0
        %8225 = vmatprep.subr.mxu0 0.0
        %8226 = vmatpush1.msra.mxu0 0.0
        %8227 = vmatprep.subr.mxu0 0.0
        %8228 = vmatpush1.msra.mxu0 0.0
        %8229 = vmatprep.subr.mxu0 0.0
        %8230 = vmatpush1.msra.mxu0 0.0
        %8231 = vmatprep.mubr.f32.mxu0 0.0
        %8232 = vmatmul.mubr.f32.gmra.mrb[0].mxu0 %v8134
        %v8233 = vpop.f32.mrb[0].mxu0
        %v8234 = vadd.f32 0.0, %v8233
        %v8235 = vpop.f32.mrb[0].mxu0
        %8236 = vmatprep.mubr.f32.mxu0 0.0
        %8237 = vmatmul.mubr.f32.gmra.mrb[0].mxu0 %v8135
        %v8238 = vpop.f32.mrb[0].mxu0
        %v8239 = vadd.f32 0.0, %v8238
        %v8240 = vpop.f32.mrb[0].mxu0
        %8241 = vmatprep.mubr.f32.mxu0 0.0
        %8242 = vmatmul.mubr.f32.gmra.mrb[0].mxu0 %v8136
        %v8243 = vpop.f32.mrb[0].mxu0
        %v8244 = vadd.f32 0.0, %v8243
        %v8245 = vpop.f32.mrb[0].mxu0
        %8246 = vmatprep.mubr.f32.mxu0 0.0
        %8247 = vmatmul.mubr.f32.gmra.mrb[0].mxu0 %v8137
        %v8248 = vpop.f32.mrb[0].mxu0
        %v8249 = vadd.f32 0.0, %v8248
        %v8250 = vpop.f32.mrb[0].mxu0
        %8251 = vmatprep.mubr.f32.mxu0 0.0
        %8252 = vmatmul.mubr.f32.gmra.mrb[0].mxu0 %v8138
        %v8253 = vpop.f32.mrb[0].mxu0
        %v8254 = vadd.f32 0.0, %v8253
        %v8255 = vpop.f32.mrb[0].mxu0
        %8256 = vmatprep.mubr.f32.mxu0 0.0
        %8257 = vmatmul.mubr.f32.gmra.mrb[0].mxu0 %v8139
        %v8258 = vpop.f32.mrb[0].mxu0
        %v8259 = vadd.f32 0.0, %v8258
        %v8260 = vpop.f32.mrb[0].mxu0
        %8261 = vmatprep.mubr.f32.mxu0 0.0
        %8262 = vmatmul.mubr.f32.gmra.mrb[0].mxu0 %v8140
        %v8263 = vpop.f32.mrb[0].mxu0
        %v8264 = vadd.f32 0.0, %v8263
        %v8265 = vpop.f32.mrb[0].mxu0
        %8266 = vmatprep.mubr.f32.mxu0 0.0
        %8267 = vmatmul.mubr.f32.gmra.mrb[0].mxu0 %v8141
        %v8268 = vpop.f32.mrb[0].mxu0
        %v8269 = vadd.f32 0.0, %v8268
        %v8270 = vpop.f32.mrb[0].mxu0
        %8271 = vdwg.mxu0
        %v8272 = vadd.f32 %v8142, %v8234
        %v8273 = vadd.f32 %v8143, %v8239
        %v8274 = vadd.f32 %v8144, %v8244
        %v8275 = vadd.f32 %v8145, %v8249
        %v8276 = vadd.f32 %v8146, %v8254
        %v8277 = vadd.f32 %v8147, %v8259
        %v8278 = vadd.f32 %v8148, %v8264
        %v8279 = vadd.f32 %v8149, %v8269
        %8280 = vst [vmem:[#allocation6] sm:$0xff] %v8272
        %8281 = vst [vmem:[#allocation6 + $0x8] sm:$0xff] %v8273
        %8282 = vst [vmem:[#allocation6 + $0x10] sm:$0xff] %v8274
        %8283 = vst [vmem:[#allocation6 + $0x18] sm:$0xff] %v8275
        %8284 = vst [vmem:[#allocation6 + $0x20] sm:$0xff] %v8276
        %8285 = vst [vmem:[#allocation6 + $0x28] sm:$0xff] %v8277
        %8286 = vst [vmem:[#allocation6 + $0x30] sm:$0xff] %v8278
        %8287 = vst [vmem:[#allocation6 + $0x38] sm:$0xff] %v8279
        %s8288 = scalar_lea.vmem [#allocation4], 96
        %v8289 = vld [vmem:[%s8288] sm:$0xff]
        %v8290 = vld [vmem:[%s8288 + $0x8] sm:$0xff]
        %v8291 = vld [vmem:[%s8288 + $0x10] sm:$0xff]
        %v8292 = vld [vmem:[%s8288 + $0x18] sm:$0xff]
        %v8293 = vld [vmem:[%s8288 + $0x20] sm:$0xff]
        %v8294 = vld [vmem:[%s8288 + $0x28] sm:$0xff]
        %v8295 = vld [vmem:[%s8288 + $0x30] sm:$0xff]
        %v8296 = vld [vmem:[%s8288 + $0x38] sm:$0xff]
        %v8297 = vld [vmem:[#allocation6] sm:$0xff]
        %v8298 = vld [vmem:[#allocation6 + $0x8] sm:$0xff]
        %v8299 = vld [vmem:[#allocation6 + $0x10] sm:$0xff]
        %v8300 = vld [vmem:[#allocation6 + $0x18] sm:$0xff]
        %v8301 = vld [vmem:[#allocation6 + $0x20] sm:$0xff]
        %v8302 = vld [vmem:[#allocation6 + $0x28] sm:$0xff]
        %v8303 = vld [vmem:[#allocation6 + $0x30] sm:$0xff]
        %v8304 = vld [vmem:[#allocation6 + $0x38] sm:$0xff]
        %s8305 = scalar_lea.vmem %s7, 896
        %v8306 = vld [vmem:[%s8305] sm:$0xff]
        %v8307 = vld [vmem:[%s8305 + $0x8] sm:$0xff]
        %v8308 = vld [vmem:[%s8305 + $0x10] sm:$0xff]
        %v8309 = vld [vmem:[%s8305 + $0x18] sm:$0xff]
        %v8310 = vld [vmem:[%s8305 + $0x20] sm:$0xff]
        %v8311 = vld [vmem:[%s8305 + $0x28] sm:$0xff]
        %v8312 = vld [vmem:[%s8305 + $0x30] sm:$0xff]
        %v8313 = vld [vmem:[%s8305 + $0x38] sm:$0xff]
        %v8314 = vld [vmem:[%s8305 + $0x40] sm:$0xff]
        %v8315 = vld [vmem:[%s8305 + $0x48] sm:$0xff]
        %v8316 = vld [vmem:[%s8305 + $0x50] sm:$0xff]
        %v8317 = vld [vmem:[%s8305 + $0x58] sm:$0xff]
        %v8318 = vld [vmem:[%s8305 + $0x60] sm:$0xff]
        %v8319 = vld [vmem:[%s8305 + $0x68] sm:$0xff]
        %v8320 = vld [vmem:[%s8305 + $0x70] sm:$0xff]
        %v8321 = vld [vmem:[%s8305 + $0x78] sm:$0xff]
        %8322 = vmatprep.subr.mxu0 0.0
        %8323 = vmatpush1.msra.mxu0 %v8306
        %8324 = vmatprep.subr.mxu0 0.0
        %8325 = vmatpush1.msra.mxu0 %v8307
        %8326 = vmatprep.subr.mxu0 0.0
        %8327 = vmatpush1.msra.mxu0 %v8308
        %8328 = vmatprep.subr.mxu0 0.0
        %8329 = vmatpush1.msra.mxu0 %v8309
        %8330 = vmatprep.subr.mxu0 0.0
        %8331 = vmatpush1.msra.mxu0 %v8310
        %8332 = vmatprep.subr.mxu0 0.0
        %8333 = vmatpush1.msra.mxu0 %v8311
        %8334 = vmatprep.subr.mxu0 0.0
        %8335 = vmatpush1.msra.mxu0 %v8312
        %8336 = vmatprep.subr.mxu0 0.0
        %8337 = vmatpush1.msra.mxu0 %v8313
        %8338 = vmatprep.subr.mxu0 0.0
        %8339 = vmatpush1.msra.mxu0 %v8314
        %8340 = vmatprep.subr.mxu0 0.0
        %8341 = vmatpush1.msra.mxu0 %v8315
        %8342 = vmatprep.subr.mxu0 0.0
        %8343 = vmatpush1.msra.mxu0 %v8316
        %8344 = vmatprep.subr.mxu0 0.0
        %8345 = vmatpush1.msra.mxu0 %v8317
        %8346 = vmatprep.subr.mxu0 0.0
        %8347 = vmatpush1.msra.mxu0 %v8318
        %8348 = vmatprep.subr.mxu0 0.0
        %8349 = vmatpush1.msra.mxu0 %v8319
        %8350 = vmatprep.subr.mxu0 0.0
        %8351 = vmatpush1.msra.mxu0 %v8320
        %8352 = vmatprep.subr.mxu0 0.0
        %8353 = vmatpush1.msra.mxu0 %v8321
        %8354 = vmatprep.subr.mxu0 0.0
        %8355 = vmatpush1.msra.mxu0 0.0
        %8356 = vmatprep.subr.mxu0 0.0
        %8357 = vmatpush1.msra.mxu0 0.0
        %8358 = vmatprep.subr.mxu0 0.0
        %8359 = vmatpush1.msra.mxu0 0.0
        %8360 = vmatprep.subr.mxu0 0.0
        %8361 = vmatpush1.msra.mxu0 0.0
        %8362 = vmatprep.subr.mxu0 0.0
        %8363 = vmatpush1.msra.mxu0 0.0
        %8364 = vmatprep.subr.mxu0 0.0
        %8365 = vmatpush1.msra.mxu0 0.0
        %8366 = vmatprep.subr.mxu0 0.0
        %8367 = vmatpush1.msra.mxu0 0.0
        %8368 = vmatprep.subr.mxu0 0.0
        %8369 = vmatpush1.msra.mxu0 0.0
        %8370 = vmatprep.subr.mxu0 0.0
        %8371 = vmatpush1.msra.mxu0 0.0
        %8372 = vmatprep.subr.mxu0 0.0
        %8373 = vmatpush1.msra.mxu0 0.0
        %8374 = vmatprep.subr.mxu0 0.0
        %8375 = vmatpush1.msra.mxu0 0.0
        %8376 = vmatprep.subr.mxu0 0.0
        %8377 = vmatpush1.msra.mxu0 0.0
        %8378 = vmatprep.subr.mxu0 0.0
        %8379 = vmatpush1.msra.mxu0 0.0
        %8380 = vmatprep.subr.mxu0 0.0
        %8381 = vmatpush1.msra.mxu0 0.0
        %8382 = vmatprep.subr.mxu0 0.0
        %8383 = vmatpush1.msra.mxu0 0.0
        %8384 = vmatprep.subr.mxu0 0.0
        %8385 = vmatpush1.msra.mxu0 0.0
        %8386 = vmatprep.mubr.f32.mxu0 0.0
        %8387 = vmatmul.mubr.f32.gmra.mrb[0].mxu0 %v8289
        %v8388 = vpop.f32.mrb[0].mxu0
        %v8389 = vadd.f32 0.0, %v8388
        %v8390 = vpop.f32.mrb[0].mxu0
        %8391 = vmatprep.mubr.f32.mxu0 0.0
        %8392 = vmatmul.mubr.f32.gmra.mrb[0].mxu0 %v8290
        %v8393 = vpop.f32.mrb[0].mxu0
        %v8394 = vadd.f32 0.0, %v8393
        %v8395 = vpop.f32.mrb[0].mxu0
        %8396 = vmatprep.mubr.f32.mxu0 0.0
        %8397 = vmatmul.mubr.f32.gmra.mrb[0].mxu0 %v8291
        %v8398 = vpop.f32.mrb[0].mxu0
        %v8399 = vadd.f32 0.0, %v8398
        %v8400 = vpop.f32.mrb[0].mxu0
        %8401 = vmatprep.mubr.f32.mxu0 0.0
        %8402 = vmatmul.mubr.f32.gmra.mrb[0].mxu0 %v8292
        %v8403 = vpop.f32.mrb[0].mxu0
        %v8404 = vadd.f32 0.0, %v8403
        %v8405 = vpop.f32.mrb[0].mxu0
        %8406 = vmatprep.mubr.f32.mxu0 0.0
        %8407 = vmatmul.mubr.f32.gmra.mrb[0].mxu0 %v8293
        %v8408 = vpop.f32.mrb[0].mxu0
        %v8409 = vadd.f32 0.0, %v8408
        %v8410 = vpop.f32.mrb[0].mxu0
        %8411 = vmatprep.mubr.f32.mxu0 0.0
        %8412 = vmatmul.mubr.f32.gmra.mrb[0].mxu0 %v8294
        %v8413 = vpop.f32.mrb[0].mxu0
        %v8414 = vadd.f32 0.0, %v8413
        %v8415 = vpop.f32.mrb[0].mxu0
        %8416 = vmatprep.mubr.f32.mxu0 0.0
        %8417 = vmatmul.mubr.f32.gmra.mrb[0].mxu0 %v8295
        %v8418 = vpop.f32.mrb[0].mxu0
        %v8419 = vadd.f32 0.0, %v8418
        %v8420 = vpop.f32.mrb[0].mxu0
        %8421 = vmatprep.mubr.f32.mxu0 0.0
        %8422 = vmatmul.mubr.f32.gmra.mrb[0].mxu0 %v8296
        %v8423 = vpop.f32.mrb[0].mxu0
        %v8424 = vadd.f32 0.0, %v8423
        %v8425 = vpop.f32.mrb[0].mxu0
        %8426 = vdwg.mxu0
        %v8427 = vadd.f32 %v8297, %v8389
        %v8428 = vadd.f32 %v8298, %v8394
        %v8429 = vadd.f32 %v8299, %v8399
        %v8430 = vadd.f32 %v8300, %v8404
        %v8431 = vadd.f32 %v8301, %v8409
        %v8432 = vadd.f32 %v8302, %v8414
        %v8433 = vadd.f32 %v8303, %v8419
        %v8434 = vadd.f32 %v8304, %v8424
        %8435 = vst [vmem:[#allocation6] sm:$0xff] %v8427
        %8436 = vst [vmem:[#allocation6 + $0x8] sm:$0xff] %v8428
        %8437 = vst [vmem:[#allocation6 + $0x10] sm:$0xff] %v8429
        %8438 = vst [vmem:[#allocation6 + $0x18] sm:$0xff] %v8430
        %8439 = vst [vmem:[#allocation6 + $0x20] sm:$0xff] %v8431
        %8440 = vst [vmem:[#allocation6 + $0x28] sm:$0xff] %v8432
        %8441 = vst [vmem:[#allocation6 + $0x30] sm:$0xff] %v8433
        %8442 = vst [vmem:[#allocation6 + $0x38] sm:$0xff] %v8434
        %s8443 = scalar_lea.vmem [#allocation4], 176
        %v8444 = vld [vmem:[%s8443] sm:$0xff]
        %v8445 = vld [vmem:[%s8443 + $0x8] sm:$0xff]
        %v8446 = vld [vmem:[%s8443 + $0x10] sm:$0xff]
        %v8447 = vld [vmem:[%s8443 + $0x18] sm:$0xff]
        %v8448 = vld [vmem:[%s8443 + $0x20] sm:$0xff]
        %v8449 = vld [vmem:[%s8443 + $0x28] sm:$0xff]
        %v8450 = vld [vmem:[%s8443 + $0x30] sm:$0xff]
        %v8451 = vld [vmem:[%s8443 + $0x38] sm:$0xff]
        %v8452 = vld [vmem:[#allocation6] sm:$0xff]
        %v8453 = vld [vmem:[#allocation6 + $0x8] sm:$0xff]
        %v8454 = vld [vmem:[#allocation6 + $0x10] sm:$0xff]
        %v8455 = vld [vmem:[#allocation6 + $0x18] sm:$0xff]
        %v8456 = vld [vmem:[#allocation6 + $0x20] sm:$0xff]
        %v8457 = vld [vmem:[#allocation6 + $0x28] sm:$0xff]
        %v8458 = vld [vmem:[#allocation6 + $0x30] sm:$0xff]
        %v8459 = vld [vmem:[#allocation6 + $0x38] sm:$0xff]
        %s8460 = scalar_lea.vmem %s7, 1024
        %v8461 = vld [vmem:[%s8460] sm:$0xff]
        %v8462 = vld [vmem:[%s8460 + $0x8] sm:$0xff]
        %v8463 = vld [vmem:[%s8460 + $0x10] sm:$0xff]
        %v8464 = vld [vmem:[%s8460 + $0x18] sm:$0xff]
        %v8465 = vld [vmem:[%s8460 + $0x20] sm:$0xff]
        %v8466 = vld [vmem:[%s8460 + $0x28] sm:$0xff]
        %v8467 = vld [vmem:[%s8460 + $0x30] sm:$0xff]
        %v8468 = vld [vmem:[%s8460 + $0x38] sm:$0xff]
        %v8469 = vld [vmem:[%s8460 + $0x40] sm:$0xff]
        %v8470 = vld [vmem:[%s8460 + $0x48] sm:$0xff]
        %v8471 = vld [vmem:[%s8460 + $0x50] sm:$0xff]
        %v8472 = vld [vmem:[%s8460 + $0x58] sm:$0xff]
        %v8473 = vld [vmem:[%s8460 + $0x60] sm:$0xff]
        %v8474 = vld [vmem:[%s8460 + $0x68] sm:$0xff]
        %v8475 = vld [vmem:[%s8460 + $0x70] sm:$0xff]
        %v8476 = vld [vmem:[%s8460 + $0x78] sm:$0xff]
        %8477 = vmatprep.subr.mxu0 0.0
        %8478 = vmatpush1.msra.mxu0 %v8461
        %8479 = vmatprep.subr.mxu0 0.0
        %8480 = vmatpush1.msra.mxu0 %v8462
        %8481 = vmatprep.subr.mxu0 0.0
        %8482 = vmatpush1.msra.mxu0 %v8463
        %8483 = vmatprep.subr.mxu0 0.0
        %8484 = vmatpush1.msra.mxu0 %v8464
        %8485 = vmatprep.subr.mxu0 0.0
        %8486 = vmatpush1.msra.mxu0 %v8465
        %8487 = vmatprep.subr.mxu0 0.0
        %8488 = vmatpush1.msra.mxu0 %v8466
        %8489 = vmatprep.subr.mxu0 0.0
        %8490 = vmatpush1.msra.mxu0 %v8467
        %8491 = vmatprep.subr.mxu0 0.0
        %8492 = vmatpush1.msra.mxu0 %v8468
        %8493 = vmatprep.subr.mxu0 0.0
        %8494 = vmatpush1.msra.mxu0 %v8469
        %8495 = vmatprep.subr.mxu0 0.0
        %8496 = vmatpush1.msra.mxu0 %v8470
        %8497 = vmatprep.subr.mxu0 0.0
        %8498 = vmatpush1.msra.mxu0 %v8471
        %8499 = vmatprep.subr.mxu0 0.0
        %8500 = vmatpush1.msra.mxu0 %v8472
        %8501 = vmatprep.subr.mxu0 0.0
        %8502 = vmatpush1.msra.mxu0 %v8473
        %8503 = vmatprep.subr.mxu0 0.0
        %8504 = vmatpush1.msra.mxu0 %v8474
        %8505 = vmatprep.subr.mxu0 0.0
        %8506 = vmatpush1.msra.mxu0 %v8475
        %8507 = vmatprep.subr.mxu0 0.0
        %8508 = vmatpush1.msra.mxu0 %v8476
        %8509 = vmatprep.subr.mxu0 0.0
        %8510 = vmatpush1.msra.mxu0 0.0
        %8511 = vmatprep.subr.mxu0 0.0
        %8512 = vmatpush1.msra.mxu0 0.0
        %8513 = vmatprep.subr.mxu0 0.0
        %8514 = vmatpush1.msra.mxu0 0.0
        %8515 = vmatprep.subr.mxu0 0.0
        %8516 = vmatpush1.msra.mxu0 0.0
        %8517 = vmatprep.subr.mxu0 0.0
        %8518 = vmatpush1.msra.mxu0 0.0
        %8519 = vmatprep.subr.mxu0 0.0
        %8520 = vmatpush1.msra.mxu0 0.0
        %8521 = vmatprep.subr.mxu0 0.0
        %8522 = vmatpush1.msra.mxu0 0.0
        %8523 = vmatprep.subr.mxu0 0.0
        %8524 = vmatpush1.msra.mxu0 0.0
        %8525 = vmatprep.subr.mxu0 0.0
        %8526 = vmatpush1.msra.mxu0 0.0
        %8527 = vmatprep.subr.mxu0 0.0
        %8528 = vmatpush1.msra.mxu0 0.0
        %8529 = vmatprep.subr.mxu0 0.0
        %8530 = vmatpush1.msra.mxu0 0.0
        %8531 = vmatprep.subr.mxu0 0.0
        %8532 = vmatpush1.msra.mxu0 0.0
        %8533 = vmatprep.subr.mxu0 0.0
        %8534 = vmatpush1.msra.mxu0 0.0
        %8535 = vmatprep.subr.mxu0 0.0
        %8536 = vmatpush1.msra.mxu0 0.0
        %8537 = vmatprep.subr.mxu0 0.0
        %8538 = vmatpush1.msra.mxu0 0.0
        %8539 = vmatprep.subr.mxu0 0.0
        %8540 = vmatpush1.msra.mxu0 0.0
        %8541 = vmatprep.mubr.f32.mxu0 0.0
        %8542 = vmatmul.mubr.f32.gmra.mrb[0].mxu0 %v8444
        %v8543 = vpop.f32.mrb[0].mxu0
        %v8544 = vadd.f32 0.0, %v8543
        %v8545 = vpop.f32.mrb[0].mxu0
        %8546 = vmatprep.mubr.f32.mxu0 0.0
        %8547 = vmatmul.mubr.f32.gmra.mrb[0].mxu0 %v8445
        %v8548 = vpop.f32.mrb[0].mxu0
        %v8549 = vadd.f32 0.0, %v8548
        %v8550 = vpop.f32.mrb[0].mxu0
        %8551 = vmatprep.mubr.f32.mxu0 0.0
        %8552 = vmatmul.mubr.f32.gmra.mrb[0].mxu0 %v8446
        %v8553 = vpop.f32.mrb[0].mxu0
        %v8554 = vadd.f32 0.0, %v8553
        %v8555 = vpop.f32.mrb[0].mxu0
        %8556 = vmatprep.mubr.f32.mxu0 0.0
        %8557 = vmatmul.mubr.f32.gmra.mrb[0].mxu0 %v8447
        %v8558 = vpop.f32.mrb[0].mxu0
        %v8559 = vadd.f32 0.0, %v8558
        %v8560 = vpop.f32.mrb[0].mxu0
        %8561 = vmatprep.mubr.f32.mxu0 0.0
        %8562 = vmatmul.mubr.f32.gmra.mrb[0].mxu0 %v8448
        %v8563 = vpop.f32.mrb[0].mxu0
        %v8564 = vadd.f32 0.0, %v8563
        %v8565 = vpop.f32.mrb[0].mxu0
        %8566 = vmatprep.mubr.f32.mxu0 0.0
        %8567 = vmatmul.mubr.f32.gmra.mrb[0].mxu0 %v8449
        %v8568 = vpop.f32.mrb[0].mxu0
        %v8569 = vadd.f32 0.0, %v8568
        %v8570 = vpop.f32.mrb[0].mxu0
        %8571 = vmatprep.mubr.f32.mxu0 0.0
        %8572 = vmatmul.mubr.f32.gmra.mrb[0].mxu0 %v8450
        %v8573 = vpop.f32.mrb[0].mxu0
        %v8574 = vadd.f32 0.0, %v8573
        %v8575 = vpop.f32.mrb[0].mxu0
        %8576 = vmatprep.mubr.f32.mxu0 0.0
        %8577 = vmatmul.mubr.f32.gmra.mrb[0].mxu0 %v8451
        %v8578 = vpop.f32.mrb[0].mxu0
        %v8579 = vadd.f32 0.0, %v8578
        %v8580 = vpop.f32.mrb[0].mxu0
        %8581 = vdwg.mxu0
        %v8582 = vadd.f32 %v8452, %v8544
        %v8583 = vadd.f32 %v8453, %v8549
        %v8584 = vadd.f32 %v8454, %v8554
        %v8585 = vadd.f32 %v8455, %v8559
        %v8586 = vadd.f32 %v8456, %v8564
        %v8587 = vadd.f32 %v8457, %v8569
        %v8588 = vadd.f32 %v8458, %v8574
        %v8589 = vadd.f32 %v8459, %v8579
        %8590 = vst [vmem:[#allocation6] sm:$0xff] %v8582
        %8591 = vst [vmem:[#allocation6 + $0x8] sm:$0xff] %v8583
        %8592 = vst [vmem:[#allocation6 + $0x10] sm:$0xff] %v8584
        %8593 = vst [vmem:[#allocation6 + $0x18] sm:$0xff] %v8585
        %8594 = vst [vmem:[#allocation6 + $0x20] sm:$0xff] %v8586
        %8595 = vst [vmem:[#allocation6 + $0x28] sm:$0xff] %v8587
        %8596 = vst [vmem:[#allocation6 + $0x30] sm:$0xff] %v8588
        %8597 = vst [vmem:[#allocation6 + $0x38] sm:$0xff] %v8589
        %v8598 = vld [vmem:[#allocation6] sm:$0xff]
        %v8599 = vld [vmem:[#allocation6 + $0x8] sm:$0xff]
        %v8600 = vld [vmem:[#allocation6 + $0x10] sm:$0xff]
        %v8601 = vld [vmem:[#allocation6 + $0x18] sm:$0xff]
        %v8602 = vld [vmem:[#allocation6 + $0x20] sm:$0xff]
        %v8603 = vld [vmem:[#allocation6 + $0x28] sm:$0xff]
        %v8604 = vld [vmem:[#allocation6 + $0x30] sm:$0xff]
        %v8605 = vld [vmem:[#allocation6 + $0x38] sm:$0xff]
        %v8606 = vld [vmem:[%s8] sm:$0x1]
        %v8608 = vlaneseq
        %v8609 = vshrl.u32 %v8608, 7
        %v8610 = vsub.s32 0, %v8609
        %v8611 = vrot.slane %v8606, %v8610
        %v8613 = vadd.f32 %v8598, %v8611
        %v8614 = vadd.f32 %v8599, %v8611
        %v8615 = vadd.f32 %v8600, %v8611
        %v8616 = vadd.f32 %v8601, %v8611
        %v8617 = vadd.f32 %v8602, %v8611
        %v8618 = vadd.f32 %v8603, %v8611
        %v8619 = vadd.f32 %v8604, %v8611
        %v8620 = vadd.f32 %v8605, %v8611
        %8621 = vst [vmem:[%s325] sm:$0xff] %v8613
        %8622 = vst [vmem:[%s325 + $0x8] sm:$0xff] %v8614
        %8623 = vst [vmem:[%s325 + $0x10] sm:$0xff] %v8615
        %8624 = vst [vmem:[%s325 + $0x18] sm:$0xff] %v8616
        %8625 = vst [vmem:[%s325 + $0x20] sm:$0xff] %v8617
        %8626 = vst [vmem:[%s325 + $0x28] sm:$0xff] %v8618
        %8627 = vst [vmem:[%s325 + $0x30] sm:$0xff] %v8619
        %8628 = vst [vmem:[%s325 + $0x38] sm:$0xff] %v8620
        %s8629 = sand.u32 %s225, 1
        %s8630 = scalar_lea.sflag [#allocation8], %s8629
        %s8631 = sand.u32 %s225, 1
        %s8632 = smul.addr %s8631, 64
        %s8633 = scalar_lea.vmem [#allocation7], %s8632
        // Predicated region
        $region57: #{feature_extractor_forward.1} parent=55 // pred_check
          %p8634 = pneg %p235
        $region58: #{feature_extractor_forward.1} parent=55 // pred_check_branch
          %8636 = sbr.rel (%p8634) target = $region60
        $region59: #{feature_extractor_forward.1} parent=55 // pred_region
          %s8638 = ssub.s32 1024, 1024
          %8639 = vsyncadd %s8630, %s8638
          %s8640 = smul.addr %s23, 8
          %s8641 = smul.addr %s8640, 128
          %s8642 = scalar_lea.hbm %s9, %s8641
          %s8643 = sshll.u32 %s8633, 4
          %s8644 = int_to_ptr.vmem [resolvable:$true] %s8643
          %8649 = dma.vmem_to_hbm [thread:$0]  %s8644, 1024, %s8642, %s8630, 128, 128, 8
        $region60: #{feature_extractor_forward.1} parent=55 // pred_fallthru
          _
      $region56: #{feature_extractor_forward.1} parent=5 // pred_fallthru
        _
      %p8650 = scmp.le.s32.totalorder 2, %s18
      // Predicated region
      $region61: #{feature_extractor_forward.1} parent=5 // pred_check
        %p8651 = pneg %p8650
      $region62: #{feature_extractor_forward.1} parent=5 // pred_check_branch
        %8653 = sbr.rel (%p8651) target = $region64
      $region63: #{feature_extractor_forward.1} parent=5 // pred_region
        %s8654 = ssub.s32 %s18, 2
        // Predicated region
        $region65: #{feature_extractor_forward.1} parent=63 // pred_check
          %p8655 = pneg %p241
        $region66: #{feature_extractor_forward.1} parent=63 // pred_check_branch
          %8657 = sbr.rel (%p8655) target = $region68
        $region67: #{feature_extractor_forward.1} parent=63 // pred_region
          %s8658 = sand.u32 %s226, 1
          %s8659 = scalar_lea.sflag [#allocation8], %s8658
          %s8660 = sand.u32 %s226, 1
          %s8661 = smul.addr %s8660, 64
          %s8662 = scalar_lea.vmem [#allocation7], %s8661
          %8663 = dma.done %s8659, 1024
        $region68: #{feature_extractor_forward.1} parent=63 // pred_fallthru
          _
      $region64: #{feature_extractor_forward.1} parent=5 // pred_fallthru
        _
    $region6: #{feature_extractor_forward.1} parent=1 // loop_footer
      %s22 = sadd.s32 1, %s18
    $region7: #{feature_extractor_forward.1} parent=1 // loop_footer_branch
      %17 = sbr.rel target = $region3
    $region8: #{feature_extractor_forward.1} parent=1 // loop_exit
      _
    %8664 = vsyncpa [#allocation8], 1
    %s8665 = scalar_lea.sflag [#allocation8], 1
    %8666 = vsyncpa %s8665, 1

</llo_original>
